<compile_context>
chip_gen: v7x
topology: tpu7x:2x2x1
jax: 0.10.0
libtpu: 0.0.40
codegen_flags: <defaults>
</compile_context>

<pallas_src>
import functools

import jax
import jax.numpy as jnp
from jax.experimental import pallas as pl
from jax.experimental.pallas import tpu as pltpu

LANE = 128
H_BERT = 768
H_MID = 512
N_SARC = 2
N_TYPE = 4
N_FAKE = 2

# Output-slab lane layout: [fake(2) | sarc(2) | type(4) | zero pad ... 128]
OFF_FAKE = 0
OFF_SARC = N_FAKE                   # 2
OFF_TYPE = N_FAKE + N_SARC          # 4


def _masked_log_softmax(logits, lo, hi):
    """LogSoftmax over lanes [lo, hi) of a lane-padded [rows, 128] block.

    Returns a full-width array whose lanes outside [lo, hi) are zero, so the
    per-head results can simply be added into the lane-dense output slab.
    """
    lane = jax.lax.broadcasted_iota(jnp.int32, logits.shape, dimension=1)
    valid = jnp.logical_and(lane >= lo, lane < hi)
    masked = jnp.where(valid, logits, -1e30)
    m = jnp.max(masked, axis=-1, keepdims=True)
    s = masked - m
    den = jnp.sum(jnp.exp(s), axis=-1, keepdims=True)
    return jnp.where(valid, s - jnp.log(den), 0.0)


def bert_heads_kernel(
    pooled_ref,                 # [TM, 768]  bf16 batch tile
    wp_ref, bp_ref,             # synthetic BERT pooler dense (768 -> 768)
    w1_ref, b1_ref,             # fused fc1_sarcastic | fc1_type | fc1_fake[cls] (768 -> 1536)
    w2st_ref, b2st_ref,         # block-diag fc2_sarc | fc2_type (1024 -> 128, lane-padded)
    w1f_st_ref,                 # fc1_fake x_s/x_t rows packed at slab lanes (128 -> 512, bf16)
    w2f_ref, b2f_ref,           # fc2_fake (512 -> 128, lane-padded)
    out_ref,                    # [TM, 128] f32 output slab
):
    # --- synthetic BERT pooler dense: cls_hs = tanh(pooled @ Wp + bp)
    cls_hs = jnp.tanh(
        jnp.dot(pooled_ref[...], wp_ref[...], preferred_element_type=jnp.float32)
        + bp_ref[...]
    ).astype(jnp.bfloat16)

    # --- one fused fc1 matmul for all three heads (K=768, N=1536), bias folded in.
    h = jnp.dot(cls_hs, w1_ref[...], preferred_element_type=jnp.float32) + b1_ref[...]
    h_st = jnp.maximum(h[:, : 2 * H_MID], 0.0)          # fc1_sarc | fc1_type, ReLU'd
    h_f_cls = h[:, 2 * H_MID:]                          # fc1_fake @ cls columns (pre-ReLU)

    # --- block-diagonal fc2 for sarc+type; sarcastic logits land on lanes 2:4 and
    #     type logits on lanes 4:8 (their final slab positions).
    logits_st = (
        jnp.dot(h_st.astype(jnp.bfloat16), w2st_ref[...], preferred_element_type=jnp.float32)
        + b2st_ref[...]
    )
    x_s = _masked_log_softmax(logits_st, OFF_SARC, OFF_SARC + N_SARC)   # lanes 2:4
    x_t = _masked_log_softmax(logits_st, OFF_TYPE, OFF_TYPE + N_TYPE)   # lanes 4:8

    # --- fc1_fake on concat(cls_hs, x_s, x_t): the cls part came from the fused matmul
    #     above; the 6 x_s/x_t columns are one tiny K=128 MXU matmul (rows of w1f_st
    #     sit at the same lanes the log-probs occupy, so (x_s + x_t) feeds it directly).
    h_f = h_f_cls + jnp.dot(
        (x_s + x_t).astype(jnp.bfloat16), w1f_st_ref[...],
        preferred_element_type=jnp.float32)
    h_f = jnp.maximum(h_f, 0.0)

    # --- fc2_fake (lane-padded to 128) + LogSoftmax over lanes 0:2
    logits_f = (
        jnp.dot(h_f.astype(jnp.bfloat16), w2f_ref[...], preferred_element_type=jnp.float32)
        + b2f_ref[...]
    )
    x_f = _masked_log_softmax(logits_f, OFF_FAKE, OFF_FAKE + N_FAKE)    # lanes 0:2

    # --- heads occupy disjoint lanes (rest are zero) -> plain add assembles the slab.
    out_ref[...] = x_f + x_s + x_t


def _round_up(x, m):
    return (x + m - 1) // m * m


_WEIGHT_ORDER = ("wp", "bp", "w1", "b1", "w2st", "b2st", "w1f_st", "w2f", "b2f")

# ~0.35us per grid step ~= compute time of ~96 extra rows on v6e/v7x: used to trade
# padded-row waste against per-step overhead when choosing the batch tile.
_STEP_OVERHEAD_ROWS = 96


def _select_tiling(b, tm_max=512):
    """Returns (tm, padded_batch, use_megacore_split)."""
    if b <= 256:
        # Small serving batch: weight-DMA-bound. One grid step, single TC (don't
        # duplicate the ~3.3 MiB weight fetch per core), pad only to the bf16
        # (16,128) input-tile packing.
        tm = max(16, _round_up(b, 16))
        return tm, tm, False
    best = None
    for tm in (512, 256, 128):
        if tm > tm_max:
            continue
        bp = _round_up(b, tm)
        score = bp + (bp // tm) * _STEP_OVERHEAD_ROWS    # wasted rows + step overhead
        if best is None or score < best[0]:
            best = (score, tm, bp)
    _, tm, bp = best
    parallel = (bp // tm >= 2) and (b >= 512)            # split only when compute >> weight DMA
    return tm, bp, parallel


@functools.partial(jax.jit, static_argnames=("tm", "parallel"))
def _heads_pallas(pooled_bf16, packed, *, tm, parallel):
    bp = pooled_bf16.shape[0]               # padded batch, multiple of tm
    grid = (bp // tm,)
    weights = tuple(packed[k] for k in _WEIGHT_ORDER)

    def resident(arr):
        # Constant index map keeps the weight VMEM-resident across grid steps;
        # single-buffering avoids doubling its VMEM footprint.
        idx = (0,) * arr.ndim
        return pl.BlockSpec(arr.shape, lambda i, _idx=idx: _idx,
                            pipeline_mode=pl.Buffered(1))

    flops_per_row = 2 * (H_BERT * H_BERT            # pooler dense
                         + H_BERT * 3 * H_MID       # fused fc1 (1536 cols)
                         + 2 * H_MID * LANE         # block-diag fc2_sarc|type
                         + LANE * H_MID             # x_s/x_t columns of fc1_fake
                         + H_MID * LANE)            # fc2_fake
    weight_bytes = sum(int(w.size) * w.dtype.itemsize for w in weights)
    cost = pl.CostEstimate(
        flops=bp * flops_per_row,
        transcendentals=bp * (H_BERT + 3 * LANE + 3),
        bytes_accessed=weight_bytes + bp * (H_BERT * 2 + LANE * 4),
    )

    return pl.pallas_call(
        bert_heads_kernel,
        out_shape=jax.ShapeDtypeStruct((bp, LANE), jnp.float32),
        grid=grid,
        in_specs=[pl.BlockSpec((tm, H_BERT), lambda i: (i, 0))]
                 + [resident(w) for w in weights],
        out_specs=pl.BlockSpec((tm, LANE), lambda i: (i, 0)),
        compiler_params=pltpu.CompilerParams(
            dimension_semantics=("parallel",) if parallel else ("arbitrary",),
            vmem_limit_bytes=32 * 1024 * 1024,
        ),
        cost_estimate=cost,
    )(pooled_bf16, *weights)


def bert_arch_forward(pooled, packed, *, tm_max=512):
    """Returns (x_fake, x_sarcastic, x_type), matching BERT_Arch.forward downstream
    of pooler_output (dropout is identity at inference)."""
    b = pooled.shape[0]
    tm, bp, parallel = _select_tiling(b, tm_max)
    pooled_p = jnp.zeros((bp, H_BERT), jnp.bfloat16).at[:b].set(pooled.astype(jnp.bfloat16))
    slab = _heads_pallas(pooled_p, packed, tm=tm, parallel=parallel)    # [bp, 128]
    x_fake = slab[:b, OFF_FAKE:OFF_FAKE + N_FAKE]
    x_sarc = slab[:b, OFF_SARC:OFF_SARC + N_SARC]
    x_type = slab[:b, OFF_TYPE:OFF_TYPE + N_TYPE]
    return x_fake, x_sarc, x_type


# ----------------------------- parameter setup ------------------------------

def _linear_params(key, fan_in, fan_out):
    # PyTorch-style init (uniform +/- 1/sqrt(fan_in)); weight stored as [in, out].
    kw, kb = jax.random.split(key)
    bound = 1.0 / jnp.sqrt(float(fan_in))
    w = jax.random.uniform(kw, (fan_in, fan_out), jnp.float32, -bound, bound)
    b = jax.random.uniform(kb, (1, fan_out), jnp.float32, -bound, bound)
    return w, b


def make_raw_params(key):
    keys = jax.random.split(key, 6)
    w1s, b1s = _linear_params(keys[0], H_BERT, H_MID)
    w2s, b2s = _linear_params(keys[1], H_MID, N_SARC)
    w1t, b1t = _linear_params(keys[2], H_BERT, H_MID)
    w2t, b2t = _linear_params(keys[3], H_MID, N_TYPE)
    w1f, b1f = _linear_params(keys[4], H_BERT + N_SARC + N_TYPE, H_MID)
    w2f, b2f = _linear_params(keys[5], H_MID, N_FAKE)
    return dict(w1s=w1s, b1s=b1s, w2s=w2s, b2s=b2s, w1t=w1t, b1t=b1t,
                w2t=w2t, b2t=b2t, w1f=w1f, b1f=b1f, w2f=w2f, b2f=b2f)


def pack_params(raw, w_pool, b_pool):
    """Pre-pack / pre-cast weights for the fused kernel (done once, offline)."""
    bf16 = lambda a: a.astype(jnp.bfloat16)

    # Fused fc1: [fc1_sarc | fc1_type | fc1_fake(cls rows)] -> one [768, 1536] matmul.
    w1 = bf16(jnp.concatenate([raw["w1s"], raw["w1t"], raw["w1f"][:H_BERT]], axis=1))
    b1 = jnp.concatenate([raw["b1s"], raw["b1t"], raw["b1f"]], axis=1)

    # Block-diagonal fc2_sarc | fc2_type; columns placed at their final slab lanes.
    w2st = jnp.zeros((2 * H_MID, LANE), jnp.float32)
    w2st = w2st.at[:H_MID, OFF_SARC:OFF_SARC + N_SARC].set(raw["w2s"])
    w2st = w2st.at[H_MID:, OFF_TYPE:OFF_TYPE + N_TYPE].set(raw["w2t"])
    b2st = jnp.zeros((1, LANE), jnp.float32)
    b2st = b2st.at[:, OFF_SARC:OFF_SARC + N_SARC].set(raw["b2s"])
    b2st = b2st.at[:, OFF_TYPE:OFF_TYPE + N_TYPE].set(raw["b2t"])

    # fc1_fake x_s/x_t rows as a [128, 512] matmul operand whose rows sit at the same
    # lanes the log-probs occupy in the slab (2:4 sarc, 4:8 type); other rows zero, so
    # (x_s + x_t) @ w1f_st reproduces the concat(x_s, x_t) contribution exactly.
    w1f_st = jnp.zeros((LANE, H_MID), jnp.float32)
    w1f_st = w1f_st.at[OFF_SARC:OFF_SARC + N_SARC].set(raw["w1f"][H_BERT:H_BERT + N_SARC])
    w1f_st = w1f_st.at[OFF_TYPE:OFF_TYPE + N_TYPE].set(raw["w1f"][H_BERT + N_SARC:])

    # fc2_fake, lane-padded to 128 output columns.
    w2f = jnp.zeros((H_MID, LANE), jnp.float32).at[:, OFF_FAKE:OFF_FAKE + N_FAKE].set(raw["w2f"])
    b2f = jnp.zeros((1, LANE), jnp.float32).at[:, OFF_FAKE:OFF_FAKE + N_FAKE].set(raw["b2f"])

    return {
        "wp": bf16(w_pool), "bp": b_pool.reshape(1, H_BERT).astype(jnp.float32),
        "w1": w1, "b1": b1,
        "w2st": bf16(w2st), "b2st": b2st,
        "w1f_st": bf16(w1f_st),
        "w2f": bf16(w2f), "b2f": b2f,
    }


def synthetic_masked_mean(sent_id, mask, emb):
    """Stand-in for the BERT encoder body (embedding lookup + masked mean pool).
    The pooler dense + tanh is fused into the Pallas kernel."""
    tok = emb[sent_id]                                   # [B, S, 768]
    m = mask.astype(jnp.float32)[..., None]
    return (tok * m).sum(axis=1) / jnp.maximum(m.sum(axis=1), 1.0)


def reference_forward(pooled, raw, w_pool, b_pool):
    """Pure-JAX reference (f32 math, weights rounded through bf16 like the kernel)."""
    r = lambda a: a.astype(jnp.bfloat16).astype(jnp.float32)
    pooled = r(pooled)
    cls = jnp.tanh(pooled @ r(w_pool) + b_pool)
    h_s = jax.nn.relu(cls @ r(raw["w1s"]) + raw["b1s"])
    x_s = jax.nn.log_softmax(h_s @ r(raw["w2s"]) + raw["b2s"], axis=-1)
    h_t = jax.nn.relu(cls @ r(raw["w1t"]) + raw["b1t"])
    x_t = jax.nn.log_softmax(h_t @ r(raw["w2t"]) + raw["b2t"], axis=-1)
    comb = jnp.concatenate([cls, x_s, x_t], axis=-1)
    h_f = jax.nn.relu(comb @ r(raw["w1f"]) + raw["b1f"])
    x_f = jax.nn.log_softmax(h_f @ r(raw["w2f"]) + raw["b2f"], axis=-1)
    return x_f, x_s, x_t


if __name__ == "__main__":
    B, S, VOCAB = 8, 16, 1000

    root = jax.random.PRNGKey(0)
    k_params, k_emb, k_pool, k_ids, k_mask = jax.random.split(root, 5)

    raw = make_raw_params(k_params)
    emb = jax.random.normal(k_emb, (VOCAB, H_BERT), jnp.float32) * 0.02
    w_pool = jax.random.normal(k_pool, (H_BERT, H_BERT), jnp.float32) * 0.02
    b_pool = jnp.zeros((H_BERT,), jnp.float32)
    packed = pack_params(raw, w_pool, b_pool)

    sent_id = jax.random.randint(k_ids, (B, S), 0, VOCAB, dtype=jnp.int32)
    mask = (jax.random.uniform(k_mask, (B, S)) > 0.2).astype(jnp.int32)
    mask = mask.at[:, 0].set(1)          # at least one valid token per row

    pooled = synthetic_masked_mean(sent_id, mask, emb)

    x_fake, x_sarc, x_type = bert_arch_forward(pooled, packed)
    jax.block_until_ready((x_fake, x_sarc, x_type))

    assert x_fake.shape == (B, N_FAKE)
    assert x_sarc.shape == (B, N_SARC)
    assert x_type.shape == (B, N_TYPE)

    # Log-softmax rows must exponentiate-sum to 1 (computed in f32 in-kernel).
    for out in (x_fake, x_sarc, x_type):
        row_sums = jnp.exp(out).sum(axis=1)
        assert jnp.allclose(row_sums, 1.0, atol=1e-4), row_sums

    # Compare against the pure-JAX reference; tolerance absorbs bf16 activation casts.
    rf, rs, rt = reference_forward(pooled, raw, w_pool, b_pool)
    for got, ref in ((x_fake, rf), (x_sarc, rs), (x_type, rt)):
        assert jnp.allclose(got, ref, atol=0.1), float(jnp.max(jnp.abs(got - ref)))

    print("KERNEL_OK")
</pallas_src>

<mosaic_0001>
module attributes {stable_mosaic.version = 11 : i64} {
  func.func @bert_heads_kernel(%arg0: i32, %arg1: memref<16x768xbf16, #tpu.memory_space<vmem>>, %arg2: memref<768x768xbf16, #tpu.memory_space<vmem>>, %arg3: memref<1x768xf32, #tpu.memory_space<vmem>>, %arg4: memref<768x1536xbf16, #tpu.memory_space<vmem>>, %arg5: memref<1x1536xf32, #tpu.memory_space<vmem>>, %arg6: memref<1024x128xbf16, #tpu.memory_space<vmem>>, %arg7: memref<1x128xf32, #tpu.memory_space<vmem>>, %arg8: memref<128x512xbf16, #tpu.memory_space<vmem>>, %arg9: memref<512x128xbf16, #tpu.memory_space<vmem>>, %arg10: memref<1x128xf32, #tpu.memory_space<vmem>>, %arg11: memref<16x128xf32, #tpu.memory_space<vmem>>) attributes {dimension_semantics = [#tpu.dimension_semantics<arbitrary>], iteration_bounds = array<i64: 1>, scalar_prefetch = 0 : i64, scratch_operands = 0 : i64, tpu.core_type = #tpu.core_type<tc>, window_params = [{transform_indices = @transform_0, window_bounds = array<i64: 16, 768>}, {pipeline_mode = #tpu.pipeline_mode<synchronous>, transform_indices = @transform_1, window_bounds = array<i64: 768, 768>}, {pipeline_mode = #tpu.pipeline_mode<synchronous>, transform_indices = @transform_2, window_bounds = array<i64: 1, 768>}, {pipeline_mode = #tpu.pipeline_mode<synchronous>, transform_indices = @transform_3, window_bounds = array<i64: 768, 1536>}, {pipeline_mode = #tpu.pipeline_mode<synchronous>, transform_indices = @transform_4, window_bounds = array<i64: 1, 1536>}, {pipeline_mode = #tpu.pipeline_mode<synchronous>, transform_indices = @transform_5, window_bounds = array<i64: 1024, 128>}, {pipeline_mode = #tpu.pipeline_mode<synchronous>, transform_indices = @transform_6, window_bounds = array<i64: 1, 128>}, {pipeline_mode = #tpu.pipeline_mode<synchronous>, transform_indices = @transform_7, window_bounds = array<i64: 128, 512>}, {pipeline_mode = #tpu.pipeline_mode<synchronous>, transform_indices = @transform_8, window_bounds = array<i64: 512, 128>}, {pipeline_mode = #tpu.pipeline_mode<synchronous>, transform_indices = @transform_9, window_bounds = array<i64: 1, 128>}, {transform_indices = @transform_10, window_bounds = array<i64: 16, 128>}]} {
    %c0 = arith.constant 0 : index
    %c0_0 = arith.constant 0 : index
    %0 = vector.load %arg1[%c0, %c0_0] : memref<16x768xbf16, #tpu.memory_space<vmem>>, vector<16x768xbf16>
    %c0_1 = arith.constant 0 : index
    %c0_2 = arith.constant 0 : index
    %1 = vector.load %arg2[%c0_1, %c0_2] : memref<768x768xbf16, #tpu.memory_space<vmem>>, vector<768x768xbf16>
    %cst = arith.constant dense<0.000000e+00> : vector<16x768xf32>
    %2 = tpu.matmul %0, %1, %cst {dimension_numbers = #tpu.dot_dimension_numbers<[1], [0], [0], [1], [0, 0, 1, 1], [], []>} : vector<16x768xbf16>, vector<768x768xbf16>, vector<16x768xf32> -> vector<16x768xf32>
    %c0_3 = arith.constant 0 : index
    %c0_4 = arith.constant 0 : index
    %3 = vector.load %arg3[%c0_3, %c0_4] : memref<1x768xf32, #tpu.memory_space<vmem>>, vector<1x768xf32>
    %4 = vector.broadcast %3 : vector<1x768xf32> to vector<16x768xf32>
    %5 = arith.addf %2, %4 : vector<16x768xf32>
    %6 = math.tanh %5 : vector<16x768xf32>
    %7 = arith.truncf %6 : vector<16x768xf32> to vector<16x768xbf16>
    %c0_5 = arith.constant 0 : index
    %c0_6 = arith.constant 0 : index
    %8 = vector.load %arg4[%c0_5, %c0_6] : memref<768x1536xbf16, #tpu.memory_space<vmem>>, vector<768x1536xbf16>
    %cst_7 = arith.constant dense<0.000000e+00> : vector<16x1536xf32>
    %9 = tpu.matmul %7, %8, %cst_7 {dimension_numbers = #tpu.dot_dimension_numbers<[1], [0], [0], [1], [0, 0, 1, 1], [], []>} : vector<16x768xbf16>, vector<768x1536xbf16>, vector<16x1536xf32> -> vector<16x1536xf32>
    %c0_8 = arith.constant 0 : index
    %c0_9 = arith.constant 0 : index
    %10 = vector.load %arg5[%c0_8, %c0_9] : memref<1x1536xf32, #tpu.memory_space<vmem>>, vector<1x1536xf32>
    %11 = vector.broadcast %10 : vector<1x1536xf32> to vector<16x1536xf32>
    %12 = arith.addf %9, %11 : vector<16x1536xf32>
    %13 = vector.extract_strided_slice %12 {offsets = [0, 0], sizes = [16, 1024], strides = [1, 1]} : vector<16x1536xf32> to vector<16x1024xf32>
    %cst_10 = arith.constant 0.000000e+00 : f32
    %14 = vector.broadcast %cst_10 : f32 to vector<16x1024xf32>
    %15 = arith.maximumf %13, %14 : vector<16x1024xf32>
    %16 = vector.extract_strided_slice %12 {offsets = [0, 1024], sizes = [16, 512], strides = [1, 1]} : vector<16x1536xf32> to vector<16x512xf32>
    %17 = arith.truncf %15 : vector<16x1024xf32> to vector<16x1024xbf16>
    %c0_11 = arith.constant 0 : index
    %c0_12 = arith.constant 0 : index
    %18 = vector.load %arg6[%c0_11, %c0_12] : memref<1024x128xbf16, #tpu.memory_space<vmem>>, vector<1024x128xbf16>
    %cst_13 = arith.constant dense<0.000000e+00> : vector<16x128xf32>
    %19 = tpu.matmul %17, %18, %cst_13 {dimension_numbers = #tpu.dot_dimension_numbers<[1], [0], [0], [1], [0, 0, 1, 1], [], []>} : vector<16x1024xbf16>, vector<1024x128xbf16>, vector<16x128xf32> -> vector<16x128xf32>
    %c0_14 = arith.constant 0 : index
    %c0_15 = arith.constant 0 : index
    %20 = vector.load %arg7[%c0_14, %c0_15] : memref<1x128xf32, #tpu.memory_space<vmem>>, vector<1x128xf32>
    %21 = vector.broadcast %20 : vector<1x128xf32> to vector<16x128xf32>
    %22 = arith.addf %19, %21 : vector<16x128xf32>
    %23 = tpu.iota {dimensions = array<i32: 1>} : vector<16x128xi32>
    %c2_i32 = arith.constant 2 : i32
    %24 = vector.broadcast %c2_i32 : i32 to vector<16x128xi32>
    %25 = arith.cmpi sge, %23, %24 : vector<16x128xi32>
    %c4_i32 = arith.constant 4 : i32
    %26 = vector.broadcast %c4_i32 : i32 to vector<16x128xi32>
    %27 = arith.cmpi slt, %23, %26 : vector<16x128xi32>
    %28 = arith.andi %25, %27 : vector<16x128xi1>
    %cst_16 = arith.constant -1.000000e+30 : f32
    %29 = vector.broadcast %cst_16 : f32 to vector<16x128xf32>
    %30 = arith.select %28, %22, %29 : vector<16x128xi1>, vector<16x128xf32>
    %cst_17 = arith.constant dense<0xFF800000> : vector<16xf32>
    %31 = vector.multi_reduction <maximumf>, %30, %cst_17 [1] : vector<16x128xf32> to vector<16xf32>
    %32 = vector.shape_cast %31 : vector<16xf32> to vector<16x1xf32>
    %33 = vector.broadcast %32 : vector<16x1xf32> to vector<16x128xf32>
    %34 = arith.subf %30, %33 : vector<16x128xf32>
    %35 = math.exp %34 : vector<16x128xf32>
    %cst_18 = arith.constant dense<0.000000e+00> : vector<16xf32>
    %36 = vector.multi_reduction <add>, %35, %cst_18 [1] : vector<16x128xf32> to vector<16xf32>
    %37 = vector.shape_cast %36 : vector<16xf32> to vector<16x1xf32>
    %38 = math.log %37 : vector<16x1xf32>
    %39 = vector.broadcast %38 : vector<16x1xf32> to vector<16x128xf32>
    %40 = arith.subf %34, %39 : vector<16x128xf32>
    %cst_19 = arith.constant 0.000000e+00 : f32
    %41 = vector.broadcast %cst_19 : f32 to vector<16x128xf32>
    %42 = arith.select %28, %40, %41 : vector<16x128xi1>, vector<16x128xf32>
    %43 = tpu.iota {dimensions = array<i32: 1>} : vector<16x128xi32>
    %c4_i32_20 = arith.constant 4 : i32
    %44 = vector.broadcast %c4_i32_20 : i32 to vector<16x128xi32>
    %45 = arith.cmpi sge, %43, %44 : vector<16x128xi32>
    %c8_i32 = arith.constant 8 : i32
    %46 = vector.broadcast %c8_i32 : i32 to vector<16x128xi32>
    %47 = arith.cmpi slt, %43, %46 : vector<16x128xi32>
    %48 = arith.andi %45, %47 : vector<16x128xi1>
    %cst_21 = arith.constant -1.000000e+30 : f32
    %49 = vector.broadcast %cst_21 : f32 to vector<16x128xf32>
    %50 = arith.select %48, %22, %49 : vector<16x128xi1>, vector<16x128xf32>
    %cst_22 = arith.constant dense<0xFF800000> : vector<16xf32>
    %51 = vector.multi_reduction <maximumf>, %50, %cst_22 [1] : vector<16x128xf32> to vector<16xf32>
    %52 = vector.shape_cast %51 : vector<16xf32> to vector<16x1xf32>
    %53 = vector.broadcast %52 : vector<16x1xf32> to vector<16x128xf32>
    %54 = arith.subf %50, %53 : vector<16x128xf32>
    %55 = math.exp %54 : vector<16x128xf32>
    %cst_23 = arith.constant dense<0.000000e+00> : vector<16xf32>
    %56 = vector.multi_reduction <add>, %55, %cst_23 [1] : vector<16x128xf32> to vector<16xf32>
    %57 = vector.shape_cast %56 : vector<16xf32> to vector<16x1xf32>
    %58 = math.log %57 : vector<16x1xf32>
    %59 = vector.broadcast %58 : vector<16x1xf32> to vector<16x128xf32>
    %60 = arith.subf %54, %59 : vector<16x128xf32>
    %cst_24 = arith.constant 0.000000e+00 : f32
    %61 = vector.broadcast %cst_24 : f32 to vector<16x128xf32>
    %62 = arith.select %48, %60, %61 : vector<16x128xi1>, vector<16x128xf32>
    %63 = arith.addf %42, %62 : vector<16x128xf32>
    %64 = arith.truncf %63 : vector<16x128xf32> to vector<16x128xbf16>
    %c0_25 = arith.constant 0 : index
    %c0_26 = arith.constant 0 : index
    %65 = vector.load %arg8[%c0_25, %c0_26] : memref<128x512xbf16, #tpu.memory_space<vmem>>, vector<128x512xbf16>
    %cst_27 = arith.constant dense<0.000000e+00> : vector<16x512xf32>
    %66 = tpu.matmul %64, %65, %cst_27 {dimension_numbers = #tpu.dot_dimension_numbers<[1], [0], [0], [1], [0, 0, 1, 1], [], []>} : vector<16x128xbf16>, vector<128x512xbf16>, vector<16x512xf32> -> vector<16x512xf32>
    %67 = arith.addf %16, %66 : vector<16x512xf32>
    %cst_28 = arith.constant 0.000000e+00 : f32
    %68 = vector.broadcast %cst_28 : f32 to vector<16x512xf32>
    %69 = arith.maximumf %67, %68 : vector<16x512xf32>
    %70 = arith.truncf %69 : vector<16x512xf32> to vector<16x512xbf16>
    %c0_29 = arith.constant 0 : index
    %c0_30 = arith.constant 0 : index
    %71 = vector.load %arg9[%c0_29, %c0_30] : memref<512x128xbf16, #tpu.memory_space<vmem>>, vector<512x128xbf16>
    %cst_31 = arith.constant dense<0.000000e+00> : vector<16x128xf32>
    %72 = tpu.matmul %70, %71, %cst_31 {dimension_numbers = #tpu.dot_dimension_numbers<[1], [0], [0], [1], [0, 0, 1, 1], [], []>} : vector<16x512xbf16>, vector<512x128xbf16>, vector<16x128xf32> -> vector<16x128xf32>
    %c0_32 = arith.constant 0 : index
    %c0_33 = arith.constant 0 : index
    %73 = vector.load %arg10[%c0_32, %c0_33] : memref<1x128xf32, #tpu.memory_space<vmem>>, vector<1x128xf32>
    %74 = vector.broadcast %73 : vector<1x128xf32> to vector<16x128xf32>
    %75 = arith.addf %72, %74 : vector<16x128xf32>
    %76 = tpu.iota {dimensions = array<i32: 1>} : vector<16x128xi32>
    %c0_i32 = arith.constant 0 : i32
    %77 = vector.broadcast %c0_i32 : i32 to vector<16x128xi32>
    %78 = arith.cmpi sge, %76, %77 : vector<16x128xi32>
    %c2_i32_34 = arith.constant 2 : i32
    %79 = vector.broadcast %c2_i32_34 : i32 to vector<16x128xi32>
    %80 = arith.cmpi slt, %76, %79 : vector<16x128xi32>
    %81 = arith.andi %78, %80 : vector<16x128xi1>
    %cst_35 = arith.constant -1.000000e+30 : f32
    %82 = vector.broadcast %cst_35 : f32 to vector<16x128xf32>
    %83 = arith.select %81, %75, %82 : vector<16x128xi1>, vector<16x128xf32>
    %cst_36 = arith.constant dense<0xFF800000> : vector<16xf32>
    %84 = vector.multi_reduction <maximumf>, %83, %cst_36 [1] : vector<16x128xf32> to vector<16xf32>
    %85 = vector.shape_cast %84 : vector<16xf32> to vector<16x1xf32>
    %86 = vector.broadcast %85 : vector<16x1xf32> to vector<16x128xf32>
    %87 = arith.subf %83, %86 : vector<16x128xf32>
    %88 = math.exp %87 : vector<16x128xf32>
    %cst_37 = arith.constant dense<0.000000e+00> : vector<16xf32>
    %89 = vector.multi_reduction <add>, %88, %cst_37 [1] : vector<16x128xf32> to vector<16xf32>
    %90 = vector.shape_cast %89 : vector<16xf32> to vector<16x1xf32>
    %91 = math.log %90 : vector<16x1xf32>
    %92 = vector.broadcast %91 : vector<16x1xf32> to vector<16x128xf32>
    %93 = arith.subf %87, %92 : vector<16x128xf32>
    %cst_38 = arith.constant 0.000000e+00 : f32
    %94 = vector.broadcast %cst_38 : f32 to vector<16x128xf32>
    %95 = arith.select %81, %93, %94 : vector<16x128xi1>, vector<16x128xf32>
    %96 = arith.addf %95, %42 : vector<16x128xf32>
    %97 = arith.addf %96, %62 : vector<16x128xf32>
    %c0_39 = arith.constant 0 : index
    %c0_40 = arith.constant 0 : index
    %98 = vector.load %arg11[%c0_39, %c0_40] : memref<16x128xf32, #tpu.memory_space<vmem>>, vector<16x128xf32>
    tpu.vector_store %arg11[%c0_39, %c0_40], %97 {strides = array<i32>} : memref<16x128xf32, #tpu.memory_space<vmem>>, vector<16x128xf32>,
    return
  }
  func.func @transform_0(%arg0: i32) -> (i32, i32) {
    %c0_i32 = arith.constant 0 : i32
    %c0_i32_0 = arith.constant 0 : i32
    return %arg0, %c0_i32 : i32, i32
  }
  func.func @transform_1(%arg0: i32) -> (i32, i32) {
    %c0_i32 = arith.constant 0 : i32
    %c0_i32_0 = arith.constant 0 : i32
    %c0_i32_1 = arith.constant 0 : i32
    return %c0_i32, %c0_i32_0 : i32, i32
  }
  func.func @transform_2(%arg0: i32) -> (i32, i32) {
    %c0_i32 = arith.constant 0 : i32
    %c0_i32_0 = arith.constant 0 : i32
    %c0_i32_1 = arith.constant 0 : i32
    return %c0_i32, %c0_i32_0 : i32, i32
  }
  func.func @transform_3(%arg0: i32) -> (i32, i32) {
    %c0_i32 = arith.constant 0 : i32
    %c0_i32_0 = arith.constant 0 : i32
    %c0_i32_1 = arith.constant 0 : i32
    return %c0_i32, %c0_i32_0 : i32, i32
  }
  func.func @transform_4(%arg0: i32) -> (i32, i32) {
    %c0_i32 = arith.constant 0 : i32
    %c0_i32_0 = arith.constant 0 : i32
    %c0_i32_1 = arith.constant 0 : i32
    return %c0_i32, %c0_i32_0 : i32, i32
  }
  func.func @transform_5(%arg0: i32) -> (i32, i32) {
    %c0_i32 = arith.constant 0 : i32
    %c0_i32_0 = arith.constant 0 : i32
    %c0_i32_1 = arith.constant 0 : i32
    return %c0_i32, %c0_i32_0 : i32, i32
  }
  func.func @transform_6(%arg0: i32) -> (i32, i32) {
    %c0_i32 = arith.constant 0 : i32
    %c0_i32_0 = arith.constant 0 : i32
    %c0_i32_1 = arith.constant 0 : i32
    return %c0_i32, %c0_i32_0 : i32, i32
  }
  func.func @transform_7(%arg0: i32) -> (i32, i32) {
    %c0_i32 = arith.constant 0 : i32
    %c0_i32_0 = arith.constant 0 : i32
    %c0_i32_1 = arith.constant 0 : i32
    return %c0_i32, %c0_i32_0 : i32, i32
  }
  func.func @transform_8(%arg0: i32) -> (i32, i32) {
    %c0_i32 = arith.constant 0 : i32
    %c0_i32_0 = arith.constant 0 : i32
    %c0_i32_1 = arith.constant 0 : i32
    return %c0_i32, %c0_i32_0 : i32, i32
  }
  func.func @transform_9(%arg0: i32) -> (i32, i32) {
    %c0_i32 = arith.constant 0 : i32
    %c0_i32_0 = arith.constant 0 : i32
    %c0_i32_1 = arith.constant 0 : i32
    return %c0_i32, %c0_i32_0 : i32, i32
  }
  func.func @transform_10(%arg0: i32) -> (i32, i32) {
    %c0_i32 = arith.constant 0 : i32
    %c0_i32_0 = arith.constant 0 : i32
    return %arg0, %c0_i32 : i32, i32
  }
}

</mosaic_0001>

<llo_original>
// kernel: _heads_pallas.1
$region0: #{_heads_pallas.1}
  #allocation0 [shape = 'u32[]', space=smem, size = 0x4, offset = 0x4, fixed_abs, tag = 'smem constant byte address 0x4 - core index']
  #allocation1 [shape = 'u32[144,128]{1,0:T(1,128)}', space=vmem, size = 0x12000, scoped, tag = 'internal scratch']
  %s0 = inlined_call_operand.hbm [shape: bf16[16,768], index: 0, kind: input, shape index: {}]
  %s1 = inlined_call_operand.hbm [shape: bf16[768,768], index: 1, kind: input, shape index: {}]
  %s2 = inlined_call_operand.hbm [shape: f32[1,768], index: 2, kind: input, shape index: {}]
  %s3 = inlined_call_operand.hbm [shape: bf16[768,1536], index: 3, kind: input, shape index: {}]
  %s4 = inlined_call_operand.hbm [shape: f32[1,1536], index: 4, kind: input, shape index: {}]
  %s5 = inlined_call_operand.hbm [shape: bf16[1024,128], index: 5, kind: input, shape index: {}]
  %s6 = inlined_call_operand.hbm [shape: f32[1,128], index: 6, kind: input, shape index: {}]
  %s7 = inlined_call_operand.hbm [shape: bf16[128,512], index: 7, kind: input, shape index: {}]
  %s8 = inlined_call_operand.hbm [shape: bf16[512,128], index: 8, kind: input, shape index: {}]
  %s9 = inlined_call_operand.hbm [shape: f32[1,128], index: 9, kind: input, shape index: {}]
  %s10 = inlined_call_operand.hbm [shape: f32[16,128], index: 10, kind: output, shape index: {}]
  %s11 = sld [smem:[#allocation0]]
  $region90: #{_heads_pallas.1} parent=0
    _
  %s13 = ssub.s32 1, %s11
  %s14 = scalar_select 0, %s13, %s11
  $region1: #{_heads_pallas.1} parent=0
    #allocation2 [shape = 'u8[24576]{0}', space=vmem, size = 0x6000, scoped, tag = 'input window, operand 0, single buffered']
    #allocation3 [shape = 's32[1]{0}', space=sflag, size = 0x4, scoped, tag = 'scoped memory for _heads_pallas.1']
    #allocation4 [shape = 's32[1]{0}', space=sflag, size = 0x4, scoped, tag = 'scoped memory for _heads_pallas.1']
    #allocation5 [shape = 'u8[1179648]{0}', space=vmem, size = 0x120000, scoped, tag = 'input window, operand 1, single buffered']
    #allocation6 [shape = 's32[1]{0}', space=sflag, size = 0x4, scoped, tag = 'scoped memory for _heads_pallas.1']
    #allocation7 [shape = 'u8[3072]{0}', space=vmem, size = 0xc00, scoped, tag = 'input window, operand 2, single buffered']
    #allocation8 [shape = 'u8[2359296]{0}', space=vmem, size = 0x240000, scoped, tag = 'input window, operand 3, single buffered']
    #allocation9 [shape = 's32[1]{0}', space=sflag, size = 0x4, scoped, tag = 'scoped memory for _heads_pallas.1']
    #allocation10 [shape = 'u8[6144]{0}', space=vmem, size = 0x1800, scoped, tag = 'input window, operand 4, single buffered']
    #allocation11 [shape = 'u8[262144]{0}', space=vmem, size = 0x40000, scoped, tag = 'input window, operand 5, single buffered']
    #allocation12 [shape = 's32[1]{0}', space=sflag, size = 0x4, scoped, tag = 'scoped memory for _heads_pallas.1']
    #allocation13 [shape = 'u8[512]{0}', space=vmem, size = 0x400, scoped, tag = 'input window, operand 6, single buffered']
    #allocation14 [shape = 'u8[131072]{0}', space=vmem, size = 0x20000, scoped, tag = 'input window, operand 7, single buffered']
    #allocation15 [shape = 's32[1]{0}', space=sflag, size = 0x4, scoped, tag = 'scoped memory for _heads_pallas.1']
    #allocation16 [shape = 'u8[131072]{0}', space=vmem, size = 0x20000, scoped, tag = 'input window, operand 8, single buffered']
    #allocation17 [shape = 'u8[512]{0}', space=vmem, size = 0x400, scoped, tag = 'input window, operand 9, single buffered']
    #allocation18 [shape = 's32[1]{0}', space=sflag, size = 0x4, scoped, tag = 'scoped memory for _heads_pallas.1']
    #allocation19 [shape = 'u8[8192]{0}', space=vmem, size = 0x2000, scoped, tag = 'output window, operand 0, single buffered']
    %15 = vsyncpa [#allocation3], 0
    %16 = vsyncpa [#allocation6], 0
    %17 = vsyncpa [#allocation9], 0
    %18 = vsyncpa [#allocation12], 0
    %19 = vsyncpa [#allocation15], 0
    %20 = vsyncpa [#allocation18], 0
    %21 = vsyncpa [#allocation4], 0
    // Predicated region
    $region2: #{_heads_pallas.1} parent=1 // pred_check
      _
    $region3: #{_heads_pallas.1} parent=1 // pred_check_branch
      %23 = sbr.rel (0) target = $region5
    $region4: #{_heads_pallas.1} parent=1 // pred_region
      %s25 = ssub.s32 768, 768
      %26 = vsyncadd [#allocation3], %s25
      %s27 = sshll.u32 [#allocation2], 4
      %s28 = int_to_ptr.vmem [resolvable:$true] %s27
      %33 = dma.hbm_to_vmem [thread:$0]  %s0, 768, %s28, [#allocation3], 384, 384, 24
    $region5: #{_heads_pallas.1} parent=1 // pred_fallthru
      _
    // Predicated region
    $region6: #{_heads_pallas.1} parent=1 // pred_check
      _
    $region7: #{_heads_pallas.1} parent=1 // pred_check_branch
      %35 = sbr.rel (0) target = $region9
    $region8: #{_heads_pallas.1} parent=1 // pred_region
      %s37 = ssub.s32 36864, 36864
      %38 = vsyncadd [#allocation6], %s37
      %s39 = sshll.u32 [#allocation5], 4
      %s40 = int_to_ptr.vmem [resolvable:$true] %s39
      %45 = dma.hbm_to_vmem [thread:$0]  %s1, 36864, %s40, [#allocation6], 384, 384, 24
    $region9: #{_heads_pallas.1} parent=1 // pred_fallthru
      _
    // Predicated region
    $region10: #{_heads_pallas.1} parent=1 // pred_check
      _
    $region11: #{_heads_pallas.1} parent=1 // pred_check_branch
      %47 = sbr.rel (0) target = $region13
    $region12: #{_heads_pallas.1} parent=1 // pred_region
      %s49 = ssub.s32 96, 96
      %50 = vsyncadd [#allocation6], %s49
      %s52 = sshll.u32 [#allocation7], 4
      %s53 = int_to_ptr.vmem [resolvable:$true] %s52
      %55 = dma.hbm_to_vmem [thread:$0]  %s2, 96, %s53, [#allocation6]
    $region13: #{_heads_pallas.1} parent=1 // pred_fallthru
      _
    // Predicated region
    $region14: #{_heads_pallas.1} parent=1 // pred_check
      _
    $region15: #{_heads_pallas.1} parent=1 // pred_check_branch
      %57 = sbr.rel (0) target = $region17
    $region16: #{_heads_pallas.1} parent=1 // pred_region
      %s59 = ssub.s32 73728, 73728
      %60 = vsyncadd [#allocation9], %s59
      %s61 = sshll.u32 [#allocation8], 4
      %s62 = int_to_ptr.vmem [resolvable:$true] %s61
      %67 = dma.hbm_to_vmem [thread:$0]  %s3, 73728, %s62, [#allocation9], 768, 768, 48
    $region17: #{_heads_pallas.1} parent=1 // pred_fallthru
      _
    // Predicated region
    $region18: #{_heads_pallas.1} parent=1 // pred_check
      _
    $region19: #{_heads_pallas.1} parent=1 // pred_check_branch
      %69 = sbr.rel (0) target = $region21
    $region20: #{_heads_pallas.1} parent=1 // pred_region
      %s71 = ssub.s32 192, 192
      %72 = vsyncadd [#allocation9], %s71
      %s74 = sshll.u32 [#allocation10], 4
      %s75 = int_to_ptr.vmem [resolvable:$true] %s74
      %77 = dma.hbm_to_vmem [thread:$0]  %s4, 192, %s75, [#allocation9]
    $region21: #{_heads_pallas.1} parent=1 // pred_fallthru
      _
    // Predicated region
    $region22: #{_heads_pallas.1} parent=1 // pred_check
      _
    $region23: #{_heads_pallas.1} parent=1 // pred_check_branch
      %79 = sbr.rel (0) target = $region25
    $region24: #{_heads_pallas.1} parent=1 // pred_region
      %s81 = ssub.s32 8192, 8192
      %82 = vsyncadd [#allocation12], %s81
      %s83 = sshll.u32 [#allocation11], 4
      %s84 = int_to_ptr.vmem [resolvable:$true] %s83
      %89 = dma.hbm_to_vmem [thread:$0]  %s5, 8192, %s84, [#allocation12], 64, 64, 4
    $region25: #{_heads_pallas.1} parent=1 // pred_fallthru
      _
    // Predicated region
    $region26: #{_heads_pallas.1} parent=1 // pred_check
      _
    $region27: #{_heads_pallas.1} parent=1 // pred_check_branch
      %91 = sbr.rel (0) target = $region29
    $region28: #{_heads_pallas.1} parent=1 // pred_region
      %s93 = ssub.s32 16, 16
      %94 = vsyncadd [#allocation12], %s93
      %s96 = sshll.u32 [#allocation13], 4
      %s97 = int_to_ptr.vmem [resolvable:$true] %s96
      %99 = dma.hbm_to_vmem [thread:$0]  %s6, 16, %s97, [#allocation12]
    $region29: #{_heads_pallas.1} parent=1 // pred_fallthru
      _
    // Predicated region
    $region30: #{_heads_pallas.1} parent=1 // pred_check
      _
    $region31: #{_heads_pallas.1} parent=1 // pred_check_branch
      %101 = sbr.rel (0) target = $region33
    $region32: #{_heads_pallas.1} parent=1 // pred_region
      %s103 = ssub.s32 4096, 4096
      %104 = vsyncadd [#allocation15], %s103
      %s105 = sshll.u32 [#allocation14], 4
      %s106 = int_to_ptr.vmem [resolvable:$true] %s105
      %111 = dma.hbm_to_vmem [thread:$0]  %s7, 4096, %s106, [#allocation15], 256, 256, 16
    $region33: #{_heads_pallas.1} parent=1 // pred_fallthru
      _
    // Predicated region
    $region34: #{_heads_pallas.1} parent=1 // pred_check
      _
    $region35: #{_heads_pallas.1} parent=1 // pred_check_branch
      %113 = sbr.rel (0) target = $region37
    $region36: #{_heads_pallas.1} parent=1 // pred_region
      %s115 = ssub.s32 4096, 4096
      %116 = vsyncadd [#allocation15], %s115
      %s117 = sshll.u32 [#allocation16], 4
      %s118 = int_to_ptr.vmem [resolvable:$true] %s117
      %123 = dma.hbm_to_vmem [thread:$0]  %s8, 4096, %s118, [#allocation15], 64, 64, 4
    $region37: #{_heads_pallas.1} parent=1 // pred_fallthru
      _
    // Predicated region
    $region38: #{_heads_pallas.1} parent=1 // pred_check
      _
    $region39: #{_heads_pallas.1} parent=1 // pred_check_branch
      %125 = sbr.rel (0) target = $region41
    $region40: #{_heads_pallas.1} parent=1 // pred_region
      %s127 = ssub.s32 16, 16
      %128 = vsyncadd [#allocation18], %s127
      %s130 = sshll.u32 [#allocation17], 4
      %s131 = int_to_ptr.vmem [resolvable:$true] %s130
      %133 = dma.hbm_to_vmem [thread:$0]  %s9, 16, %s131, [#allocation18]
    $region41: #{_heads_pallas.1} parent=1 // pred_fallthru
      _
    // Predicated region
    $region42: #{_heads_pallas.1} parent=1 // pred_check
      _
    $region43: #{_heads_pallas.1} parent=1 // pred_check_branch
      %135 = sbr.rel (0) target = $region45
    $region44: #{_heads_pallas.1} parent=1 // pred_region
      %136 = dma.done [#allocation3], 768
    $region45: #{_heads_pallas.1} parent=1 // pred_fallthru
      _
    // Predicated region
    $region46: #{_heads_pallas.1} parent=1 // pred_check
      _
    $region47: #{_heads_pallas.1} parent=1 // pred_check_branch
      %138 = sbr.rel (0) target = $region49
    $region48: #{_heads_pallas.1} parent=1 // pred_region
      %139 = dma.done [#allocation6], 36864
    $region49: #{_heads_pallas.1} parent=1 // pred_fallthru
      _
    // Predicated region
    $region50: #{_heads_pallas.1} parent=1 // pred_check
      _
    $region51: #{_heads_pallas.1} parent=1 // pred_check_branch
      %141 = sbr.rel (0) target = $region53
    $region52: #{_heads_pallas.1} parent=1 // pred_region
      %142 = dma.done [#allocation6], 96
    $region53: #{_heads_pallas.1} parent=1 // pred_fallthru
      _
    // Predicated region
    $region54: #{_heads_pallas.1} parent=1 // pred_check
      _
    $region55: #{_heads_pallas.1} parent=1 // pred_check_branch
      %144 = sbr.rel (0) target = $region57
    $region56: #{_heads_pallas.1} parent=1 // pred_region
      %145 = dma.done [#allocation9], 73728
    $region57: #{_heads_pallas.1} parent=1 // pred_fallthru
      _
    // Predicated region
    $region58: #{_heads_pallas.1} parent=1 // pred_check
      _
    $region59: #{_heads_pallas.1} parent=1 // pred_check_branch
      %147 = sbr.rel (0) target = $region61
    $region60: #{_heads_pallas.1} parent=1 // pred_region
      %148 = dma.done [#allocation9], 192
    $region61: #{_heads_pallas.1} parent=1 // pred_fallthru
      _
    // Predicated region
    $region62: #{_heads_pallas.1} parent=1 // pred_check
      _
    $region63: #{_heads_pallas.1} parent=1 // pred_check_branch
      %150 = sbr.rel (0) target = $region65
    $region64: #{_heads_pallas.1} parent=1 // pred_region
      %151 = dma.done [#allocation12], 8192
    $region65: #{_heads_pallas.1} parent=1 // pred_fallthru
      _
    // Predicated region
    $region66: #{_heads_pallas.1} parent=1 // pred_check
      _
    $region67: #{_heads_pallas.1} parent=1 // pred_check_branch
      %153 = sbr.rel (0) target = $region69
    $region68: #{_heads_pallas.1} parent=1 // pred_region
      %154 = dma.done [#allocation12], 16
    $region69: #{_heads_pallas.1} parent=1 // pred_fallthru
      _
    // Predicated region
    $region70: #{_heads_pallas.1} parent=1 // pred_check
      _
    $region71: #{_heads_pallas.1} parent=1 // pred_check_branch
      %156 = sbr.rel (0) target = $region73
    $region72: #{_heads_pallas.1} parent=1 // pred_region
      %157 = dma.done [#allocation15], 4096
    $region73: #{_heads_pallas.1} parent=1 // pred_fallthru
      _
    // Predicated region
    $region74: #{_heads_pallas.1} parent=1 // pred_check
      _
    $region75: #{_heads_pallas.1} parent=1 // pred_check_branch
      %159 = sbr.rel (0) target = $region77
    $region76: #{_heads_pallas.1} parent=1 // pred_region
      %160 = dma.done [#allocation15], 4096
    $region77: #{_heads_pallas.1} parent=1 // pred_fallthru
      _
    // Predicated region
    $region78: #{_heads_pallas.1} parent=1 // pred_check
      _
    $region79: #{_heads_pallas.1} parent=1 // pred_check_branch
      %162 = sbr.rel (0) target = $region81
    $region80: #{_heads_pallas.1} parent=1 // pred_region
      %163 = dma.done [#allocation18], 16
    $region81: #{_heads_pallas.1} parent=1 // pred_fallthru
      _
    %v165 = vld [vmem:[#allocation2] sm:$0xff]
    %v166 = vld [vmem:[#allocation2 + $0x8] sm:$0xff]
    %v167 = vld [vmem:[#allocation2 + $0x10] sm:$0xff]
    %v168 = vld [vmem:[#allocation2 + $0x18] sm:$0xff]
    %v169 = vld [vmem:[#allocation2 + $0x20] sm:$0xff]
    %v170 = vld [vmem:[#allocation2 + $0x28] sm:$0xff]
    %v171 = vld [vmem:[#allocation5] sm:$0xff]
    %v172 = vld [vmem:[#allocation5 + $0x8] sm:$0xff]
    %v173 = vld [vmem:[#allocation5 + $0x10] sm:$0xff]
    %v174 = vld [vmem:[#allocation5 + $0x18] sm:$0xff]
    %v175 = vld [vmem:[#allocation5 + $0x20] sm:$0xff]
    %v176 = vld [vmem:[#allocation5 + $0x28] sm:$0xff]
    %v177 = vld [vmem:[#allocation5 + $0x30] sm:$0xff]
    %v178 = vld [vmem:[#allocation5 + $0x38] sm:$0xff]
    %v179 = vld [vmem:[#allocation5 + $0x40] sm:$0xff]
    %v180 = vld [vmem:[#allocation5 + $0x48] sm:$0xff]
    %v181 = vld [vmem:[#allocation5 + $0x50] sm:$0xff]
    %v182 = vld [vmem:[#allocation5 + $0x58] sm:$0xff]
    %v183 = vld [vmem:[#allocation5 + $0x60] sm:$0xff]
    %v184 = vld [vmem:[#allocation5 + $0x68] sm:$0xff]
    %v185 = vld [vmem:[#allocation5 + $0x70] sm:$0xff]
    %v186 = vld [vmem:[#allocation5 + $0x78] sm:$0xff]
    %v187 = vld [vmem:[#allocation5 + $0x80] sm:$0xff]
    %v188 = vld [vmem:[#allocation5 + $0x88] sm:$0xff]
    %v189 = vld [vmem:[#allocation5 + $0x90] sm:$0xff]
    %v190 = vld [vmem:[#allocation5 + $0x98] sm:$0xff]
    %v191 = vld [vmem:[#allocation5 + $0xa0] sm:$0xff]
    %v192 = vld [vmem:[#allocation5 + $0xa8] sm:$0xff]
    %v193 = vld [vmem:[#allocation5 + $0xb0] sm:$0xff]
    %v194 = vld [vmem:[#allocation5 + $0xb8] sm:$0xff]
    %v195 = vld [vmem:[#allocation5 + $0xc0] sm:$0xff]
    %v196 = vld [vmem:[#allocation5 + $0xc8] sm:$0xff]
    %v197 = vld [vmem:[#allocation5 + $0xd0] sm:$0xff]
    %v198 = vld [vmem:[#allocation5 + $0xd8] sm:$0xff]
    %v199 = vld [vmem:[#allocation5 + $0xe0] sm:$0xff]
    %v200 = vld [vmem:[#allocation5 + $0xe8] sm:$0xff]
    %v201 = vld [vmem:[#allocation5 + $0xf0] sm:$0xff]
    %v202 = vld [vmem:[#allocation5 + $0xf8] sm:$0xff]
    %v203 = vld [vmem:[#allocation5 + $0x100] sm:$0xff]
    %v204 = vld [vmem:[#allocation5 + $0x108] sm:$0xff]
    %v205 = vld [vmem:[#allocation5 + $0x110] sm:$0xff]
    %v206 = vld [vmem:[#allocation5 + $0x118] sm:$0xff]
    %v207 = vld [vmem:[#allocation5 + $0x120] sm:$0xff]
    %v208 = vld [vmem:[#allocation5 + $0x128] sm:$0xff]
    %v209 = vld [vmem:[#allocation5 + $0x130] sm:$0xff]
    %v210 = vld [vmem:[#allocation5 + $0x138] sm:$0xff]
    %v211 = vld [vmem:[#allocation5 + $0x140] sm:$0xff]
    %v212 = vld [vmem:[#allocation5 + $0x148] sm:$0xff]
    %v213 = vld [vmem:[#allocation5 + $0x150] sm:$0xff]
    %v214 = vld [vmem:[#allocation5 + $0x158] sm:$0xff]
    %v215 = vld [vmem:[#allocation5 + $0x160] sm:$0xff]
    %v216 = vld [vmem:[#allocation5 + $0x168] sm:$0xff]
    %v217 = vld [vmem:[#allocation5 + $0x170] sm:$0xff]
    %v218 = vld [vmem:[#allocation5 + $0x178] sm:$0xff]
    %v219 = vld [vmem:[#allocation5 + $0x180] sm:$0xff]
    %v220 = vld [vmem:[#allocation5 + $0x188] sm:$0xff]
    %v221 = vld [vmem:[#allocation5 + $0x190] sm:$0xff]
    %v222 = vld [vmem:[#allocation5 + $0x198] sm:$0xff]
    %v223 = vld [vmem:[#allocation5 + $0x1a0] sm:$0xff]
    %v224 = vld [vmem:[#allocation5 + $0x1a8] sm:$0xff]
    %v225 = vld [vmem:[#allocation5 + $0x1b0] sm:$0xff]
    %v226 = vld [vmem:[#allocation5 + $0x1b8] sm:$0xff]
    %v227 = vld [vmem:[#allocation5 + $0x1c0] sm:$0xff]
    %v228 = vld [vmem:[#allocation5 + $0x1c8] sm:$0xff]
    %v229 = vld [vmem:[#allocation5 + $0x1d0] sm:$0xff]
    %v230 = vld [vmem:[#allocation5 + $0x1d8] sm:$0xff]
    %v231 = vld [vmem:[#allocation5 + $0x1e0] sm:$0xff]
    %v232 = vld [vmem:[#allocation5 + $0x1e8] sm:$0xff]
    %v233 = vld [vmem:[#allocation5 + $0x1f0] sm:$0xff]
    %v234 = vld [vmem:[#allocation5 + $0x1f8] sm:$0xff]
    %v235 = vld [vmem:[#allocation5 + $0x200] sm:$0xff]
    %v236 = vld [vmem:[#allocation5 + $0x208] sm:$0xff]
    %v237 = vld [vmem:[#allocation5 + $0x210] sm:$0xff]
    %v238 = vld [vmem:[#allocation5 + $0x218] sm:$0xff]
    %v239 = vld [vmem:[#allocation5 + $0x220] sm:$0xff]
    %v240 = vld [vmem:[#allocation5 + $0x228] sm:$0xff]
    %v241 = vld [vmem:[#allocation5 + $0x230] sm:$0xff]
    %v242 = vld [vmem:[#allocation5 + $0x238] sm:$0xff]
    %v243 = vld [vmem:[#allocation5 + $0x240] sm:$0xff]
    %v244 = vld [vmem:[#allocation5 + $0x248] sm:$0xff]
    %v245 = vld [vmem:[#allocation5 + $0x250] sm:$0xff]
    %v246 = vld [vmem:[#allocation5 + $0x258] sm:$0xff]
    %v247 = vld [vmem:[#allocation5 + $0x260] sm:$0xff]
    %v248 = vld [vmem:[#allocation5 + $0x268] sm:$0xff]
    %v249 = vld [vmem:[#allocation5 + $0x270] sm:$0xff]
    %v250 = vld [vmem:[#allocation5 + $0x278] sm:$0xff]
    %v251 = vld [vmem:[#allocation5 + $0x280] sm:$0xff]
    %v252 = vld [vmem:[#allocation5 + $0x288] sm:$0xff]
    %v253 = vld [vmem:[#allocation5 + $0x290] sm:$0xff]
    %v254 = vld [vmem:[#allocation5 + $0x298] sm:$0xff]
    %v255 = vld [vmem:[#allocation5 + $0x2a0] sm:$0xff]
    %v256 = vld [vmem:[#allocation5 + $0x2a8] sm:$0xff]
    %v257 = vld [vmem:[#allocation5 + $0x2b0] sm:$0xff]
    %v258 = vld [vmem:[#allocation5 + $0x2b8] sm:$0xff]
    %v259 = vld [vmem:[#allocation5 + $0x2c0] sm:$0xff]
    %v260 = vld [vmem:[#allocation5 + $0x2c8] sm:$0xff]
    %v261 = vld [vmem:[#allocation5 + $0x2d0] sm:$0xff]
    %v262 = vld [vmem:[#allocation5 + $0x2d8] sm:$0xff]
    %v263 = vld [vmem:[#allocation5 + $0x2e0] sm:$0xff]
    %v264 = vld [vmem:[#allocation5 + $0x2e8] sm:$0xff]
    %v265 = vld [vmem:[#allocation5 + $0x2f0] sm:$0xff]
    %v266 = vld [vmem:[#allocation5 + $0x2f8] sm:$0xff]
    %v267 = vld [vmem:[#allocation5 + $0x300] sm:$0xff]
    %v268 = vld [vmem:[#allocation5 + $0x308] sm:$0xff]
    %v269 = vld [vmem:[#allocation5 + $0x310] sm:$0xff]
    %v270 = vld [vmem:[#allocation5 + $0x318] sm:$0xff]
    %v271 = vld [vmem:[#allocation5 + $0x320] sm:$0xff]
    %v272 = vld [vmem:[#allocation5 + $0x328] sm:$0xff]
    %v273 = vld [vmem:[#allocation5 + $0x330] sm:$0xff]
    %v274 = vld [vmem:[#allocation5 + $0x338] sm:$0xff]
    %v275 = vld [vmem:[#allocation5 + $0x340] sm:$0xff]
    %v276 = vld [vmem:[#allocation5 + $0x348] sm:$0xff]
    %v277 = vld [vmem:[#allocation5 + $0x350] sm:$0xff]
    %v278 = vld [vmem:[#allocation5 + $0x358] sm:$0xff]
    %v279 = vld [vmem:[#allocation5 + $0x360] sm:$0xff]
    %v280 = vld [vmem:[#allocation5 + $0x368] sm:$0xff]
    %v281 = vld [vmem:[#allocation5 + $0x370] sm:$0xff]
    %v282 = vld [vmem:[#allocation5 + $0x378] sm:$0xff]
    %v283 = vld [vmem:[#allocation5 + $0x380] sm:$0xff]
    %v284 = vld [vmem:[#allocation5 + $0x388] sm:$0xff]
    %v285 = vld [vmem:[#allocation5 + $0x390] sm:$0xff]
    %v286 = vld [vmem:[#allocation5 + $0x398] sm:$0xff]
    %v287 = vld [vmem:[#allocation5 + $0x3a0] sm:$0xff]
    %v288 = vld [vmem:[#allocation5 + $0x3a8] sm:$0xff]
    %v289 = vld [vmem:[#allocation5 + $0x3b0] sm:$0xff]
    %v290 = vld [vmem:[#allocation5 + $0x3b8] sm:$0xff]
    %v291 = vld [vmem:[#allocation5 + $0x3c0] sm:$0xff]
    %v292 = vld [vmem:[#allocation5 + $0x3c8] sm:$0xff]
    %v293 = vld [vmem:[#allocation5 + $0x3d0] sm:$0xff]
    %v294 = vld [vmem:[#allocation5 + $0x3d8] sm:$0xff]
    %v295 = vld [vmem:[#allocation5 + $0x3e0] sm:$0xff]
    %v296 = vld [vmem:[#allocation5 + $0x3e8] sm:$0xff]
    %v297 = vld [vmem:[#allocation5 + $0x3f0] sm:$0xff]
    %v298 = vld [vmem:[#allocation5 + $0x3f8] sm:$0xff]
    %v299 = vld [vmem:[#allocation5 + $0x400] sm:$0xff]
    %v300 = vld [vmem:[#allocation5 + $0x408] sm:$0xff]
    %v301 = vld [vmem:[#allocation5 + $0x410] sm:$0xff]
    %v302 = vld [vmem:[#allocation5 + $0x418] sm:$0xff]
    %v303 = vld [vmem:[#allocation5 + $0x420] sm:$0xff]
    %v304 = vld [vmem:[#allocation5 + $0x428] sm:$0xff]
    %v305 = vld [vmem:[#allocation5 + $0x430] sm:$0xff]
    %v306 = vld [vmem:[#allocation5 + $0x438] sm:$0xff]
    %v307 = vld [vmem:[#allocation5 + $0x440] sm:$0xff]
    %v308 = vld [vmem:[#allocation5 + $0x448] sm:$0xff]
    %v309 = vld [vmem:[#allocation5 + $0x450] sm:$0xff]
    %v310 = vld [vmem:[#allocation5 + $0x458] sm:$0xff]
    %v311 = vld [vmem:[#allocation5 + $0x460] sm:$0xff]
    %v312 = vld [vmem:[#allocation5 + $0x468] sm:$0xff]
    %v313 = vld [vmem:[#allocation5 + $0x470] sm:$0xff]
    %v314 = vld [vmem:[#allocation5 + $0x478] sm:$0xff]
    %v315 = vld [vmem:[#allocation5 + $0x480] sm:$0xff]
    %v316 = vld [vmem:[#allocation5 + $0x488] sm:$0xff]
    %v317 = vld [vmem:[#allocation5 + $0x490] sm:$0xff]
    %v318 = vld [vmem:[#allocation5 + $0x498] sm:$0xff]
    %v319 = vld [vmem:[#allocation5 + $0x4a0] sm:$0xff]
    %v320 = vld [vmem:[#allocation5 + $0x4a8] sm:$0xff]
    %v321 = vld [vmem:[#allocation5 + $0x4b0] sm:$0xff]
    %v322 = vld [vmem:[#allocation5 + $0x4b8] sm:$0xff]
    %v323 = vld [vmem:[#allocation5 + $0x4c0] sm:$0xff]
    %v324 = vld [vmem:[#allocation5 + $0x4c8] sm:$0xff]
    %v325 = vld [vmem:[#allocation5 + $0x4d0] sm:$0xff]
    %v326 = vld [vmem:[#allocation5 + $0x4d8] sm:$0xff]
    %v327 = vld [vmem:[#allocation5 + $0x4e0] sm:$0xff]
    %v328 = vld [vmem:[#allocation5 + $0x4e8] sm:$0xff]
    %v329 = vld [vmem:[#allocation5 + $0x4f0] sm:$0xff]
    %v330 = vld [vmem:[#allocation5 + $0x4f8] sm:$0xff]
    %v331 = vld [vmem:[#allocation5 + $0x500] sm:$0xff]
    %v332 = vld [vmem:[#allocation5 + $0x508] sm:$0xff]
    %v333 = vld [vmem:[#allocation5 + $0x510] sm:$0xff]
    %v334 = vld [vmem:[#allocation5 + $0x518] sm:$0xff]
    %v335 = vld [vmem:[#allocation5 + $0x520] sm:$0xff]
    %v336 = vld [vmem:[#allocation5 + $0x528] sm:$0xff]
    %v337 = vld [vmem:[#allocation5 + $0x530] sm:$0xff]
    %v338 = vld [vmem:[#allocation5 + $0x538] sm:$0xff]
    %v339 = vld [vmem:[#allocation5 + $0x540] sm:$0xff]
    %v340 = vld [vmem:[#allocation5 + $0x548] sm:$0xff]
    %v341 = vld [vmem:[#allocation5 + $0x550] sm:$0xff]
    %v342 = vld [vmem:[#allocation5 + $0x558] sm:$0xff]
    %v343 = vld [vmem:[#allocation5 + $0x560] sm:$0xff]
    %v344 = vld [vmem:[#allocation5 + $0x568] sm:$0xff]
    %v345 = vld [vmem:[#allocation5 + $0x570] sm:$0xff]
    %v346 = vld [vmem:[#allocation5 + $0x578] sm:$0xff]
    %v347 = vld [vmem:[#allocation5 + $0x580] sm:$0xff]
    %v348 = vld [vmem:[#allocation5 + $0x588] sm:$0xff]
    %v349 = vld [vmem:[#allocation5 + $0x590] sm:$0xff]
    %v350 = vld [vmem:[#allocation5 + $0x598] sm:$0xff]
    %v351 = vld [vmem:[#allocation5 + $0x5a0] sm:$0xff]
    %v352 = vld [vmem:[#allocation5 + $0x5a8] sm:$0xff]
    %v353 = vld [vmem:[#allocation5 + $0x5b0] sm:$0xff]
    %v354 = vld [vmem:[#allocation5 + $0x5b8] sm:$0xff]
    %v355 = vld [vmem:[#allocation5 + $0x5c0] sm:$0xff]
    %v356 = vld [vmem:[#allocation5 + $0x5c8] sm:$0xff]
    %v357 = vld [vmem:[#allocation5 + $0x5d0] sm:$0xff]
    %v358 = vld [vmem:[#allocation5 + $0x5d8] sm:$0xff]
    %v359 = vld [vmem:[#allocation5 + $0x5e0] sm:$0xff]
    %v360 = vld [vmem:[#allocation5 + $0x5e8] sm:$0xff]
    %v361 = vld [vmem:[#allocation5 + $0x5f0] sm:$0xff]
    %v362 = vld [vmem:[#allocation5 + $0x5f8] sm:$0xff]
    %v363 = vld [vmem:[#allocation5 + $0x600] sm:$0xff]
    %v364 = vld [vmem:[#allocation5 + $0x608] sm:$0xff]
    %v365 = vld [vmem:[#allocation5 + $0x610] sm:$0xff]
    %v366 = vld [vmem:[#allocation5 + $0x618] sm:$0xff]
    %v367 = vld [vmem:[#allocation5 + $0x620] sm:$0xff]
    %v368 = vld [vmem:[#allocation5 + $0x628] sm:$0xff]
    %v369 = vld [vmem:[#allocation5 + $0x630] sm:$0xff]
    %v370 = vld [vmem:[#allocation5 + $0x638] sm:$0xff]
    %v371 = vld [vmem:[#allocation5 + $0x640] sm:$0xff]
    %v372 = vld [vmem:[#allocation5 + $0x648] sm:$0xff]
    %v373 = vld [vmem:[#allocation5 + $0x650] sm:$0xff]
    %v374 = vld [vmem:[#allocation5 + $0x658] sm:$0xff]
    %v375 = vld [vmem:[#allocation5 + $0x660] sm:$0xff]
    %v376 = vld [vmem:[#allocation5 + $0x668] sm:$0xff]
    %v377 = vld [vmem:[#allocation5 + $0x670] sm:$0xff]
    %v378 = vld [vmem:[#allocation5 + $0x678] sm:$0xff]
    %v379 = vld [vmem:[#allocation5 + $0x680] sm:$0xff]
    %v380 = vld [vmem:[#allocation5 + $0x688] sm:$0xff]
    %v381 = vld [vmem:[#allocation5 + $0x690] sm:$0xff]
    %v382 = vld [vmem:[#allocation5 + $0x698] sm:$0xff]
    %v383 = vld [vmem:[#allocation5 + $0x6a0] sm:$0xff]
    %v384 = vld [vmem:[#allocation5 + $0x6a8] sm:$0xff]
    %v385 = vld [vmem:[#allocation5 + $0x6b0] sm:$0xff]
    %v386 = vld [vmem:[#allocation5 + $0x6b8] sm:$0xff]
    %v387 = vld [vmem:[#allocation5 + $0x6c0] sm:$0xff]
    %v388 = vld [vmem:[#allocation5 + $0x6c8] sm:$0xff]
    %v389 = vld [vmem:[#allocation5 + $0x6d0] sm:$0xff]
    %v390 = vld [vmem:[#allocation5 + $0x6d8] sm:$0xff]
    %v391 = vld [vmem:[#allocation5 + $0x6e0] sm:$0xff]
    %v392 = vld [vmem:[#allocation5 + $0x6e8] sm:$0xff]
    %v393 = vld [vmem:[#allocation5 + $0x6f0] sm:$0xff]
    %v394 = vld [vmem:[#allocation5 + $0x6f8] sm:$0xff]
    %v395 = vld [vmem:[#allocation5 + $0x700] sm:$0xff]
    %v396 = vld [vmem:[#allocation5 + $0x708] sm:$0xff]
    %v397 = vld [vmem:[#allocation5 + $0x710] sm:$0xff]
    %v398 = vld [vmem:[#allocation5 + $0x718] sm:$0xff]
    %v399 = vld [vmem:[#allocation5 + $0x720] sm:$0xff]
    %v400 = vld [vmem:[#allocation5 + $0x728] sm:$0xff]
    %v401 = vld [vmem:[#allocation5 + $0x730] sm:$0xff]
    %v402 = vld [vmem:[#allocation5 + $0x738] sm:$0xff]
    %v403 = vld [vmem:[#allocation5 + $0x740] sm:$0xff]
    %v404 = vld [vmem:[#allocation5 + $0x748] sm:$0xff]
    %v405 = vld [vmem:[#allocation5 + $0x750] sm:$0xff]
    %v406 = vld [vmem:[#allocation5 + $0x758] sm:$0xff]
    %v407 = vld [vmem:[#allocation5 + $0x760] sm:$0xff]
    %v408 = vld [vmem:[#allocation5 + $0x768] sm:$0xff]
    %v409 = vld [vmem:[#allocation5 + $0x770] sm:$0xff]
    %v410 = vld [vmem:[#allocation5 + $0x778] sm:$0xff]
    %v411 = vld [vmem:[#allocation5 + $0x780] sm:$0xff]
    %v412 = vld [vmem:[#allocation5 + $0x788] sm:$0xff]
    %v413 = vld [vmem:[#allocation5 + $0x790] sm:$0xff]
    %v414 = vld [vmem:[#allocation5 + $0x798] sm:$0xff]
    %v415 = vld [vmem:[#allocation5 + $0x7a0] sm:$0xff]
    %v416 = vld [vmem:[#allocation5 + $0x7a8] sm:$0xff]
    %v417 = vld [vmem:[#allocation5 + $0x7b0] sm:$0xff]
    %v418 = vld [vmem:[#allocation5 + $0x7b8] sm:$0xff]
    %v419 = vld [vmem:[#allocation5 + $0x7c0] sm:$0xff]
    %v420 = vld [vmem:[#allocation5 + $0x7c8] sm:$0xff]
    %v421 = vld [vmem:[#allocation5 + $0x7d0] sm:$0xff]
    %v422 = vld [vmem:[#allocation5 + $0x7d8] sm:$0xff]
    %v423 = vld [vmem:[#allocation5 + $0x7e0] sm:$0xff]
    %v424 = vld [vmem:[#allocation5 + $0x7e8] sm:$0xff]
    %v425 = vld [vmem:[#allocation5 + $0x7f0] sm:$0xff]
    %v426 = vld [vmem:[#allocation5 + $0x7f8] sm:$0xff]
    %v427 = vld [vmem:[#allocation5 + $0x800] sm:$0xff]
    %v428 = vld [vmem:[#allocation5 + $0x808] sm:$0xff]
    %v429 = vld [vmem:[#allocation5 + $0x810] sm:$0xff]
    %v430 = vld [vmem:[#allocation5 + $0x818] sm:$0xff]
    %v431 = vld [vmem:[#allocation5 + $0x820] sm:$0xff]
    %v432 = vld [vmem:[#allocation5 + $0x828] sm:$0xff]
    %v433 = vld [vmem:[#allocation5 + $0x830] sm:$0xff]
    %v434 = vld [vmem:[#allocation5 + $0x838] sm:$0xff]
    %v435 = vld [vmem:[#allocation5 + $0x840] sm:$0xff]
    %v436 = vld [vmem:[#allocation5 + $0x848] sm:$0xff]
    %v437 = vld [vmem:[#allocation5 + $0x850] sm:$0xff]
    %v438 = vld [vmem:[#allocation5 + $0x858] sm:$0xff]
    %v439 = vld [vmem:[#allocation5 + $0x860] sm:$0xff]
    %v440 = vld [vmem:[#allocation5 + $0x868] sm:$0xff]
    %v441 = vld [vmem:[#allocation5 + $0x870] sm:$0xff]
    %v442 = vld [vmem:[#allocation5 + $0x878] sm:$0xff]
    %v443 = vld [vmem:[#allocation5 + $0x880] sm:$0xff]
    %v444 = vld [vmem:[#allocation5 + $0x888] sm:$0xff]
    %v445 = vld [vmem:[#allocation5 + $0x890] sm:$0xff]
    %v446 = vld [vmem:[#allocation5 + $0x898] sm:$0xff]
    %v447 = vld [vmem:[#allocation5 + $0x8a0] sm:$0xff]
    %v448 = vld [vmem:[#allocation5 + $0x8a8] sm:$0xff]
    %v449 = vld [vmem:[#allocation5 + $0x8b0] sm:$0xff]
    %v450 = vld [vmem:[#allocation5 + $0x8b8] sm:$0xff]
    %v451 = vld [vmem:[#allocation5 + $0x8c0] sm:$0xff]
    %v452 = vld [vmem:[#allocation5 + $0x8c8] sm:$0xff]
    %v453 = vld [vmem:[#allocation5 + $0x8d0] sm:$0xff]
    %v454 = vld [vmem:[#allocation5 + $0x8d8] sm:$0xff]
    %v455 = vld [vmem:[#allocation5 + $0x8e0] sm:$0xff]
    %v456 = vld [vmem:[#allocation5 + $0x8e8] sm:$0xff]
    %v457 = vld [vmem:[#allocation5 + $0x8f0] sm:$0xff]
    %v458 = vld [vmem:[#allocation5 + $0x8f8] sm:$0xff]
    %v459 = vld [vmem:[#allocation7] sm:$0x3f]
    %v461 = vlaneseq
    %v462 = vshrl.u32 %v461, 7
    %v463 = vsub.s32 0, %v462
    %v464 = vrot.slane %v459, %v463
    %v465 = vlaneseq
    %v466 = vshrl.u32 %v465, 7
    %v467 = vsub.s32 1, %v466
    %v468 = vrot.slane %v459, %v467
    %v469 = vlaneseq
    %v470 = vshrl.u32 %v469, 7
    %v471 = vsub.s32 2, %v470
    %v472 = vrot.slane %v459, %v471
    %v473 = vlaneseq
    %v474 = vshrl.u32 %v473, 7
    %v475 = vsub.s32 3, %v474
    %v476 = vrot.slane %v459, %v475
    %v477 = vlaneseq
    %v478 = vshrl.u32 %v477, 7
    %v479 = vsub.s32 4, %v478
    %v480 = vrot.slane %v459, %v479
    %v481 = vlaneseq
    %v482 = vshrl.u32 %v481, 7
    %v483 = vsub.s32 5, %v482
    %v484 = vrot.slane %v459, %v483
    %v497 = vunpack.c.l.b16 %v165
    %v498 = vunpack.c.h.b16 %v165
    %v499 = vunpack.c.l.b16 %v166
    %v500 = vunpack.c.h.b16 %v166
    %v501 = vunpack.c.l.b16 %v167
    %v502 = vunpack.c.h.b16 %v167
    %v503 = vunpack.c.l.b16 %v168
    %v504 = vunpack.c.h.b16 %v168
    %v505 = vunpack.c.l.b16 %v169
    %v506 = vunpack.c.h.b16 %v169
    %v507 = vunpack.c.l.b16 %v170
    %v508 = vunpack.c.h.b16 %v170
    %v509 = vpack.c.b16 %v503, %v497
    %v510 = vpack.c.b16 %v504, %v498
    %v511 = vpack.c.b16 %v505, %v499
    %v512 = vpack.c.b16 %v506, %v500
    %v513 = vpack.c.b16 %v507, %v501
    %v514 = vpack.c.b16 %v508, %v502
    %v809 = vunpack.c.l.b16 %v171
    %v810 = vunpack.c.h.b16 %v171
    %v811 = vunpack.c.l.b16 %v172
    %v812 = vunpack.c.h.b16 %v172
    %v813 = vunpack.c.l.b16 %v173
    %v814 = vunpack.c.h.b16 %v173
    %v815 = vunpack.c.l.b16 %v174
    %v816 = vunpack.c.h.b16 %v174
    %v817 = vunpack.c.l.b16 %v175
    %v818 = vunpack.c.h.b16 %v175
    %v819 = vunpack.c.l.b16 %v176
    %v820 = vunpack.c.h.b16 %v176
    %v821 = vunpack.c.l.b16 %v177
    %v822 = vunpack.c.h.b16 %v177
    %v823 = vunpack.c.l.b16 %v178
    %v824 = vunpack.c.h.b16 %v178
    %v825 = vunpack.c.l.b16 %v179
    %v826 = vunpack.c.h.b16 %v179
    %v827 = vunpack.c.l.b16 %v180
    %v828 = vunpack.c.h.b16 %v180
    %v829 = vunpack.c.l.b16 %v181
    %v830 = vunpack.c.h.b16 %v181
    %v831 = vunpack.c.l.b16 %v182
    %v832 = vunpack.c.h.b16 %v182
    %v833 = vunpack.c.l.b16 %v183
    %v834 = vunpack.c.h.b16 %v183
    %v835 = vunpack.c.l.b16 %v184
    %v836 = vunpack.c.h.b16 %v184
    %v837 = vunpack.c.l.b16 %v185
    %v838 = vunpack.c.h.b16 %v185
    %v839 = vunpack.c.l.b16 %v186
    %v840 = vunpack.c.h.b16 %v186
    %v841 = vunpack.c.l.b16 %v187
    %v842 = vunpack.c.h.b16 %v187
    %v843 = vunpack.c.l.b16 %v188
    %v844 = vunpack.c.h.b16 %v188
    %v845 = vunpack.c.l.b16 %v189
    %v846 = vunpack.c.h.b16 %v189
    %v847 = vunpack.c.l.b16 %v190
    %v848 = vunpack.c.h.b16 %v190
    %v849 = vunpack.c.l.b16 %v191
    %v850 = vunpack.c.h.b16 %v191
    %v851 = vunpack.c.l.b16 %v192
    %v852 = vunpack.c.h.b16 %v192
    %v853 = vunpack.c.l.b16 %v193
    %v854 = vunpack.c.h.b16 %v193
    %v855 = vunpack.c.l.b16 %v194
    %v856 = vunpack.c.h.b16 %v194
    %v857 = vunpack.c.l.b16 %v195
    %v858 = vunpack.c.h.b16 %v195
    %v859 = vunpack.c.l.b16 %v196
    %v860 = vunpack.c.h.b16 %v196
    %v861 = vunpack.c.l.b16 %v197
    %v862 = vunpack.c.h.b16 %v197
    %v863 = vunpack.c.l.b16 %v198
    %v864 = vunpack.c.h.b16 %v198
    %v865 = vunpack.c.l.b16 %v199
    %v866 = vunpack.c.h.b16 %v199
    %v867 = vunpack.c.l.b16 %v200
    %v868 = vunpack.c.h.b16 %v200
    %v869 = vunpack.c.l.b16 %v201
    %v870 = vunpack.c.h.b16 %v201
    %v871 = vunpack.c.l.b16 %v202
    %v872 = vunpack.c.h.b16 %v202
    %v873 = vunpack.c.l.b16 %v203
    %v874 = vunpack.c.h.b16 %v203
    %v875 = vunpack.c.l.b16 %v204
    %v876 = vunpack.c.h.b16 %v204
    %v877 = vunpack.c.l.b16 %v205
    %v878 = vunpack.c.h.b16 %v205
    %v879 = vunpack.c.l.b16 %v206
    %v880 = vunpack.c.h.b16 %v206
    %v881 = vunpack.c.l.b16 %v207
    %v882 = vunpack.c.h.b16 %v207
    %v883 = vunpack.c.l.b16 %v208
    %v884 = vunpack.c.h.b16 %v208
    %v885 = vunpack.c.l.b16 %v209
    %v886 = vunpack.c.h.b16 %v209
    %v887 = vunpack.c.l.b16 %v210
    %v888 = vunpack.c.h.b16 %v210
    %v889 = vunpack.c.l.b16 %v211
    %v890 = vunpack.c.h.b16 %v211
    %v891 = vunpack.c.l.b16 %v212
    %v892 = vunpack.c.h.b16 %v212
    %v893 = vunpack.c.l.b16 %v213
    %v894 = vunpack.c.h.b16 %v213
    %v895 = vunpack.c.l.b16 %v214
    %v896 = vunpack.c.h.b16 %v214
    %v897 = vunpack.c.l.b16 %v215
    %v898 = vunpack.c.h.b16 %v215
    %v899 = vunpack.c.l.b16 %v216
    %v900 = vunpack.c.h.b16 %v216
    %v901 = vunpack.c.l.b16 %v217
    %v902 = vunpack.c.h.b16 %v217
    %v903 = vunpack.c.l.b16 %v218
    %v904 = vunpack.c.h.b16 %v218
    %v905 = vunpack.c.l.b16 %v219
    %v906 = vunpack.c.h.b16 %v219
    %v907 = vunpack.c.l.b16 %v220
    %v908 = vunpack.c.h.b16 %v220
    %v909 = vunpack.c.l.b16 %v221
    %v910 = vunpack.c.h.b16 %v221
    %v911 = vunpack.c.l.b16 %v222
    %v912 = vunpack.c.h.b16 %v222
    %v913 = vunpack.c.l.b16 %v223
    %v914 = vunpack.c.h.b16 %v223
    %v915 = vunpack.c.l.b16 %v224
    %v916 = vunpack.c.h.b16 %v224
    %v917 = vunpack.c.l.b16 %v225
    %v918 = vunpack.c.h.b16 %v225
    %v919 = vunpack.c.l.b16 %v226
    %v920 = vunpack.c.h.b16 %v226
    %v921 = vunpack.c.l.b16 %v227
    %v922 = vunpack.c.h.b16 %v227
    %v923 = vunpack.c.l.b16 %v228
    %v924 = vunpack.c.h.b16 %v228
    %v925 = vunpack.c.l.b16 %v229
    %v926 = vunpack.c.h.b16 %v229
    %v927 = vunpack.c.l.b16 %v230
    %v928 = vunpack.c.h.b16 %v230
    %v929 = vunpack.c.l.b16 %v231
    %v930 = vunpack.c.h.b16 %v231
    %v931 = vunpack.c.l.b16 %v232
    %v932 = vunpack.c.h.b16 %v232
    %v933 = vunpack.c.l.b16 %v233
    %v934 = vunpack.c.h.b16 %v233
    %v935 = vunpack.c.l.b16 %v234
    %v936 = vunpack.c.h.b16 %v234
    %v937 = vunpack.c.l.b16 %v235
    %v938 = vunpack.c.h.b16 %v235
    %v939 = vunpack.c.l.b16 %v236
    %v940 = vunpack.c.h.b16 %v236
    %v941 = vunpack.c.l.b16 %v237
    %v942 = vunpack.c.h.b16 %v237
    %v943 = vunpack.c.l.b16 %v238
    %v944 = vunpack.c.h.b16 %v238
    %v945 = vunpack.c.l.b16 %v239
    %v946 = vunpack.c.h.b16 %v239
    %v947 = vunpack.c.l.b16 %v240
    %v948 = vunpack.c.h.b16 %v240
    %v949 = vunpack.c.l.b16 %v241
    %v950 = vunpack.c.h.b16 %v241
    %v951 = vunpack.c.l.b16 %v242
    %v952 = vunpack.c.h.b16 %v242
    %v953 = vunpack.c.l.b16 %v243
    %v954 = vunpack.c.h.b16 %v243
    %v955 = vunpack.c.l.b16 %v244
    %v956 = vunpack.c.h.b16 %v244
    %v957 = vunpack.c.l.b16 %v245
    %v958 = vunpack.c.h.b16 %v245
    %v959 = vunpack.c.l.b16 %v246
    %v960 = vunpack.c.h.b16 %v246
    %v961 = vunpack.c.l.b16 %v247
    %v962 = vunpack.c.h.b16 %v247
    %v963 = vunpack.c.l.b16 %v248
    %v964 = vunpack.c.h.b16 %v248
    %v965 = vunpack.c.l.b16 %v249
    %v966 = vunpack.c.h.b16 %v249
    %v967 = vunpack.c.l.b16 %v250
    %v968 = vunpack.c.h.b16 %v250
    %v969 = vunpack.c.l.b16 %v251
    %v970 = vunpack.c.h.b16 %v251
    %v971 = vunpack.c.l.b16 %v252
    %v972 = vunpack.c.h.b16 %v252
    %v973 = vunpack.c.l.b16 %v253
    %v974 = vunpack.c.h.b16 %v253
    %v975 = vunpack.c.l.b16 %v254
    %v976 = vunpack.c.h.b16 %v254
    %v977 = vunpack.c.l.b16 %v255
    %v978 = vunpack.c.h.b16 %v255
    %v979 = vunpack.c.l.b16 %v256
    %v980 = vunpack.c.h.b16 %v256
    %v981 = vunpack.c.l.b16 %v257
    %v982 = vunpack.c.h.b16 %v257
    %v983 = vunpack.c.l.b16 %v258
    %v984 = vunpack.c.h.b16 %v258
    %v985 = vunpack.c.l.b16 %v259
    %v986 = vunpack.c.h.b16 %v259
    %v987 = vunpack.c.l.b16 %v260
    %v988 = vunpack.c.h.b16 %v260
    %v989 = vunpack.c.l.b16 %v261
    %v990 = vunpack.c.h.b16 %v261
    %v991 = vunpack.c.l.b16 %v262
    %v992 = vunpack.c.h.b16 %v262
    %v993 = vunpack.c.l.b16 %v263
    %v994 = vunpack.c.h.b16 %v263
    %v995 = vunpack.c.l.b16 %v264
    %v996 = vunpack.c.h.b16 %v264
    %v997 = vunpack.c.l.b16 %v265
    %v998 = vunpack.c.h.b16 %v265
    %v999 = vunpack.c.l.b16 %v266
    %v1000 = vunpack.c.h.b16 %v266
    %v1001 = vunpack.c.l.b16 %v267
    %v1002 = vunpack.c.h.b16 %v267
    %v1003 = vunpack.c.l.b16 %v268
    %v1004 = vunpack.c.h.b16 %v268
    %v1005 = vunpack.c.l.b16 %v269
    %v1006 = vunpack.c.h.b16 %v269
    %v1007 = vunpack.c.l.b16 %v270
    %v1008 = vunpack.c.h.b16 %v270
    %v1009 = vunpack.c.l.b16 %v271
    %v1010 = vunpack.c.h.b16 %v271
    %v1011 = vunpack.c.l.b16 %v272
    %v1012 = vunpack.c.h.b16 %v272
    %v1013 = vunpack.c.l.b16 %v273
    %v1014 = vunpack.c.h.b16 %v273
    %v1015 = vunpack.c.l.b16 %v274
    %v1016 = vunpack.c.h.b16 %v274
    %v1017 = vunpack.c.l.b16 %v275
    %v1018 = vunpack.c.h.b16 %v275
    %v1019 = vunpack.c.l.b16 %v276
    %v1020 = vunpack.c.h.b16 %v276
    %v1021 = vunpack.c.l.b16 %v277
    %v1022 = vunpack.c.h.b16 %v277
    %v1023 = vunpack.c.l.b16 %v278
    %v1024 = vunpack.c.h.b16 %v278
    %v1025 = vunpack.c.l.b16 %v279
    %v1026 = vunpack.c.h.b16 %v279
    %v1027 = vunpack.c.l.b16 %v280
    %v1028 = vunpack.c.h.b16 %v280
    %v1029 = vunpack.c.l.b16 %v281
    %v1030 = vunpack.c.h.b16 %v281
    %v1031 = vunpack.c.l.b16 %v282
    %v1032 = vunpack.c.h.b16 %v282
    %v1033 = vunpack.c.l.b16 %v283
    %v1034 = vunpack.c.h.b16 %v283
    %v1035 = vunpack.c.l.b16 %v284
    %v1036 = vunpack.c.h.b16 %v284
    %v1037 = vunpack.c.l.b16 %v285
    %v1038 = vunpack.c.h.b16 %v285
    %v1039 = vunpack.c.l.b16 %v286
    %v1040 = vunpack.c.h.b16 %v286
    %v1041 = vunpack.c.l.b16 %v287
    %v1042 = vunpack.c.h.b16 %v287
    %v1043 = vunpack.c.l.b16 %v288
    %v1044 = vunpack.c.h.b16 %v288
    %v1045 = vunpack.c.l.b16 %v289
    %v1046 = vunpack.c.h.b16 %v289
    %v1047 = vunpack.c.l.b16 %v290
    %v1048 = vunpack.c.h.b16 %v290
    %v1049 = vunpack.c.l.b16 %v291
    %v1050 = vunpack.c.h.b16 %v291
    %v1051 = vunpack.c.l.b16 %v292
    %v1052 = vunpack.c.h.b16 %v292
    %v1053 = vunpack.c.l.b16 %v293
    %v1054 = vunpack.c.h.b16 %v293
    %v1055 = vunpack.c.l.b16 %v294
    %v1056 = vunpack.c.h.b16 %v294
    %v1057 = vunpack.c.l.b16 %v295
    %v1058 = vunpack.c.h.b16 %v295
    %v1059 = vunpack.c.l.b16 %v296
    %v1060 = vunpack.c.h.b16 %v296
    %v1061 = vunpack.c.l.b16 %v297
    %v1062 = vunpack.c.h.b16 %v297
    %v1063 = vunpack.c.l.b16 %v298
    %v1064 = vunpack.c.h.b16 %v298
    %v1065 = vunpack.c.l.b16 %v299
    %v1066 = vunpack.c.h.b16 %v299
    %v1067 = vunpack.c.l.b16 %v300
    %v1068 = vunpack.c.h.b16 %v300
    %v1069 = vunpack.c.l.b16 %v301
    %v1070 = vunpack.c.h.b16 %v301
    %v1071 = vunpack.c.l.b16 %v302
    %v1072 = vunpack.c.h.b16 %v302
    %v1073 = vunpack.c.l.b16 %v303
    %v1074 = vunpack.c.h.b16 %v303
    %v1075 = vunpack.c.l.b16 %v304
    %v1076 = vunpack.c.h.b16 %v304
    %v1077 = vunpack.c.l.b16 %v305
    %v1078 = vunpack.c.h.b16 %v305
    %v1079 = vunpack.c.l.b16 %v306
    %v1080 = vunpack.c.h.b16 %v306
    %v1081 = vunpack.c.l.b16 %v307
    %v1082 = vunpack.c.h.b16 %v307
    %v1083 = vunpack.c.l.b16 %v308
    %v1084 = vunpack.c.h.b16 %v308
    %v1085 = vunpack.c.l.b16 %v309
    %v1086 = vunpack.c.h.b16 %v309
    %v1087 = vunpack.c.l.b16 %v310
    %v1088 = vunpack.c.h.b16 %v310
    %v1089 = vunpack.c.l.b16 %v311
    %v1090 = vunpack.c.h.b16 %v311
    %v1091 = vunpack.c.l.b16 %v312
    %v1092 = vunpack.c.h.b16 %v312
    %v1093 = vunpack.c.l.b16 %v313
    %v1094 = vunpack.c.h.b16 %v313
    %v1095 = vunpack.c.l.b16 %v314
    %v1096 = vunpack.c.h.b16 %v314
    %v1097 = vunpack.c.l.b16 %v315
    %v1098 = vunpack.c.h.b16 %v315
    %v1099 = vunpack.c.l.b16 %v316
    %v1100 = vunpack.c.h.b16 %v316
    %v1101 = vunpack.c.l.b16 %v317
    %v1102 = vunpack.c.h.b16 %v317
    %v1103 = vunpack.c.l.b16 %v318
    %v1104 = vunpack.c.h.b16 %v318
    %v1105 = vunpack.c.l.b16 %v319
    %v1106 = vunpack.c.h.b16 %v319
    %v1107 = vunpack.c.l.b16 %v320
    %v1108 = vunpack.c.h.b16 %v320
    %v1109 = vunpack.c.l.b16 %v321
    %v1110 = vunpack.c.h.b16 %v321
    %v1111 = vunpack.c.l.b16 %v322
    %v1112 = vunpack.c.h.b16 %v322
    %v1113 = vunpack.c.l.b16 %v323
    %v1114 = vunpack.c.h.b16 %v323
    %v1115 = vunpack.c.l.b16 %v324
    %v1116 = vunpack.c.h.b16 %v324
    %v1117 = vunpack.c.l.b16 %v325
    %v1118 = vunpack.c.h.b16 %v325
    %v1119 = vunpack.c.l.b16 %v326
    %v1120 = vunpack.c.h.b16 %v326
    %v1121 = vunpack.c.l.b16 %v327
    %v1122 = vunpack.c.h.b16 %v327
    %v1123 = vunpack.c.l.b16 %v328
    %v1124 = vunpack.c.h.b16 %v328
    %v1125 = vunpack.c.l.b16 %v329
    %v1126 = vunpack.c.h.b16 %v329
    %v1127 = vunpack.c.l.b16 %v330
    %v1128 = vunpack.c.h.b16 %v330
    %v1129 = vunpack.c.l.b16 %v331
    %v1130 = vunpack.c.h.b16 %v331
    %v1131 = vunpack.c.l.b16 %v332
    %v1132 = vunpack.c.h.b16 %v332
    %v1133 = vunpack.c.l.b16 %v333
    %v1134 = vunpack.c.h.b16 %v333
    %v1135 = vunpack.c.l.b16 %v334
    %v1136 = vunpack.c.h.b16 %v334
    %v1137 = vunpack.c.l.b16 %v335
    %v1138 = vunpack.c.h.b16 %v335
    %v1139 = vunpack.c.l.b16 %v336
    %v1140 = vunpack.c.h.b16 %v336
    %v1141 = vunpack.c.l.b16 %v337
    %v1142 = vunpack.c.h.b16 %v337
    %v1143 = vunpack.c.l.b16 %v338
    %v1144 = vunpack.c.h.b16 %v338
    %v1145 = vunpack.c.l.b16 %v339
    %v1146 = vunpack.c.h.b16 %v339
    %v1147 = vunpack.c.l.b16 %v340
    %v1148 = vunpack.c.h.b16 %v340
    %v1149 = vunpack.c.l.b16 %v341
    %v1150 = vunpack.c.h.b16 %v341
    %v1151 = vunpack.c.l.b16 %v342
    %v1152 = vunpack.c.h.b16 %v342
    %v1153 = vunpack.c.l.b16 %v343
    %v1154 = vunpack.c.h.b16 %v343
    %v1155 = vunpack.c.l.b16 %v344
    %v1156 = vunpack.c.h.b16 %v344
    %v1157 = vunpack.c.l.b16 %v345
    %v1158 = vunpack.c.h.b16 %v345
    %v1159 = vunpack.c.l.b16 %v346
    %v1160 = vunpack.c.h.b16 %v346
    %v1161 = vunpack.c.l.b16 %v347
    %v1162 = vunpack.c.h.b16 %v347
    %v1163 = vunpack.c.l.b16 %v348
    %v1164 = vunpack.c.h.b16 %v348
    %v1165 = vunpack.c.l.b16 %v349
    %v1166 = vunpack.c.h.b16 %v349
    %v1167 = vunpack.c.l.b16 %v350
    %v1168 = vunpack.c.h.b16 %v350
    %v1169 = vunpack.c.l.b16 %v351
    %v1170 = vunpack.c.h.b16 %v351
    %v1171 = vunpack.c.l.b16 %v352
    %v1172 = vunpack.c.h.b16 %v352
    %v1173 = vunpack.c.l.b16 %v353
    %v1174 = vunpack.c.h.b16 %v353
    %v1175 = vunpack.c.l.b16 %v354
    %v1176 = vunpack.c.h.b16 %v354
    %v1177 = vunpack.c.l.b16 %v355
    %v1178 = vunpack.c.h.b16 %v355
    %v1179 = vunpack.c.l.b16 %v356
    %v1180 = vunpack.c.h.b16 %v356
    %v1181 = vunpack.c.l.b16 %v357
    %v1182 = vunpack.c.h.b16 %v357
    %v1183 = vunpack.c.l.b16 %v358
    %v1184 = vunpack.c.h.b16 %v358
    %v1185 = vunpack.c.l.b16 %v359
    %v1186 = vunpack.c.h.b16 %v359
    %v1187 = vunpack.c.l.b16 %v360
    %v1188 = vunpack.c.h.b16 %v360
    %v1189 = vunpack.c.l.b16 %v361
    %v1190 = vunpack.c.h.b16 %v361
    %v1191 = vunpack.c.l.b16 %v362
    %v1192 = vunpack.c.h.b16 %v362
    %v1193 = vunpack.c.l.b16 %v363
    %v1194 = vunpack.c.h.b16 %v363
    %v1195 = vunpack.c.l.b16 %v364
    %v1196 = vunpack.c.h.b16 %v364
    %v1197 = vunpack.c.l.b16 %v365
    %v1198 = vunpack.c.h.b16 %v365
    %v1199 = vunpack.c.l.b16 %v366
    %v1200 = vunpack.c.h.b16 %v366
    %v1201 = vunpack.c.l.b16 %v367
    %v1202 = vunpack.c.h.b16 %v367
    %v1203 = vunpack.c.l.b16 %v368
    %v1204 = vunpack.c.h.b16 %v368
    %v1205 = vunpack.c.l.b16 %v369
    %v1206 = vunpack.c.h.b16 %v369
    %v1207 = vunpack.c.l.b16 %v370
    %v1208 = vunpack.c.h.b16 %v370
    %v1209 = vunpack.c.l.b16 %v371
    %v1210 = vunpack.c.h.b16 %v371
    %v1211 = vunpack.c.l.b16 %v372
    %v1212 = vunpack.c.h.b16 %v372
    %v1213 = vunpack.c.l.b16 %v373
    %v1214 = vunpack.c.h.b16 %v373
    %v1215 = vunpack.c.l.b16 %v374
    %v1216 = vunpack.c.h.b16 %v374
    %v1217 = vunpack.c.l.b16 %v375
    %v1218 = vunpack.c.h.b16 %v375
    %v1219 = vunpack.c.l.b16 %v376
    %v1220 = vunpack.c.h.b16 %v376
    %v1221 = vunpack.c.l.b16 %v377
    %v1222 = vunpack.c.h.b16 %v377
    %v1223 = vunpack.c.l.b16 %v378
    %v1224 = vunpack.c.h.b16 %v378
    %v1225 = vunpack.c.l.b16 %v379
    %v1226 = vunpack.c.h.b16 %v379
    %v1227 = vunpack.c.l.b16 %v380
    %v1228 = vunpack.c.h.b16 %v380
    %v1229 = vunpack.c.l.b16 %v381
    %v1230 = vunpack.c.h.b16 %v381
    %v1231 = vunpack.c.l.b16 %v382
    %v1232 = vunpack.c.h.b16 %v382
    %v1233 = vunpack.c.l.b16 %v383
    %v1234 = vunpack.c.h.b16 %v383
    %v1235 = vunpack.c.l.b16 %v384
    %v1236 = vunpack.c.h.b16 %v384
    %v1237 = vunpack.c.l.b16 %v385
    %v1238 = vunpack.c.h.b16 %v385
    %v1239 = vunpack.c.l.b16 %v386
    %v1240 = vunpack.c.h.b16 %v386
    %v1241 = vunpack.c.l.b16 %v387
    %v1242 = vunpack.c.h.b16 %v387
    %v1243 = vunpack.c.l.b16 %v388
    %v1244 = vunpack.c.h.b16 %v388
    %v1245 = vunpack.c.l.b16 %v389
    %v1246 = vunpack.c.h.b16 %v389
    %v1247 = vunpack.c.l.b16 %v390
    %v1248 = vunpack.c.h.b16 %v390
    %v1249 = vunpack.c.l.b16 %v391
    %v1250 = vunpack.c.h.b16 %v391
    %v1251 = vunpack.c.l.b16 %v392
    %v1252 = vunpack.c.h.b16 %v392
    %v1253 = vunpack.c.l.b16 %v393
    %v1254 = vunpack.c.h.b16 %v393
    %v1255 = vunpack.c.l.b16 %v394
    %v1256 = vunpack.c.h.b16 %v394
    %v1257 = vunpack.c.l.b16 %v395
    %v1258 = vunpack.c.h.b16 %v395
    %v1259 = vunpack.c.l.b16 %v396
    %v1260 = vunpack.c.h.b16 %v396
    %v1261 = vunpack.c.l.b16 %v397
    %v1262 = vunpack.c.h.b16 %v397
    %v1263 = vunpack.c.l.b16 %v398
    %v1264 = vunpack.c.h.b16 %v398
    %v1265 = vunpack.c.l.b16 %v399
    %v1266 = vunpack.c.h.b16 %v399
    %v1267 = vunpack.c.l.b16 %v400
    %v1268 = vunpack.c.h.b16 %v400
    %v1269 = vunpack.c.l.b16 %v401
    %v1270 = vunpack.c.h.b16 %v401
    %v1271 = vunpack.c.l.b16 %v402
    %v1272 = vunpack.c.h.b16 %v402
    %v1273 = vunpack.c.l.b16 %v403
    %v1274 = vunpack.c.h.b16 %v403
    %v1275 = vunpack.c.l.b16 %v404
    %v1276 = vunpack.c.h.b16 %v404
    %v1277 = vunpack.c.l.b16 %v405
    %v1278 = vunpack.c.h.b16 %v405
    %v1279 = vunpack.c.l.b16 %v406
    %v1280 = vunpack.c.h.b16 %v406
    %v1281 = vunpack.c.l.b16 %v407
    %v1282 = vunpack.c.h.b16 %v407
    %v1283 = vunpack.c.l.b16 %v408
    %v1284 = vunpack.c.h.b16 %v408
    %v1285 = vunpack.c.l.b16 %v409
    %v1286 = vunpack.c.h.b16 %v409
    %v1287 = vunpack.c.l.b16 %v410
    %v1288 = vunpack.c.h.b16 %v410
    %v1289 = vunpack.c.l.b16 %v411
    %v1290 = vunpack.c.h.b16 %v411
    %v1291 = vunpack.c.l.b16 %v412
    %v1292 = vunpack.c.h.b16 %v412
    %v1293 = vunpack.c.l.b16 %v413
    %v1294 = vunpack.c.h.b16 %v413
    %v1295 = vunpack.c.l.b16 %v414
    %v1296 = vunpack.c.h.b16 %v414
    %v1297 = vunpack.c.l.b16 %v415
    %v1298 = vunpack.c.h.b16 %v415
    %v1299 = vunpack.c.l.b16 %v416
    %v1300 = vunpack.c.h.b16 %v416
    %v1301 = vunpack.c.l.b16 %v417
    %v1302 = vunpack.c.h.b16 %v417
    %v1303 = vunpack.c.l.b16 %v418
    %v1304 = vunpack.c.h.b16 %v418
    %v1305 = vunpack.c.l.b16 %v419
    %v1306 = vunpack.c.h.b16 %v419
    %v1307 = vunpack.c.l.b16 %v420
    %v1308 = vunpack.c.h.b16 %v420
    %v1309 = vunpack.c.l.b16 %v421
    %v1310 = vunpack.c.h.b16 %v421
    %v1311 = vunpack.c.l.b16 %v422
    %v1312 = vunpack.c.h.b16 %v422
    %v1313 = vunpack.c.l.b16 %v423
    %v1314 = vunpack.c.h.b16 %v423
    %v1315 = vunpack.c.l.b16 %v424
    %v1316 = vunpack.c.h.b16 %v424
    %v1317 = vunpack.c.l.b16 %v425
    %v1318 = vunpack.c.h.b16 %v425
    %v1319 = vunpack.c.l.b16 %v426
    %v1320 = vunpack.c.h.b16 %v426
    %v1321 = vunpack.c.l.b16 %v427
    %v1322 = vunpack.c.h.b16 %v427
    %v1323 = vunpack.c.l.b16 %v428
    %v1324 = vunpack.c.h.b16 %v428
    %v1325 = vunpack.c.l.b16 %v429
    %v1326 = vunpack.c.h.b16 %v429
    %v1327 = vunpack.c.l.b16 %v430
    %v1328 = vunpack.c.h.b16 %v430
    %v1329 = vunpack.c.l.b16 %v431
    %v1330 = vunpack.c.h.b16 %v431
    %v1331 = vunpack.c.l.b16 %v432
    %v1332 = vunpack.c.h.b16 %v432
    %v1333 = vunpack.c.l.b16 %v433
    %v1334 = vunpack.c.h.b16 %v433
    %v1335 = vunpack.c.l.b16 %v434
    %v1336 = vunpack.c.h.b16 %v434
    %v1337 = vunpack.c.l.b16 %v435
    %v1338 = vunpack.c.h.b16 %v435
    %v1339 = vunpack.c.l.b16 %v436
    %v1340 = vunpack.c.h.b16 %v436
    %v1341 = vunpack.c.l.b16 %v437
    %v1342 = vunpack.c.h.b16 %v437
    %v1343 = vunpack.c.l.b16 %v438
    %v1344 = vunpack.c.h.b16 %v438
    %v1345 = vunpack.c.l.b16 %v439
    %v1346 = vunpack.c.h.b16 %v439
    %v1347 = vunpack.c.l.b16 %v440
    %v1348 = vunpack.c.h.b16 %v440
    %v1349 = vunpack.c.l.b16 %v441
    %v1350 = vunpack.c.h.b16 %v441
    %v1351 = vunpack.c.l.b16 %v442
    %v1352 = vunpack.c.h.b16 %v442
    %v1353 = vunpack.c.l.b16 %v443
    %v1354 = vunpack.c.h.b16 %v443
    %v1355 = vunpack.c.l.b16 %v444
    %v1356 = vunpack.c.h.b16 %v444
    %v1357 = vunpack.c.l.b16 %v445
    %v1358 = vunpack.c.h.b16 %v445
    %v1359 = vunpack.c.l.b16 %v446
    %v1360 = vunpack.c.h.b16 %v446
    %v1361 = vunpack.c.l.b16 %v447
    %v1362 = vunpack.c.h.b16 %v447
    %v1363 = vunpack.c.l.b16 %v448
    %v1364 = vunpack.c.h.b16 %v448
    %v1365 = vunpack.c.l.b16 %v449
    %v1366 = vunpack.c.h.b16 %v449
    %v1367 = vunpack.c.l.b16 %v450
    %v1368 = vunpack.c.h.b16 %v450
    %v1369 = vunpack.c.l.b16 %v451
    %v1370 = vunpack.c.h.b16 %v451
    %v1371 = vunpack.c.l.b16 %v452
    %v1372 = vunpack.c.h.b16 %v452
    %v1373 = vunpack.c.l.b16 %v453
    %v1374 = vunpack.c.h.b16 %v453
    %v1375 = vunpack.c.l.b16 %v454
    %v1376 = vunpack.c.h.b16 %v454
    %v1377 = vunpack.c.l.b16 %v455
    %v1378 = vunpack.c.h.b16 %v455
    %v1379 = vunpack.c.l.b16 %v456
    %v1380 = vunpack.c.h.b16 %v456
    %v1381 = vunpack.c.l.b16 %v457
    %v1382 = vunpack.c.h.b16 %v457
    %v1383 = vunpack.c.l.b16 %v458
    %v1384 = vunpack.c.h.b16 %v458
    %v1385 = vpack.c.b16 %v815, %v809
    %v1386 = vpack.c.b16 %v816, %v810
    %v1387 = vpack.c.b16 %v817, %v811
    %v1388 = vpack.c.b16 %v818, %v812
    %v1389 = vpack.c.b16 %v819, %v813
    %v1390 = vpack.c.b16 %v820, %v814
    %v1391 = vpack.c.b16 %v827, %v821
    %v1392 = vpack.c.b16 %v828, %v822
    %v1393 = vpack.c.b16 %v829, %v823
    %v1394 = vpack.c.b16 %v830, %v824
    %v1395 = vpack.c.b16 %v831, %v825
    %v1396 = vpack.c.b16 %v832, %v826
    %v1397 = vpack.c.b16 %v839, %v833
    %v1398 = vpack.c.b16 %v840, %v834
    %v1399 = vpack.c.b16 %v841, %v835
    %v1400 = vpack.c.b16 %v842, %v836
    %v1401 = vpack.c.b16 %v843, %v837
    %v1402 = vpack.c.b16 %v844, %v838
    %v1403 = vpack.c.b16 %v851, %v845
    %v1404 = vpack.c.b16 %v852, %v846
    %v1405 = vpack.c.b16 %v853, %v847
    %v1406 = vpack.c.b16 %v854, %v848
    %v1407 = vpack.c.b16 %v855, %v849
    %v1408 = vpack.c.b16 %v856, %v850
    %v1409 = vpack.c.b16 %v863, %v857
    %v1410 = vpack.c.b16 %v864, %v858
    %v1411 = vpack.c.b16 %v865, %v859
    %v1412 = vpack.c.b16 %v866, %v860
    %v1413 = vpack.c.b16 %v867, %v861
    %v1414 = vpack.c.b16 %v868, %v862
    %v1415 = vpack.c.b16 %v875, %v869
    %v1416 = vpack.c.b16 %v876, %v870
    %v1417 = vpack.c.b16 %v877, %v871
    %v1418 = vpack.c.b16 %v878, %v872
    %v1419 = vpack.c.b16 %v879, %v873
    %v1420 = vpack.c.b16 %v880, %v874
    %v1421 = vpack.c.b16 %v887, %v881
    %v1422 = vpack.c.b16 %v888, %v882
    %v1423 = vpack.c.b16 %v889, %v883
    %v1424 = vpack.c.b16 %v890, %v884
    %v1425 = vpack.c.b16 %v891, %v885
    %v1426 = vpack.c.b16 %v892, %v886
    %v1427 = vpack.c.b16 %v899, %v893
    %v1428 = vpack.c.b16 %v900, %v894
    %v1429 = vpack.c.b16 %v901, %v895
    %v1430 = vpack.c.b16 %v902, %v896
    %v1431 = vpack.c.b16 %v903, %v897
    %v1432 = vpack.c.b16 %v904, %v898
    %v1433 = vpack.c.b16 %v911, %v905
    %v1434 = vpack.c.b16 %v912, %v906
    %v1435 = vpack.c.b16 %v913, %v907
    %v1436 = vpack.c.b16 %v914, %v908
    %v1437 = vpack.c.b16 %v915, %v909
    %v1438 = vpack.c.b16 %v916, %v910
    %v1439 = vpack.c.b16 %v923, %v917
    %v1440 = vpack.c.b16 %v924, %v918
    %v1441 = vpack.c.b16 %v925, %v919
    %v1442 = vpack.c.b16 %v926, %v920
    %v1443 = vpack.c.b16 %v927, %v921
    %v1444 = vpack.c.b16 %v928, %v922
    %v1445 = vpack.c.b16 %v935, %v929
    %v1446 = vpack.c.b16 %v936, %v930
    %v1447 = vpack.c.b16 %v937, %v931
    %v1448 = vpack.c.b16 %v938, %v932
    %v1449 = vpack.c.b16 %v939, %v933
    %v1450 = vpack.c.b16 %v940, %v934
    %v1451 = vpack.c.b16 %v947, %v941
    %v1452 = vpack.c.b16 %v948, %v942
    %v1453 = vpack.c.b16 %v949, %v943
    %v1454 = vpack.c.b16 %v950, %v944
    %v1455 = vpack.c.b16 %v951, %v945
    %v1456 = vpack.c.b16 %v952, %v946
    %v1457 = vpack.c.b16 %v959, %v953
    %v1458 = vpack.c.b16 %v960, %v954
    %v1459 = vpack.c.b16 %v961, %v955
    %v1460 = vpack.c.b16 %v962, %v956
    %v1461 = vpack.c.b16 %v963, %v957
    %v1462 = vpack.c.b16 %v964, %v958
    %v1463 = vpack.c.b16 %v971, %v965
    %v1464 = vpack.c.b16 %v972, %v966
    %v1465 = vpack.c.b16 %v973, %v967
    %v1466 = vpack.c.b16 %v974, %v968
    %v1467 = vpack.c.b16 %v975, %v969
    %v1468 = vpack.c.b16 %v976, %v970
    %v1469 = vpack.c.b16 %v983, %v977
    %v1470 = vpack.c.b16 %v984, %v978
    %v1471 = vpack.c.b16 %v985, %v979
    %v1472 = vpack.c.b16 %v986, %v980
    %v1473 = vpack.c.b16 %v987, %v981
    %v1474 = vpack.c.b16 %v988, %v982
    %v1475 = vpack.c.b16 %v995, %v989
    %v1476 = vpack.c.b16 %v996, %v990
    %v1477 = vpack.c.b16 %v997, %v991
    %v1478 = vpack.c.b16 %v998, %v992
    %v1479 = vpack.c.b16 %v999, %v993
    %v1480 = vpack.c.b16 %v1000, %v994
    %v1481 = vpack.c.b16 %v1007, %v1001
    %v1482 = vpack.c.b16 %v1008, %v1002
    %v1483 = vpack.c.b16 %v1009, %v1003
    %v1484 = vpack.c.b16 %v1010, %v1004
    %v1485 = vpack.c.b16 %v1011, %v1005
    %v1486 = vpack.c.b16 %v1012, %v1006
    %v1487 = vpack.c.b16 %v1019, %v1013
    %v1488 = vpack.c.b16 %v1020, %v1014
    %v1489 = vpack.c.b16 %v1021, %v1015
    %v1490 = vpack.c.b16 %v1022, %v1016
    %v1491 = vpack.c.b16 %v1023, %v1017
    %v1492 = vpack.c.b16 %v1024, %v1018
    %v1493 = vpack.c.b16 %v1031, %v1025
    %v1494 = vpack.c.b16 %v1032, %v1026
    %v1495 = vpack.c.b16 %v1033, %v1027
    %v1496 = vpack.c.b16 %v1034, %v1028
    %v1497 = vpack.c.b16 %v1035, %v1029
    %v1498 = vpack.c.b16 %v1036, %v1030
    %v1499 = vpack.c.b16 %v1043, %v1037
    %v1500 = vpack.c.b16 %v1044, %v1038
    %v1501 = vpack.c.b16 %v1045, %v1039
    %v1502 = vpack.c.b16 %v1046, %v1040
    %v1503 = vpack.c.b16 %v1047, %v1041
    %v1504 = vpack.c.b16 %v1048, %v1042
    %v1505 = vpack.c.b16 %v1055, %v1049
    %v1506 = vpack.c.b16 %v1056, %v1050
    %v1507 = vpack.c.b16 %v1057, %v1051
    %v1508 = vpack.c.b16 %v1058, %v1052
    %v1509 = vpack.c.b16 %v1059, %v1053
    %v1510 = vpack.c.b16 %v1060, %v1054
    %v1511 = vpack.c.b16 %v1067, %v1061
    %v1512 = vpack.c.b16 %v1068, %v1062
    %v1513 = vpack.c.b16 %v1069, %v1063
    %v1514 = vpack.c.b16 %v1070, %v1064
    %v1515 = vpack.c.b16 %v1071, %v1065
    %v1516 = vpack.c.b16 %v1072, %v1066
    %v1517 = vpack.c.b16 %v1079, %v1073
    %v1518 = vpack.c.b16 %v1080, %v1074
    %v1519 = vpack.c.b16 %v1081, %v1075
    %v1520 = vpack.c.b16 %v1082, %v1076
    %v1521 = vpack.c.b16 %v1083, %v1077
    %v1522 = vpack.c.b16 %v1084, %v1078
    %v1523 = vpack.c.b16 %v1091, %v1085
    %v1524 = vpack.c.b16 %v1092, %v1086
    %v1525 = vpack.c.b16 %v1093, %v1087
    %v1526 = vpack.c.b16 %v1094, %v1088
    %v1527 = vpack.c.b16 %v1095, %v1089
    %v1528 = vpack.c.b16 %v1096, %v1090
    %v1529 = vpack.c.b16 %v1103, %v1097
    %v1530 = vpack.c.b16 %v1104, %v1098
    %v1531 = vpack.c.b16 %v1105, %v1099
    %v1532 = vpack.c.b16 %v1106, %v1100
    %v1533 = vpack.c.b16 %v1107, %v1101
    %v1534 = vpack.c.b16 %v1108, %v1102
    %v1535 = vpack.c.b16 %v1115, %v1109
    %v1536 = vpack.c.b16 %v1116, %v1110
    %v1537 = vpack.c.b16 %v1117, %v1111
    %v1538 = vpack.c.b16 %v1118, %v1112
    %v1539 = vpack.c.b16 %v1119, %v1113
    %v1540 = vpack.c.b16 %v1120, %v1114
    %v1541 = vpack.c.b16 %v1127, %v1121
    %v1542 = vpack.c.b16 %v1128, %v1122
    %v1543 = vpack.c.b16 %v1129, %v1123
    %v1544 = vpack.c.b16 %v1130, %v1124
    %v1545 = vpack.c.b16 %v1131, %v1125
    %v1546 = vpack.c.b16 %v1132, %v1126
    %v1547 = vpack.c.b16 %v1139, %v1133
    %v1548 = vpack.c.b16 %v1140, %v1134
    %v1549 = vpack.c.b16 %v1141, %v1135
    %v1550 = vpack.c.b16 %v1142, %v1136
    %v1551 = vpack.c.b16 %v1143, %v1137
    %v1552 = vpack.c.b16 %v1144, %v1138
    %v1553 = vpack.c.b16 %v1151, %v1145
    %v1554 = vpack.c.b16 %v1152, %v1146
    %v1555 = vpack.c.b16 %v1153, %v1147
    %v1556 = vpack.c.b16 %v1154, %v1148
    %v1557 = vpack.c.b16 %v1155, %v1149
    %v1558 = vpack.c.b16 %v1156, %v1150
    %v1559 = vpack.c.b16 %v1163, %v1157
    %v1560 = vpack.c.b16 %v1164, %v1158
    %v1561 = vpack.c.b16 %v1165, %v1159
    %v1562 = vpack.c.b16 %v1166, %v1160
    %v1563 = vpack.c.b16 %v1167, %v1161
    %v1564 = vpack.c.b16 %v1168, %v1162
    %v1565 = vpack.c.b16 %v1175, %v1169
    %v1566 = vpack.c.b16 %v1176, %v1170
    %v1567 = vpack.c.b16 %v1177, %v1171
    %v1568 = vpack.c.b16 %v1178, %v1172
    %v1569 = vpack.c.b16 %v1179, %v1173
    %v1570 = vpack.c.b16 %v1180, %v1174
    %v1571 = vpack.c.b16 %v1187, %v1181
    %v1572 = vpack.c.b16 %v1188, %v1182
    %v1573 = vpack.c.b16 %v1189, %v1183
    %v1574 = vpack.c.b16 %v1190, %v1184
    %v1575 = vpack.c.b16 %v1191, %v1185
    %v1576 = vpack.c.b16 %v1192, %v1186
    %v1577 = vpack.c.b16 %v1199, %v1193
    %v1578 = vpack.c.b16 %v1200, %v1194
    %v1579 = vpack.c.b16 %v1201, %v1195
    %v1580 = vpack.c.b16 %v1202, %v1196
    %v1581 = vpack.c.b16 %v1203, %v1197
    %v1582 = vpack.c.b16 %v1204, %v1198
    %v1583 = vpack.c.b16 %v1211, %v1205
    %v1584 = vpack.c.b16 %v1212, %v1206
    %v1585 = vpack.c.b16 %v1213, %v1207
    %v1586 = vpack.c.b16 %v1214, %v1208
    %v1587 = vpack.c.b16 %v1215, %v1209
    %v1588 = vpack.c.b16 %v1216, %v1210
    %v1589 = vpack.c.b16 %v1223, %v1217
    %v1590 = vpack.c.b16 %v1224, %v1218
    %v1591 = vpack.c.b16 %v1225, %v1219
    %v1592 = vpack.c.b16 %v1226, %v1220
    %v1593 = vpack.c.b16 %v1227, %v1221
    %v1594 = vpack.c.b16 %v1228, %v1222
    %v1595 = vpack.c.b16 %v1235, %v1229
    %v1596 = vpack.c.b16 %v1236, %v1230
    %v1597 = vpack.c.b16 %v1237, %v1231
    %v1598 = vpack.c.b16 %v1238, %v1232
    %v1599 = vpack.c.b16 %v1239, %v1233
    %v1600 = vpack.c.b16 %v1240, %v1234
    %v1601 = vpack.c.b16 %v1247, %v1241
    %v1602 = vpack.c.b16 %v1248, %v1242
    %v1603 = vpack.c.b16 %v1249, %v1243
    %v1604 = vpack.c.b16 %v1250, %v1244
    %v1605 = vpack.c.b16 %v1251, %v1245
    %v1606 = vpack.c.b16 %v1252, %v1246
    %v1607 = vpack.c.b16 %v1259, %v1253
    %v1608 = vpack.c.b16 %v1260, %v1254
    %v1609 = vpack.c.b16 %v1261, %v1255
    %v1610 = vpack.c.b16 %v1262, %v1256
    %v1611 = vpack.c.b16 %v1263, %v1257
    %v1612 = vpack.c.b16 %v1264, %v1258
    %v1613 = vpack.c.b16 %v1271, %v1265
    %v1614 = vpack.c.b16 %v1272, %v1266
    %v1615 = vpack.c.b16 %v1273, %v1267
    %v1616 = vpack.c.b16 %v1274, %v1268
    %v1617 = vpack.c.b16 %v1275, %v1269
    %v1618 = vpack.c.b16 %v1276, %v1270
    %v1619 = vpack.c.b16 %v1283, %v1277
    %v1620 = vpack.c.b16 %v1284, %v1278
    %v1621 = vpack.c.b16 %v1285, %v1279
    %v1622 = vpack.c.b16 %v1286, %v1280
    %v1623 = vpack.c.b16 %v1287, %v1281
    %v1624 = vpack.c.b16 %v1288, %v1282
    %v1625 = vpack.c.b16 %v1295, %v1289
    %v1626 = vpack.c.b16 %v1296, %v1290
    %v1627 = vpack.c.b16 %v1297, %v1291
    %v1628 = vpack.c.b16 %v1298, %v1292
    %v1629 = vpack.c.b16 %v1299, %v1293
    %v1630 = vpack.c.b16 %v1300, %v1294
    %v1631 = vpack.c.b16 %v1307, %v1301
    %v1632 = vpack.c.b16 %v1308, %v1302
    %v1633 = vpack.c.b16 %v1309, %v1303
    %v1634 = vpack.c.b16 %v1310, %v1304
    %v1635 = vpack.c.b16 %v1311, %v1305
    %v1636 = vpack.c.b16 %v1312, %v1306
    %v1637 = vpack.c.b16 %v1319, %v1313
    %v1638 = vpack.c.b16 %v1320, %v1314
    %v1639 = vpack.c.b16 %v1321, %v1315
    %v1640 = vpack.c.b16 %v1322, %v1316
    %v1641 = vpack.c.b16 %v1323, %v1317
    %v1642 = vpack.c.b16 %v1324, %v1318
    %v1643 = vpack.c.b16 %v1331, %v1325
    %v1644 = vpack.c.b16 %v1332, %v1326
    %v1645 = vpack.c.b16 %v1333, %v1327
    %v1646 = vpack.c.b16 %v1334, %v1328
    %v1647 = vpack.c.b16 %v1335, %v1329
    %v1648 = vpack.c.b16 %v1336, %v1330
    %v1649 = vpack.c.b16 %v1343, %v1337
    %v1650 = vpack.c.b16 %v1344, %v1338
    %v1651 = vpack.c.b16 %v1345, %v1339
    %v1652 = vpack.c.b16 %v1346, %v1340
    %v1653 = vpack.c.b16 %v1347, %v1341
    %v1654 = vpack.c.b16 %v1348, %v1342
    %v1655 = vpack.c.b16 %v1355, %v1349
    %v1656 = vpack.c.b16 %v1356, %v1350
    %v1657 = vpack.c.b16 %v1357, %v1351
    %v1658 = vpack.c.b16 %v1358, %v1352
    %v1659 = vpack.c.b16 %v1359, %v1353
    %v1660 = vpack.c.b16 %v1360, %v1354
    %v1661 = vpack.c.b16 %v1367, %v1361
    %v1662 = vpack.c.b16 %v1368, %v1362
    %v1663 = vpack.c.b16 %v1369, %v1363
    %v1664 = vpack.c.b16 %v1370, %v1364
    %v1665 = vpack.c.b16 %v1371, %v1365
    %v1666 = vpack.c.b16 %v1372, %v1366
    %v1667 = vpack.c.b16 %v1379, %v1373
    %v1668 = vpack.c.b16 %v1380, %v1374
    %v1669 = vpack.c.b16 %v1381, %v1375
    %v1670 = vpack.c.b16 %v1382, %v1376
    %v1671 = vpack.c.b16 %v1383, %v1377
    %v1672 = vpack.c.b16 %v1384, %v1378
    %1961 = vmatprep.subr.bf16.mxu0 %v1386
    %1962 = vmatpush1.bf16.msra.mxu0 %v1385
    %1963 = vmatprep.subr.bf16.mxu0 %v1392
    %1964 = vmatpush1.bf16.msra.mxu0 %v1391
    %1965 = vmatprep.subr.bf16.mxu0 %v1398
    %1966 = vmatpush1.bf16.msra.mxu0 %v1397
    %1967 = vmatprep.subr.bf16.mxu0 %v1404
    %1968 = vmatpush1.bf16.msra.mxu0 %v1403
    %1969 = vmatprep.subr.bf16.mxu0 %v1410
    %1970 = vmatpush1.bf16.msra.mxu0 %v1409
    %1971 = vmatprep.subr.bf16.mxu0 %v1416
    %1972 = vmatpush1.bf16.msra.mxu0 %v1415
    %1973 = vmatprep.subr.bf16.mxu0 %v1422
    %1974 = vmatpush1.bf16.msra.mxu0 %v1421
    %1975 = vmatprep.subr.bf16.mxu0 %v1428
    %1976 = vmatpush1.bf16.msra.mxu0 %v1427
    %1977 = vmatprep.subr.bf16.mxu0 %v1434
    %1978 = vmatpush1.bf16.msra.mxu0 %v1433
    %1979 = vmatprep.subr.bf16.mxu0 %v1440
    %1980 = vmatpush1.bf16.msra.mxu0 %v1439
    %1981 = vmatprep.subr.bf16.mxu0 %v1446
    %1982 = vmatpush1.bf16.msra.mxu0 %v1445
    %1983 = vmatprep.subr.bf16.mxu0 %v1452
    %1984 = vmatpush1.bf16.msra.mxu0 %v1451
    %1985 = vmatprep.subr.bf16.mxu0 %v1458
    %1986 = vmatpush1.bf16.msra.mxu0 %v1457
    %1987 = vmatprep.subr.bf16.mxu0 %v1464
    %1988 = vmatpush1.bf16.msra.mxu0 %v1463
    %1989 = vmatprep.subr.bf16.mxu0 %v1470
    %1990 = vmatpush1.bf16.msra.mxu0 %v1469
    %1991 = vmatprep.subr.bf16.mxu0 %v1476
    %1992 = vmatpush1.bf16.msra.mxu0 %v1475
    %1993 = vmatprep.mubr.bf16.mxu0 %v510
    %1994 = vmatmul.mubr.bf16.gmra.mrb[0].mxu0 %v509
    %v1995 = vpop.f32.mrb[0].mxu0
    %v1996 = vadd.f32 %v464, %v1995
    %v1997 = vpop.f32.mrb[0].mxu0
    %v1998 = vadd.f32 %v468, %v1997
    %v1999 = vpop.f32.mrb[0].mxu0
    %v2000 = vadd.f32 %v464, %v1999
    %v2001 = vpop.f32.mrb[0].mxu0
    %v2002 = vadd.f32 %v468, %v2001
    %2003 = vdwg.mxu0
    %2004 = vmatprep.subr.bf16.mxu0 %v1482
    %2005 = vmatpush1.bf16.msra.mxu0 %v1481
    %2006 = vmatprep.subr.bf16.mxu0 %v1488
    %2007 = vmatpush1.bf16.msra.mxu0 %v1487
    %2008 = vmatprep.subr.bf16.mxu0 %v1494
    %2009 = vmatpush1.bf16.msra.mxu0 %v1493
    %2010 = vmatprep.subr.bf16.mxu0 %v1500
    %2011 = vmatpush1.bf16.msra.mxu0 %v1499
    %2012 = vmatprep.subr.bf16.mxu0 %v1506
    %2013 = vmatpush1.bf16.msra.mxu0 %v1505
    %2014 = vmatprep.subr.bf16.mxu0 %v1512
    %2015 = vmatpush1.bf16.msra.mxu0 %v1511
    %2016 = vmatprep.subr.bf16.mxu0 %v1518
    %2017 = vmatpush1.bf16.msra.mxu0 %v1517
    %2018 = vmatprep.subr.bf16.mxu0 %v1524
    %2019 = vmatpush1.bf16.msra.mxu0 %v1523
    %2020 = vmatprep.subr.bf16.mxu0 %v1530
    %2021 = vmatpush1.bf16.msra.mxu0 %v1529
    %2022 = vmatprep.subr.bf16.mxu0 %v1536
    %2023 = vmatpush1.bf16.msra.mxu0 %v1535
    %2024 = vmatprep.subr.bf16.mxu0 %v1542
    %2025 = vmatpush1.bf16.msra.mxu0 %v1541
    %2026 = vmatprep.subr.bf16.mxu0 %v1548
    %2027 = vmatpush1.bf16.msra.mxu0 %v1547
    %2028 = vmatprep.subr.bf16.mxu0 %v1554
    %2029 = vmatpush1.bf16.msra.mxu0 %v1553
    %2030 = vmatprep.subr.bf16.mxu0 %v1560
    %2031 = vmatpush1.bf16.msra.mxu0 %v1559
    %2032 = vmatprep.subr.bf16.mxu0 %v1566
    %2033 = vmatpush1.bf16.msra.mxu0 %v1565
    %2034 = vmatprep.subr.bf16.mxu0 %v1572
    %2035 = vmatpush1.bf16.msra.mxu0 %v1571
    %2036 = vmatprep.mubr.bf16.mxu0 %v512
    %2037 = vmatmul.mubr.bf16.gmra.mrb[0].mxu0 %v511
    %v2038 = vpop.f32.mrb[0].mxu0
    %v2039 = vadd.f32 %v1996, %v2038
    %v2040 = vpop.f32.mrb[0].mxu0
    %v2041 = vadd.f32 %v1998, %v2040
    %v2042 = vpop.f32.mrb[0].mxu0
    %v2043 = vadd.f32 %v2000, %v2042
    %v2044 = vpop.f32.mrb[0].mxu0
    %v2045 = vadd.f32 %v2002, %v2044
    %2046 = vdwg.mxu0
    %2047 = vmatprep.subr.bf16.mxu0 %v1578
    %2048 = vmatpush1.bf16.msra.mxu0 %v1577
    %2049 = vmatprep.subr.bf16.mxu0 %v1584
    %2050 = vmatpush1.bf16.msra.mxu0 %v1583
    %2051 = vmatprep.subr.bf16.mxu0 %v1590
    %2052 = vmatpush1.bf16.msra.mxu0 %v1589
    %2053 = vmatprep.subr.bf16.mxu0 %v1596
    %2054 = vmatpush1.bf16.msra.mxu0 %v1595
    %2055 = vmatprep.subr.bf16.mxu0 %v1602
    %2056 = vmatpush1.bf16.msra.mxu0 %v1601
    %2057 = vmatprep.subr.bf16.mxu0 %v1608
    %2058 = vmatpush1.bf16.msra.mxu0 %v1607
    %2059 = vmatprep.subr.bf16.mxu0 %v1614
    %2060 = vmatpush1.bf16.msra.mxu0 %v1613
    %2061 = vmatprep.subr.bf16.mxu0 %v1620
    %2062 = vmatpush1.bf16.msra.mxu0 %v1619
    %2063 = vmatprep.subr.bf16.mxu0 %v1626
    %2064 = vmatpush1.bf16.msra.mxu0 %v1625
    %2065 = vmatprep.subr.bf16.mxu0 %v1632
    %2066 = vmatpush1.bf16.msra.mxu0 %v1631
    %2067 = vmatprep.subr.bf16.mxu0 %v1638
    %2068 = vmatpush1.bf16.msra.mxu0 %v1637
    %2069 = vmatprep.subr.bf16.mxu0 %v1644
    %2070 = vmatpush1.bf16.msra.mxu0 %v1643
    %2071 = vmatprep.subr.bf16.mxu0 %v1650
    %2072 = vmatpush1.bf16.msra.mxu0 %v1649
    %2073 = vmatprep.subr.bf16.mxu0 %v1656
    %2074 = vmatpush1.bf16.msra.mxu0 %v1655
    %2075 = vmatprep.subr.bf16.mxu0 %v1662
    %2076 = vmatpush1.bf16.msra.mxu0 %v1661
    %2077 = vmatprep.subr.bf16.mxu0 %v1668
    %2078 = vmatpush1.bf16.msra.mxu0 %v1667
    %2079 = vmatprep.mubr.bf16.mxu0 %v514
    %2080 = vmatmul.mubr.bf16.gmra.mrb[0].mxu0 %v513
    %v2081 = vpop.f32.mrb[0].mxu0
    %v2082 = vadd.f32 %v2039, %v2081
    %v2083 = vpop.f32.mrb[0].mxu0
    %v2084 = vadd.f32 %v2041, %v2083
    %v2085 = vpop.f32.mrb[0].mxu0
    %v2086 = vadd.f32 %v2043, %v2085
    %v2087 = vpop.f32.mrb[0].mxu0
    %v2088 = vadd.f32 %v2045, %v2087
    %2089 = vdwg.mxu0
    %2090 = vmatprep.subr.bf16.mxu0 %v1388
    %2091 = vmatpush1.bf16.msra.mxu0 %v1387
    %2092 = vmatprep.subr.bf16.mxu0 %v1394
    %2093 = vmatpush1.bf16.msra.mxu0 %v1393
    %2094 = vmatprep.subr.bf16.mxu0 %v1400
    %2095 = vmatpush1.bf16.msra.mxu0 %v1399
    %2096 = vmatprep.subr.bf16.mxu0 %v1406
    %2097 = vmatpush1.bf16.msra.mxu0 %v1405
    %2098 = vmatprep.subr.bf16.mxu0 %v1412
    %2099 = vmatpush1.bf16.msra.mxu0 %v1411
    %2100 = vmatprep.subr.bf16.mxu0 %v1418
    %2101 = vmatpush1.bf16.msra.mxu0 %v1417
    %2102 = vmatprep.subr.bf16.mxu0 %v1424
    %2103 = vmatpush1.bf16.msra.mxu0 %v1423
    %2104 = vmatprep.subr.bf16.mxu0 %v1430
    %2105 = vmatpush1.bf16.msra.mxu0 %v1429
    %2106 = vmatprep.subr.bf16.mxu0 %v1436
    %2107 = vmatpush1.bf16.msra.mxu0 %v1435
    %2108 = vmatprep.subr.bf16.mxu0 %v1442
    %2109 = vmatpush1.bf16.msra.mxu0 %v1441
    %2110 = vmatprep.subr.bf16.mxu0 %v1448
    %2111 = vmatpush1.bf16.msra.mxu0 %v1447
    %2112 = vmatprep.subr.bf16.mxu0 %v1454
    %2113 = vmatpush1.bf16.msra.mxu0 %v1453
    %2114 = vmatprep.subr.bf16.mxu0 %v1460
    %2115 = vmatpush1.bf16.msra.mxu0 %v1459
    %2116 = vmatprep.subr.bf16.mxu0 %v1466
    %2117 = vmatpush1.bf16.msra.mxu0 %v1465
    %2118 = vmatprep.subr.bf16.mxu0 %v1472
    %2119 = vmatpush1.bf16.msra.mxu0 %v1471
    %2120 = vmatprep.subr.bf16.mxu0 %v1478
    %2121 = vmatpush1.bf16.msra.mxu0 %v1477
    %2122 = vmatprep.mubr.bf16.mxu0 %v510
    %2123 = vmatmul.mubr.bf16.gmra.mrb[0].mxu0 %v509
    %v2124 = vpop.f32.mrb[0].mxu0
    %v2125 = vadd.f32 %v472, %v2124
    %v2126 = vpop.f32.mrb[0].mxu0
    %v2127 = vadd.f32 %v476, %v2126
    %v2128 = vpop.f32.mrb[0].mxu0
    %v2129 = vadd.f32 %v472, %v2128
    %v2130 = vpop.f32.mrb[0].mxu0
    %v2131 = vadd.f32 %v476, %v2130
    %2132 = vdwg.mxu0
    %2133 = vmatprep.subr.bf16.mxu0 %v1484
    %2134 = vmatpush1.bf16.msra.mxu0 %v1483
    %2135 = vmatprep.subr.bf16.mxu0 %v1490
    %2136 = vmatpush1.bf16.msra.mxu0 %v1489
    %2137 = vmatprep.subr.bf16.mxu0 %v1496
    %2138 = vmatpush1.bf16.msra.mxu0 %v1495
    %2139 = vmatprep.subr.bf16.mxu0 %v1502
    %2140 = vmatpush1.bf16.msra.mxu0 %v1501
    %2141 = vmatprep.subr.bf16.mxu0 %v1508
    %2142 = vmatpush1.bf16.msra.mxu0 %v1507
    %2143 = vmatprep.subr.bf16.mxu0 %v1514
    %2144 = vmatpush1.bf16.msra.mxu0 %v1513
    %2145 = vmatprep.subr.bf16.mxu0 %v1520
    %2146 = vmatpush1.bf16.msra.mxu0 %v1519
    %2147 = vmatprep.subr.bf16.mxu0 %v1526
    %2148 = vmatpush1.bf16.msra.mxu0 %v1525
    %2149 = vmatprep.subr.bf16.mxu0 %v1532
    %2150 = vmatpush1.bf16.msra.mxu0 %v1531
    %2151 = vmatprep.subr.bf16.mxu0 %v1538
    %2152 = vmatpush1.bf16.msra.mxu0 %v1537
    %2153 = vmatprep.subr.bf16.mxu0 %v1544
    %2154 = vmatpush1.bf16.msra.mxu0 %v1543
    %2155 = vmatprep.subr.bf16.mxu0 %v1550
    %2156 = vmatpush1.bf16.msra.mxu0 %v1549
    %2157 = vmatprep.subr.bf16.mxu0 %v1556
    %2158 = vmatpush1.bf16.msra.mxu0 %v1555
    %2159 = vmatprep.subr.bf16.mxu0 %v1562
    %2160 = vmatpush1.bf16.msra.mxu0 %v1561
    %2161 = vmatprep.subr.bf16.mxu0 %v1568
    %2162 = vmatpush1.bf16.msra.mxu0 %v1567
    %2163 = vmatprep.subr.bf16.mxu0 %v1574
    %2164 = vmatpush1.bf16.msra.mxu0 %v1573
    %2165 = vmatprep.mubr.bf16.mxu0 %v512
    %2166 = vmatmul.mubr.bf16.gmra.mrb[0].mxu0 %v511
    %v2167 = vpop.f32.mrb[0].mxu0
    %v2168 = vadd.f32 %v2125, %v2167
    %v2169 = vpop.f32.mrb[0].mxu0
    %v2170 = vadd.f32 %v2127, %v2169
    %v2171 = vpop.f32.mrb[0].mxu0
    %v2172 = vadd.f32 %v2129, %v2171
    %v2173 = vpop.f32.mrb[0].mxu0
    %v2174 = vadd.f32 %v2131, %v2173
    %2175 = vdwg.mxu0
    %2176 = vmatprep.subr.bf16.mxu0 %v1580
    %2177 = vmatpush1.bf16.msra.mxu0 %v1579
    %2178 = vmatprep.subr.bf16.mxu0 %v1586
    %2179 = vmatpush1.bf16.msra.mxu0 %v1585
    %2180 = vmatprep.subr.bf16.mxu0 %v1592
    %2181 = vmatpush1.bf16.msra.mxu0 %v1591
    %2182 = vmatprep.subr.bf16.mxu0 %v1598
    %2183 = vmatpush1.bf16.msra.mxu0 %v1597
    %2184 = vmatprep.subr.bf16.mxu0 %v1604
    %2185 = vmatpush1.bf16.msra.mxu0 %v1603
    %2186 = vmatprep.subr.bf16.mxu0 %v1610
    %2187 = vmatpush1.bf16.msra.mxu0 %v1609
    %2188 = vmatprep.subr.bf16.mxu0 %v1616
    %2189 = vmatpush1.bf16.msra.mxu0 %v1615
    %2190 = vmatprep.subr.bf16.mxu0 %v1622
    %2191 = vmatpush1.bf16.msra.mxu0 %v1621
    %2192 = vmatprep.subr.bf16.mxu0 %v1628
    %2193 = vmatpush1.bf16.msra.mxu0 %v1627
    %2194 = vmatprep.subr.bf16.mxu0 %v1634
    %2195 = vmatpush1.bf16.msra.mxu0 %v1633
    %2196 = vmatprep.subr.bf16.mxu0 %v1640
    %2197 = vmatpush1.bf16.msra.mxu0 %v1639
    %2198 = vmatprep.subr.bf16.mxu0 %v1646
    %2199 = vmatpush1.bf16.msra.mxu0 %v1645
    %2200 = vmatprep.subr.bf16.mxu0 %v1652
    %2201 = vmatpush1.bf16.msra.mxu0 %v1651
    %2202 = vmatprep.subr.bf16.mxu0 %v1658
    %2203 = vmatpush1.bf16.msra.mxu0 %v1657
    %2204 = vmatprep.subr.bf16.mxu0 %v1664
    %2205 = vmatpush1.bf16.msra.mxu0 %v1663
    %2206 = vmatprep.subr.bf16.mxu0 %v1670
    %2207 = vmatpush1.bf16.msra.mxu0 %v1669
    %2208 = vmatprep.mubr.bf16.mxu0 %v514
    %2209 = vmatmul.mubr.bf16.gmra.mrb[0].mxu0 %v513
    %v2210 = vpop.f32.mrb[0].mxu0
    %v2211 = vadd.f32 %v2168, %v2210
    %v2212 = vpop.f32.mrb[0].mxu0
    %v2213 = vadd.f32 %v2170, %v2212
    %v2214 = vpop.f32.mrb[0].mxu0
    %v2215 = vadd.f32 %v2172, %v2214
    %v2216 = vpop.f32.mrb[0].mxu0
    %v2217 = vadd.f32 %v2174, %v2216
    %2218 = vdwg.mxu0
    %2219 = vmatprep.subr.bf16.mxu0 %v1390
    %2220 = vmatpush1.bf16.msra.mxu0 %v1389
    %2221 = vmatprep.subr.bf16.mxu0 %v1396
    %2222 = vmatpush1.bf16.msra.mxu0 %v1395
    %2223 = vmatprep.subr.bf16.mxu0 %v1402
    %2224 = vmatpush1.bf16.msra.mxu0 %v1401
    %2225 = vmatprep.subr.bf16.mxu0 %v1408
    %2226 = vmatpush1.bf16.msra.mxu0 %v1407
    %2227 = vmatprep.subr.bf16.mxu0 %v1414
    %2228 = vmatpush1.bf16.msra.mxu0 %v1413
    %2229 = vmatprep.subr.bf16.mxu0 %v1420
    %2230 = vmatpush1.bf16.msra.mxu0 %v1419
    %2231 = vmatprep.subr.bf16.mxu0 %v1426
    %2232 = vmatpush1.bf16.msra.mxu0 %v1425
    %2233 = vmatprep.subr.bf16.mxu0 %v1432
    %2234 = vmatpush1.bf16.msra.mxu0 %v1431
    %2235 = vmatprep.subr.bf16.mxu0 %v1438
    %2236 = vmatpush1.bf16.msra.mxu0 %v1437
    %2237 = vmatprep.subr.bf16.mxu0 %v1444
    %2238 = vmatpush1.bf16.msra.mxu0 %v1443
    %2239 = vmatprep.subr.bf16.mxu0 %v1450
    %2240 = vmatpush1.bf16.msra.mxu0 %v1449
    %2241 = vmatprep.subr.bf16.mxu0 %v1456
    %2242 = vmatpush1.bf16.msra.mxu0 %v1455
    %2243 = vmatprep.subr.bf16.mxu0 %v1462
    %2244 = vmatpush1.bf16.msra.mxu0 %v1461
    %2245 = vmatprep.subr.bf16.mxu0 %v1468
    %2246 = vmatpush1.bf16.msra.mxu0 %v1467
    %2247 = vmatprep.subr.bf16.mxu0 %v1474
    %2248 = vmatpush1.bf16.msra.mxu0 %v1473
    %2249 = vmatprep.subr.bf16.mxu0 %v1480
    %2250 = vmatpush1.bf16.msra.mxu0 %v1479
    %2251 = vmatprep.mubr.bf16.mxu0 %v510
    %2252 = vmatmul.mubr.bf16.gmra.mrb[0].mxu0 %v509
    %v2253 = vpop.f32.mrb[0].mxu0
    %v2254 = vadd.f32 %v480, %v2253
    %v2255 = vpop.f32.mrb[0].mxu0
    %v2256 = vadd.f32 %v484, %v2255
    %v2257 = vpop.f32.mrb[0].mxu0
    %v2258 = vadd.f32 %v480, %v2257
    %v2259 = vpop.f32.mrb[0].mxu0
    %v2260 = vadd.f32 %v484, %v2259
    %2261 = vdwg.mxu0
    %2262 = vmatprep.subr.bf16.mxu0 %v1486
    %2263 = vmatpush1.bf16.msra.mxu0 %v1485
    %2264 = vmatprep.subr.bf16.mxu0 %v1492
    %2265 = vmatpush1.bf16.msra.mxu0 %v1491
    %2266 = vmatprep.subr.bf16.mxu0 %v1498
    %2267 = vmatpush1.bf16.msra.mxu0 %v1497
    %2268 = vmatprep.subr.bf16.mxu0 %v1504
    %2269 = vmatpush1.bf16.msra.mxu0 %v1503
    %2270 = vmatprep.subr.bf16.mxu0 %v1510
    %2271 = vmatpush1.bf16.msra.mxu0 %v1509
    %2272 = vmatprep.subr.bf16.mxu0 %v1516
    %2273 = vmatpush1.bf16.msra.mxu0 %v1515
    %2274 = vmatprep.subr.bf16.mxu0 %v1522
    %2275 = vmatpush1.bf16.msra.mxu0 %v1521
    %2276 = vmatprep.subr.bf16.mxu0 %v1528
    %2277 = vmatpush1.bf16.msra.mxu0 %v1527
    %2278 = vmatprep.subr.bf16.mxu0 %v1534
    %2279 = vmatpush1.bf16.msra.mxu0 %v1533
    %2280 = vmatprep.subr.bf16.mxu0 %v1540
    %2281 = vmatpush1.bf16.msra.mxu0 %v1539
    %2282 = vmatprep.subr.bf16.mxu0 %v1546
    %2283 = vmatpush1.bf16.msra.mxu0 %v1545
    %2284 = vmatprep.subr.bf16.mxu0 %v1552
    %2285 = vmatpush1.bf16.msra.mxu0 %v1551
    %2286 = vmatprep.subr.bf16.mxu0 %v1558
    %2287 = vmatpush1.bf16.msra.mxu0 %v1557
    %2288 = vmatprep.subr.bf16.mxu0 %v1564
    %2289 = vmatpush1.bf16.msra.mxu0 %v1563
    %2290 = vmatprep.subr.bf16.mxu0 %v1570
    %2291 = vmatpush1.bf16.msra.mxu0 %v1569
    %2292 = vmatprep.subr.bf16.mxu0 %v1576
    %2293 = vmatpush1.bf16.msra.mxu0 %v1575
    %2294 = vmatprep.mubr.bf16.mxu0 %v512
    %2295 = vmatmul.mubr.bf16.gmra.mrb[0].mxu0 %v511
    %v2296 = vpop.f32.mrb[0].mxu0
    %v2297 = vadd.f32 %v2254, %v2296
    %v2298 = vpop.f32.mrb[0].mxu0
    %v2299 = vadd.f32 %v2256, %v2298
    %v2300 = vpop.f32.mrb[0].mxu0
    %v2301 = vadd.f32 %v2258, %v2300
    %v2302 = vpop.f32.mrb[0].mxu0
    %v2303 = vadd.f32 %v2260, %v2302
    %2304 = vdwg.mxu0
    %2305 = vmatprep.subr.bf16.mxu0 %v1582
    %2306 = vmatpush1.bf16.msra.mxu0 %v1581
    %2307 = vmatprep.subr.bf16.mxu0 %v1588
    %2308 = vmatpush1.bf16.msra.mxu0 %v1587
    %2309 = vmatprep.subr.bf16.mxu0 %v1594
    %2310 = vmatpush1.bf16.msra.mxu0 %v1593
    %2311 = vmatprep.subr.bf16.mxu0 %v1600
    %2312 = vmatpush1.bf16.msra.mxu0 %v1599
    %2313 = vmatprep.subr.bf16.mxu0 %v1606
    %2314 = vmatpush1.bf16.msra.mxu0 %v1605
    %2315 = vmatprep.subr.bf16.mxu0 %v1612
    %2316 = vmatpush1.bf16.msra.mxu0 %v1611
    %2317 = vmatprep.subr.bf16.mxu0 %v1618
    %2318 = vmatpush1.bf16.msra.mxu0 %v1617
    %2319 = vmatprep.subr.bf16.mxu0 %v1624
    %2320 = vmatpush1.bf16.msra.mxu0 %v1623
    %2321 = vmatprep.subr.bf16.mxu0 %v1630
    %2322 = vmatpush1.bf16.msra.mxu0 %v1629
    %2323 = vmatprep.subr.bf16.mxu0 %v1636
    %2324 = vmatpush1.bf16.msra.mxu0 %v1635
    %2325 = vmatprep.subr.bf16.mxu0 %v1642
    %2326 = vmatpush1.bf16.msra.mxu0 %v1641
    %2327 = vmatprep.subr.bf16.mxu0 %v1648
    %2328 = vmatpush1.bf16.msra.mxu0 %v1647
    %2329 = vmatprep.subr.bf16.mxu0 %v1654
    %2330 = vmatpush1.bf16.msra.mxu0 %v1653
    %2331 = vmatprep.subr.bf16.mxu0 %v1660
    %2332 = vmatpush1.bf16.msra.mxu0 %v1659
    %2333 = vmatprep.subr.bf16.mxu0 %v1666
    %2334 = vmatpush1.bf16.msra.mxu0 %v1665
    %2335 = vmatprep.subr.bf16.mxu0 %v1672
    %2336 = vmatpush1.bf16.msra.mxu0 %v1671
    %2337 = vmatprep.mubr.bf16.mxu0 %v514
    %2338 = vmatmul.mubr.bf16.gmra.mrb[0].mxu0 %v513
    %v2339 = vpop.f32.mrb[0].mxu0
    %v2340 = vadd.f32 %v2297, %v2339
    %v2341 = vpop.f32.mrb[0].mxu0
    %v2342 = vadd.f32 %v2299, %v2341
    %v2343 = vpop.f32.mrb[0].mxu0
    %v2344 = vadd.f32 %v2301, %v2343
    %v2345 = vpop.f32.mrb[0].mxu0
    %v2346 = vadd.f32 %v2303, %v2345
    %2347 = vdwg.mxu0
    %v2348 = vtanh.pop %v2082
    %v2349 = vtanh.pop %v2084
    %v2350 = vtanh.pop %v2211
    %v2351 = vtanh.pop %v2213
    %v2352 = vtanh.pop %v2340
    %v2353 = vtanh.pop %v2342
    %v2354 = vtanh.pop %v2086
    %v2355 = vtanh.pop %v2088
    %v2356 = vtanh.pop %v2215
    %v2357 = vtanh.pop %v2217
    %v2358 = vtanh.pop %v2344
    %v2359 = vtanh.pop %v2346
    %v2360 = vpack.c.bf16 %v2354, %v2348
    %v2361 = vpack.c.bf16 %v2355, %v2349
    %v2362 = vpack.c.bf16 %v2356, %v2350
    %v2363 = vpack.c.bf16 %v2357, %v2351
    %v2364 = vpack.c.bf16 %v2358, %v2352
    %v2365 = vpack.c.bf16 %v2359, %v2353
    %v2366 = vld [vmem:[#allocation8] sm:$0xff]
    %v2367 = vld [vmem:[#allocation8 + $0x8] sm:$0xff]
    %v2368 = vld [vmem:[#allocation8 + $0x10] sm:$0xff]
    %v2369 = vld [vmem:[#allocation8 + $0x18] sm:$0xff]
    %v2370 = vld [vmem:[#allocation8 + $0x20] sm:$0xff]
    %v2371 = vld [vmem:[#allocation8 + $0x28] sm:$0xff]
    %v2372 = vld [vmem:[#allocation8 + $0x30] sm:$0xff]
    %v2373 = vld [vmem:[#allocation8 + $0x38] sm:$0xff]
    %v2374 = vld [vmem:[#allocation8 + $0x40] sm:$0xff]
    %v2375 = vld [vmem:[#allocation8 + $0x48] sm:$0xff]
    %v2376 = vld [vmem:[#allocation8 + $0x50] sm:$0xff]
    %v2377 = vld [vmem:[#allocation8 + $0x58] sm:$0xff]
    %v2378 = vld [vmem:[#allocation8 + $0x60] sm:$0xff]
    %v2379 = vld [vmem:[#allocation8 + $0x68] sm:$0xff]
    %v2380 = vld [vmem:[#allocation8 + $0x70] sm:$0xff]
    %v2381 = vld [vmem:[#allocation8 + $0x78] sm:$0xff]
    %v2382 = vld [vmem:[#allocation8 + $0x80] sm:$0xff]
    %v2383 = vld [vmem:[#allocation8 + $0x88] sm:$0xff]
    %v2384 = vld [vmem:[#allocation8 + $0x90] sm:$0xff]
    %v2385 = vld [vmem:[#allocation8 + $0x98] sm:$0xff]
    %v2386 = vld [vmem:[#allocation8 + $0xa0] sm:$0xff]
    %v2387 = vld [vmem:[#allocation8 + $0xa8] sm:$0xff]
    %v2388 = vld [vmem:[#allocation8 + $0xb0] sm:$0xff]
    %v2389 = vld [vmem:[#allocation8 + $0xb8] sm:$0xff]
    %v2390 = vld [vmem:[#allocation8 + $0xc0] sm:$0xff]
    %v2391 = vld [vmem:[#allocation8 + $0xc8] sm:$0xff]
    %v2392 = vld [vmem:[#allocation8 + $0xd0] sm:$0xff]
    %v2393 = vld [vmem:[#allocation8 + $0xd8] sm:$0xff]
    %v2394 = vld [vmem:[#allocation8 + $0xe0] sm:$0xff]
    %v2395 = vld [vmem:[#allocation8 + $0xe8] sm:$0xff]
    %v2396 = vld [vmem:[#allocation8 + $0xf0] sm:$0xff]
    %v2397 = vld [vmem:[#allocation8 + $0xf8] sm:$0xff]
    %v2398 = vld [vmem:[#allocation8 + $0x100] sm:$0xff]
    %v2399 = vld [vmem:[#allocation8 + $0x108] sm:$0xff]
    %v2400 = vld [vmem:[#allocation8 + $0x110] sm:$0xff]
    %v2401 = vld [vmem:[#allocation8 + $0x118] sm:$0xff]
    %v2402 = vld [vmem:[#allocation8 + $0x120] sm:$0xff]
    %v2403 = vld [vmem:[#allocation8 + $0x128] sm:$0xff]
    %v2404 = vld [vmem:[#allocation8 + $0x130] sm:$0xff]
    %v2405 = vld [vmem:[#allocation8 + $0x138] sm:$0xff]
    %v2406 = vld [vmem:[#allocation8 + $0x140] sm:$0xff]
    %v2407 = vld [vmem:[#allocation8 + $0x148] sm:$0xff]
    %v2408 = vld [vmem:[#allocation8 + $0x150] sm:$0xff]
    %v2409 = vld [vmem:[#allocation8 + $0x158] sm:$0xff]
    %v2410 = vld [vmem:[#allocation8 + $0x160] sm:$0xff]
    %v2411 = vld [vmem:[#allocation8 + $0x168] sm:$0xff]
    %v2412 = vld [vmem:[#allocation8 + $0x170] sm:$0xff]
    %v2413 = vld [vmem:[#allocation8 + $0x178] sm:$0xff]
    %v2414 = vld [vmem:[#allocation8 + $0x180] sm:$0xff]
    %v2415 = vld [vmem:[#allocation8 + $0x188] sm:$0xff]
    %v2416 = vld [vmem:[#allocation8 + $0x190] sm:$0xff]
    %v2417 = vld [vmem:[#allocation8 + $0x198] sm:$0xff]
    %v2418 = vld [vmem:[#allocation8 + $0x1a0] sm:$0xff]
    %v2419 = vld [vmem:[#allocation8 + $0x1a8] sm:$0xff]
    %v2420 = vld [vmem:[#allocation8 + $0x1b0] sm:$0xff]
    %v2421 = vld [vmem:[#allocation8 + $0x1b8] sm:$0xff]
    %v2422 = vld [vmem:[#allocation8 + $0x1c0] sm:$0xff]
    %v2423 = vld [vmem:[#allocation8 + $0x1c8] sm:$0xff]
    %v2424 = vld [vmem:[#allocation8 + $0x1d0] sm:$0xff]
    %v2425 = vld [vmem:[#allocation8 + $0x1d8] sm:$0xff]
    %v2426 = vld [vmem:[#allocation8 + $0x1e0] sm:$0xff]
    %v2427 = vld [vmem:[#allocation8 + $0x1e8] sm:$0xff]
    %v2428 = vld [vmem:[#allocation8 + $0x1f0] sm:$0xff]
    %v2429 = vld [vmem:[#allocation8 + $0x1f8] sm:$0xff]
    %v2430 = vld [vmem:[#allocation8 + $0x200] sm:$0xff]
    %v2431 = vld [vmem:[#allocation8 + $0x208] sm:$0xff]
    %v2432 = vld [vmem:[#allocation8 + $0x210] sm:$0xff]
    %v2433 = vld [vmem:[#allocation8 + $0x218] sm:$0xff]
    %v2434 = vld [vmem:[#allocation8 + $0x220] sm:$0xff]
    %v2435 = vld [vmem:[#allocation8 + $0x228] sm:$0xff]
    %v2436 = vld [vmem:[#allocation8 + $0x230] sm:$0xff]
    %v2437 = vld [vmem:[#allocation8 + $0x238] sm:$0xff]
    %v2438 = vld [vmem:[#allocation8 + $0x240] sm:$0xff]
    %v2439 = vld [vmem:[#allocation8 + $0x248] sm:$0xff]
    %v2440 = vld [vmem:[#allocation8 + $0x250] sm:$0xff]
    %v2441 = vld [vmem:[#allocation8 + $0x258] sm:$0xff]
    %v2442 = vld [vmem:[#allocation8 + $0x260] sm:$0xff]
    %v2443 = vld [vmem:[#allocation8 + $0x268] sm:$0xff]
    %v2444 = vld [vmem:[#allocation8 + $0x270] sm:$0xff]
    %v2445 = vld [vmem:[#allocation8 + $0x278] sm:$0xff]
    %v2446 = vld [vmem:[#allocation8 + $0x280] sm:$0xff]
    %v2447 = vld [vmem:[#allocation8 + $0x288] sm:$0xff]
    %v2448 = vld [vmem:[#allocation8 + $0x290] sm:$0xff]
    %v2449 = vld [vmem:[#allocation8 + $0x298] sm:$0xff]
    %v2450 = vld [vmem:[#allocation8 + $0x2a0] sm:$0xff]
    %v2451 = vld [vmem:[#allocation8 + $0x2a8] sm:$0xff]
    %v2452 = vld [vmem:[#allocation8 + $0x2b0] sm:$0xff]
    %v2453 = vld [vmem:[#allocation8 + $0x2b8] sm:$0xff]
    %v2454 = vld [vmem:[#allocation8 + $0x2c0] sm:$0xff]
    %v2455 = vld [vmem:[#allocation8 + $0x2c8] sm:$0xff]
    %v2456 = vld [vmem:[#allocation8 + $0x2d0] sm:$0xff]
    %v2457 = vld [vmem:[#allocation8 + $0x2d8] sm:$0xff]
    %v2458 = vld [vmem:[#allocation8 + $0x2e0] sm:$0xff]
    %v2459 = vld [vmem:[#allocation8 + $0x2e8] sm:$0xff]
    %v2460 = vld [vmem:[#allocation8 + $0x2f0] sm:$0xff]
    %v2461 = vld [vmem:[#allocation8 + $0x2f8] sm:$0xff]
    %v2462 = vld [vmem:[#allocation8 + $0x300] sm:$0xff]
    %v2463 = vld [vmem:[#allocation8 + $0x308] sm:$0xff]
    %v2464 = vld [vmem:[#allocation8 + $0x310] sm:$0xff]
    %v2465 = vld [vmem:[#allocation8 + $0x318] sm:$0xff]
    %v2466 = vld [vmem:[#allocation8 + $0x320] sm:$0xff]
    %v2467 = vld [vmem:[#allocation8 + $0x328] sm:$0xff]
    %v2468 = vld [vmem:[#allocation8 + $0x330] sm:$0xff]
    %v2469 = vld [vmem:[#allocation8 + $0x338] sm:$0xff]
    %v2470 = vld [vmem:[#allocation8 + $0x340] sm:$0xff]
    %v2471 = vld [vmem:[#allocation8 + $0x348] sm:$0xff]
    %v2472 = vld [vmem:[#allocation8 + $0x350] sm:$0xff]
    %v2473 = vld [vmem:[#allocation8 + $0x358] sm:$0xff]
    %v2474 = vld [vmem:[#allocation8 + $0x360] sm:$0xff]
    %v2475 = vld [vmem:[#allocation8 + $0x368] sm:$0xff]
    %v2476 = vld [vmem:[#allocation8 + $0x370] sm:$0xff]
    %v2477 = vld [vmem:[#allocation8 + $0x378] sm:$0xff]
    %v2478 = vld [vmem:[#allocation8 + $0x380] sm:$0xff]
    %v2479 = vld [vmem:[#allocation8 + $0x388] sm:$0xff]
    %v2480 = vld [vmem:[#allocation8 + $0x390] sm:$0xff]
    %v2481 = vld [vmem:[#allocation8 + $0x398] sm:$0xff]
    %v2482 = vld [vmem:[#allocation8 + $0x3a0] sm:$0xff]
    %v2483 = vld [vmem:[#allocation8 + $0x3a8] sm:$0xff]
    %v2484 = vld [vmem:[#allocation8 + $0x3b0] sm:$0xff]
    %v2485 = vld [vmem:[#allocation8 + $0x3b8] sm:$0xff]
    %v2486 = vld [vmem:[#allocation8 + $0x3c0] sm:$0xff]
    %v2487 = vld [vmem:[#allocation8 + $0x3c8] sm:$0xff]
    %v2488 = vld [vmem:[#allocation8 + $0x3d0] sm:$0xff]
    %v2489 = vld [vmem:[#allocation8 + $0x3d8] sm:$0xff]
    %v2490 = vld [vmem:[#allocation8 + $0x3e0] sm:$0xff]
    %v2491 = vld [vmem:[#allocation8 + $0x3e8] sm:$0xff]
    %v2492 = vld [vmem:[#allocation8 + $0x3f0] sm:$0xff]
    %v2493 = vld [vmem:[#allocation8 + $0x3f8] sm:$0xff]
    %v2494 = vld [vmem:[#allocation8 + $0x400] sm:$0xff]
    %v2495 = vld [vmem:[#allocation8 + $0x408] sm:$0xff]
    %v2496 = vld [vmem:[#allocation8 + $0x410] sm:$0xff]
    %v2497 = vld [vmem:[#allocation8 + $0x418] sm:$0xff]
    %v2498 = vld [vmem:[#allocation8 + $0x420] sm:$0xff]
    %v2499 = vld [vmem:[#allocation8 + $0x428] sm:$0xff]
    %v2500 = vld [vmem:[#allocation8 + $0x430] sm:$0xff]
    %v2501 = vld [vmem:[#allocation8 + $0x438] sm:$0xff]
    %v2502 = vld [vmem:[#allocation8 + $0x440] sm:$0xff]
    %v2503 = vld [vmem:[#allocation8 + $0x448] sm:$0xff]
    %v2504 = vld [vmem:[#allocation8 + $0x450] sm:$0xff]
    %v2505 = vld [vmem:[#allocation8 + $0x458] sm:$0xff]
    %v2506 = vld [vmem:[#allocation8 + $0x460] sm:$0xff]
    %v2507 = vld [vmem:[#allocation8 + $0x468] sm:$0xff]
    %v2508 = vld [vmem:[#allocation8 + $0x470] sm:$0xff]
    %v2509 = vld [vmem:[#allocation8 + $0x478] sm:$0xff]
    %v2510 = vld [vmem:[#allocation8 + $0x480] sm:$0xff]
    %v2511 = vld [vmem:[#allocation8 + $0x488] sm:$0xff]
    %v2512 = vld [vmem:[#allocation8 + $0x490] sm:$0xff]
    %v2513 = vld [vmem:[#allocation8 + $0x498] sm:$0xff]
    %v2514 = vld [vmem:[#allocation8 + $0x4a0] sm:$0xff]
    %v2515 = vld [vmem:[#allocation8 + $0x4a8] sm:$0xff]
    %v2516 = vld [vmem:[#allocation8 + $0x4b0] sm:$0xff]
    %v2517 = vld [vmem:[#allocation8 + $0x4b8] sm:$0xff]
    %v2518 = vld [vmem:[#allocation8 + $0x4c0] sm:$0xff]
    %v2519 = vld [vmem:[#allocation8 + $0x4c8] sm:$0xff]
    %v2520 = vld [vmem:[#allocation8 + $0x4d0] sm:$0xff]
    %v2521 = vld [vmem:[#allocation8 + $0x4d8] sm:$0xff]
    %v2522 = vld [vmem:[#allocation8 + $0x4e0] sm:$0xff]
    %v2523 = vld [vmem:[#allocation8 + $0x4e8] sm:$0xff]
    %v2524 = vld [vmem:[#allocation8 + $0x4f0] sm:$0xff]
    %v2525 = vld [vmem:[#allocation8 + $0x4f8] sm:$0xff]
    %v2526 = vld [vmem:[#allocation8 + $0x500] sm:$0xff]
    %v2527 = vld [vmem:[#allocation8 + $0x508] sm:$0xff]
    %v2528 = vld [vmem:[#allocation8 + $0x510] sm:$0xff]
    %v2529 = vld [vmem:[#allocation8 + $0x518] sm:$0xff]
    %v2530 = vld [vmem:[#allocation8 + $0x520] sm:$0xff]
    %v2531 = vld [vmem:[#allocation8 + $0x528] sm:$0xff]
    %v2532 = vld [vmem:[#allocation8 + $0x530] sm:$0xff]
    %v2533 = vld [vmem:[#allocation8 + $0x538] sm:$0xff]
    %v2534 = vld [vmem:[#allocation8 + $0x540] sm:$0xff]
    %v2535 = vld [vmem:[#allocation8 + $0x548] sm:$0xff]
    %v2536 = vld [vmem:[#allocation8 + $0x550] sm:$0xff]
    %v2537 = vld [vmem:[#allocation8 + $0x558] sm:$0xff]
    %v2538 = vld [vmem:[#allocation8 + $0x560] sm:$0xff]
    %v2539 = vld [vmem:[#allocation8 + $0x568] sm:$0xff]
    %v2540 = vld [vmem:[#allocation8 + $0x570] sm:$0xff]
    %v2541 = vld [vmem:[#allocation8 + $0x578] sm:$0xff]
    %v2542 = vld [vmem:[#allocation8 + $0x580] sm:$0xff]
    %v2543 = vld [vmem:[#allocation8 + $0x588] sm:$0xff]
    %v2544 = vld [vmem:[#allocation8 + $0x590] sm:$0xff]
    %v2545 = vld [vmem:[#allocation8 + $0x598] sm:$0xff]
    %v2546 = vld [vmem:[#allocation8 + $0x5a0] sm:$0xff]
    %v2547 = vld [vmem:[#allocation8 + $0x5a8] sm:$0xff]
    %v2548 = vld [vmem:[#allocation8 + $0x5b0] sm:$0xff]
    %v2549 = vld [vmem:[#allocation8 + $0x5b8] sm:$0xff]
    %v2550 = vld [vmem:[#allocation8 + $0x5c0] sm:$0xff]
    %v2551 = vld [vmem:[#allocation8 + $0x5c8] sm:$0xff]
    %v2552 = vld [vmem:[#allocation8 + $0x5d0] sm:$0xff]
    %v2553 = vld [vmem:[#allocation8 + $0x5d8] sm:$0xff]
    %v2554 = vld [vmem:[#allocation8 + $0x5e0] sm:$0xff]
    %v2555 = vld [vmem:[#allocation8 + $0x5e8] sm:$0xff]
    %v2556 = vld [vmem:[#allocation8 + $0x5f0] sm:$0xff]
    %v2557 = vld [vmem:[#allocation8 + $0x5f8] sm:$0xff]
    %v2558 = vld [vmem:[#allocation8 + $0x600] sm:$0xff]
    %v2559 = vld [vmem:[#allocation8 + $0x608] sm:$0xff]
    %v2560 = vld [vmem:[#allocation8 + $0x610] sm:$0xff]
    %v2561 = vld [vmem:[#allocation8 + $0x618] sm:$0xff]
    %v2562 = vld [vmem:[#allocation8 + $0x620] sm:$0xff]
    %v2563 = vld [vmem:[#allocation8 + $0x628] sm:$0xff]
    %v2564 = vld [vmem:[#allocation8 + $0x630] sm:$0xff]
    %v2565 = vld [vmem:[#allocation8 + $0x638] sm:$0xff]
    %v2566 = vld [vmem:[#allocation8 + $0x640] sm:$0xff]
    %v2567 = vld [vmem:[#allocation8 + $0x648] sm:$0xff]
    %v2568 = vld [vmem:[#allocation8 + $0x650] sm:$0xff]
    %v2569 = vld [vmem:[#allocation8 + $0x658] sm:$0xff]
    %v2570 = vld [vmem:[#allocation8 + $0x660] sm:$0xff]
    %v2571 = vld [vmem:[#allocation8 + $0x668] sm:$0xff]
    %v2572 = vld [vmem:[#allocation8 + $0x670] sm:$0xff]
    %v2573 = vld [vmem:[#allocation8 + $0x678] sm:$0xff]
    %v2574 = vld [vmem:[#allocation8 + $0x680] sm:$0xff]
    %v2575 = vld [vmem:[#allocation8 + $0x688] sm:$0xff]
    %v2576 = vld [vmem:[#allocation8 + $0x690] sm:$0xff]
    %v2577 = vld [vmem:[#allocation8 + $0x698] sm:$0xff]
    %v2578 = vld [vmem:[#allocation8 + $0x6a0] sm:$0xff]
    %v2579 = vld [vmem:[#allocation8 + $0x6a8] sm:$0xff]
    %v2580 = vld [vmem:[#allocation8 + $0x6b0] sm:$0xff]
    %v2581 = vld [vmem:[#allocation8 + $0x6b8] sm:$0xff]
    %v2582 = vld [vmem:[#allocation8 + $0x6c0] sm:$0xff]
    %v2583 = vld [vmem:[#allocation8 + $0x6c8] sm:$0xff]
    %v2584 = vld [vmem:[#allocation8 + $0x6d0] sm:$0xff]
    %v2585 = vld [vmem:[#allocation8 + $0x6d8] sm:$0xff]
    %v2586 = vld [vmem:[#allocation8 + $0x6e0] sm:$0xff]
    %v2587 = vld [vmem:[#allocation8 + $0x6e8] sm:$0xff]
    %v2588 = vld [vmem:[#allocation8 + $0x6f0] sm:$0xff]
    %v2589 = vld [vmem:[#allocation8 + $0x6f8] sm:$0xff]
    %v2590 = vld [vmem:[#allocation8 + $0x700] sm:$0xff]
    %v2591 = vld [vmem:[#allocation8 + $0x708] sm:$0xff]
    %v2592 = vld [vmem:[#allocation8 + $0x710] sm:$0xff]
    %v2593 = vld [vmem:[#allocation8 + $0x718] sm:$0xff]
    %v2594 = vld [vmem:[#allocation8 + $0x720] sm:$0xff]
    %v2595 = vld [vmem:[#allocation8 + $0x728] sm:$0xff]
    %v2596 = vld [vmem:[#allocation8 + $0x730] sm:$0xff]
    %v2597 = vld [vmem:[#allocation8 + $0x738] sm:$0xff]
    %v2598 = vld [vmem:[#allocation8 + $0x740] sm:$0xff]
    %v2599 = vld [vmem:[#allocation8 + $0x748] sm:$0xff]
    %v2600 = vld [vmem:[#allocation8 + $0x750] sm:$0xff]
    %v2601 = vld [vmem:[#allocation8 + $0x758] sm:$0xff]
    %v2602 = vld [vmem:[#allocation8 + $0x760] sm:$0xff]
    %v2603 = vld [vmem:[#allocation8 + $0x768] sm:$0xff]
    %v2604 = vld [vmem:[#allocation8 + $0x770] sm:$0xff]
    %v2605 = vld [vmem:[#allocation8 + $0x778] sm:$0xff]
    %v2606 = vld [vmem:[#allocation8 + $0x780] sm:$0xff]
    %v2607 = vld [vmem:[#allocation8 + $0x788] sm:$0xff]
    %v2608 = vld [vmem:[#allocation8 + $0x790] sm:$0xff]
    %v2609 = vld [vmem:[#allocation8 + $0x798] sm:$0xff]
    %v2610 = vld [vmem:[#allocation8 + $0x7a0] sm:$0xff]
    %v2611 = vld [vmem:[#allocation8 + $0x7a8] sm:$0xff]
    %v2612 = vld [vmem:[#allocation8 + $0x7b0] sm:$0xff]
    %v2613 = vld [vmem:[#allocation8 + $0x7b8] sm:$0xff]
    %v2614 = vld [vmem:[#allocation8 + $0x7c0] sm:$0xff]
    %v2615 = vld [vmem:[#allocation8 + $0x7c8] sm:$0xff]
    %v2616 = vld [vmem:[#allocation8 + $0x7d0] sm:$0xff]
    %v2617 = vld [vmem:[#allocation8 + $0x7d8] sm:$0xff]
    %v2618 = vld [vmem:[#allocation8 + $0x7e0] sm:$0xff]
    %v2619 = vld [vmem:[#allocation8 + $0x7e8] sm:$0xff]
    %v2620 = vld [vmem:[#allocation8 + $0x7f0] sm:$0xff]
    %v2621 = vld [vmem:[#allocation8 + $0x7f8] sm:$0xff]
    %v2622 = vld [vmem:[#allocation8 + $0x800] sm:$0xff]
    %v2623 = vld [vmem:[#allocation8 + $0x808] sm:$0xff]
    %v2624 = vld [vmem:[#allocation8 + $0x810] sm:$0xff]
    %v2625 = vld [vmem:[#allocation8 + $0x818] sm:$0xff]
    %v2626 = vld [vmem:[#allocation8 + $0x820] sm:$0xff]
    %v2627 = vld [vmem:[#allocation8 + $0x828] sm:$0xff]
    %v2628 = vld [vmem:[#allocation8 + $0x830] sm:$0xff]
    %v2629 = vld [vmem:[#allocation8 + $0x838] sm:$0xff]
    %v2630 = vld [vmem:[#allocation8 + $0x840] sm:$0xff]
    %v2631 = vld [vmem:[#allocation8 + $0x848] sm:$0xff]
    %v2632 = vld [vmem:[#allocation8 + $0x850] sm:$0xff]
    %v2633 = vld [vmem:[#allocation8 + $0x858] sm:$0xff]
    %v2634 = vld [vmem:[#allocation8 + $0x860] sm:$0xff]
    %v2635 = vld [vmem:[#allocation8 + $0x868] sm:$0xff]
    %v2636 = vld [vmem:[#allocation8 + $0x870] sm:$0xff]
    %v2637 = vld [vmem:[#allocation8 + $0x878] sm:$0xff]
    %v2638 = vld [vmem:[#allocation8 + $0x880] sm:$0xff]
    %v2639 = vld [vmem:[#allocation8 + $0x888] sm:$0xff]
    %v2640 = vld [vmem:[#allocation8 + $0x890] sm:$0xff]
    %v2641 = vld [vmem:[#allocation8 + $0x898] sm:$0xff]
    %v2642 = vld [vmem:[#allocation8 + $0x8a0] sm:$0xff]
    %v2643 = vld [vmem:[#allocation8 + $0x8a8] sm:$0xff]
    %v2644 = vld [vmem:[#allocation8 + $0x8b0] sm:$0xff]
    %v2645 = vld [vmem:[#allocation8 + $0x8b8] sm:$0xff]
    %v2646 = vld [vmem:[#allocation8 + $0x8c0] sm:$0xff]
    %v2647 = vld [vmem:[#allocation8 + $0x8c8] sm:$0xff]
    %v2648 = vld [vmem:[#allocation8 + $0x8d0] sm:$0xff]
    %v2649 = vld [vmem:[#allocation8 + $0x8d8] sm:$0xff]
    %v2650 = vld [vmem:[#allocation8 + $0x8e0] sm:$0xff]
    %v2651 = vld [vmem:[#allocation8 + $0x8e8] sm:$0xff]
    %v2652 = vld [vmem:[#allocation8 + $0x8f0] sm:$0xff]
    %v2653 = vld [vmem:[#allocation8 + $0x8f8] sm:$0xff]
    %v2654 = vld [vmem:[#allocation8 + $0x900] sm:$0xff]
    %v2655 = vld [vmem:[#allocation8 + $0x908] sm:$0xff]
    %v2656 = vld [vmem:[#allocation8 + $0x910] sm:$0xff]
    %v2657 = vld [vmem:[#allocation8 + $0x918] sm:$0xff]
    %v2658 = vld [vmem:[#allocation8 + $0x920] sm:$0xff]
    %v2659 = vld [vmem:[#allocation8 + $0x928] sm:$0xff]
    %v2660 = vld [vmem:[#allocation8 + $0x930] sm:$0xff]
    %v2661 = vld [vmem:[#allocation8 + $0x938] sm:$0xff]
    %v2662 = vld [vmem:[#allocation8 + $0x940] sm:$0xff]
    %v2663 = vld [vmem:[#allocation8 + $0x948] sm:$0xff]
    %v2664 = vld [vmem:[#allocation8 + $0x950] sm:$0xff]
    %v2665 = vld [vmem:[#allocation8 + $0x958] sm:$0xff]
    %v2666 = vld [vmem:[#allocation8 + $0x960] sm:$0xff]
    %v2667 = vld [vmem:[#allocation8 + $0x968] sm:$0xff]
    %v2668 = vld [vmem:[#allocation8 + $0x970] sm:$0xff]
    %v2669 = vld [vmem:[#allocation8 + $0x978] sm:$0xff]
    %v2670 = vld [vmem:[#allocation8 + $0x980] sm:$0xff]
    %v2671 = vld [vmem:[#allocation8 + $0x988] sm:$0xff]
    %v2672 = vld [vmem:[#allocation8 + $0x990] sm:$0xff]
    %v2673 = vld [vmem:[#allocation8 + $0x998] sm:$0xff]
    %v2674 = vld [vmem:[#allocation8 + $0x9a0] sm:$0xff]
    %v2675 = vld [vmem:[#allocation8 + $0x9a8] sm:$0xff]
    %v2676 = vld [vmem:[#allocation8 + $0x9b0] sm:$0xff]
    %v2677 = vld [vmem:[#allocation8 + $0x9b8] sm:$0xff]
    %v2678 = vld [vmem:[#allocation8 + $0x9c0] sm:$0xff]
    %v2679 = vld [vmem:[#allocation8 + $0x9c8] sm:$0xff]
    %v2680 = vld [vmem:[#allocation8 + $0x9d0] sm:$0xff]
    %v2681 = vld [vmem:[#allocation8 + $0x9d8] sm:$0xff]
    %v2682 = vld [vmem:[#allocation8 + $0x9e0] sm:$0xff]
    %v2683 = vld [vmem:[#allocation8 + $0x9e8] sm:$0xff]
    %v2684 = vld [vmem:[#allocation8 + $0x9f0] sm:$0xff]
    %v2685 = vld [vmem:[#allocation8 + $0x9f8] sm:$0xff]
    %v2686 = vld [vmem:[#allocation8 + $0xa00] sm:$0xff]
    %v2687 = vld [vmem:[#allocation8 + $0xa08] sm:$0xff]
    %v2688 = vld [vmem:[#allocation8 + $0xa10] sm:$0xff]
    %v2689 = vld [vmem:[#allocation8 + $0xa18] sm:$0xff]
    %v2690 = vld [vmem:[#allocation8 + $0xa20] sm:$0xff]
    %v2691 = vld [vmem:[#allocation8 + $0xa28] sm:$0xff]
    %v2692 = vld [vmem:[#allocation8 + $0xa30] sm:$0xff]
    %v2693 = vld [vmem:[#allocation8 + $0xa38] sm:$0xff]
    %v2694 = vld [vmem:[#allocation8 + $0xa40] sm:$0xff]
    %v2695 = vld [vmem:[#allocation8 + $0xa48] sm:$0xff]
    %v2696 = vld [vmem:[#allocation8 + $0xa50] sm:$0xff]
    %v2697 = vld [vmem:[#allocation8 + $0xa58] sm:$0xff]
    %v2698 = vld [vmem:[#allocation8 + $0xa60] sm:$0xff]
    %v2699 = vld [vmem:[#allocation8 + $0xa68] sm:$0xff]
    %v2700 = vld [vmem:[#allocation8 + $0xa70] sm:$0xff]
    %v2701 = vld [vmem:[#allocation8 + $0xa78] sm:$0xff]
    %v2702 = vld [vmem:[#allocation8 + $0xa80] sm:$0xff]
    %v2703 = vld [vmem:[#allocation8 + $0xa88] sm:$0xff]
    %v2704 = vld [vmem:[#allocation8 + $0xa90] sm:$0xff]
    %v2705 = vld [vmem:[#allocation8 + $0xa98] sm:$0xff]
    %v2706 = vld [vmem:[#allocation8 + $0xaa0] sm:$0xff]
    %v2707 = vld [vmem:[#allocation8 + $0xaa8] sm:$0xff]
    %v2708 = vld [vmem:[#allocation8 + $0xab0] sm:$0xff]
    %v2709 = vld [vmem:[#allocation8 + $0xab8] sm:$0xff]
    %v2710 = vld [vmem:[#allocation8 + $0xac0] sm:$0xff]
    %v2711 = vld [vmem:[#allocation8 + $0xac8] sm:$0xff]
    %v2712 = vld [vmem:[#allocation8 + $0xad0] sm:$0xff]
    %v2713 = vld [vmem:[#allocation8 + $0xad8] sm:$0xff]
    %v2714 = vld [vmem:[#allocation8 + $0xae0] sm:$0xff]
    %v2715 = vld [vmem:[#allocation8 + $0xae8] sm:$0xff]
    %v2716 = vld [vmem:[#allocation8 + $0xaf0] sm:$0xff]
    %v2717 = vld [vmem:[#allocation8 + $0xaf8] sm:$0xff]
    %v2718 = vld [vmem:[#allocation8 + $0xb00] sm:$0xff]
    %v2719 = vld [vmem:[#allocation8 + $0xb08] sm:$0xff]
    %v2720 = vld [vmem:[#allocation8 + $0xb10] sm:$0xff]
    %v2721 = vld [vmem:[#allocation8 + $0xb18] sm:$0xff]
    %v2722 = vld [vmem:[#allocation8 + $0xb20] sm:$0xff]
    %v2723 = vld [vmem:[#allocation8 + $0xb28] sm:$0xff]
    %v2724 = vld [vmem:[#allocation8 + $0xb30] sm:$0xff]
    %v2725 = vld [vmem:[#allocation8 + $0xb38] sm:$0xff]
    %v2726 = vld [vmem:[#allocation8 + $0xb40] sm:$0xff]
    %v2727 = vld [vmem:[#allocation8 + $0xb48] sm:$0xff]
    %v2728 = vld [vmem:[#allocation8 + $0xb50] sm:$0xff]
    %v2729 = vld [vmem:[#allocation8 + $0xb58] sm:$0xff]
    %v2730 = vld [vmem:[#allocation8 + $0xb60] sm:$0xff]
    %v2731 = vld [vmem:[#allocation8 + $0xb68] sm:$0xff]
    %v2732 = vld [vmem:[#allocation8 + $0xb70] sm:$0xff]
    %v2733 = vld [vmem:[#allocation8 + $0xb78] sm:$0xff]
    %v2734 = vld [vmem:[#allocation8 + $0xb80] sm:$0xff]
    %v2735 = vld [vmem:[#allocation8 + $0xb88] sm:$0xff]
    %v2736 = vld [vmem:[#allocation8 + $0xb90] sm:$0xff]
    %v2737 = vld [vmem:[#allocation8 + $0xb98] sm:$0xff]
    %v2738 = vld [vmem:[#allocation8 + $0xba0] sm:$0xff]
    %v2739 = vld [vmem:[#allocation8 + $0xba8] sm:$0xff]
    %v2740 = vld [vmem:[#allocation8 + $0xbb0] sm:$0xff]
    %v2741 = vld [vmem:[#allocation8 + $0xbb8] sm:$0xff]
    %v2742 = vld [vmem:[#allocation8 + $0xbc0] sm:$0xff]
    %v2743 = vld [vmem:[#allocation8 + $0xbc8] sm:$0xff]
    %v2744 = vld [vmem:[#allocation8 + $0xbd0] sm:$0xff]
    %v2745 = vld [vmem:[#allocation8 + $0xbd8] sm:$0xff]
    %v2746 = vld [vmem:[#allocation8 + $0xbe0] sm:$0xff]
    %v2747 = vld [vmem:[#allocation8 + $0xbe8] sm:$0xff]
    %v2748 = vld [vmem:[#allocation8 + $0xbf0] sm:$0xff]
    %v2749 = vld [vmem:[#allocation8 + $0xbf8] sm:$0xff]
    %v2750 = vld [vmem:[#allocation8 + $0xc00] sm:$0xff]
    %v2751 = vld [vmem:[#allocation8 + $0xc08] sm:$0xff]
    %v2752 = vld [vmem:[#allocation8 + $0xc10] sm:$0xff]
    %v2753 = vld [vmem:[#allocation8 + $0xc18] sm:$0xff]
    %v2754 = vld [vmem:[#allocation8 + $0xc20] sm:$0xff]
    %v2755 = vld [vmem:[#allocation8 + $0xc28] sm:$0xff]
    %v2756 = vld [vmem:[#allocation8 + $0xc30] sm:$0xff]
    %v2757 = vld [vmem:[#allocation8 + $0xc38] sm:$0xff]
    %v2758 = vld [vmem:[#allocation8 + $0xc40] sm:$0xff]
    %v2759 = vld [vmem:[#allocation8 + $0xc48] sm:$0xff]
    %v2760 = vld [vmem:[#allocation8 + $0xc50] sm:$0xff]
    %v2761 = vld [vmem:[#allocation8 + $0xc58] sm:$0xff]
    %v2762 = vld [vmem:[#allocation8 + $0xc60] sm:$0xff]
    %v2763 = vld [vmem:[#allocation8 + $0xc68] sm:$0xff]
    %v2764 = vld [vmem:[#allocation8 + $0xc70] sm:$0xff]
    %v2765 = vld [vmem:[#allocation8 + $0xc78] sm:$0xff]
    %v2766 = vld [vmem:[#allocation8 + $0xc80] sm:$0xff]
    %v2767 = vld [vmem:[#allocation8 + $0xc88] sm:$0xff]
    %v2768 = vld [vmem:[#allocation8 + $0xc90] sm:$0xff]
    %v2769 = vld [vmem:[#allocation8 + $0xc98] sm:$0xff]
    %v2770 = vld [vmem:[#allocation8 + $0xca0] sm:$0xff]
    %v2771 = vld [vmem:[#allocation8 + $0xca8] sm:$0xff]
    %v2772 = vld [vmem:[#allocation8 + $0xcb0] sm:$0xff]
    %v2773 = vld [vmem:[#allocation8 + $0xcb8] sm:$0xff]
    %v2774 = vld [vmem:[#allocation8 + $0xcc0] sm:$0xff]
    %v2775 = vld [vmem:[#allocation8 + $0xcc8] sm:$0xff]
    %v2776 = vld [vmem:[#allocation8 + $0xcd0] sm:$0xff]
    %v2777 = vld [vmem:[#allocation8 + $0xcd8] sm:$0xff]
    %v2778 = vld [vmem:[#allocation8 + $0xce0] sm:$0xff]
    %v2779 = vld [vmem:[#allocation8 + $0xce8] sm:$0xff]
    %v2780 = vld [vmem:[#allocation8 + $0xcf0] sm:$0xff]
    %v2781 = vld [vmem:[#allocation8 + $0xcf8] sm:$0xff]
    %v2782 = vld [vmem:[#allocation8 + $0xd00] sm:$0xff]
    %v2783 = vld [vmem:[#allocation8 + $0xd08] sm:$0xff]
    %v2784 = vld [vmem:[#allocation8 + $0xd10] sm:$0xff]
    %v2785 = vld [vmem:[#allocation8 + $0xd18] sm:$0xff]
    %v2786 = vld [vmem:[#allocation8 + $0xd20] sm:$0xff]
    %v2787 = vld [vmem:[#allocation8 + $0xd28] sm:$0xff]
    %v2788 = vld [vmem:[#allocation8 + $0xd30] sm:$0xff]
    %v2789 = vld [vmem:[#allocation8 + $0xd38] sm:$0xff]
    %v2790 = vld [vmem:[#allocation8 + $0xd40] sm:$0xff]
    %v2791 = vld [vmem:[#allocation8 + $0xd48] sm:$0xff]
    %v2792 = vld [vmem:[#allocation8 + $0xd50] sm:$0xff]
    %v2793 = vld [vmem:[#allocation8 + $0xd58] sm:$0xff]
    %v2794 = vld [vmem:[#allocation8 + $0xd60] sm:$0xff]
    %v2795 = vld [vmem:[#allocation8 + $0xd68] sm:$0xff]
    %v2796 = vld [vmem:[#allocation8 + $0xd70] sm:$0xff]
    %v2797 = vld [vmem:[#allocation8 + $0xd78] sm:$0xff]
    %v2798 = vld [vmem:[#allocation8 + $0xd80] sm:$0xff]
    %v2799 = vld [vmem:[#allocation8 + $0xd88] sm:$0xff]
    %v2800 = vld [vmem:[#allocation8 + $0xd90] sm:$0xff]
    %v2801 = vld [vmem:[#allocation8 + $0xd98] sm:$0xff]
    %v2802 = vld [vmem:[#allocation8 + $0xda0] sm:$0xff]
    %v2803 = vld [vmem:[#allocation8 + $0xda8] sm:$0xff]
    %v2804 = vld [vmem:[#allocation8 + $0xdb0] sm:$0xff]
    %v2805 = vld [vmem:[#allocation8 + $0xdb8] sm:$0xff]
    %v2806 = vld [vmem:[#allocation8 + $0xdc0] sm:$0xff]
    %v2807 = vld [vmem:[#allocation8 + $0xdc8] sm:$0xff]
    %v2808 = vld [vmem:[#allocation8 + $0xdd0] sm:$0xff]
    %v2809 = vld [vmem:[#allocation8 + $0xdd8] sm:$0xff]
    %v2810 = vld [vmem:[#allocation8 + $0xde0] sm:$0xff]
    %v2811 = vld [vmem:[#allocation8 + $0xde8] sm:$0xff]
    %v2812 = vld [vmem:[#allocation8 + $0xdf0] sm:$0xff]
    %v2813 = vld [vmem:[#allocation8 + $0xdf8] sm:$0xff]
    %v2814 = vld [vmem:[#allocation8 + $0xe00] sm:$0xff]
    %v2815 = vld [vmem:[#allocation8 + $0xe08] sm:$0xff]
    %v2816 = vld [vmem:[#allocation8 + $0xe10] sm:$0xff]
    %v2817 = vld [vmem:[#allocation8 + $0xe18] sm:$0xff]
    %v2818 = vld [vmem:[#allocation8 + $0xe20] sm:$0xff]
    %v2819 = vld [vmem:[#allocation8 + $0xe28] sm:$0xff]
    %v2820 = vld [vmem:[#allocation8 + $0xe30] sm:$0xff]
    %v2821 = vld [vmem:[#allocation8 + $0xe38] sm:$0xff]
    %v2822 = vld [vmem:[#allocation8 + $0xe40] sm:$0xff]
    %v2823 = vld [vmem:[#allocation8 + $0xe48] sm:$0xff]
    %v2824 = vld [vmem:[#allocation8 + $0xe50] sm:$0xff]
    %v2825 = vld [vmem:[#allocation8 + $0xe58] sm:$0xff]
    %v2826 = vld [vmem:[#allocation8 + $0xe60] sm:$0xff]
    %v2827 = vld [vmem:[#allocation8 + $0xe68] sm:$0xff]
    %v2828 = vld [vmem:[#allocation8 + $0xe70] sm:$0xff]
    %v2829 = vld [vmem:[#allocation8 + $0xe78] sm:$0xff]
    %v2830 = vld [vmem:[#allocation8 + $0xe80] sm:$0xff]
    %v2831 = vld [vmem:[#allocation8 + $0xe88] sm:$0xff]
    %v2832 = vld [vmem:[#allocation8 + $0xe90] sm:$0xff]
    %v2833 = vld [vmem:[#allocation8 + $0xe98] sm:$0xff]
    %v2834 = vld [vmem:[#allocation8 + $0xea0] sm:$0xff]
    %v2835 = vld [vmem:[#allocation8 + $0xea8] sm:$0xff]
    %v2836 = vld [vmem:[#allocation8 + $0xeb0] sm:$0xff]
    %v2837 = vld [vmem:[#allocation8 + $0xeb8] sm:$0xff]
    %v2838 = vld [vmem:[#allocation8 + $0xec0] sm:$0xff]
    %v2839 = vld [vmem:[#allocation8 + $0xec8] sm:$0xff]
    %v2840 = vld [vmem:[#allocation8 + $0xed0] sm:$0xff]
    %v2841 = vld [vmem:[#allocation8 + $0xed8] sm:$0xff]
    %v2842 = vld [vmem:[#allocation8 + $0xee0] sm:$0xff]
    %v2843 = vld [vmem:[#allocation8 + $0xee8] sm:$0xff]
    %v2844 = vld [vmem:[#allocation8 + $0xef0] sm:$0xff]
    %v2845 = vld [vmem:[#allocation8 + $0xef8] sm:$0xff]
    %v2846 = vld [vmem:[#allocation8 + $0xf00] sm:$0xff]
    %v2847 = vld [vmem:[#allocation8 + $0xf08] sm:$0xff]
    %v2848 = vld [vmem:[#allocation8 + $0xf10] sm:$0xff]
    %v2849 = vld [vmem:[#allocation8 + $0xf18] sm:$0xff]
    %v2850 = vld [vmem:[#allocation8 + $0xf20] sm:$0xff]
    %v2851 = vld [vmem:[#allocation8 + $0xf28] sm:$0xff]
    %v2852 = vld [vmem:[#allocation8 + $0xf30] sm:$0xff]
    %v2853 = vld [vmem:[#allocation8 + $0xf38] sm:$0xff]
    %v2854 = vld [vmem:[#allocation8 + $0xf40] sm:$0xff]
    %v2855 = vld [vmem:[#allocation8 + $0xf48] sm:$0xff]
    %v2856 = vld [vmem:[#allocation8 + $0xf50] sm:$0xff]
    %v2857 = vld [vmem:[#allocation8 + $0xf58] sm:$0xff]
    %v2858 = vld [vmem:[#allocation8 + $0xf60] sm:$0xff]
    %v2859 = vld [vmem:[#allocation8 + $0xf68] sm:$0xff]
    %v2860 = vld [vmem:[#allocation8 + $0xf70] sm:$0xff]
    %v2861 = vld [vmem:[#allocation8 + $0xf78] sm:$0xff]
    %v2862 = vld [vmem:[#allocation8 + $0xf80] sm:$0xff]
    %v2863 = vld [vmem:[#allocation8 + $0xf88] sm:$0xff]
    %v2864 = vld [vmem:[#allocation8 + $0xf90] sm:$0xff]
    %v2865 = vld [vmem:[#allocation8 + $0xf98] sm:$0xff]
    %v2866 = vld [vmem:[#allocation8 + $0xfa0] sm:$0xff]
    %v2867 = vld [vmem:[#allocation8 + $0xfa8] sm:$0xff]
    %v2868 = vld [vmem:[#allocation8 + $0xfb0] sm:$0xff]
    %v2869 = vld [vmem:[#allocation8 + $0xfb8] sm:$0xff]
    %v2870 = vld [vmem:[#allocation8 + $0xfc0] sm:$0xff]
    %v2871 = vld [vmem:[#allocation8 + $0xfc8] sm:$0xff]
    %v2872 = vld [vmem:[#allocation8 + $0xfd0] sm:$0xff]
    %v2873 = vld [vmem:[#allocation8 + $0xfd8] sm:$0xff]
    %v2874 = vld [vmem:[#allocation8 + $0xfe0] sm:$0xff]
    %v2875 = vld [vmem:[#allocation8 + $0xfe8] sm:$0xff]
    %v2876 = vld [vmem:[#allocation8 + $0xff0] sm:$0xff]
    %v2877 = vld [vmem:[#allocation8 + $0xff8] sm:$0xff]
    %v2878 = vld [vmem:[#allocation8 + $0x1000] sm:$0xff]
    %v2879 = vld [vmem:[#allocation8 + $0x1008] sm:$0xff]
    %v2880 = vld [vmem:[#allocation8 + $0x1010] sm:$0xff]
    %v2881 = vld [vmem:[#allocation8 + $0x1018] sm:$0xff]
    %v2882 = vld [vmem:[#allocation8 + $0x1020] sm:$0xff]
    %v2883 = vld [vmem:[#allocation8 + $0x1028] sm:$0xff]
    %v2884 = vld [vmem:[#allocation8 + $0x1030] sm:$0xff]
    %v2885 = vld [vmem:[#allocation8 + $0x1038] sm:$0xff]
    %v2886 = vld [vmem:[#allocation8 + $0x1040] sm:$0xff]
    %v2887 = vld [vmem:[#allocation8 + $0x1048] sm:$0xff]
    %v2888 = vld [vmem:[#allocation8 + $0x1050] sm:$0xff]
    %v2889 = vld [vmem:[#allocation8 + $0x1058] sm:$0xff]
    %v2890 = vld [vmem:[#allocation8 + $0x1060] sm:$0xff]
    %v2891 = vld [vmem:[#allocation8 + $0x1068] sm:$0xff]
    %v2892 = vld [vmem:[#allocation8 + $0x1070] sm:$0xff]
    %v2893 = vld [vmem:[#allocation8 + $0x1078] sm:$0xff]
    %v2894 = vld [vmem:[#allocation8 + $0x1080] sm:$0xff]
    %v2895 = vld [vmem:[#allocation8 + $0x1088] sm:$0xff]
    %v2896 = vld [vmem:[#allocation8 + $0x1090] sm:$0xff]
    %v2897 = vld [vmem:[#allocation8 + $0x1098] sm:$0xff]
    %v2898 = vld [vmem:[#allocation8 + $0x10a0] sm:$0xff]
    %v2899 = vld [vmem:[#allocation8 + $0x10a8] sm:$0xff]
    %v2900 = vld [vmem:[#allocation8 + $0x10b0] sm:$0xff]
    %v2901 = vld [vmem:[#allocation8 + $0x10b8] sm:$0xff]
    %v2902 = vld [vmem:[#allocation8 + $0x10c0] sm:$0xff]
    %v2903 = vld [vmem:[#allocation8 + $0x10c8] sm:$0xff]
    %v2904 = vld [vmem:[#allocation8 + $0x10d0] sm:$0xff]
    %v2905 = vld [vmem:[#allocation8 + $0x10d8] sm:$0xff]
    %v2906 = vld [vmem:[#allocation8 + $0x10e0] sm:$0xff]
    %v2907 = vld [vmem:[#allocation8 + $0x10e8] sm:$0xff]
    %v2908 = vld [vmem:[#allocation8 + $0x10f0] sm:$0xff]
    %v2909 = vld [vmem:[#allocation8 + $0x10f8] sm:$0xff]
    %v2910 = vld [vmem:[#allocation8 + $0x1100] sm:$0xff]
    %v2911 = vld [vmem:[#allocation8 + $0x1108] sm:$0xff]
    %v2912 = vld [vmem:[#allocation8 + $0x1110] sm:$0xff]
    %v2913 = vld [vmem:[#allocation8 + $0x1118] sm:$0xff]
    %v2914 = vld [vmem:[#allocation8 + $0x1120] sm:$0xff]
    %v2915 = vld [vmem:[#allocation8 + $0x1128] sm:$0xff]
    %v2916 = vld [vmem:[#allocation8 + $0x1130] sm:$0xff]
    %v2917 = vld [vmem:[#allocation8 + $0x1138] sm:$0xff]
    %v2918 = vld [vmem:[#allocation8 + $0x1140] sm:$0xff]
    %v2919 = vld [vmem:[#allocation8 + $0x1148] sm:$0xff]
    %v2920 = vld [vmem:[#allocation8 + $0x1150] sm:$0xff]
    %v2921 = vld [vmem:[#allocation8 + $0x1158] sm:$0xff]
    %v2922 = vld [vmem:[#allocation8 + $0x1160] sm:$0xff]
    %v2923 = vld [vmem:[#allocation8 + $0x1168] sm:$0xff]
    %v2924 = vld [vmem:[#allocation8 + $0x1170] sm:$0xff]
    %v2925 = vld [vmem:[#allocation8 + $0x1178] sm:$0xff]
    %v2926 = vld [vmem:[#allocation8 + $0x1180] sm:$0xff]
    %v2927 = vld [vmem:[#allocation8 + $0x1188] sm:$0xff]
    %v2928 = vld [vmem:[#allocation8 + $0x1190] sm:$0xff]
    %v2929 = vld [vmem:[#allocation8 + $0x1198] sm:$0xff]
    %v2930 = vld [vmem:[#allocation8 + $0x11a0] sm:$0xff]
    %v2931 = vld [vmem:[#allocation8 + $0x11a8] sm:$0xff]
    %v2932 = vld [vmem:[#allocation8 + $0x11b0] sm:$0xff]
    %v2933 = vld [vmem:[#allocation8 + $0x11b8] sm:$0xff]
    %v2934 = vld [vmem:[#allocation8 + $0x11c0] sm:$0xff]
    %v2935 = vld [vmem:[#allocation8 + $0x11c8] sm:$0xff]
    %v2936 = vld [vmem:[#allocation8 + $0x11d0] sm:$0xff]
    %v2937 = vld [vmem:[#allocation8 + $0x11d8] sm:$0xff]
    %v2938 = vld [vmem:[#allocation8 + $0x11e0] sm:$0xff]
    %v2939 = vld [vmem:[#allocation8 + $0x11e8] sm:$0xff]
    %v2940 = vld [vmem:[#allocation8 + $0x11f0] sm:$0xff]
    %v2941 = vld [vmem:[#allocation8 + $0x11f8] sm:$0xff]
    %v2942 = vld [vmem:[#allocation10] sm:$0xff]
    %v2943 = vld [vmem:[#allocation10 + $0x8] sm:$0xf]
    %v2946 = vlaneseq
    %v2947 = vshrl.u32 %v2946, 7
    %v2948 = vsub.s32 0, %v2947
    %v2949 = vrot.slane %v2942, %v2948
    %v2950 = vlaneseq
    %v2951 = vshrl.u32 %v2950, 7
    %v2952 = vsub.s32 1, %v2951
    %v2953 = vrot.slane %v2942, %v2952
    %v2954 = vlaneseq
    %v2955 = vshrl.u32 %v2954, 7
    %v2956 = vsub.s32 2, %v2955
    %v2957 = vrot.slane %v2942, %v2956
    %v2958 = vlaneseq
    %v2959 = vshrl.u32 %v2958, 7
    %v2960 = vsub.s32 3, %v2959
    %v2961 = vrot.slane %v2942, %v2960
    %v2962 = vlaneseq
    %v2963 = vshrl.u32 %v2962, 7
    %v2964 = vsub.s32 4, %v2963
    %v2965 = vrot.slane %v2942, %v2964
    %v2966 = vlaneseq
    %v2967 = vshrl.u32 %v2966, 7
    %v2968 = vsub.s32 5, %v2967
    %v2969 = vrot.slane %v2942, %v2968
    %v2970 = vlaneseq
    %v2971 = vshrl.u32 %v2970, 7
    %v2972 = vsub.s32 6, %v2971
    %v2973 = vrot.slane %v2942, %v2972
    %v2974 = vlaneseq
    %v2975 = vshrl.u32 %v2974, 7
    %v2976 = vsub.s32 7, %v2975
    %v2977 = vrot.slane %v2942, %v2976
    %v2978 = vlaneseq
    %v2979 = vshrl.u32 %v2978, 7
    %v2980 = vsub.s32 0, %v2979
    %v2981 = vrot.slane %v2943, %v2980
    %v2982 = vlaneseq
    %v2983 = vshrl.u32 %v2982, 7
    %v2984 = vsub.s32 1, %v2983
    %v2985 = vrot.slane %v2943, %v2984
    %v2986 = vlaneseq
    %v2987 = vshrl.u32 %v2986, 7
    %v2988 = vsub.s32 2, %v2987
    %v2989 = vrot.slane %v2943, %v2988
    %v2990 = vlaneseq
    %v2991 = vshrl.u32 %v2990, 7
    %v2992 = vsub.s32 3, %v2991
    %v2993 = vrot.slane %v2943, %v2992
    %v3582 = vunpack.c.l.b16 %v2366
    %v3583 = vunpack.c.h.b16 %v2366
    %v3584 = vunpack.c.l.b16 %v2367
    %v3585 = vunpack.c.h.b16 %v2367
    %v3586 = vunpack.c.l.b16 %v2368
    %v3587 = vunpack.c.h.b16 %v2368
    %v3588 = vunpack.c.l.b16 %v2369
    %v3589 = vunpack.c.h.b16 %v2369
    %v3590 = vunpack.c.l.b16 %v2370
    %v3591 = vunpack.c.h.b16 %v2370
    %v3592 = vunpack.c.l.b16 %v2371
    %v3593 = vunpack.c.h.b16 %v2371
    %v3594 = vunpack.c.l.b16 %v2372
    %v3595 = vunpack.c.h.b16 %v2372
    %v3596 = vunpack.c.l.b16 %v2373
    %v3597 = vunpack.c.h.b16 %v2373
    %v3598 = vunpack.c.l.b16 %v2374
    %v3599 = vunpack.c.h.b16 %v2374
    %v3600 = vunpack.c.l.b16 %v2375
    %v3601 = vunpack.c.h.b16 %v2375
    %v3602 = vunpack.c.l.b16 %v2376
    %v3603 = vunpack.c.h.b16 %v2376
    %v3604 = vunpack.c.l.b16 %v2377
    %v3605 = vunpack.c.h.b16 %v2377
    %v3606 = vunpack.c.l.b16 %v2378
    %v3607 = vunpack.c.h.b16 %v2378
    %v3608 = vunpack.c.l.b16 %v2379
    %v3609 = vunpack.c.h.b16 %v2379
    %v3610 = vunpack.c.l.b16 %v2380
    %v3611 = vunpack.c.h.b16 %v2380
    %v3612 = vunpack.c.l.b16 %v2381
    %v3613 = vunpack.c.h.b16 %v2381
    %v3614 = vunpack.c.l.b16 %v2382
    %v3615 = vunpack.c.h.b16 %v2382
    %v3616 = vunpack.c.l.b16 %v2383
    %v3617 = vunpack.c.h.b16 %v2383
    %v3618 = vunpack.c.l.b16 %v2384
    %v3619 = vunpack.c.h.b16 %v2384
    %v3620 = vunpack.c.l.b16 %v2385
    %v3621 = vunpack.c.h.b16 %v2385
    %v3622 = vunpack.c.l.b16 %v2386
    %v3623 = vunpack.c.h.b16 %v2386
    %v3624 = vunpack.c.l.b16 %v2387
    %v3625 = vunpack.c.h.b16 %v2387
    %v3626 = vunpack.c.l.b16 %v2388
    %v3627 = vunpack.c.h.b16 %v2388
    %v3628 = vunpack.c.l.b16 %v2389
    %v3629 = vunpack.c.h.b16 %v2389
    %v3630 = vunpack.c.l.b16 %v2390
    %v3631 = vunpack.c.h.b16 %v2390
    %v3632 = vunpack.c.l.b16 %v2391
    %v3633 = vunpack.c.h.b16 %v2391
    %v3634 = vunpack.c.l.b16 %v2392
    %v3635 = vunpack.c.h.b16 %v2392
    %v3636 = vunpack.c.l.b16 %v2393
    %v3637 = vunpack.c.h.b16 %v2393
    %v3638 = vunpack.c.l.b16 %v2394
    %v3639 = vunpack.c.h.b16 %v2394
    %v3640 = vunpack.c.l.b16 %v2395
    %v3641 = vunpack.c.h.b16 %v2395
    %v3642 = vunpack.c.l.b16 %v2396
    %v3643 = vunpack.c.h.b16 %v2396
    %v3644 = vunpack.c.l.b16 %v2397
    %v3645 = vunpack.c.h.b16 %v2397
    %v3646 = vunpack.c.l.b16 %v2398
    %v3647 = vunpack.c.h.b16 %v2398
    %v3648 = vunpack.c.l.b16 %v2399
    %v3649 = vunpack.c.h.b16 %v2399
    %v3650 = vunpack.c.l.b16 %v2400
    %v3651 = vunpack.c.h.b16 %v2400
    %v3652 = vunpack.c.l.b16 %v2401
    %v3653 = vunpack.c.h.b16 %v2401
    %v3654 = vunpack.c.l.b16 %v2402
    %v3655 = vunpack.c.h.b16 %v2402
    %v3656 = vunpack.c.l.b16 %v2403
    %v3657 = vunpack.c.h.b16 %v2403
    %v3658 = vunpack.c.l.b16 %v2404
    %v3659 = vunpack.c.h.b16 %v2404
    %v3660 = vunpack.c.l.b16 %v2405
    %v3661 = vunpack.c.h.b16 %v2405
    %v3662 = vunpack.c.l.b16 %v2406
    %v3663 = vunpack.c.h.b16 %v2406
    %v3664 = vunpack.c.l.b16 %v2407
    %v3665 = vunpack.c.h.b16 %v2407
    %v3666 = vunpack.c.l.b16 %v2408
    %v3667 = vunpack.c.h.b16 %v2408
    %v3668 = vunpack.c.l.b16 %v2409
    %v3669 = vunpack.c.h.b16 %v2409
    %v3670 = vunpack.c.l.b16 %v2410
    %v3671 = vunpack.c.h.b16 %v2410
    %v3672 = vunpack.c.l.b16 %v2411
    %v3673 = vunpack.c.h.b16 %v2411
    %v3674 = vunpack.c.l.b16 %v2412
    %v3675 = vunpack.c.h.b16 %v2412
    %v3676 = vunpack.c.l.b16 %v2413
    %v3677 = vunpack.c.h.b16 %v2413
    %v3678 = vunpack.c.l.b16 %v2414
    %v3679 = vunpack.c.h.b16 %v2414
    %v3680 = vunpack.c.l.b16 %v2415
    %v3681 = vunpack.c.h.b16 %v2415
    %v3682 = vunpack.c.l.b16 %v2416
    %v3683 = vunpack.c.h.b16 %v2416
    %v3684 = vunpack.c.l.b16 %v2417
    %v3685 = vunpack.c.h.b16 %v2417
    %v3686 = vunpack.c.l.b16 %v2418
    %v3687 = vunpack.c.h.b16 %v2418
    %v3688 = vunpack.c.l.b16 %v2419
    %v3689 = vunpack.c.h.b16 %v2419
    %v3690 = vunpack.c.l.b16 %v2420
    %v3691 = vunpack.c.h.b16 %v2420
    %v3692 = vunpack.c.l.b16 %v2421
    %v3693 = vunpack.c.h.b16 %v2421
    %v3694 = vunpack.c.l.b16 %v2422
    %v3695 = vunpack.c.h.b16 %v2422
    %v3696 = vunpack.c.l.b16 %v2423
    %v3697 = vunpack.c.h.b16 %v2423
    %v3698 = vunpack.c.l.b16 %v2424
    %v3699 = vunpack.c.h.b16 %v2424
    %v3700 = vunpack.c.l.b16 %v2425
    %v3701 = vunpack.c.h.b16 %v2425
    %v3702 = vunpack.c.l.b16 %v2426
    %v3703 = vunpack.c.h.b16 %v2426
    %v3704 = vunpack.c.l.b16 %v2427
    %v3705 = vunpack.c.h.b16 %v2427
    %v3706 = vunpack.c.l.b16 %v2428
    %v3707 = vunpack.c.h.b16 %v2428
    %v3708 = vunpack.c.l.b16 %v2429
    %v3709 = vunpack.c.h.b16 %v2429
    %v3710 = vunpack.c.l.b16 %v2430
    %v3711 = vunpack.c.h.b16 %v2430
    %v3712 = vunpack.c.l.b16 %v2431
    %v3713 = vunpack.c.h.b16 %v2431
    %v3714 = vunpack.c.l.b16 %v2432
    %v3715 = vunpack.c.h.b16 %v2432
    %v3716 = vunpack.c.l.b16 %v2433
    %v3717 = vunpack.c.h.b16 %v2433
    %v3718 = vunpack.c.l.b16 %v2434
    %v3719 = vunpack.c.h.b16 %v2434
    %v3720 = vunpack.c.l.b16 %v2435
    %v3721 = vunpack.c.h.b16 %v2435
    %v3722 = vunpack.c.l.b16 %v2436
    %v3723 = vunpack.c.h.b16 %v2436
    %v3724 = vunpack.c.l.b16 %v2437
    %v3725 = vunpack.c.h.b16 %v2437
    %v3726 = vunpack.c.l.b16 %v2438
    %v3727 = vunpack.c.h.b16 %v2438
    %v3728 = vunpack.c.l.b16 %v2439
    %v3729 = vunpack.c.h.b16 %v2439
    %v3730 = vunpack.c.l.b16 %v2440
    %v3731 = vunpack.c.h.b16 %v2440
    %v3732 = vunpack.c.l.b16 %v2441
    %v3733 = vunpack.c.h.b16 %v2441
    %v3734 = vunpack.c.l.b16 %v2442
    %v3735 = vunpack.c.h.b16 %v2442
    %v3736 = vunpack.c.l.b16 %v2443
    %v3737 = vunpack.c.h.b16 %v2443
    %v3738 = vunpack.c.l.b16 %v2444
    %v3739 = vunpack.c.h.b16 %v2444
    %v3740 = vunpack.c.l.b16 %v2445
    %v3741 = vunpack.c.h.b16 %v2445
    %v3742 = vunpack.c.l.b16 %v2446
    %v3743 = vunpack.c.h.b16 %v2446
    %v3744 = vunpack.c.l.b16 %v2447
    %v3745 = vunpack.c.h.b16 %v2447
    %v3746 = vunpack.c.l.b16 %v2448
    %v3747 = vunpack.c.h.b16 %v2448
    %v3748 = vunpack.c.l.b16 %v2449
    %v3749 = vunpack.c.h.b16 %v2449
    %v3750 = vunpack.c.l.b16 %v2450
    %v3751 = vunpack.c.h.b16 %v2450
    %v3752 = vunpack.c.l.b16 %v2451
    %v3753 = vunpack.c.h.b16 %v2451
    %v3754 = vunpack.c.l.b16 %v2452
    %v3755 = vunpack.c.h.b16 %v2452
    %v3756 = vunpack.c.l.b16 %v2453
    %v3757 = vunpack.c.h.b16 %v2453
    %v3758 = vunpack.c.l.b16 %v2454
    %v3759 = vunpack.c.h.b16 %v2454
    %v3760 = vunpack.c.l.b16 %v2455
    %v3761 = vunpack.c.h.b16 %v2455
    %v3762 = vunpack.c.l.b16 %v2456
    %v3763 = vunpack.c.h.b16 %v2456
    %v3764 = vunpack.c.l.b16 %v2457
    %v3765 = vunpack.c.h.b16 %v2457
    %v3766 = vunpack.c.l.b16 %v2458
    %v3767 = vunpack.c.h.b16 %v2458
    %v3768 = vunpack.c.l.b16 %v2459
    %v3769 = vunpack.c.h.b16 %v2459
    %v3770 = vunpack.c.l.b16 %v2460
    %v3771 = vunpack.c.h.b16 %v2460
    %v3772 = vunpack.c.l.b16 %v2461
    %v3773 = vunpack.c.h.b16 %v2461
    %v3774 = vunpack.c.l.b16 %v2462
    %v3775 = vunpack.c.h.b16 %v2462
    %v3776 = vunpack.c.l.b16 %v2463
    %v3777 = vunpack.c.h.b16 %v2463
    %v3778 = vunpack.c.l.b16 %v2464
    %v3779 = vunpack.c.h.b16 %v2464
    %v3780 = vunpack.c.l.b16 %v2465
    %v3781 = vunpack.c.h.b16 %v2465
    %v3782 = vunpack.c.l.b16 %v2466
    %v3783 = vunpack.c.h.b16 %v2466
    %v3784 = vunpack.c.l.b16 %v2467
    %v3785 = vunpack.c.h.b16 %v2467
    %v3786 = vunpack.c.l.b16 %v2468
    %v3787 = vunpack.c.h.b16 %v2468
    %v3788 = vunpack.c.l.b16 %v2469
    %v3789 = vunpack.c.h.b16 %v2469
    %v3790 = vunpack.c.l.b16 %v2470
    %v3791 = vunpack.c.h.b16 %v2470
    %v3792 = vunpack.c.l.b16 %v2471
    %v3793 = vunpack.c.h.b16 %v2471
    %v3794 = vunpack.c.l.b16 %v2472
    %v3795 = vunpack.c.h.b16 %v2472
    %v3796 = vunpack.c.l.b16 %v2473
    %v3797 = vunpack.c.h.b16 %v2473
    %v3798 = vunpack.c.l.b16 %v2474
    %v3799 = vunpack.c.h.b16 %v2474
    %v3800 = vunpack.c.l.b16 %v2475
    %v3801 = vunpack.c.h.b16 %v2475
    %v3802 = vunpack.c.l.b16 %v2476
    %v3803 = vunpack.c.h.b16 %v2476
    %v3804 = vunpack.c.l.b16 %v2477
    %v3805 = vunpack.c.h.b16 %v2477
    %v3806 = vunpack.c.l.b16 %v2478
    %v3807 = vunpack.c.h.b16 %v2478
    %v3808 = vunpack.c.l.b16 %v2479
    %v3809 = vunpack.c.h.b16 %v2479
    %v3810 = vunpack.c.l.b16 %v2480
    %v3811 = vunpack.c.h.b16 %v2480
    %v3812 = vunpack.c.l.b16 %v2481
    %v3813 = vunpack.c.h.b16 %v2481
    %v3814 = vunpack.c.l.b16 %v2482
    %v3815 = vunpack.c.h.b16 %v2482
    %v3816 = vunpack.c.l.b16 %v2483
    %v3817 = vunpack.c.h.b16 %v2483
    %v3818 = vunpack.c.l.b16 %v2484
    %v3819 = vunpack.c.h.b16 %v2484
    %v3820 = vunpack.c.l.b16 %v2485
    %v3821 = vunpack.c.h.b16 %v2485
    %v3822 = vunpack.c.l.b16 %v2486
    %v3823 = vunpack.c.h.b16 %v2486
    %v3824 = vunpack.c.l.b16 %v2487
    %v3825 = vunpack.c.h.b16 %v2487
    %v3826 = vunpack.c.l.b16 %v2488
    %v3827 = vunpack.c.h.b16 %v2488
    %v3828 = vunpack.c.l.b16 %v2489
    %v3829 = vunpack.c.h.b16 %v2489
    %v3830 = vunpack.c.l.b16 %v2490
    %v3831 = vunpack.c.h.b16 %v2490
    %v3832 = vunpack.c.l.b16 %v2491
    %v3833 = vunpack.c.h.b16 %v2491
    %v3834 = vunpack.c.l.b16 %v2492
    %v3835 = vunpack.c.h.b16 %v2492
    %v3836 = vunpack.c.l.b16 %v2493
    %v3837 = vunpack.c.h.b16 %v2493
    %v3838 = vunpack.c.l.b16 %v2494
    %v3839 = vunpack.c.h.b16 %v2494
    %v3840 = vunpack.c.l.b16 %v2495
    %v3841 = vunpack.c.h.b16 %v2495
    %v3842 = vunpack.c.l.b16 %v2496
    %v3843 = vunpack.c.h.b16 %v2496
    %v3844 = vunpack.c.l.b16 %v2497
    %v3845 = vunpack.c.h.b16 %v2497
    %v3846 = vunpack.c.l.b16 %v2498
    %v3847 = vunpack.c.h.b16 %v2498
    %v3848 = vunpack.c.l.b16 %v2499
    %v3849 = vunpack.c.h.b16 %v2499
    %v3850 = vunpack.c.l.b16 %v2500
    %v3851 = vunpack.c.h.b16 %v2500
    %v3852 = vunpack.c.l.b16 %v2501
    %v3853 = vunpack.c.h.b16 %v2501
    %v3854 = vunpack.c.l.b16 %v2502
    %v3855 = vunpack.c.h.b16 %v2502
    %v3856 = vunpack.c.l.b16 %v2503
    %v3857 = vunpack.c.h.b16 %v2503
    %v3858 = vunpack.c.l.b16 %v2504
    %v3859 = vunpack.c.h.b16 %v2504
    %v3860 = vunpack.c.l.b16 %v2505
    %v3861 = vunpack.c.h.b16 %v2505
    %v3862 = vunpack.c.l.b16 %v2506
    %v3863 = vunpack.c.h.b16 %v2506
    %v3864 = vunpack.c.l.b16 %v2507
    %v3865 = vunpack.c.h.b16 %v2507
    %v3866 = vunpack.c.l.b16 %v2508
    %v3867 = vunpack.c.h.b16 %v2508
    %v3868 = vunpack.c.l.b16 %v2509
    %v3869 = vunpack.c.h.b16 %v2509
    %v3870 = vunpack.c.l.b16 %v2510
    %v3871 = vunpack.c.h.b16 %v2510
    %v3872 = vunpack.c.l.b16 %v2511
    %v3873 = vunpack.c.h.b16 %v2511
    %v3874 = vunpack.c.l.b16 %v2512
    %v3875 = vunpack.c.h.b16 %v2512
    %v3876 = vunpack.c.l.b16 %v2513
    %v3877 = vunpack.c.h.b16 %v2513
    %v3878 = vunpack.c.l.b16 %v2514
    %v3879 = vunpack.c.h.b16 %v2514
    %v3880 = vunpack.c.l.b16 %v2515
    %v3881 = vunpack.c.h.b16 %v2515
    %v3882 = vunpack.c.l.b16 %v2516
    %v3883 = vunpack.c.h.b16 %v2516
    %v3884 = vunpack.c.l.b16 %v2517
    %v3885 = vunpack.c.h.b16 %v2517
    %v3886 = vunpack.c.l.b16 %v2518
    %v3887 = vunpack.c.h.b16 %v2518
    %v3888 = vunpack.c.l.b16 %v2519
    %v3889 = vunpack.c.h.b16 %v2519
    %v3890 = vunpack.c.l.b16 %v2520
    %v3891 = vunpack.c.h.b16 %v2520
    %v3892 = vunpack.c.l.b16 %v2521
    %v3893 = vunpack.c.h.b16 %v2521
    %v3894 = vunpack.c.l.b16 %v2522
    %v3895 = vunpack.c.h.b16 %v2522
    %v3896 = vunpack.c.l.b16 %v2523
    %v3897 = vunpack.c.h.b16 %v2523
    %v3898 = vunpack.c.l.b16 %v2524
    %v3899 = vunpack.c.h.b16 %v2524
    %v3900 = vunpack.c.l.b16 %v2525
    %v3901 = vunpack.c.h.b16 %v2525
    %v3902 = vunpack.c.l.b16 %v2526
    %v3903 = vunpack.c.h.b16 %v2526
    %v3904 = vunpack.c.l.b16 %v2527
    %v3905 = vunpack.c.h.b16 %v2527
    %v3906 = vunpack.c.l.b16 %v2528
    %v3907 = vunpack.c.h.b16 %v2528
    %v3908 = vunpack.c.l.b16 %v2529
    %v3909 = vunpack.c.h.b16 %v2529
    %v3910 = vunpack.c.l.b16 %v2530
    %v3911 = vunpack.c.h.b16 %v2530
    %v3912 = vunpack.c.l.b16 %v2531
    %v3913 = vunpack.c.h.b16 %v2531
    %v3914 = vunpack.c.l.b16 %v2532
    %v3915 = vunpack.c.h.b16 %v2532
    %v3916 = vunpack.c.l.b16 %v2533
    %v3917 = vunpack.c.h.b16 %v2533
    %v3918 = vunpack.c.l.b16 %v2534
    %v3919 = vunpack.c.h.b16 %v2534
    %v3920 = vunpack.c.l.b16 %v2535
    %v3921 = vunpack.c.h.b16 %v2535
    %v3922 = vunpack.c.l.b16 %v2536
    %v3923 = vunpack.c.h.b16 %v2536
    %v3924 = vunpack.c.l.b16 %v2537
    %v3925 = vunpack.c.h.b16 %v2537
    %v3926 = vunpack.c.l.b16 %v2538
    %v3927 = vunpack.c.h.b16 %v2538
    %v3928 = vunpack.c.l.b16 %v2539
    %v3929 = vunpack.c.h.b16 %v2539
    %v3930 = vunpack.c.l.b16 %v2540
    %v3931 = vunpack.c.h.b16 %v2540
    %v3932 = vunpack.c.l.b16 %v2541
    %v3933 = vunpack.c.h.b16 %v2541
    %v3934 = vunpack.c.l.b16 %v2542
    %v3935 = vunpack.c.h.b16 %v2542
    %v3936 = vunpack.c.l.b16 %v2543
    %v3937 = vunpack.c.h.b16 %v2543
    %v3938 = vunpack.c.l.b16 %v2544
    %v3939 = vunpack.c.h.b16 %v2544
    %v3940 = vunpack.c.l.b16 %v2545
    %v3941 = vunpack.c.h.b16 %v2545
    %v3942 = vunpack.c.l.b16 %v2546
    %v3943 = vunpack.c.h.b16 %v2546
    %v3944 = vunpack.c.l.b16 %v2547
    %v3945 = vunpack.c.h.b16 %v2547
    %v3946 = vunpack.c.l.b16 %v2548
    %v3947 = vunpack.c.h.b16 %v2548
    %v3948 = vunpack.c.l.b16 %v2549
    %v3949 = vunpack.c.h.b16 %v2549
    %v3950 = vunpack.c.l.b16 %v2550
    %v3951 = vunpack.c.h.b16 %v2550
    %v3952 = vunpack.c.l.b16 %v2551
    %v3953 = vunpack.c.h.b16 %v2551
    %v3954 = vunpack.c.l.b16 %v2552
    %v3955 = vunpack.c.h.b16 %v2552
    %v3956 = vunpack.c.l.b16 %v2553
    %v3957 = vunpack.c.h.b16 %v2553
    %v3958 = vunpack.c.l.b16 %v2554
    %v3959 = vunpack.c.h.b16 %v2554
    %v3960 = vunpack.c.l.b16 %v2555
    %v3961 = vunpack.c.h.b16 %v2555
    %v3962 = vunpack.c.l.b16 %v2556
    %v3963 = vunpack.c.h.b16 %v2556
    %v3964 = vunpack.c.l.b16 %v2557
    %v3965 = vunpack.c.h.b16 %v2557
    %v3966 = vunpack.c.l.b16 %v2558
    %v3967 = vunpack.c.h.b16 %v2558
    %v3968 = vunpack.c.l.b16 %v2559
    %v3969 = vunpack.c.h.b16 %v2559
    %v3970 = vunpack.c.l.b16 %v2560
    %v3971 = vunpack.c.h.b16 %v2560
    %v3972 = vunpack.c.l.b16 %v2561
    %v3973 = vunpack.c.h.b16 %v2561
    %v3974 = vunpack.c.l.b16 %v2562
    %v3975 = vunpack.c.h.b16 %v2562
    %v3976 = vunpack.c.l.b16 %v2563
    %v3977 = vunpack.c.h.b16 %v2563
    %v3978 = vunpack.c.l.b16 %v2564
    %v3979 = vunpack.c.h.b16 %v2564
    %v3980 = vunpack.c.l.b16 %v2565
    %v3981 = vunpack.c.h.b16 %v2565
    %v3982 = vunpack.c.l.b16 %v2566
    %v3983 = vunpack.c.h.b16 %v2566
    %v3984 = vunpack.c.l.b16 %v2567
    %v3985 = vunpack.c.h.b16 %v2567
    %v3986 = vunpack.c.l.b16 %v2568
    %v3987 = vunpack.c.h.b16 %v2568
    %v3988 = vunpack.c.l.b16 %v2569
    %v3989 = vunpack.c.h.b16 %v2569
    %v3990 = vunpack.c.l.b16 %v2570
    %v3991 = vunpack.c.h.b16 %v2570
    %v3992 = vunpack.c.l.b16 %v2571
    %v3993 = vunpack.c.h.b16 %v2571
    %v3994 = vunpack.c.l.b16 %v2572
    %v3995 = vunpack.c.h.b16 %v2572
    %v3996 = vunpack.c.l.b16 %v2573
    %v3997 = vunpack.c.h.b16 %v2573
    %v3998 = vunpack.c.l.b16 %v2574
    %v3999 = vunpack.c.h.b16 %v2574
    %v4000 = vunpack.c.l.b16 %v2575
    %v4001 = vunpack.c.h.b16 %v2575
    %v4002 = vunpack.c.l.b16 %v2576
    %v4003 = vunpack.c.h.b16 %v2576
    %v4004 = vunpack.c.l.b16 %v2577
    %v4005 = vunpack.c.h.b16 %v2577
    %v4006 = vunpack.c.l.b16 %v2578
    %v4007 = vunpack.c.h.b16 %v2578
    %v4008 = vunpack.c.l.b16 %v2579
    %v4009 = vunpack.c.h.b16 %v2579
    %v4010 = vunpack.c.l.b16 %v2580
    %v4011 = vunpack.c.h.b16 %v2580
    %v4012 = vunpack.c.l.b16 %v2581
    %v4013 = vunpack.c.h.b16 %v2581
    %v4014 = vunpack.c.l.b16 %v2582
    %v4015 = vunpack.c.h.b16 %v2582
    %v4016 = vunpack.c.l.b16 %v2583
    %v4017 = vunpack.c.h.b16 %v2583
    %v4018 = vunpack.c.l.b16 %v2584
    %v4019 = vunpack.c.h.b16 %v2584
    %v4020 = vunpack.c.l.b16 %v2585
    %v4021 = vunpack.c.h.b16 %v2585
    %v4022 = vunpack.c.l.b16 %v2586
    %v4023 = vunpack.c.h.b16 %v2586
    %v4024 = vunpack.c.l.b16 %v2587
    %v4025 = vunpack.c.h.b16 %v2587
    %v4026 = vunpack.c.l.b16 %v2588
    %v4027 = vunpack.c.h.b16 %v2588
    %v4028 = vunpack.c.l.b16 %v2589
    %v4029 = vunpack.c.h.b16 %v2589
    %v4030 = vunpack.c.l.b16 %v2590
    %v4031 = vunpack.c.h.b16 %v2590
    %v4032 = vunpack.c.l.b16 %v2591
    %v4033 = vunpack.c.h.b16 %v2591
    %v4034 = vunpack.c.l.b16 %v2592
    %v4035 = vunpack.c.h.b16 %v2592
    %v4036 = vunpack.c.l.b16 %v2593
    %v4037 = vunpack.c.h.b16 %v2593
    %v4038 = vunpack.c.l.b16 %v2594
    %v4039 = vunpack.c.h.b16 %v2594
    %v4040 = vunpack.c.l.b16 %v2595
    %v4041 = vunpack.c.h.b16 %v2595
    %v4042 = vunpack.c.l.b16 %v2596
    %v4043 = vunpack.c.h.b16 %v2596
    %v4044 = vunpack.c.l.b16 %v2597
    %v4045 = vunpack.c.h.b16 %v2597
    %v4046 = vunpack.c.l.b16 %v2598
    %v4047 = vunpack.c.h.b16 %v2598
    %v4048 = vunpack.c.l.b16 %v2599
    %v4049 = vunpack.c.h.b16 %v2599
    %v4050 = vunpack.c.l.b16 %v2600
    %v4051 = vunpack.c.h.b16 %v2600
    %v4052 = vunpack.c.l.b16 %v2601
    %v4053 = vunpack.c.h.b16 %v2601
    %v4054 = vunpack.c.l.b16 %v2602
    %v4055 = vunpack.c.h.b16 %v2602
    %v4056 = vunpack.c.l.b16 %v2603
    %v4057 = vunpack.c.h.b16 %v2603
    %v4058 = vunpack.c.l.b16 %v2604
    %v4059 = vunpack.c.h.b16 %v2604
    %v4060 = vunpack.c.l.b16 %v2605
    %v4061 = vunpack.c.h.b16 %v2605
    %v4062 = vunpack.c.l.b16 %v2606
    %v4063 = vunpack.c.h.b16 %v2606
    %v4064 = vunpack.c.l.b16 %v2607
    %v4065 = vunpack.c.h.b16 %v2607
    %v4066 = vunpack.c.l.b16 %v2608
    %v4067 = vunpack.c.h.b16 %v2608
    %v4068 = vunpack.c.l.b16 %v2609
    %v4069 = vunpack.c.h.b16 %v2609
    %v4070 = vunpack.c.l.b16 %v2610
    %v4071 = vunpack.c.h.b16 %v2610
    %v4072 = vunpack.c.l.b16 %v2611
    %v4073 = vunpack.c.h.b16 %v2611
    %v4074 = vunpack.c.l.b16 %v2612
    %v4075 = vunpack.c.h.b16 %v2612
    %v4076 = vunpack.c.l.b16 %v2613
    %v4077 = vunpack.c.h.b16 %v2613
    %v4078 = vunpack.c.l.b16 %v2614
    %v4079 = vunpack.c.h.b16 %v2614
    %v4080 = vunpack.c.l.b16 %v2615
    %v4081 = vunpack.c.h.b16 %v2615
    %v4082 = vunpack.c.l.b16 %v2616
    %v4083 = vunpack.c.h.b16 %v2616
    %v4084 = vunpack.c.l.b16 %v2617
    %v4085 = vunpack.c.h.b16 %v2617
    %v4086 = vunpack.c.l.b16 %v2618
    %v4087 = vunpack.c.h.b16 %v2618
    %v4088 = vunpack.c.l.b16 %v2619
    %v4089 = vunpack.c.h.b16 %v2619
    %v4090 = vunpack.c.l.b16 %v2620
    %v4091 = vunpack.c.h.b16 %v2620
    %v4092 = vunpack.c.l.b16 %v2621
    %v4093 = vunpack.c.h.b16 %v2621
    %v4094 = vunpack.c.l.b16 %v2622
    %v4095 = vunpack.c.h.b16 %v2622
    %v4096 = vunpack.c.l.b16 %v2623
    %v4097 = vunpack.c.h.b16 %v2623
    %v4098 = vunpack.c.l.b16 %v2624
    %v4099 = vunpack.c.h.b16 %v2624
    %v4100 = vunpack.c.l.b16 %v2625
    %v4101 = vunpack.c.h.b16 %v2625
    %v4102 = vunpack.c.l.b16 %v2626
    %v4103 = vunpack.c.h.b16 %v2626
    %v4104 = vunpack.c.l.b16 %v2627
    %v4105 = vunpack.c.h.b16 %v2627
    %v4106 = vunpack.c.l.b16 %v2628
    %v4107 = vunpack.c.h.b16 %v2628
    %v4108 = vunpack.c.l.b16 %v2629
    %v4109 = vunpack.c.h.b16 %v2629
    %v4110 = vunpack.c.l.b16 %v2630
    %v4111 = vunpack.c.h.b16 %v2630
    %v4112 = vunpack.c.l.b16 %v2631
    %v4113 = vunpack.c.h.b16 %v2631
    %v4114 = vunpack.c.l.b16 %v2632
    %v4115 = vunpack.c.h.b16 %v2632
    %v4116 = vunpack.c.l.b16 %v2633
    %v4117 = vunpack.c.h.b16 %v2633
    %v4118 = vunpack.c.l.b16 %v2634
    %v4119 = vunpack.c.h.b16 %v2634
    %v4120 = vunpack.c.l.b16 %v2635
    %v4121 = vunpack.c.h.b16 %v2635
    %v4122 = vunpack.c.l.b16 %v2636
    %v4123 = vunpack.c.h.b16 %v2636
    %v4124 = vunpack.c.l.b16 %v2637
    %v4125 = vunpack.c.h.b16 %v2637
    %v4126 = vunpack.c.l.b16 %v2638
    %v4127 = vunpack.c.h.b16 %v2638
    %v4128 = vunpack.c.l.b16 %v2639
    %v4129 = vunpack.c.h.b16 %v2639
    %v4130 = vunpack.c.l.b16 %v2640
    %v4131 = vunpack.c.h.b16 %v2640
    %v4132 = vunpack.c.l.b16 %v2641
    %v4133 = vunpack.c.h.b16 %v2641
    %v4134 = vunpack.c.l.b16 %v2642
    %v4135 = vunpack.c.h.b16 %v2642
    %v4136 = vunpack.c.l.b16 %v2643
    %v4137 = vunpack.c.h.b16 %v2643
    %v4138 = vunpack.c.l.b16 %v2644
    %v4139 = vunpack.c.h.b16 %v2644
    %v4140 = vunpack.c.l.b16 %v2645
    %v4141 = vunpack.c.h.b16 %v2645
    %v4142 = vunpack.c.l.b16 %v2646
    %v4143 = vunpack.c.h.b16 %v2646
    %v4144 = vunpack.c.l.b16 %v2647
    %v4145 = vunpack.c.h.b16 %v2647
    %v4146 = vunpack.c.l.b16 %v2648
    %v4147 = vunpack.c.h.b16 %v2648
    %v4148 = vunpack.c.l.b16 %v2649
    %v4149 = vunpack.c.h.b16 %v2649
    %v4150 = vunpack.c.l.b16 %v2650
    %v4151 = vunpack.c.h.b16 %v2650
    %v4152 = vunpack.c.l.b16 %v2651
    %v4153 = vunpack.c.h.b16 %v2651
    %v4154 = vunpack.c.l.b16 %v2652
    %v4155 = vunpack.c.h.b16 %v2652
    %v4156 = vunpack.c.l.b16 %v2653
    %v4157 = vunpack.c.h.b16 %v2653
    %v4158 = vunpack.c.l.b16 %v2654
    %v4159 = vunpack.c.h.b16 %v2654
    %v4160 = vunpack.c.l.b16 %v2655
    %v4161 = vunpack.c.h.b16 %v2655
    %v4162 = vunpack.c.l.b16 %v2656
    %v4163 = vunpack.c.h.b16 %v2656
    %v4164 = vunpack.c.l.b16 %v2657
    %v4165 = vunpack.c.h.b16 %v2657
    %v4166 = vunpack.c.l.b16 %v2658
    %v4167 = vunpack.c.h.b16 %v2658
    %v4168 = vunpack.c.l.b16 %v2659
    %v4169 = vunpack.c.h.b16 %v2659
    %v4170 = vunpack.c.l.b16 %v2660
    %v4171 = vunpack.c.h.b16 %v2660
    %v4172 = vunpack.c.l.b16 %v2661
    %v4173 = vunpack.c.h.b16 %v2661
    %v4174 = vunpack.c.l.b16 %v2662
    %v4175 = vunpack.c.h.b16 %v2662
    %v4176 = vunpack.c.l.b16 %v2663
    %v4177 = vunpack.c.h.b16 %v2663
    %v4178 = vunpack.c.l.b16 %v2664
    %v4179 = vunpack.c.h.b16 %v2664
    %v4180 = vunpack.c.l.b16 %v2665
    %v4181 = vunpack.c.h.b16 %v2665
    %v4182 = vunpack.c.l.b16 %v2666
    %v4183 = vunpack.c.h.b16 %v2666
    %v4184 = vunpack.c.l.b16 %v2667
    %v4185 = vunpack.c.h.b16 %v2667
    %v4186 = vunpack.c.l.b16 %v2668
    %v4187 = vunpack.c.h.b16 %v2668
    %v4188 = vunpack.c.l.b16 %v2669
    %v4189 = vunpack.c.h.b16 %v2669
    %v4190 = vunpack.c.l.b16 %v2670
    %v4191 = vunpack.c.h.b16 %v2670
    %v4192 = vunpack.c.l.b16 %v2671
    %v4193 = vunpack.c.h.b16 %v2671
    %v4194 = vunpack.c.l.b16 %v2672
    %v4195 = vunpack.c.h.b16 %v2672
    %v4196 = vunpack.c.l.b16 %v2673
    %v4197 = vunpack.c.h.b16 %v2673
    %v4198 = vunpack.c.l.b16 %v2674
    %v4199 = vunpack.c.h.b16 %v2674
    %v4200 = vunpack.c.l.b16 %v2675
    %v4201 = vunpack.c.h.b16 %v2675
    %v4202 = vunpack.c.l.b16 %v2676
    %v4203 = vunpack.c.h.b16 %v2676
    %v4204 = vunpack.c.l.b16 %v2677
    %v4205 = vunpack.c.h.b16 %v2677
    %v4206 = vunpack.c.l.b16 %v2678
    %v4207 = vunpack.c.h.b16 %v2678
    %v4208 = vunpack.c.l.b16 %v2679
    %v4209 = vunpack.c.h.b16 %v2679
    %v4210 = vunpack.c.l.b16 %v2680
    %v4211 = vunpack.c.h.b16 %v2680
    %v4212 = vunpack.c.l.b16 %v2681
    %v4213 = vunpack.c.h.b16 %v2681
    %v4214 = vunpack.c.l.b16 %v2682
    %v4215 = vunpack.c.h.b16 %v2682
    %v4216 = vunpack.c.l.b16 %v2683
    %v4217 = vunpack.c.h.b16 %v2683
    %v4218 = vunpack.c.l.b16 %v2684
    %v4219 = vunpack.c.h.b16 %v2684
    %v4220 = vunpack.c.l.b16 %v2685
    %v4221 = vunpack.c.h.b16 %v2685
    %v4222 = vunpack.c.l.b16 %v2686
    %v4223 = vunpack.c.h.b16 %v2686
    %v4224 = vunpack.c.l.b16 %v2687
    %v4225 = vunpack.c.h.b16 %v2687
    %v4226 = vunpack.c.l.b16 %v2688
    %v4227 = vunpack.c.h.b16 %v2688
    %v4228 = vunpack.c.l.b16 %v2689
    %v4229 = vunpack.c.h.b16 %v2689
    %v4230 = vunpack.c.l.b16 %v2690
    %v4231 = vunpack.c.h.b16 %v2690
    %v4232 = vunpack.c.l.b16 %v2691
    %v4233 = vunpack.c.h.b16 %v2691
    %v4234 = vunpack.c.l.b16 %v2692
    %v4235 = vunpack.c.h.b16 %v2692
    %v4236 = vunpack.c.l.b16 %v2693
    %v4237 = vunpack.c.h.b16 %v2693
    %v4238 = vunpack.c.l.b16 %v2694
    %v4239 = vunpack.c.h.b16 %v2694
    %v4240 = vunpack.c.l.b16 %v2695
    %v4241 = vunpack.c.h.b16 %v2695
    %v4242 = vunpack.c.l.b16 %v2696
    %v4243 = vunpack.c.h.b16 %v2696
    %v4244 = vunpack.c.l.b16 %v2697
    %v4245 = vunpack.c.h.b16 %v2697
    %v4246 = vunpack.c.l.b16 %v2698
    %v4247 = vunpack.c.h.b16 %v2698
    %v4248 = vunpack.c.l.b16 %v2699
    %v4249 = vunpack.c.h.b16 %v2699
    %v4250 = vunpack.c.l.b16 %v2700
    %v4251 = vunpack.c.h.b16 %v2700
    %v4252 = vunpack.c.l.b16 %v2701
    %v4253 = vunpack.c.h.b16 %v2701
    %v4254 = vunpack.c.l.b16 %v2702
    %v4255 = vunpack.c.h.b16 %v2702
    %v4256 = vunpack.c.l.b16 %v2703
    %v4257 = vunpack.c.h.b16 %v2703
    %v4258 = vunpack.c.l.b16 %v2704
    %v4259 = vunpack.c.h.b16 %v2704
    %v4260 = vunpack.c.l.b16 %v2705
    %v4261 = vunpack.c.h.b16 %v2705
    %v4262 = vunpack.c.l.b16 %v2706
    %v4263 = vunpack.c.h.b16 %v2706
    %v4264 = vunpack.c.l.b16 %v2707
    %v4265 = vunpack.c.h.b16 %v2707
    %v4266 = vunpack.c.l.b16 %v2708
    %v4267 = vunpack.c.h.b16 %v2708
    %v4268 = vunpack.c.l.b16 %v2709
    %v4269 = vunpack.c.h.b16 %v2709
    %v4270 = vunpack.c.l.b16 %v2710
    %v4271 = vunpack.c.h.b16 %v2710
    %v4272 = vunpack.c.l.b16 %v2711
    %v4273 = vunpack.c.h.b16 %v2711
    %v4274 = vunpack.c.l.b16 %v2712
    %v4275 = vunpack.c.h.b16 %v2712
    %v4276 = vunpack.c.l.b16 %v2713
    %v4277 = vunpack.c.h.b16 %v2713
    %v4278 = vunpack.c.l.b16 %v2714
    %v4279 = vunpack.c.h.b16 %v2714
    %v4280 = vunpack.c.l.b16 %v2715
    %v4281 = vunpack.c.h.b16 %v2715
    %v4282 = vunpack.c.l.b16 %v2716
    %v4283 = vunpack.c.h.b16 %v2716
    %v4284 = vunpack.c.l.b16 %v2717
    %v4285 = vunpack.c.h.b16 %v2717
    %v4286 = vunpack.c.l.b16 %v2718
    %v4287 = vunpack.c.h.b16 %v2718
    %v4288 = vunpack.c.l.b16 %v2719
    %v4289 = vunpack.c.h.b16 %v2719
    %v4290 = vunpack.c.l.b16 %v2720
    %v4291 = vunpack.c.h.b16 %v2720
    %v4292 = vunpack.c.l.b16 %v2721
    %v4293 = vunpack.c.h.b16 %v2721
    %v4294 = vunpack.c.l.b16 %v2722
    %v4295 = vunpack.c.h.b16 %v2722
    %v4296 = vunpack.c.l.b16 %v2723
    %v4297 = vunpack.c.h.b16 %v2723
    %v4298 = vunpack.c.l.b16 %v2724
    %v4299 = vunpack.c.h.b16 %v2724
    %v4300 = vunpack.c.l.b16 %v2725
    %v4301 = vunpack.c.h.b16 %v2725
    %v4302 = vunpack.c.l.b16 %v2726
    %v4303 = vunpack.c.h.b16 %v2726
    %v4304 = vunpack.c.l.b16 %v2727
    %v4305 = vunpack.c.h.b16 %v2727
    %v4306 = vunpack.c.l.b16 %v2728
    %v4307 = vunpack.c.h.b16 %v2728
    %v4308 = vunpack.c.l.b16 %v2729
    %v4309 = vunpack.c.h.b16 %v2729
    %v4310 = vunpack.c.l.b16 %v2730
    %v4311 = vunpack.c.h.b16 %v2730
    %v4312 = vunpack.c.l.b16 %v2731
    %v4313 = vunpack.c.h.b16 %v2731
    %v4314 = vunpack.c.l.b16 %v2732
    %v4315 = vunpack.c.h.b16 %v2732
    %v4316 = vunpack.c.l.b16 %v2733
    %v4317 = vunpack.c.h.b16 %v2733
    %v4318 = vunpack.c.l.b16 %v2734
    %v4319 = vunpack.c.h.b16 %v2734
    %v4320 = vunpack.c.l.b16 %v2735
    %v4321 = vunpack.c.h.b16 %v2735
    %v4322 = vunpack.c.l.b16 %v2736
    %v4323 = vunpack.c.h.b16 %v2736
    %v4324 = vunpack.c.l.b16 %v2737
    %v4325 = vunpack.c.h.b16 %v2737
    %v4326 = vunpack.c.l.b16 %v2738
    %v4327 = vunpack.c.h.b16 %v2738
    %v4328 = vunpack.c.l.b16 %v2739
    %v4329 = vunpack.c.h.b16 %v2739
    %v4330 = vunpack.c.l.b16 %v2740
    %v4331 = vunpack.c.h.b16 %v2740
    %v4332 = vunpack.c.l.b16 %v2741
    %v4333 = vunpack.c.h.b16 %v2741
    %v4334 = vunpack.c.l.b16 %v2742
    %v4335 = vunpack.c.h.b16 %v2742
    %v4336 = vunpack.c.l.b16 %v2743
    %v4337 = vunpack.c.h.b16 %v2743
    %v4338 = vunpack.c.l.b16 %v2744
    %v4339 = vunpack.c.h.b16 %v2744
    %v4340 = vunpack.c.l.b16 %v2745
    %v4341 = vunpack.c.h.b16 %v2745
    %v4342 = vunpack.c.l.b16 %v2746
    %v4343 = vunpack.c.h.b16 %v2746
    %v4344 = vunpack.c.l.b16 %v2747
    %v4345 = vunpack.c.h.b16 %v2747
    %v4346 = vunpack.c.l.b16 %v2748
    %v4347 = vunpack.c.h.b16 %v2748
    %v4348 = vunpack.c.l.b16 %v2749
    %v4349 = vunpack.c.h.b16 %v2749
    %v4350 = vunpack.c.l.b16 %v2750
    %v4351 = vunpack.c.h.b16 %v2750
    %v4352 = vunpack.c.l.b16 %v2751
    %v4353 = vunpack.c.h.b16 %v2751
    %v4354 = vunpack.c.l.b16 %v2752
    %v4355 = vunpack.c.h.b16 %v2752
    %v4356 = vunpack.c.l.b16 %v2753
    %v4357 = vunpack.c.h.b16 %v2753
    %v4358 = vunpack.c.l.b16 %v2754
    %v4359 = vunpack.c.h.b16 %v2754
    %v4360 = vunpack.c.l.b16 %v2755
    %v4361 = vunpack.c.h.b16 %v2755
    %v4362 = vunpack.c.l.b16 %v2756
    %v4363 = vunpack.c.h.b16 %v2756
    %v4364 = vunpack.c.l.b16 %v2757
    %v4365 = vunpack.c.h.b16 %v2757
    %v4366 = vunpack.c.l.b16 %v2758
    %v4367 = vunpack.c.h.b16 %v2758
    %v4368 = vunpack.c.l.b16 %v2759
    %v4369 = vunpack.c.h.b16 %v2759
    %v4370 = vunpack.c.l.b16 %v2760
    %v4371 = vunpack.c.h.b16 %v2760
    %v4372 = vunpack.c.l.b16 %v2761
    %v4373 = vunpack.c.h.b16 %v2761
    %v4374 = vunpack.c.l.b16 %v2762
    %v4375 = vunpack.c.h.b16 %v2762
    %v4376 = vunpack.c.l.b16 %v2763
    %v4377 = vunpack.c.h.b16 %v2763
    %v4378 = vunpack.c.l.b16 %v2764
    %v4379 = vunpack.c.h.b16 %v2764
    %v4380 = vunpack.c.l.b16 %v2765
    %v4381 = vunpack.c.h.b16 %v2765
    %v4382 = vunpack.c.l.b16 %v2766
    %v4383 = vunpack.c.h.b16 %v2766
    %v4384 = vunpack.c.l.b16 %v2767
    %v4385 = vunpack.c.h.b16 %v2767
    %v4386 = vunpack.c.l.b16 %v2768
    %v4387 = vunpack.c.h.b16 %v2768
    %v4388 = vunpack.c.l.b16 %v2769
    %v4389 = vunpack.c.h.b16 %v2769
    %v4390 = vunpack.c.l.b16 %v2770
    %v4391 = vunpack.c.h.b16 %v2770
    %v4392 = vunpack.c.l.b16 %v2771
    %v4393 = vunpack.c.h.b16 %v2771
    %v4394 = vunpack.c.l.b16 %v2772
    %v4395 = vunpack.c.h.b16 %v2772
    %v4396 = vunpack.c.l.b16 %v2773
    %v4397 = vunpack.c.h.b16 %v2773
    %v4398 = vunpack.c.l.b16 %v2774
    %v4399 = vunpack.c.h.b16 %v2774
    %v4400 = vunpack.c.l.b16 %v2775
    %v4401 = vunpack.c.h.b16 %v2775
    %v4402 = vunpack.c.l.b16 %v2776
    %v4403 = vunpack.c.h.b16 %v2776
    %v4404 = vunpack.c.l.b16 %v2777
    %v4405 = vunpack.c.h.b16 %v2777
    %v4406 = vunpack.c.l.b16 %v2778
    %v4407 = vunpack.c.h.b16 %v2778
    %v4408 = vunpack.c.l.b16 %v2779
    %v4409 = vunpack.c.h.b16 %v2779
    %v4410 = vunpack.c.l.b16 %v2780
    %v4411 = vunpack.c.h.b16 %v2780
    %v4412 = vunpack.c.l.b16 %v2781
    %v4413 = vunpack.c.h.b16 %v2781
    %v4414 = vunpack.c.l.b16 %v2782
    %v4415 = vunpack.c.h.b16 %v2782
    %v4416 = vunpack.c.l.b16 %v2783
    %v4417 = vunpack.c.h.b16 %v2783
    %v4418 = vunpack.c.l.b16 %v2784
    %v4419 = vunpack.c.h.b16 %v2784
    %v4420 = vunpack.c.l.b16 %v2785
    %v4421 = vunpack.c.h.b16 %v2785
    %v4422 = vunpack.c.l.b16 %v2786
    %v4423 = vunpack.c.h.b16 %v2786
    %v4424 = vunpack.c.l.b16 %v2787
    %v4425 = vunpack.c.h.b16 %v2787
    %v4426 = vunpack.c.l.b16 %v2788
    %v4427 = vunpack.c.h.b16 %v2788
    %v4428 = vunpack.c.l.b16 %v2789
    %v4429 = vunpack.c.h.b16 %v2789
    %v4430 = vunpack.c.l.b16 %v2790
    %v4431 = vunpack.c.h.b16 %v2790
    %v4432 = vunpack.c.l.b16 %v2791
    %v4433 = vunpack.c.h.b16 %v2791
    %v4434 = vunpack.c.l.b16 %v2792
    %v4435 = vunpack.c.h.b16 %v2792
    %v4436 = vunpack.c.l.b16 %v2793
    %v4437 = vunpack.c.h.b16 %v2793
    %v4438 = vunpack.c.l.b16 %v2794
    %v4439 = vunpack.c.h.b16 %v2794
    %v4440 = vunpack.c.l.b16 %v2795
    %v4441 = vunpack.c.h.b16 %v2795
    %v4442 = vunpack.c.l.b16 %v2796
    %v4443 = vunpack.c.h.b16 %v2796
    %v4444 = vunpack.c.l.b16 %v2797
    %v4445 = vunpack.c.h.b16 %v2797
    %v4446 = vunpack.c.l.b16 %v2798
    %v4447 = vunpack.c.h.b16 %v2798
    %v4448 = vunpack.c.l.b16 %v2799
    %v4449 = vunpack.c.h.b16 %v2799
    %v4450 = vunpack.c.l.b16 %v2800
    %v4451 = vunpack.c.h.b16 %v2800
    %v4452 = vunpack.c.l.b16 %v2801
    %v4453 = vunpack.c.h.b16 %v2801
    %v4454 = vunpack.c.l.b16 %v2802
    %v4455 = vunpack.c.h.b16 %v2802
    %v4456 = vunpack.c.l.b16 %v2803
    %v4457 = vunpack.c.h.b16 %v2803
    %v4458 = vunpack.c.l.b16 %v2804
    %v4459 = vunpack.c.h.b16 %v2804
    %v4460 = vunpack.c.l.b16 %v2805
    %v4461 = vunpack.c.h.b16 %v2805
    %v4462 = vunpack.c.l.b16 %v2806
    %v4463 = vunpack.c.h.b16 %v2806
    %v4464 = vunpack.c.l.b16 %v2807
    %v4465 = vunpack.c.h.b16 %v2807
    %v4466 = vunpack.c.l.b16 %v2808
    %v4467 = vunpack.c.h.b16 %v2808
    %v4468 = vunpack.c.l.b16 %v2809
    %v4469 = vunpack.c.h.b16 %v2809
    %v4470 = vunpack.c.l.b16 %v2810
    %v4471 = vunpack.c.h.b16 %v2810
    %v4472 = vunpack.c.l.b16 %v2811
    %v4473 = vunpack.c.h.b16 %v2811
    %v4474 = vunpack.c.l.b16 %v2812
    %v4475 = vunpack.c.h.b16 %v2812
    %v4476 = vunpack.c.l.b16 %v2813
    %v4477 = vunpack.c.h.b16 %v2813
    %v4478 = vunpack.c.l.b16 %v2814
    %v4479 = vunpack.c.h.b16 %v2814
    %v4480 = vunpack.c.l.b16 %v2815
    %v4481 = vunpack.c.h.b16 %v2815
    %v4482 = vunpack.c.l.b16 %v2816
    %v4483 = vunpack.c.h.b16 %v2816
    %v4484 = vunpack.c.l.b16 %v2817
    %v4485 = vunpack.c.h.b16 %v2817
    %v4486 = vunpack.c.l.b16 %v2818
    %v4487 = vunpack.c.h.b16 %v2818
    %v4488 = vunpack.c.l.b16 %v2819
    %v4489 = vunpack.c.h.b16 %v2819
    %v4490 = vunpack.c.l.b16 %v2820
    %v4491 = vunpack.c.h.b16 %v2820
    %v4492 = vunpack.c.l.b16 %v2821
    %v4493 = vunpack.c.h.b16 %v2821
    %v4494 = vunpack.c.l.b16 %v2822
    %v4495 = vunpack.c.h.b16 %v2822
    %v4496 = vunpack.c.l.b16 %v2823
    %v4497 = vunpack.c.h.b16 %v2823
    %v4498 = vunpack.c.l.b16 %v2824
    %v4499 = vunpack.c.h.b16 %v2824
    %v4500 = vunpack.c.l.b16 %v2825
    %v4501 = vunpack.c.h.b16 %v2825
    %v4502 = vunpack.c.l.b16 %v2826
    %v4503 = vunpack.c.h.b16 %v2826
    %v4504 = vunpack.c.l.b16 %v2827
    %v4505 = vunpack.c.h.b16 %v2827
    %v4506 = vunpack.c.l.b16 %v2828
    %v4507 = vunpack.c.h.b16 %v2828
    %v4508 = vunpack.c.l.b16 %v2829
    %v4509 = vunpack.c.h.b16 %v2829
    %v4510 = vunpack.c.l.b16 %v2830
    %v4511 = vunpack.c.h.b16 %v2830
    %v4512 = vunpack.c.l.b16 %v2831
    %v4513 = vunpack.c.h.b16 %v2831
    %v4514 = vunpack.c.l.b16 %v2832
    %v4515 = vunpack.c.h.b16 %v2832
    %v4516 = vunpack.c.l.b16 %v2833
    %v4517 = vunpack.c.h.b16 %v2833
    %v4518 = vunpack.c.l.b16 %v2834
    %v4519 = vunpack.c.h.b16 %v2834
    %v4520 = vunpack.c.l.b16 %v2835
    %v4521 = vunpack.c.h.b16 %v2835
    %v4522 = vunpack.c.l.b16 %v2836
    %v4523 = vunpack.c.h.b16 %v2836
    %v4524 = vunpack.c.l.b16 %v2837
    %v4525 = vunpack.c.h.b16 %v2837
    %v4526 = vunpack.c.l.b16 %v2838
    %v4527 = vunpack.c.h.b16 %v2838
    %v4528 = vunpack.c.l.b16 %v2839
    %v4529 = vunpack.c.h.b16 %v2839
    %v4530 = vunpack.c.l.b16 %v2840
    %v4531 = vunpack.c.h.b16 %v2840
    %v4532 = vunpack.c.l.b16 %v2841
    %v4533 = vunpack.c.h.b16 %v2841
    %v4534 = vunpack.c.l.b16 %v2842
    %v4535 = vunpack.c.h.b16 %v2842
    %v4536 = vunpack.c.l.b16 %v2843
    %v4537 = vunpack.c.h.b16 %v2843
    %v4538 = vunpack.c.l.b16 %v2844
    %v4539 = vunpack.c.h.b16 %v2844
    %v4540 = vunpack.c.l.b16 %v2845
    %v4541 = vunpack.c.h.b16 %v2845
    %v4542 = vunpack.c.l.b16 %v2846
    %v4543 = vunpack.c.h.b16 %v2846
    %v4544 = vunpack.c.l.b16 %v2847
    %v4545 = vunpack.c.h.b16 %v2847
    %v4546 = vunpack.c.l.b16 %v2848
    %v4547 = vunpack.c.h.b16 %v2848
    %v4548 = vunpack.c.l.b16 %v2849
    %v4549 = vunpack.c.h.b16 %v2849
    %v4550 = vunpack.c.l.b16 %v2850
    %v4551 = vunpack.c.h.b16 %v2850
    %v4552 = vunpack.c.l.b16 %v2851
    %v4553 = vunpack.c.h.b16 %v2851
    %v4554 = vunpack.c.l.b16 %v2852
    %v4555 = vunpack.c.h.b16 %v2852
    %v4556 = vunpack.c.l.b16 %v2853
    %v4557 = vunpack.c.h.b16 %v2853
    %v4558 = vunpack.c.l.b16 %v2854
    %v4559 = vunpack.c.h.b16 %v2854
    %v4560 = vunpack.c.l.b16 %v2855
    %v4561 = vunpack.c.h.b16 %v2855
    %v4562 = vunpack.c.l.b16 %v2856
    %v4563 = vunpack.c.h.b16 %v2856
    %v4564 = vunpack.c.l.b16 %v2857
    %v4565 = vunpack.c.h.b16 %v2857
    %v4566 = vunpack.c.l.b16 %v2858
    %v4567 = vunpack.c.h.b16 %v2858
    %v4568 = vunpack.c.l.b16 %v2859
    %v4569 = vunpack.c.h.b16 %v2859
    %v4570 = vunpack.c.l.b16 %v2860
    %v4571 = vunpack.c.h.b16 %v2860
    %v4572 = vunpack.c.l.b16 %v2861
    %v4573 = vunpack.c.h.b16 %v2861
    %v4574 = vunpack.c.l.b16 %v2862
    %v4575 = vunpack.c.h.b16 %v2862
    %v4576 = vunpack.c.l.b16 %v2863
    %v4577 = vunpack.c.h.b16 %v2863
    %v4578 = vunpack.c.l.b16 %v2864
    %v4579 = vunpack.c.h.b16 %v2864
    %v4580 = vunpack.c.l.b16 %v2865
    %v4581 = vunpack.c.h.b16 %v2865
    %v4582 = vunpack.c.l.b16 %v2866
    %v4583 = vunpack.c.h.b16 %v2866
    %v4584 = vunpack.c.l.b16 %v2867
    %v4585 = vunpack.c.h.b16 %v2867
    %v4586 = vunpack.c.l.b16 %v2868
    %v4587 = vunpack.c.h.b16 %v2868
    %v4588 = vunpack.c.l.b16 %v2869
    %v4589 = vunpack.c.h.b16 %v2869
    %v4590 = vunpack.c.l.b16 %v2870
    %v4591 = vunpack.c.h.b16 %v2870
    %v4592 = vunpack.c.l.b16 %v2871
    %v4593 = vunpack.c.h.b16 %v2871
    %v4594 = vunpack.c.l.b16 %v2872
    %v4595 = vunpack.c.h.b16 %v2872
    %v4596 = vunpack.c.l.b16 %v2873
    %v4597 = vunpack.c.h.b16 %v2873
    %v4598 = vunpack.c.l.b16 %v2874
    %v4599 = vunpack.c.h.b16 %v2874
    %v4600 = vunpack.c.l.b16 %v2875
    %v4601 = vunpack.c.h.b16 %v2875
    %v4602 = vunpack.c.l.b16 %v2876
    %v4603 = vunpack.c.h.b16 %v2876
    %v4604 = vunpack.c.l.b16 %v2877
    %v4605 = vunpack.c.h.b16 %v2877
    %v4606 = vunpack.c.l.b16 %v2878
    %v4607 = vunpack.c.h.b16 %v2878
    %v4608 = vunpack.c.l.b16 %v2879
    %v4609 = vunpack.c.h.b16 %v2879
    %v4610 = vunpack.c.l.b16 %v2880
    %v4611 = vunpack.c.h.b16 %v2880
    %v4612 = vunpack.c.l.b16 %v2881
    %v4613 = vunpack.c.h.b16 %v2881
    %v4614 = vunpack.c.l.b16 %v2882
    %v4615 = vunpack.c.h.b16 %v2882
    %v4616 = vunpack.c.l.b16 %v2883
    %v4617 = vunpack.c.h.b16 %v2883
    %v4618 = vunpack.c.l.b16 %v2884
    %v4619 = vunpack.c.h.b16 %v2884
    %v4620 = vunpack.c.l.b16 %v2885
    %v4621 = vunpack.c.h.b16 %v2885
    %v4622 = vunpack.c.l.b16 %v2886
    %v4623 = vunpack.c.h.b16 %v2886
    %v4624 = vunpack.c.l.b16 %v2887
    %v4625 = vunpack.c.h.b16 %v2887
    %v4626 = vunpack.c.l.b16 %v2888
    %v4627 = vunpack.c.h.b16 %v2888
    %v4628 = vunpack.c.l.b16 %v2889
    %v4629 = vunpack.c.h.b16 %v2889
    %v4630 = vunpack.c.l.b16 %v2890
    %v4631 = vunpack.c.h.b16 %v2890
    %v4632 = vunpack.c.l.b16 %v2891
    %v4633 = vunpack.c.h.b16 %v2891
    %v4634 = vunpack.c.l.b16 %v2892
    %v4635 = vunpack.c.h.b16 %v2892
    %v4636 = vunpack.c.l.b16 %v2893
    %v4637 = vunpack.c.h.b16 %v2893
    %v4638 = vunpack.c.l.b16 %v2894
    %v4639 = vunpack.c.h.b16 %v2894
    %v4640 = vunpack.c.l.b16 %v2895
    %v4641 = vunpack.c.h.b16 %v2895
    %v4642 = vunpack.c.l.b16 %v2896
    %v4643 = vunpack.c.h.b16 %v2896
    %v4644 = vunpack.c.l.b16 %v2897
    %v4645 = vunpack.c.h.b16 %v2897
    %v4646 = vunpack.c.l.b16 %v2898
    %v4647 = vunpack.c.h.b16 %v2898
    %v4648 = vunpack.c.l.b16 %v2899
    %v4649 = vunpack.c.h.b16 %v2899
    %v4650 = vunpack.c.l.b16 %v2900
    %v4651 = vunpack.c.h.b16 %v2900
    %v4652 = vunpack.c.l.b16 %v2901
    %v4653 = vunpack.c.h.b16 %v2901
    %v4654 = vunpack.c.l.b16 %v2902
    %v4655 = vunpack.c.h.b16 %v2902
    %v4656 = vunpack.c.l.b16 %v2903
    %v4657 = vunpack.c.h.b16 %v2903
    %v4658 = vunpack.c.l.b16 %v2904
    %v4659 = vunpack.c.h.b16 %v2904
    %v4660 = vunpack.c.l.b16 %v2905
    %v4661 = vunpack.c.h.b16 %v2905
    %v4662 = vunpack.c.l.b16 %v2906
    %v4663 = vunpack.c.h.b16 %v2906
    %v4664 = vunpack.c.l.b16 %v2907
    %v4665 = vunpack.c.h.b16 %v2907
    %v4666 = vunpack.c.l.b16 %v2908
    %v4667 = vunpack.c.h.b16 %v2908
    %v4668 = vunpack.c.l.b16 %v2909
    %v4669 = vunpack.c.h.b16 %v2909
    %v4670 = vunpack.c.l.b16 %v2910
    %v4671 = vunpack.c.h.b16 %v2910
    %v4672 = vunpack.c.l.b16 %v2911
    %v4673 = vunpack.c.h.b16 %v2911
    %v4674 = vunpack.c.l.b16 %v2912
    %v4675 = vunpack.c.h.b16 %v2912
    %v4676 = vunpack.c.l.b16 %v2913
    %v4677 = vunpack.c.h.b16 %v2913
    %v4678 = vunpack.c.l.b16 %v2914
    %v4679 = vunpack.c.h.b16 %v2914
    %v4680 = vunpack.c.l.b16 %v2915
    %v4681 = vunpack.c.h.b16 %v2915
    %v4682 = vunpack.c.l.b16 %v2916
    %v4683 = vunpack.c.h.b16 %v2916
    %v4684 = vunpack.c.l.b16 %v2917
    %v4685 = vunpack.c.h.b16 %v2917
    %v4686 = vunpack.c.l.b16 %v2918
    %v4687 = vunpack.c.h.b16 %v2918
    %v4688 = vunpack.c.l.b16 %v2919
    %v4689 = vunpack.c.h.b16 %v2919
    %v4690 = vunpack.c.l.b16 %v2920
    %v4691 = vunpack.c.h.b16 %v2920
    %v4692 = vunpack.c.l.b16 %v2921
    %v4693 = vunpack.c.h.b16 %v2921
    %v4694 = vunpack.c.l.b16 %v2922
    %v4695 = vunpack.c.h.b16 %v2922
    %v4696 = vunpack.c.l.b16 %v2923
    %v4697 = vunpack.c.h.b16 %v2923
    %v4698 = vunpack.c.l.b16 %v2924
    %v4699 = vunpack.c.h.b16 %v2924
    %v4700 = vunpack.c.l.b16 %v2925
    %v4701 = vunpack.c.h.b16 %v2925
    %v4702 = vunpack.c.l.b16 %v2926
    %v4703 = vunpack.c.h.b16 %v2926
    %v4704 = vunpack.c.l.b16 %v2927
    %v4705 = vunpack.c.h.b16 %v2927
    %v4706 = vunpack.c.l.b16 %v2928
    %v4707 = vunpack.c.h.b16 %v2928
    %v4708 = vunpack.c.l.b16 %v2929
    %v4709 = vunpack.c.h.b16 %v2929
    %v4710 = vunpack.c.l.b16 %v2930
    %v4711 = vunpack.c.h.b16 %v2930
    %v4712 = vunpack.c.l.b16 %v2931
    %v4713 = vunpack.c.h.b16 %v2931
    %v4714 = vunpack.c.l.b16 %v2932
    %v4715 = vunpack.c.h.b16 %v2932
    %v4716 = vunpack.c.l.b16 %v2933
    %v4717 = vunpack.c.h.b16 %v2933
    %v4718 = vunpack.c.l.b16 %v2934
    %v4719 = vunpack.c.h.b16 %v2934
    %v4720 = vunpack.c.l.b16 %v2935
    %v4721 = vunpack.c.h.b16 %v2935
    %v4722 = vunpack.c.l.b16 %v2936
    %v4723 = vunpack.c.h.b16 %v2936
    %v4724 = vunpack.c.l.b16 %v2937
    %v4725 = vunpack.c.h.b16 %v2937
    %v4726 = vunpack.c.l.b16 %v2938
    %v4727 = vunpack.c.h.b16 %v2938
    %v4728 = vunpack.c.l.b16 %v2939
    %v4729 = vunpack.c.h.b16 %v2939
    %v4730 = vunpack.c.l.b16 %v2940
    %v4731 = vunpack.c.h.b16 %v2940
    %v4732 = vunpack.c.l.b16 %v2941
    %v4733 = vunpack.c.h.b16 %v2941
    %v4734 = vpack.c.b16 %v3594, %v3582
    %v4735 = vpack.c.b16 %v3595, %v3583
    %v4736 = vpack.c.b16 %v3596, %v3584
    %v4737 = vpack.c.b16 %v3597, %v3585
    %v4738 = vpack.c.b16 %v3598, %v3586
    %v4739 = vpack.c.b16 %v3599, %v3587
    %v4740 = vpack.c.b16 %v3600, %v3588
    %v4741 = vpack.c.b16 %v3601, %v3589
    %v4742 = vpack.c.b16 %v3602, %v3590
    %v4743 = vpack.c.b16 %v3603, %v3591
    %v4744 = vpack.c.b16 %v3604, %v3592
    %v4745 = vpack.c.b16 %v3605, %v3593
    %v4746 = vpack.c.b16 %v3618, %v3606
    %v4747 = vpack.c.b16 %v3619, %v3607
    %v4748 = vpack.c.b16 %v3620, %v3608
    %v4749 = vpack.c.b16 %v3621, %v3609
    %v4750 = vpack.c.b16 %v3622, %v3610
    %v4751 = vpack.c.b16 %v3623, %v3611
    %v4752 = vpack.c.b16 %v3624, %v3612
    %v4753 = vpack.c.b16 %v3625, %v3613
    %v4754 = vpack.c.b16 %v3626, %v3614
    %v4755 = vpack.c.b16 %v3627, %v3615
    %v4756 = vpack.c.b16 %v3628, %v3616
    %v4757 = vpack.c.b16 %v3629, %v3617
    %v4758 = vpack.c.b16 %v3642, %v3630
    %v4759 = vpack.c.b16 %v3643, %v3631
    %v4760 = vpack.c.b16 %v3644, %v3632
    %v4761 = vpack.c.b16 %v3645, %v3633
    %v4762 = vpack.c.b16 %v3646, %v3634
    %v4763 = vpack.c.b16 %v3647, %v3635
    %v4764 = vpack.c.b16 %v3648, %v3636
    %v4765 = vpack.c.b16 %v3649, %v3637
    %v4766 = vpack.c.b16 %v3650, %v3638
    %v4767 = vpack.c.b16 %v3651, %v3639
    %v4768 = vpack.c.b16 %v3652, %v3640
    %v4769 = vpack.c.b16 %v3653, %v3641
    %v4770 = vpack.c.b16 %v3666, %v3654
    %v4771 = vpack.c.b16 %v3667, %v3655
    %v4772 = vpack.c.b16 %v3668, %v3656
    %v4773 = vpack.c.b16 %v3669, %v3657
    %v4774 = vpack.c.b16 %v3670, %v3658
    %v4775 = vpack.c.b16 %v3671, %v3659
    %v4776 = vpack.c.b16 %v3672, %v3660
    %v4777 = vpack.c.b16 %v3673, %v3661
    %v4778 = vpack.c.b16 %v3674, %v3662
    %v4779 = vpack.c.b16 %v3675, %v3663
    %v4780 = vpack.c.b16 %v3676, %v3664
    %v4781 = vpack.c.b16 %v3677, %v3665
    %v4782 = vpack.c.b16 %v3690, %v3678
    %v4783 = vpack.c.b16 %v3691, %v3679
    %v4784 = vpack.c.b16 %v3692, %v3680
    %v4785 = vpack.c.b16 %v3693, %v3681
    %v4786 = vpack.c.b16 %v3694, %v3682
    %v4787 = vpack.c.b16 %v3695, %v3683
    %v4788 = vpack.c.b16 %v3696, %v3684
    %v4789 = vpack.c.b16 %v3697, %v3685
    %v4790 = vpack.c.b16 %v3698, %v3686
    %v4791 = vpack.c.b16 %v3699, %v3687
    %v4792 = vpack.c.b16 %v3700, %v3688
    %v4793 = vpack.c.b16 %v3701, %v3689
    %v4794 = vpack.c.b16 %v3714, %v3702
    %v4795 = vpack.c.b16 %v3715, %v3703
    %v4796 = vpack.c.b16 %v3716, %v3704
    %v4797 = vpack.c.b16 %v3717, %v3705
    %v4798 = vpack.c.b16 %v3718, %v3706
    %v4799 = vpack.c.b16 %v3719, %v3707
    %v4800 = vpack.c.b16 %v3720, %v3708
    %v4801 = vpack.c.b16 %v3721, %v3709
    %v4802 = vpack.c.b16 %v3722, %v3710
    %v4803 = vpack.c.b16 %v3723, %v3711
    %v4804 = vpack.c.b16 %v3724, %v3712
    %v4805 = vpack.c.b16 %v3725, %v3713
    %v4806 = vpack.c.b16 %v3738, %v3726
    %v4807 = vpack.c.b16 %v3739, %v3727
    %v4808 = vpack.c.b16 %v3740, %v3728
    %v4809 = vpack.c.b16 %v3741, %v3729
    %v4810 = vpack.c.b16 %v3742, %v3730
    %v4811 = vpack.c.b16 %v3743, %v3731
    %v4812 = vpack.c.b16 %v3744, %v3732
    %v4813 = vpack.c.b16 %v3745, %v3733
    %v4814 = vpack.c.b16 %v3746, %v3734
    %v4815 = vpack.c.b16 %v3747, %v3735
    %v4816 = vpack.c.b16 %v3748, %v3736
    %v4817 = vpack.c.b16 %v3749, %v3737
    %v4818 = vpack.c.b16 %v3762, %v3750
    %v4819 = vpack.c.b16 %v3763, %v3751
    %v4820 = vpack.c.b16 %v3764, %v3752
    %v4821 = vpack.c.b16 %v3765, %v3753
    %v4822 = vpack.c.b16 %v3766, %v3754
    %v4823 = vpack.c.b16 %v3767, %v3755
    %v4824 = vpack.c.b16 %v3768, %v3756
    %v4825 = vpack.c.b16 %v3769, %v3757
    %v4826 = vpack.c.b16 %v3770, %v3758
    %v4827 = vpack.c.b16 %v3771, %v3759
    %v4828 = vpack.c.b16 %v3772, %v3760
    %v4829 = vpack.c.b16 %v3773, %v3761
    %v4830 = vpack.c.b16 %v3786, %v3774
    %v4831 = vpack.c.b16 %v3787, %v3775
    %v4832 = vpack.c.b16 %v3788, %v3776
    %v4833 = vpack.c.b16 %v3789, %v3777
    %v4834 = vpack.c.b16 %v3790, %v3778
    %v4835 = vpack.c.b16 %v3791, %v3779
    %v4836 = vpack.c.b16 %v3792, %v3780
    %v4837 = vpack.c.b16 %v3793, %v3781
    %v4838 = vpack.c.b16 %v3794, %v3782
    %v4839 = vpack.c.b16 %v3795, %v3783
    %v4840 = vpack.c.b16 %v3796, %v3784
    %v4841 = vpack.c.b16 %v3797, %v3785
    %v4842 = vpack.c.b16 %v3810, %v3798
    %v4843 = vpack.c.b16 %v3811, %v3799
    %v4844 = vpack.c.b16 %v3812, %v3800
    %v4845 = vpack.c.b16 %v3813, %v3801
    %v4846 = vpack.c.b16 %v3814, %v3802
    %v4847 = vpack.c.b16 %v3815, %v3803
    %v4848 = vpack.c.b16 %v3816, %v3804
    %v4849 = vpack.c.b16 %v3817, %v3805
    %v4850 = vpack.c.b16 %v3818, %v3806
    %v4851 = vpack.c.b16 %v3819, %v3807
    %v4852 = vpack.c.b16 %v3820, %v3808
    %v4853 = vpack.c.b16 %v3821, %v3809
    %v4854 = vpack.c.b16 %v3834, %v3822
    %v4855 = vpack.c.b16 %v3835, %v3823
    %v4856 = vpack.c.b16 %v3836, %v3824
    %v4857 = vpack.c.b16 %v3837, %v3825
    %v4858 = vpack.c.b16 %v3838, %v3826
    %v4859 = vpack.c.b16 %v3839, %v3827
    %v4860 = vpack.c.b16 %v3840, %v3828
    %v4861 = vpack.c.b16 %v3841, %v3829
    %v4862 = vpack.c.b16 %v3842, %v3830
    %v4863 = vpack.c.b16 %v3843, %v3831
    %v4864 = vpack.c.b16 %v3844, %v3832
    %v4865 = vpack.c.b16 %v3845, %v3833
    %v4866 = vpack.c.b16 %v3858, %v3846
    %v4867 = vpack.c.b16 %v3859, %v3847
    %v4868 = vpack.c.b16 %v3860, %v3848
    %v4869 = vpack.c.b16 %v3861, %v3849
    %v4870 = vpack.c.b16 %v3862, %v3850
    %v4871 = vpack.c.b16 %v3863, %v3851
    %v4872 = vpack.c.b16 %v3864, %v3852
    %v4873 = vpack.c.b16 %v3865, %v3853
    %v4874 = vpack.c.b16 %v3866, %v3854
    %v4875 = vpack.c.b16 %v3867, %v3855
    %v4876 = vpack.c.b16 %v3868, %v3856
    %v4877 = vpack.c.b16 %v3869, %v3857
    %v4878 = vpack.c.b16 %v3882, %v3870
    %v4879 = vpack.c.b16 %v3883, %v3871
    %v4880 = vpack.c.b16 %v3884, %v3872
    %v4881 = vpack.c.b16 %v3885, %v3873
    %v4882 = vpack.c.b16 %v3886, %v3874
    %v4883 = vpack.c.b16 %v3887, %v3875
    %v4884 = vpack.c.b16 %v3888, %v3876
    %v4885 = vpack.c.b16 %v3889, %v3877
    %v4886 = vpack.c.b16 %v3890, %v3878
    %v4887 = vpack.c.b16 %v3891, %v3879
    %v4888 = vpack.c.b16 %v3892, %v3880
    %v4889 = vpack.c.b16 %v3893, %v3881
    %v4890 = vpack.c.b16 %v3906, %v3894
    %v4891 = vpack.c.b16 %v3907, %v3895
    %v4892 = vpack.c.b16 %v3908, %v3896
    %v4893 = vpack.c.b16 %v3909, %v3897
    %v4894 = vpack.c.b16 %v3910, %v3898
    %v4895 = vpack.c.b16 %v3911, %v3899
    %v4896 = vpack.c.b16 %v3912, %v3900
    %v4897 = vpack.c.b16 %v3913, %v3901
    %v4898 = vpack.c.b16 %v3914, %v3902
    %v4899 = vpack.c.b16 %v3915, %v3903
    %v4900 = vpack.c.b16 %v3916, %v3904
    %v4901 = vpack.c.b16 %v3917, %v3905
    %v4902 = vpack.c.b16 %v3930, %v3918
    %v4903 = vpack.c.b16 %v3931, %v3919
    %v4904 = vpack.c.b16 %v3932, %v3920
    %v4905 = vpack.c.b16 %v3933, %v3921
    %v4906 = vpack.c.b16 %v3934, %v3922
    %v4907 = vpack.c.b16 %v3935, %v3923
    %v4908 = vpack.c.b16 %v3936, %v3924
    %v4909 = vpack.c.b16 %v3937, %v3925
    %v4910 = vpack.c.b16 %v3938, %v3926
    %v4911 = vpack.c.b16 %v3939, %v3927
    %v4912 = vpack.c.b16 %v3940, %v3928
    %v4913 = vpack.c.b16 %v3941, %v3929
    %v4914 = vpack.c.b16 %v3954, %v3942
    %v4915 = vpack.c.b16 %v3955, %v3943
    %v4916 = vpack.c.b16 %v3956, %v3944
    %v4917 = vpack.c.b16 %v3957, %v3945
    %v4918 = vpack.c.b16 %v3958, %v3946
    %v4919 = vpack.c.b16 %v3959, %v3947
    %v4920 = vpack.c.b16 %v3960, %v3948
    %v4921 = vpack.c.b16 %v3961, %v3949
    %v4922 = vpack.c.b16 %v3962, %v3950
    %v4923 = vpack.c.b16 %v3963, %v3951
    %v4924 = vpack.c.b16 %v3964, %v3952
    %v4925 = vpack.c.b16 %v3965, %v3953
    %v4926 = vpack.c.b16 %v3978, %v3966
    %v4927 = vpack.c.b16 %v3979, %v3967
    %v4928 = vpack.c.b16 %v3980, %v3968
    %v4929 = vpack.c.b16 %v3981, %v3969
    %v4930 = vpack.c.b16 %v3982, %v3970
    %v4931 = vpack.c.b16 %v3983, %v3971
    %v4932 = vpack.c.b16 %v3984, %v3972
    %v4933 = vpack.c.b16 %v3985, %v3973
    %v4934 = vpack.c.b16 %v3986, %v3974
    %v4935 = vpack.c.b16 %v3987, %v3975
    %v4936 = vpack.c.b16 %v3988, %v3976
    %v4937 = vpack.c.b16 %v3989, %v3977
    %v4938 = vpack.c.b16 %v4002, %v3990
    %v4939 = vpack.c.b16 %v4003, %v3991
    %v4940 = vpack.c.b16 %v4004, %v3992
    %v4941 = vpack.c.b16 %v4005, %v3993
    %v4942 = vpack.c.b16 %v4006, %v3994
    %v4943 = vpack.c.b16 %v4007, %v3995
    %v4944 = vpack.c.b16 %v4008, %v3996
    %v4945 = vpack.c.b16 %v4009, %v3997
    %v4946 = vpack.c.b16 %v4010, %v3998
    %v4947 = vpack.c.b16 %v4011, %v3999
    %v4948 = vpack.c.b16 %v4012, %v4000
    %v4949 = vpack.c.b16 %v4013, %v4001
    %v4950 = vpack.c.b16 %v4026, %v4014
    %v4951 = vpack.c.b16 %v4027, %v4015
    %v4952 = vpack.c.b16 %v4028, %v4016
    %v4953 = vpack.c.b16 %v4029, %v4017
    %v4954 = vpack.c.b16 %v4030, %v4018
    %v4955 = vpack.c.b16 %v4031, %v4019
    %v4956 = vpack.c.b16 %v4032, %v4020
    %v4957 = vpack.c.b16 %v4033, %v4021
    %v4958 = vpack.c.b16 %v4034, %v4022
    %v4959 = vpack.c.b16 %v4035, %v4023
    %v4960 = vpack.c.b16 %v4036, %v4024
    %v4961 = vpack.c.b16 %v4037, %v4025
    %v4962 = vpack.c.b16 %v4050, %v4038
    %v4963 = vpack.c.b16 %v4051, %v4039
    %v4964 = vpack.c.b16 %v4052, %v4040
    %v4965 = vpack.c.b16 %v4053, %v4041
    %v4966 = vpack.c.b16 %v4054, %v4042
    %v4967 = vpack.c.b16 %v4055, %v4043
    %v4968 = vpack.c.b16 %v4056, %v4044
    %v4969 = vpack.c.b16 %v4057, %v4045
    %v4970 = vpack.c.b16 %v4058, %v4046
    %v4971 = vpack.c.b16 %v4059, %v4047
    %v4972 = vpack.c.b16 %v4060, %v4048
    %v4973 = vpack.c.b16 %v4061, %v4049
    %v4974 = vpack.c.b16 %v4074, %v4062
    %v4975 = vpack.c.b16 %v4075, %v4063
    %v4976 = vpack.c.b16 %v4076, %v4064
    %v4977 = vpack.c.b16 %v4077, %v4065
    %v4978 = vpack.c.b16 %v4078, %v4066
    %v4979 = vpack.c.b16 %v4079, %v4067
    %v4980 = vpack.c.b16 %v4080, %v4068
    %v4981 = vpack.c.b16 %v4081, %v4069
    %v4982 = vpack.c.b16 %v4082, %v4070
    %v4983 = vpack.c.b16 %v4083, %v4071
    %v4984 = vpack.c.b16 %v4084, %v4072
    %v4985 = vpack.c.b16 %v4085, %v4073
    %v4986 = vpack.c.b16 %v4098, %v4086
    %v4987 = vpack.c.b16 %v4099, %v4087
    %v4988 = vpack.c.b16 %v4100, %v4088
    %v4989 = vpack.c.b16 %v4101, %v4089
    %v4990 = vpack.c.b16 %v4102, %v4090
    %v4991 = vpack.c.b16 %v4103, %v4091
    %v4992 = vpack.c.b16 %v4104, %v4092
    %v4993 = vpack.c.b16 %v4105, %v4093
    %v4994 = vpack.c.b16 %v4106, %v4094
    %v4995 = vpack.c.b16 %v4107, %v4095
    %v4996 = vpack.c.b16 %v4108, %v4096
    %v4997 = vpack.c.b16 %v4109, %v4097
    %v4998 = vpack.c.b16 %v4122, %v4110
    %v4999 = vpack.c.b16 %v4123, %v4111
    %v5000 = vpack.c.b16 %v4124, %v4112
    %v5001 = vpack.c.b16 %v4125, %v4113
    %v5002 = vpack.c.b16 %v4126, %v4114
    %v5003 = vpack.c.b16 %v4127, %v4115
    %v5004 = vpack.c.b16 %v4128, %v4116
    %v5005 = vpack.c.b16 %v4129, %v4117
    %v5006 = vpack.c.b16 %v4130, %v4118
    %v5007 = vpack.c.b16 %v4131, %v4119
    %v5008 = vpack.c.b16 %v4132, %v4120
    %v5009 = vpack.c.b16 %v4133, %v4121
    %v5010 = vpack.c.b16 %v4146, %v4134
    %v5011 = vpack.c.b16 %v4147, %v4135
    %v5012 = vpack.c.b16 %v4148, %v4136
    %v5013 = vpack.c.b16 %v4149, %v4137
    %v5014 = vpack.c.b16 %v4150, %v4138
    %v5015 = vpack.c.b16 %v4151, %v4139
    %v5016 = vpack.c.b16 %v4152, %v4140
    %v5017 = vpack.c.b16 %v4153, %v4141
    %v5018 = vpack.c.b16 %v4154, %v4142
    %v5019 = vpack.c.b16 %v4155, %v4143
    %v5020 = vpack.c.b16 %v4156, %v4144
    %v5021 = vpack.c.b16 %v4157, %v4145
    %v5022 = vpack.c.b16 %v4170, %v4158
    %v5023 = vpack.c.b16 %v4171, %v4159
    %v5024 = vpack.c.b16 %v4172, %v4160
    %v5025 = vpack.c.b16 %v4173, %v4161
    %v5026 = vpack.c.b16 %v4174, %v4162
    %v5027 = vpack.c.b16 %v4175, %v4163
    %v5028 = vpack.c.b16 %v4176, %v4164
    %v5029 = vpack.c.b16 %v4177, %v4165
    %v5030 = vpack.c.b16 %v4178, %v4166
    %v5031 = vpack.c.b16 %v4179, %v4167
    %v5032 = vpack.c.b16 %v4180, %v4168
    %v5033 = vpack.c.b16 %v4181, %v4169
    %v5034 = vpack.c.b16 %v4194, %v4182
    %v5035 = vpack.c.b16 %v4195, %v4183
    %v5036 = vpack.c.b16 %v4196, %v4184
    %v5037 = vpack.c.b16 %v4197, %v4185
    %v5038 = vpack.c.b16 %v4198, %v4186
    %v5039 = vpack.c.b16 %v4199, %v4187
    %v5040 = vpack.c.b16 %v4200, %v4188
    %v5041 = vpack.c.b16 %v4201, %v4189
    %v5042 = vpack.c.b16 %v4202, %v4190
    %v5043 = vpack.c.b16 %v4203, %v4191
    %v5044 = vpack.c.b16 %v4204, %v4192
    %v5045 = vpack.c.b16 %v4205, %v4193
    %v5046 = vpack.c.b16 %v4218, %v4206
    %v5047 = vpack.c.b16 %v4219, %v4207
    %v5048 = vpack.c.b16 %v4220, %v4208
    %v5049 = vpack.c.b16 %v4221, %v4209
    %v5050 = vpack.c.b16 %v4222, %v4210
    %v5051 = vpack.c.b16 %v4223, %v4211
    %v5052 = vpack.c.b16 %v4224, %v4212
    %v5053 = vpack.c.b16 %v4225, %v4213
    %v5054 = vpack.c.b16 %v4226, %v4214
    %v5055 = vpack.c.b16 %v4227, %v4215
    %v5056 = vpack.c.b16 %v4228, %v4216
    %v5057 = vpack.c.b16 %v4229, %v4217
    %v5058 = vpack.c.b16 %v4242, %v4230
    %v5059 = vpack.c.b16 %v4243, %v4231
    %v5060 = vpack.c.b16 %v4244, %v4232
    %v5061 = vpack.c.b16 %v4245, %v4233
    %v5062 = vpack.c.b16 %v4246, %v4234
    %v5063 = vpack.c.b16 %v4247, %v4235
    %v5064 = vpack.c.b16 %v4248, %v4236
    %v5065 = vpack.c.b16 %v4249, %v4237
    %v5066 = vpack.c.b16 %v4250, %v4238
    %v5067 = vpack.c.b16 %v4251, %v4239
    %v5068 = vpack.c.b16 %v4252, %v4240
    %v5069 = vpack.c.b16 %v4253, %v4241
    %v5070 = vpack.c.b16 %v4266, %v4254
    %v5071 = vpack.c.b16 %v4267, %v4255
    %v5072 = vpack.c.b16 %v4268, %v4256
    %v5073 = vpack.c.b16 %v4269, %v4257
    %v5074 = vpack.c.b16 %v4270, %v4258
    %v5075 = vpack.c.b16 %v4271, %v4259
    %v5076 = vpack.c.b16 %v4272, %v4260
    %v5077 = vpack.c.b16 %v4273, %v4261
    %v5078 = vpack.c.b16 %v4274, %v4262
    %v5079 = vpack.c.b16 %v4275, %v4263
    %v5080 = vpack.c.b16 %v4276, %v4264
    %v5081 = vpack.c.b16 %v4277, %v4265
    %v5082 = vpack.c.b16 %v4290, %v4278
    %v5083 = vpack.c.b16 %v4291, %v4279
    %v5084 = vpack.c.b16 %v4292, %v4280
    %v5085 = vpack.c.b16 %v4293, %v4281
    %v5086 = vpack.c.b16 %v4294, %v4282
    %v5087 = vpack.c.b16 %v4295, %v4283
    %v5088 = vpack.c.b16 %v4296, %v4284
    %v5089 = vpack.c.b16 %v4297, %v4285
    %v5090 = vpack.c.b16 %v4298, %v4286
    %v5091 = vpack.c.b16 %v4299, %v4287
    %v5092 = vpack.c.b16 %v4300, %v4288
    %v5093 = vpack.c.b16 %v4301, %v4289
    %v5094 = vpack.c.b16 %v4314, %v4302
    %v5095 = vpack.c.b16 %v4315, %v4303
    %v5096 = vpack.c.b16 %v4316, %v4304
    %v5097 = vpack.c.b16 %v4317, %v4305
    %v5098 = vpack.c.b16 %v4318, %v4306
    %v5099 = vpack.c.b16 %v4319, %v4307
    %v5100 = vpack.c.b16 %v4320, %v4308
    %v5101 = vpack.c.b16 %v4321, %v4309
    %v5102 = vpack.c.b16 %v4322, %v4310
    %v5103 = vpack.c.b16 %v4323, %v4311
    %v5104 = vpack.c.b16 %v4324, %v4312
    %v5105 = vpack.c.b16 %v4325, %v4313
    %v5106 = vpack.c.b16 %v4338, %v4326
    %v5107 = vpack.c.b16 %v4339, %v4327
    %v5108 = vpack.c.b16 %v4340, %v4328
    %v5109 = vpack.c.b16 %v4341, %v4329
    %v5110 = vpack.c.b16 %v4342, %v4330
    %v5111 = vpack.c.b16 %v4343, %v4331
    %v5112 = vpack.c.b16 %v4344, %v4332
    %v5113 = vpack.c.b16 %v4345, %v4333
    %v5114 = vpack.c.b16 %v4346, %v4334
    %v5115 = vpack.c.b16 %v4347, %v4335
    %v5116 = vpack.c.b16 %v4348, %v4336
    %v5117 = vpack.c.b16 %v4349, %v4337
    %v5118 = vpack.c.b16 %v4362, %v4350
    %v5119 = vpack.c.b16 %v4363, %v4351
    %v5120 = vpack.c.b16 %v4364, %v4352
    %v5121 = vpack.c.b16 %v4365, %v4353
    %v5122 = vpack.c.b16 %v4366, %v4354
    %v5123 = vpack.c.b16 %v4367, %v4355
    %v5124 = vpack.c.b16 %v4368, %v4356
    %v5125 = vpack.c.b16 %v4369, %v4357
    %v5126 = vpack.c.b16 %v4370, %v4358
    %v5127 = vpack.c.b16 %v4371, %v4359
    %v5128 = vpack.c.b16 %v4372, %v4360
    %v5129 = vpack.c.b16 %v4373, %v4361
    %v5130 = vpack.c.b16 %v4386, %v4374
    %v5131 = vpack.c.b16 %v4387, %v4375
    %v5132 = vpack.c.b16 %v4388, %v4376
    %v5133 = vpack.c.b16 %v4389, %v4377
    %v5134 = vpack.c.b16 %v4390, %v4378
    %v5135 = vpack.c.b16 %v4391, %v4379
    %v5136 = vpack.c.b16 %v4392, %v4380
    %v5137 = vpack.c.b16 %v4393, %v4381
    %v5138 = vpack.c.b16 %v4394, %v4382
    %v5139 = vpack.c.b16 %v4395, %v4383
    %v5140 = vpack.c.b16 %v4396, %v4384
    %v5141 = vpack.c.b16 %v4397, %v4385
    %v5142 = vpack.c.b16 %v4410, %v4398
    %v5143 = vpack.c.b16 %v4411, %v4399
    %v5144 = vpack.c.b16 %v4412, %v4400
    %v5145 = vpack.c.b16 %v4413, %v4401
    %v5146 = vpack.c.b16 %v4414, %v4402
    %v5147 = vpack.c.b16 %v4415, %v4403
    %v5148 = vpack.c.b16 %v4416, %v4404
    %v5149 = vpack.c.b16 %v4417, %v4405
    %v5150 = vpack.c.b16 %v4418, %v4406
    %v5151 = vpack.c.b16 %v4419, %v4407
    %v5152 = vpack.c.b16 %v4420, %v4408
    %v5153 = vpack.c.b16 %v4421, %v4409
    %v5154 = vpack.c.b16 %v4434, %v4422
    %v5155 = vpack.c.b16 %v4435, %v4423
    %v5156 = vpack.c.b16 %v4436, %v4424
    %v5157 = vpack.c.b16 %v4437, %v4425
    %v5158 = vpack.c.b16 %v4438, %v4426
    %v5159 = vpack.c.b16 %v4439, %v4427
    %v5160 = vpack.c.b16 %v4440, %v4428
    %v5161 = vpack.c.b16 %v4441, %v4429
    %v5162 = vpack.c.b16 %v4442, %v4430
    %v5163 = vpack.c.b16 %v4443, %v4431
    %v5164 = vpack.c.b16 %v4444, %v4432
    %v5165 = vpack.c.b16 %v4445, %v4433
    %v5166 = vpack.c.b16 %v4458, %v4446
    %v5167 = vpack.c.b16 %v4459, %v4447
    %v5168 = vpack.c.b16 %v4460, %v4448
    %v5169 = vpack.c.b16 %v4461, %v4449
    %v5170 = vpack.c.b16 %v4462, %v4450
    %v5171 = vpack.c.b16 %v4463, %v4451
    %v5172 = vpack.c.b16 %v4464, %v4452
    %v5173 = vpack.c.b16 %v4465, %v4453
    %v5174 = vpack.c.b16 %v4466, %v4454
    %v5175 = vpack.c.b16 %v4467, %v4455
    %v5176 = vpack.c.b16 %v4468, %v4456
    %v5177 = vpack.c.b16 %v4469, %v4457
    %v5178 = vpack.c.b16 %v4482, %v4470
    %v5179 = vpack.c.b16 %v4483, %v4471
    %v5180 = vpack.c.b16 %v4484, %v4472
    %v5181 = vpack.c.b16 %v4485, %v4473
    %v5182 = vpack.c.b16 %v4486, %v4474
    %v5183 = vpack.c.b16 %v4487, %v4475
    %v5184 = vpack.c.b16 %v4488, %v4476
    %v5185 = vpack.c.b16 %v4489, %v4477
    %v5186 = vpack.c.b16 %v4490, %v4478
    %v5187 = vpack.c.b16 %v4491, %v4479
    %v5188 = vpack.c.b16 %v4492, %v4480
    %v5189 = vpack.c.b16 %v4493, %v4481
    %v5190 = vpack.c.b16 %v4506, %v4494
    %v5191 = vpack.c.b16 %v4507, %v4495
    %v5192 = vpack.c.b16 %v4508, %v4496
    %v5193 = vpack.c.b16 %v4509, %v4497
    %v5194 = vpack.c.b16 %v4510, %v4498
    %v5195 = vpack.c.b16 %v4511, %v4499
    %v5196 = vpack.c.b16 %v4512, %v4500
    %v5197 = vpack.c.b16 %v4513, %v4501
    %v5198 = vpack.c.b16 %v4514, %v4502
    %v5199 = vpack.c.b16 %v4515, %v4503
    %v5200 = vpack.c.b16 %v4516, %v4504
    %v5201 = vpack.c.b16 %v4517, %v4505
    %v5202 = vpack.c.b16 %v4530, %v4518
    %v5203 = vpack.c.b16 %v4531, %v4519
    %v5204 = vpack.c.b16 %v4532, %v4520
    %v5205 = vpack.c.b16 %v4533, %v4521
    %v5206 = vpack.c.b16 %v4534, %v4522
    %v5207 = vpack.c.b16 %v4535, %v4523
    %v5208 = vpack.c.b16 %v4536, %v4524
    %v5209 = vpack.c.b16 %v4537, %v4525
    %v5210 = vpack.c.b16 %v4538, %v4526
    %v5211 = vpack.c.b16 %v4539, %v4527
    %v5212 = vpack.c.b16 %v4540, %v4528
    %v5213 = vpack.c.b16 %v4541, %v4529
    %v5214 = vpack.c.b16 %v4554, %v4542
    %v5215 = vpack.c.b16 %v4555, %v4543
    %v5216 = vpack.c.b16 %v4556, %v4544
    %v5217 = vpack.c.b16 %v4557, %v4545
    %v5218 = vpack.c.b16 %v4558, %v4546
    %v5219 = vpack.c.b16 %v4559, %v4547
    %v5220 = vpack.c.b16 %v4560, %v4548
    %v5221 = vpack.c.b16 %v4561, %v4549
    %v5222 = vpack.c.b16 %v4562, %v4550
    %v5223 = vpack.c.b16 %v4563, %v4551
    %v5224 = vpack.c.b16 %v4564, %v4552
    %v5225 = vpack.c.b16 %v4565, %v4553
    %v5226 = vpack.c.b16 %v4578, %v4566
    %v5227 = vpack.c.b16 %v4579, %v4567
    %v5228 = vpack.c.b16 %v4580, %v4568
    %v5229 = vpack.c.b16 %v4581, %v4569
    %v5230 = vpack.c.b16 %v4582, %v4570
    %v5231 = vpack.c.b16 %v4583, %v4571
    %v5232 = vpack.c.b16 %v4584, %v4572
    %v5233 = vpack.c.b16 %v4585, %v4573
    %v5234 = vpack.c.b16 %v4586, %v4574
    %v5235 = vpack.c.b16 %v4587, %v4575
    %v5236 = vpack.c.b16 %v4588, %v4576
    %v5237 = vpack.c.b16 %v4589, %v4577
    %v5238 = vpack.c.b16 %v4602, %v4590
    %v5239 = vpack.c.b16 %v4603, %v4591
    %v5240 = vpack.c.b16 %v4604, %v4592
    %v5241 = vpack.c.b16 %v4605, %v4593
    %v5242 = vpack.c.b16 %v4606, %v4594
    %v5243 = vpack.c.b16 %v4607, %v4595
    %v5244 = vpack.c.b16 %v4608, %v4596
    %v5245 = vpack.c.b16 %v4609, %v4597
    %v5246 = vpack.c.b16 %v4610, %v4598
    %v5247 = vpack.c.b16 %v4611, %v4599
    %v5248 = vpack.c.b16 %v4612, %v4600
    %v5249 = vpack.c.b16 %v4613, %v4601
    %v5250 = vpack.c.b16 %v4626, %v4614
    %v5251 = vpack.c.b16 %v4627, %v4615
    %v5252 = vpack.c.b16 %v4628, %v4616
    %v5253 = vpack.c.b16 %v4629, %v4617
    %v5254 = vpack.c.b16 %v4630, %v4618
    %v5255 = vpack.c.b16 %v4631, %v4619
    %v5256 = vpack.c.b16 %v4632, %v4620
    %v5257 = vpack.c.b16 %v4633, %v4621
    %v5258 = vpack.c.b16 %v4634, %v4622
    %v5259 = vpack.c.b16 %v4635, %v4623
    %v5260 = vpack.c.b16 %v4636, %v4624
    %v5261 = vpack.c.b16 %v4637, %v4625
    %v5262 = vpack.c.b16 %v4650, %v4638
    %v5263 = vpack.c.b16 %v4651, %v4639
    %v5264 = vpack.c.b16 %v4652, %v4640
    %v5265 = vpack.c.b16 %v4653, %v4641
    %v5266 = vpack.c.b16 %v4654, %v4642
    %v5267 = vpack.c.b16 %v4655, %v4643
    %v5268 = vpack.c.b16 %v4656, %v4644
    %v5269 = vpack.c.b16 %v4657, %v4645
    %v5270 = vpack.c.b16 %v4658, %v4646
    %v5271 = vpack.c.b16 %v4659, %v4647
    %v5272 = vpack.c.b16 %v4660, %v4648
    %v5273 = vpack.c.b16 %v4661, %v4649
    %v5274 = vpack.c.b16 %v4674, %v4662
    %v5275 = vpack.c.b16 %v4675, %v4663
    %v5276 = vpack.c.b16 %v4676, %v4664
    %v5277 = vpack.c.b16 %v4677, %v4665
    %v5278 = vpack.c.b16 %v4678, %v4666
    %v5279 = vpack.c.b16 %v4679, %v4667
    %v5280 = vpack.c.b16 %v4680, %v4668
    %v5281 = vpack.c.b16 %v4681, %v4669
    %v5282 = vpack.c.b16 %v4682, %v4670
    %v5283 = vpack.c.b16 %v4683, %v4671
    %v5284 = vpack.c.b16 %v4684, %v4672
    %v5285 = vpack.c.b16 %v4685, %v4673
    %v5286 = vpack.c.b16 %v4698, %v4686
    %v5287 = vpack.c.b16 %v4699, %v4687
    %v5288 = vpack.c.b16 %v4700, %v4688
    %v5289 = vpack.c.b16 %v4701, %v4689
    %v5290 = vpack.c.b16 %v4702, %v4690
    %v5291 = vpack.c.b16 %v4703, %v4691
    %v5292 = vpack.c.b16 %v4704, %v4692
    %v5293 = vpack.c.b16 %v4705, %v4693
    %v5294 = vpack.c.b16 %v4706, %v4694
    %v5295 = vpack.c.b16 %v4707, %v4695
    %v5296 = vpack.c.b16 %v4708, %v4696
    %v5297 = vpack.c.b16 %v4709, %v4697
    %v5298 = vpack.c.b16 %v4722, %v4710
    %v5299 = vpack.c.b16 %v4723, %v4711
    %v5300 = vpack.c.b16 %v4724, %v4712
    %v5301 = vpack.c.b16 %v4725, %v4713
    %v5302 = vpack.c.b16 %v4726, %v4714
    %v5303 = vpack.c.b16 %v4727, %v4715
    %v5304 = vpack.c.b16 %v4728, %v4716
    %v5305 = vpack.c.b16 %v4729, %v4717
    %v5306 = vpack.c.b16 %v4730, %v4718
    %v5307 = vpack.c.b16 %v4731, %v4719
    %v5308 = vpack.c.b16 %v4732, %v4720
    %v5309 = vpack.c.b16 %v4733, %v4721
    %5886 = vmatprep.subr.bf16.mxu0 %v4735
    %5887 = vmatpush1.bf16.msra.mxu0 %v4734
    %5888 = vmatprep.subr.bf16.mxu0 %v4747
    %5889 = vmatpush1.bf16.msra.mxu0 %v4746
    %5890 = vmatprep.subr.bf16.mxu0 %v4759
    %5891 = vmatpush1.bf16.msra.mxu0 %v4758
    %5892 = vmatprep.subr.bf16.mxu0 %v4771
    %5893 = vmatpush1.bf16.msra.mxu0 %v4770
    %5894 = vmatprep.subr.bf16.mxu0 %v4783
    %5895 = vmatpush1.bf16.msra.mxu0 %v4782
    %5896 = vmatprep.subr.bf16.mxu0 %v4795
    %5897 = vmatpush1.bf16.msra.mxu0 %v4794
    %5898 = vmatprep.subr.bf16.mxu0 %v4807
    %5899 = vmatpush1.bf16.msra.mxu0 %v4806
    %5900 = vmatprep.subr.bf16.mxu0 %v4819
    %5901 = vmatpush1.bf16.msra.mxu0 %v4818
    %5902 = vmatprep.subr.bf16.mxu0 %v4831
    %5903 = vmatpush1.bf16.msra.mxu0 %v4830
    %5904 = vmatprep.subr.bf16.mxu0 %v4843
    %5905 = vmatpush1.bf16.msra.mxu0 %v4842
    %5906 = vmatprep.subr.bf16.mxu0 %v4855
    %5907 = vmatpush1.bf16.msra.mxu0 %v4854
    %5908 = vmatprep.subr.bf16.mxu0 %v4867
    %5909 = vmatpush1.bf16.msra.mxu0 %v4866
    %5910 = vmatprep.subr.bf16.mxu0 %v4879
    %5911 = vmatpush1.bf16.msra.mxu0 %v4878
    %5912 = vmatprep.subr.bf16.mxu0 %v4891
    %5913 = vmatpush1.bf16.msra.mxu0 %v4890
    %5914 = vmatprep.subr.bf16.mxu0 %v4903
    %5915 = vmatpush1.bf16.msra.mxu0 %v4902
    %5916 = vmatprep.subr.bf16.mxu0 %v4915
    %5917 = vmatpush1.bf16.msra.mxu0 %v4914
    %5918 = vmatprep.mubr.bf16.mxu0 %v2361
    %5919 = vmatmul.mubr.bf16.gmra.mrb[0].mxu0 %v2360
    %v5920 = vpop.f32.mrb[0].mxu0
    %v5921 = vadd.f32 %v2949, %v5920
    %v5922 = vpop.f32.mrb[0].mxu0
    %v5923 = vadd.f32 %v2953, %v5922
    %v5924 = vpop.f32.mrb[0].mxu0
    %v5925 = vadd.f32 %v2949, %v5924
    %v5926 = vpop.f32.mrb[0].mxu0
    %v5927 = vadd.f32 %v2953, %v5926
    %5928 = vdwg.mxu0
    %5929 = vmatprep.subr.bf16.mxu0 %v4927
    %5930 = vmatpush1.bf16.msra.mxu0 %v4926
    %5931 = vmatprep.subr.bf16.mxu0 %v4939
    %5932 = vmatpush1.bf16.msra.mxu0 %v4938
    %5933 = vmatprep.subr.bf16.mxu0 %v4951
    %5934 = vmatpush1.bf16.msra.mxu0 %v4950
    %5935 = vmatprep.subr.bf16.mxu0 %v4963
    %5936 = vmatpush1.bf16.msra.mxu0 %v4962
    %5937 = vmatprep.subr.bf16.mxu0 %v4975
    %5938 = vmatpush1.bf16.msra.mxu0 %v4974
    %5939 = vmatprep.subr.bf16.mxu0 %v4987
    %5940 = vmatpush1.bf16.msra.mxu0 %v4986
    %5941 = vmatprep.subr.bf16.mxu0 %v4999
    %5942 = vmatpush1.bf16.msra.mxu0 %v4998
    %5943 = vmatprep.subr.bf16.mxu0 %v5011
    %5944 = vmatpush1.bf16.msra.mxu0 %v5010
    %5945 = vmatprep.subr.bf16.mxu0 %v5023
    %5946 = vmatpush1.bf16.msra.mxu0 %v5022
    %5947 = vmatprep.subr.bf16.mxu0 %v5035
    %5948 = vmatpush1.bf16.msra.mxu0 %v5034
    %5949 = vmatprep.subr.bf16.mxu0 %v5047
    %5950 = vmatpush1.bf16.msra.mxu0 %v5046
    %5951 = vmatprep.subr.bf16.mxu0 %v5059
    %5952 = vmatpush1.bf16.msra.mxu0 %v5058
    %5953 = vmatprep.subr.bf16.mxu0 %v5071
    %5954 = vmatpush1.bf16.msra.mxu0 %v5070
    %5955 = vmatprep.subr.bf16.mxu0 %v5083
    %5956 = vmatpush1.bf16.msra.mxu0 %v5082
    %5957 = vmatprep.subr.bf16.mxu0 %v5095
    %5958 = vmatpush1.bf16.msra.mxu0 %v5094
    %5959 = vmatprep.subr.bf16.mxu0 %v5107
    %5960 = vmatpush1.bf16.msra.mxu0 %v5106
    %5961 = vmatprep.mubr.bf16.mxu0 %v2363
    %5962 = vmatmul.mubr.bf16.gmra.mrb[0].mxu0 %v2362
    %v5963 = vpop.f32.mrb[0].mxu0
    %v5964 = vadd.f32 %v5921, %v5963
    %v5965 = vpop.f32.mrb[0].mxu0
    %v5966 = vadd.f32 %v5923, %v5965
    %v5967 = vpop.f32.mrb[0].mxu0
    %v5968 = vadd.f32 %v5925, %v5967
    %v5969 = vpop.f32.mrb[0].mxu0
    %v5970 = vadd.f32 %v5927, %v5969
    %5971 = vdwg.mxu0
    %5972 = vmatprep.subr.bf16.mxu0 %v5119
    %5973 = vmatpush1.bf16.msra.mxu0 %v5118
    %5974 = vmatprep.subr.bf16.mxu0 %v5131
    %5975 = vmatpush1.bf16.msra.mxu0 %v5130
    %5976 = vmatprep.subr.bf16.mxu0 %v5143
    %5977 = vmatpush1.bf16.msra.mxu0 %v5142
    %5978 = vmatprep.subr.bf16.mxu0 %v5155
    %5979 = vmatpush1.bf16.msra.mxu0 %v5154
    %5980 = vmatprep.subr.bf16.mxu0 %v5167
    %5981 = vmatpush1.bf16.msra.mxu0 %v5166
    %5982 = vmatprep.subr.bf16.mxu0 %v5179
    %5983 = vmatpush1.bf16.msra.mxu0 %v5178
    %5984 = vmatprep.subr.bf16.mxu0 %v5191
    %5985 = vmatpush1.bf16.msra.mxu0 %v5190
    %5986 = vmatprep.subr.bf16.mxu0 %v5203
    %5987 = vmatpush1.bf16.msra.mxu0 %v5202
    %5988 = vmatprep.subr.bf16.mxu0 %v5215
    %5989 = vmatpush1.bf16.msra.mxu0 %v5214
    %5990 = vmatprep.subr.bf16.mxu0 %v5227
    %5991 = vmatpush1.bf16.msra.mxu0 %v5226
    %5992 = vmatprep.subr.bf16.mxu0 %v5239
    %5993 = vmatpush1.bf16.msra.mxu0 %v5238
    %5994 = vmatprep.subr.bf16.mxu0 %v5251
    %5995 = vmatpush1.bf16.msra.mxu0 %v5250
    %5996 = vmatprep.subr.bf16.mxu0 %v5263
    %5997 = vmatpush1.bf16.msra.mxu0 %v5262
    %5998 = vmatprep.subr.bf16.mxu0 %v5275
    %5999 = vmatpush1.bf16.msra.mxu0 %v5274
    %6000 = vmatprep.subr.bf16.mxu0 %v5287
    %6001 = vmatpush1.bf16.msra.mxu0 %v5286
    %6002 = vmatprep.subr.bf16.mxu0 %v5299
    %6003 = vmatpush1.bf16.msra.mxu0 %v5298
    %6004 = vmatprep.mubr.bf16.mxu0 %v2365
    %6005 = vmatmul.mubr.bf16.gmra.mrb[0].mxu0 %v2364
    %v6006 = vpop.f32.mrb[0].mxu0
    %v6007 = vadd.f32 %v5964, %v6006
    %v6008 = vpop.f32.mrb[0].mxu0
    %v6009 = vadd.f32 %v5966, %v6008
    %v6010 = vpop.f32.mrb[0].mxu0
    %v6011 = vadd.f32 %v5968, %v6010
    %v6012 = vpop.f32.mrb[0].mxu0
    %v6013 = vadd.f32 %v5970, %v6012
    %6014 = vdwg.mxu0
    %6015 = vmatprep.subr.bf16.mxu0 %v4737
    %6016 = vmatpush1.bf16.msra.mxu0 %v4736
    %6017 = vmatprep.subr.bf16.mxu0 %v4749
    %6018 = vmatpush1.bf16.msra.mxu0 %v4748
    %6019 = vmatprep.subr.bf16.mxu0 %v4761
    %6020 = vmatpush1.bf16.msra.mxu0 %v4760
    %6021 = vmatprep.subr.bf16.mxu0 %v4773
    %6022 = vmatpush1.bf16.msra.mxu0 %v4772
    %6023 = vmatprep.subr.bf16.mxu0 %v4785
    %6024 = vmatpush1.bf16.msra.mxu0 %v4784
    %6025 = vmatprep.subr.bf16.mxu0 %v4797
    %6026 = vmatpush1.bf16.msra.mxu0 %v4796
    %6027 = vmatprep.subr.bf16.mxu0 %v4809
    %6028 = vmatpush1.bf16.msra.mxu0 %v4808
    %6029 = vmatprep.subr.bf16.mxu0 %v4821
    %6030 = vmatpush1.bf16.msra.mxu0 %v4820
    %6031 = vmatprep.subr.bf16.mxu0 %v4833
    %6032 = vmatpush1.bf16.msra.mxu0 %v4832
    %6033 = vmatprep.subr.bf16.mxu0 %v4845
    %6034 = vmatpush1.bf16.msra.mxu0 %v4844
    %6035 = vmatprep.subr.bf16.mxu0 %v4857
    %6036 = vmatpush1.bf16.msra.mxu0 %v4856
    %6037 = vmatprep.subr.bf16.mxu0 %v4869
    %6038 = vmatpush1.bf16.msra.mxu0 %v4868
    %6039 = vmatprep.subr.bf16.mxu0 %v4881
    %6040 = vmatpush1.bf16.msra.mxu0 %v4880
    %6041 = vmatprep.subr.bf16.mxu0 %v4893
    %6042 = vmatpush1.bf16.msra.mxu0 %v4892
    %6043 = vmatprep.subr.bf16.mxu0 %v4905
    %6044 = vmatpush1.bf16.msra.mxu0 %v4904
    %6045 = vmatprep.subr.bf16.mxu0 %v4917
    %6046 = vmatpush1.bf16.msra.mxu0 %v4916
    %6047 = vmatprep.mubr.bf16.mxu0 %v2361
    %6048 = vmatmul.mubr.bf16.gmra.mrb[0].mxu0 %v2360
    %v6049 = vpop.f32.mrb[0].mxu0
    %v6050 = vadd.f32 %v2957, %v6049
    %v6051 = vpop.f32.mrb[0].mxu0
    %v6052 = vadd.f32 %v2961, %v6051
    %v6053 = vpop.f32.mrb[0].mxu0
    %v6054 = vadd.f32 %v2957, %v6053
    %v6055 = vpop.f32.mrb[0].mxu0
    %v6056 = vadd.f32 %v2961, %v6055
    %6057 = vdwg.mxu0
    %6058 = vmatprep.subr.bf16.mxu0 %v4929
    %6059 = vmatpush1.bf16.msra.mxu0 %v4928
    %6060 = vmatprep.subr.bf16.mxu0 %v4941
    %6061 = vmatpush1.bf16.msra.mxu0 %v4940
    %6062 = vmatprep.subr.bf16.mxu0 %v4953
    %6063 = vmatpush1.bf16.msra.mxu0 %v4952
    %6064 = vmatprep.subr.bf16.mxu0 %v4965
    %6065 = vmatpush1.bf16.msra.mxu0 %v4964
    %6066 = vmatprep.subr.bf16.mxu0 %v4977
    %6067 = vmatpush1.bf16.msra.mxu0 %v4976
    %6068 = vmatprep.subr.bf16.mxu0 %v4989
    %6069 = vmatpush1.bf16.msra.mxu0 %v4988
    %6070 = vmatprep.subr.bf16.mxu0 %v5001
    %6071 = vmatpush1.bf16.msra.mxu0 %v5000
    %6072 = vmatprep.subr.bf16.mxu0 %v5013
    %6073 = vmatpush1.bf16.msra.mxu0 %v5012
    %6074 = vmatprep.subr.bf16.mxu0 %v5025
    %6075 = vmatpush1.bf16.msra.mxu0 %v5024
    %6076 = vmatprep.subr.bf16.mxu0 %v5037
    %6077 = vmatpush1.bf16.msra.mxu0 %v5036
    %6078 = vmatprep.subr.bf16.mxu0 %v5049
    %6079 = vmatpush1.bf16.msra.mxu0 %v5048
    %6080 = vmatprep.subr.bf16.mxu0 %v5061
    %6081 = vmatpush1.bf16.msra.mxu0 %v5060
    %6082 = vmatprep.subr.bf16.mxu0 %v5073
    %6083 = vmatpush1.bf16.msra.mxu0 %v5072
    %6084 = vmatprep.subr.bf16.mxu0 %v5085
    %6085 = vmatpush1.bf16.msra.mxu0 %v5084
    %6086 = vmatprep.subr.bf16.mxu0 %v5097
    %6087 = vmatpush1.bf16.msra.mxu0 %v5096
    %6088 = vmatprep.subr.bf16.mxu0 %v5109
    %6089 = vmatpush1.bf16.msra.mxu0 %v5108
    %6090 = vmatprep.mubr.bf16.mxu0 %v2363
    %6091 = vmatmul.mubr.bf16.gmra.mrb[0].mxu0 %v2362
    %v6092 = vpop.f32.mrb[0].mxu0
    %v6093 = vadd.f32 %v6050, %v6092
    %v6094 = vpop.f32.mrb[0].mxu0
    %v6095 = vadd.f32 %v6052, %v6094
    %v6096 = vpop.f32.mrb[0].mxu0
    %v6097 = vadd.f32 %v6054, %v6096
    %v6098 = vpop.f32.mrb[0].mxu0
    %v6099 = vadd.f32 %v6056, %v6098
    %6100 = vdwg.mxu0
    %6101 = vmatprep.subr.bf16.mxu0 %v5121
    %6102 = vmatpush1.bf16.msra.mxu0 %v5120
    %6103 = vmatprep.subr.bf16.mxu0 %v5133
    %6104 = vmatpush1.bf16.msra.mxu0 %v5132
    %6105 = vmatprep.subr.bf16.mxu0 %v5145
    %6106 = vmatpush1.bf16.msra.mxu0 %v5144
    %6107 = vmatprep.subr.bf16.mxu0 %v5157
    %6108 = vmatpush1.bf16.msra.mxu0 %v5156
    %6109 = vmatprep.subr.bf16.mxu0 %v5169
    %6110 = vmatpush1.bf16.msra.mxu0 %v5168
    %6111 = vmatprep.subr.bf16.mxu0 %v5181
    %6112 = vmatpush1.bf16.msra.mxu0 %v5180
    %6113 = vmatprep.subr.bf16.mxu0 %v5193
    %6114 = vmatpush1.bf16.msra.mxu0 %v5192
    %6115 = vmatprep.subr.bf16.mxu0 %v5205
    %6116 = vmatpush1.bf16.msra.mxu0 %v5204
    %6117 = vmatprep.subr.bf16.mxu0 %v5217
    %6118 = vmatpush1.bf16.msra.mxu0 %v5216
    %6119 = vmatprep.subr.bf16.mxu0 %v5229
    %6120 = vmatpush1.bf16.msra.mxu0 %v5228
    %6121 = vmatprep.subr.bf16.mxu0 %v5241
    %6122 = vmatpush1.bf16.msra.mxu0 %v5240
    %6123 = vmatprep.subr.bf16.mxu0 %v5253
    %6124 = vmatpush1.bf16.msra.mxu0 %v5252
    %6125 = vmatprep.subr.bf16.mxu0 %v5265
    %6126 = vmatpush1.bf16.msra.mxu0 %v5264
    %6127 = vmatprep.subr.bf16.mxu0 %v5277
    %6128 = vmatpush1.bf16.msra.mxu0 %v5276
    %6129 = vmatprep.subr.bf16.mxu0 %v5289
    %6130 = vmatpush1.bf16.msra.mxu0 %v5288
    %6131 = vmatprep.subr.bf16.mxu0 %v5301
    %6132 = vmatpush1.bf16.msra.mxu0 %v5300
    %6133 = vmatprep.mubr.bf16.mxu0 %v2365
    %6134 = vmatmul.mubr.bf16.gmra.mrb[0].mxu0 %v2364
    %v6135 = vpop.f32.mrb[0].mxu0
    %v6136 = vadd.f32 %v6093, %v6135
    %v6137 = vpop.f32.mrb[0].mxu0
    %v6138 = vadd.f32 %v6095, %v6137
    %v6139 = vpop.f32.mrb[0].mxu0
    %v6140 = vadd.f32 %v6097, %v6139
    %v6141 = vpop.f32.mrb[0].mxu0
    %v6142 = vadd.f32 %v6099, %v6141
    %6143 = vdwg.mxu0
    %6144 = vmatprep.subr.bf16.mxu0 %v4739
    %6145 = vmatpush1.bf16.msra.mxu0 %v4738
    %6146 = vmatprep.subr.bf16.mxu0 %v4751
    %6147 = vmatpush1.bf16.msra.mxu0 %v4750
    %6148 = vmatprep.subr.bf16.mxu0 %v4763
    %6149 = vmatpush1.bf16.msra.mxu0 %v4762
    %6150 = vmatprep.subr.bf16.mxu0 %v4775
    %6151 = vmatpush1.bf16.msra.mxu0 %v4774
    %6152 = vmatprep.subr.bf16.mxu0 %v4787
    %6153 = vmatpush1.bf16.msra.mxu0 %v4786
    %6154 = vmatprep.subr.bf16.mxu0 %v4799
    %6155 = vmatpush1.bf16.msra.mxu0 %v4798
    %6156 = vmatprep.subr.bf16.mxu0 %v4811
    %6157 = vmatpush1.bf16.msra.mxu0 %v4810
    %6158 = vmatprep.subr.bf16.mxu0 %v4823
    %6159 = vmatpush1.bf16.msra.mxu0 %v4822
    %6160 = vmatprep.subr.bf16.mxu0 %v4835
    %6161 = vmatpush1.bf16.msra.mxu0 %v4834
    %6162 = vmatprep.subr.bf16.mxu0 %v4847
    %6163 = vmatpush1.bf16.msra.mxu0 %v4846
    %6164 = vmatprep.subr.bf16.mxu0 %v4859
    %6165 = vmatpush1.bf16.msra.mxu0 %v4858
    %6166 = vmatprep.subr.bf16.mxu0 %v4871
    %6167 = vmatpush1.bf16.msra.mxu0 %v4870
    %6168 = vmatprep.subr.bf16.mxu0 %v4883
    %6169 = vmatpush1.bf16.msra.mxu0 %v4882
    %6170 = vmatprep.subr.bf16.mxu0 %v4895
    %6171 = vmatpush1.bf16.msra.mxu0 %v4894
    %6172 = vmatprep.subr.bf16.mxu0 %v4907
    %6173 = vmatpush1.bf16.msra.mxu0 %v4906
    %6174 = vmatprep.subr.bf16.mxu0 %v4919
    %6175 = vmatpush1.bf16.msra.mxu0 %v4918
    %6176 = vmatprep.mubr.bf16.mxu0 %v2361
    %6177 = vmatmul.mubr.bf16.gmra.mrb[0].mxu0 %v2360
    %v6178 = vpop.f32.mrb[0].mxu0
    %v6179 = vadd.f32 %v2965, %v6178
    %v6180 = vpop.f32.mrb[0].mxu0
    %v6181 = vadd.f32 %v2969, %v6180
    %v6182 = vpop.f32.mrb[0].mxu0
    %v6183 = vadd.f32 %v2965, %v6182
    %v6184 = vpop.f32.mrb[0].mxu0
    %v6185 = vadd.f32 %v2969, %v6184
    %6186 = vdwg.mxu0
    %6187 = vmatprep.subr.bf16.mxu0 %v4931
    %6188 = vmatpush1.bf16.msra.mxu0 %v4930
    %6189 = vmatprep.subr.bf16.mxu0 %v4943
    %6190 = vmatpush1.bf16.msra.mxu0 %v4942
    %6191 = vmatprep.subr.bf16.mxu0 %v4955
    %6192 = vmatpush1.bf16.msra.mxu0 %v4954
    %6193 = vmatprep.subr.bf16.mxu0 %v4967
    %6194 = vmatpush1.bf16.msra.mxu0 %v4966
    %6195 = vmatprep.subr.bf16.mxu0 %v4979
    %6196 = vmatpush1.bf16.msra.mxu0 %v4978
    %6197 = vmatprep.subr.bf16.mxu0 %v4991
    %6198 = vmatpush1.bf16.msra.mxu0 %v4990
    %6199 = vmatprep.subr.bf16.mxu0 %v5003
    %6200 = vmatpush1.bf16.msra.mxu0 %v5002
    %6201 = vmatprep.subr.bf16.mxu0 %v5015
    %6202 = vmatpush1.bf16.msra.mxu0 %v5014
    %6203 = vmatprep.subr.bf16.mxu0 %v5027
    %6204 = vmatpush1.bf16.msra.mxu0 %v5026
    %6205 = vmatprep.subr.bf16.mxu0 %v5039
    %6206 = vmatpush1.bf16.msra.mxu0 %v5038
    %6207 = vmatprep.subr.bf16.mxu0 %v5051
    %6208 = vmatpush1.bf16.msra.mxu0 %v5050
    %6209 = vmatprep.subr.bf16.mxu0 %v5063
    %6210 = vmatpush1.bf16.msra.mxu0 %v5062
    %6211 = vmatprep.subr.bf16.mxu0 %v5075
    %6212 = vmatpush1.bf16.msra.mxu0 %v5074
    %6213 = vmatprep.subr.bf16.mxu0 %v5087
    %6214 = vmatpush1.bf16.msra.mxu0 %v5086
    %6215 = vmatprep.subr.bf16.mxu0 %v5099
    %6216 = vmatpush1.bf16.msra.mxu0 %v5098
    %6217 = vmatprep.subr.bf16.mxu0 %v5111
    %6218 = vmatpush1.bf16.msra.mxu0 %v5110
    %6219 = vmatprep.mubr.bf16.mxu0 %v2363
    %6220 = vmatmul.mubr.bf16.gmra.mrb[0].mxu0 %v2362
    %v6221 = vpop.f32.mrb[0].mxu0
    %v6222 = vadd.f32 %v6179, %v6221
    %v6223 = vpop.f32.mrb[0].mxu0
    %v6224 = vadd.f32 %v6181, %v6223
    %v6225 = vpop.f32.mrb[0].mxu0
    %v6226 = vadd.f32 %v6183, %v6225
    %v6227 = vpop.f32.mrb[0].mxu0
    %v6228 = vadd.f32 %v6185, %v6227
    %6229 = vdwg.mxu0
    %6230 = vmatprep.subr.bf16.mxu0 %v5123
    %6231 = vmatpush1.bf16.msra.mxu0 %v5122
    %6232 = vmatprep.subr.bf16.mxu0 %v5135
    %6233 = vmatpush1.bf16.msra.mxu0 %v5134
    %6234 = vmatprep.subr.bf16.mxu0 %v5147
    %6235 = vmatpush1.bf16.msra.mxu0 %v5146
    %6236 = vmatprep.subr.bf16.mxu0 %v5159
    %6237 = vmatpush1.bf16.msra.mxu0 %v5158
    %6238 = vmatprep.subr.bf16.mxu0 %v5171
    %6239 = vmatpush1.bf16.msra.mxu0 %v5170
    %6240 = vmatprep.subr.bf16.mxu0 %v5183
    %6241 = vmatpush1.bf16.msra.mxu0 %v5182
    %6242 = vmatprep.subr.bf16.mxu0 %v5195
    %6243 = vmatpush1.bf16.msra.mxu0 %v5194
    %6244 = vmatprep.subr.bf16.mxu0 %v5207
    %6245 = vmatpush1.bf16.msra.mxu0 %v5206
    %6246 = vmatprep.subr.bf16.mxu0 %v5219
    %6247 = vmatpush1.bf16.msra.mxu0 %v5218
    %6248 = vmatprep.subr.bf16.mxu0 %v5231
    %6249 = vmatpush1.bf16.msra.mxu0 %v5230
    %6250 = vmatprep.subr.bf16.mxu0 %v5243
    %6251 = vmatpush1.bf16.msra.mxu0 %v5242
    %6252 = vmatprep.subr.bf16.mxu0 %v5255
    %6253 = vmatpush1.bf16.msra.mxu0 %v5254
    %6254 = vmatprep.subr.bf16.mxu0 %v5267
    %6255 = vmatpush1.bf16.msra.mxu0 %v5266
    %6256 = vmatprep.subr.bf16.mxu0 %v5279
    %6257 = vmatpush1.bf16.msra.mxu0 %v5278
    %6258 = vmatprep.subr.bf16.mxu0 %v5291
    %6259 = vmatpush1.bf16.msra.mxu0 %v5290
    %6260 = vmatprep.subr.bf16.mxu0 %v5303
    %6261 = vmatpush1.bf16.msra.mxu0 %v5302
    %6262 = vmatprep.mubr.bf16.mxu0 %v2365
    %6263 = vmatmul.mubr.bf16.gmra.mrb[0].mxu0 %v2364
    %v6264 = vpop.f32.mrb[0].mxu0
    %v6265 = vadd.f32 %v6222, %v6264
    %v6266 = vpop.f32.mrb[0].mxu0
    %v6267 = vadd.f32 %v6224, %v6266
    %v6268 = vpop.f32.mrb[0].mxu0
    %v6269 = vadd.f32 %v6226, %v6268
    %v6270 = vpop.f32.mrb[0].mxu0
    %v6271 = vadd.f32 %v6228, %v6270
    %6272 = vdwg.mxu0
    %6273 = vmatprep.subr.bf16.mxu0 %v4741
    %6274 = vmatpush1.bf16.msra.mxu0 %v4740
    %6275 = vmatprep.subr.bf16.mxu0 %v4753
    %6276 = vmatpush1.bf16.msra.mxu0 %v4752
    %6277 = vmatprep.subr.bf16.mxu0 %v4765
    %6278 = vmatpush1.bf16.msra.mxu0 %v4764
    %6279 = vmatprep.subr.bf16.mxu0 %v4777
    %6280 = vmatpush1.bf16.msra.mxu0 %v4776
    %6281 = vmatprep.subr.bf16.mxu0 %v4789
    %6282 = vmatpush1.bf16.msra.mxu0 %v4788
    %6283 = vmatprep.subr.bf16.mxu0 %v4801
    %6284 = vmatpush1.bf16.msra.mxu0 %v4800
    %6285 = vmatprep.subr.bf16.mxu0 %v4813
    %6286 = vmatpush1.bf16.msra.mxu0 %v4812
    %6287 = vmatprep.subr.bf16.mxu0 %v4825
    %6288 = vmatpush1.bf16.msra.mxu0 %v4824
    %6289 = vmatprep.subr.bf16.mxu0 %v4837
    %6290 = vmatpush1.bf16.msra.mxu0 %v4836
    %6291 = vmatprep.subr.bf16.mxu0 %v4849
    %6292 = vmatpush1.bf16.msra.mxu0 %v4848
    %6293 = vmatprep.subr.bf16.mxu0 %v4861
    %6294 = vmatpush1.bf16.msra.mxu0 %v4860
    %6295 = vmatprep.subr.bf16.mxu0 %v4873
    %6296 = vmatpush1.bf16.msra.mxu0 %v4872
    %6297 = vmatprep.subr.bf16.mxu0 %v4885
    %6298 = vmatpush1.bf16.msra.mxu0 %v4884
    %6299 = vmatprep.subr.bf16.mxu0 %v4897
    %6300 = vmatpush1.bf16.msra.mxu0 %v4896
    %6301 = vmatprep.subr.bf16.mxu0 %v4909
    %6302 = vmatpush1.bf16.msra.mxu0 %v4908
    %6303 = vmatprep.subr.bf16.mxu0 %v4921
    %6304 = vmatpush1.bf16.msra.mxu0 %v4920
    %6305 = vmatprep.mubr.bf16.mxu0 %v2361
    %6306 = vmatmul.mubr.bf16.gmra.mrb[0].mxu0 %v2360
    %v6307 = vpop.f32.mrb[0].mxu0
    %v6308 = vadd.f32 %v2973, %v6307
    %v6309 = vpop.f32.mrb[0].mxu0
    %v6310 = vadd.f32 %v2977, %v6309
    %v6311 = vpop.f32.mrb[0].mxu0
    %v6312 = vadd.f32 %v2973, %v6311
    %v6313 = vpop.f32.mrb[0].mxu0
    %v6314 = vadd.f32 %v2977, %v6313
    %6315 = vdwg.mxu0
    %6316 = vmatprep.subr.bf16.mxu0 %v4933
    %6317 = vmatpush1.bf16.msra.mxu0 %v4932
    %6318 = vmatprep.subr.bf16.mxu0 %v4945
    %6319 = vmatpush1.bf16.msra.mxu0 %v4944
    %6320 = vmatprep.subr.bf16.mxu0 %v4957
    %6321 = vmatpush1.bf16.msra.mxu0 %v4956
    %6322 = vmatprep.subr.bf16.mxu0 %v4969
    %6323 = vmatpush1.bf16.msra.mxu0 %v4968
    %6324 = vmatprep.subr.bf16.mxu0 %v4981
    %6325 = vmatpush1.bf16.msra.mxu0 %v4980
    %6326 = vmatprep.subr.bf16.mxu0 %v4993
    %6327 = vmatpush1.bf16.msra.mxu0 %v4992
    %6328 = vmatprep.subr.bf16.mxu0 %v5005
    %6329 = vmatpush1.bf16.msra.mxu0 %v5004
    %6330 = vmatprep.subr.bf16.mxu0 %v5017
    %6331 = vmatpush1.bf16.msra.mxu0 %v5016
    %6332 = vmatprep.subr.bf16.mxu0 %v5029
    %6333 = vmatpush1.bf16.msra.mxu0 %v5028
    %6334 = vmatprep.subr.bf16.mxu0 %v5041
    %6335 = vmatpush1.bf16.msra.mxu0 %v5040
    %6336 = vmatprep.subr.bf16.mxu0 %v5053
    %6337 = vmatpush1.bf16.msra.mxu0 %v5052
    %6338 = vmatprep.subr.bf16.mxu0 %v5065
    %6339 = vmatpush1.bf16.msra.mxu0 %v5064
    %6340 = vmatprep.subr.bf16.mxu0 %v5077
    %6341 = vmatpush1.bf16.msra.mxu0 %v5076
    %6342 = vmatprep.subr.bf16.mxu0 %v5089
    %6343 = vmatpush1.bf16.msra.mxu0 %v5088
    %6344 = vmatprep.subr.bf16.mxu0 %v5101
    %6345 = vmatpush1.bf16.msra.mxu0 %v5100
    %6346 = vmatprep.subr.bf16.mxu0 %v5113
    %6347 = vmatpush1.bf16.msra.mxu0 %v5112
    %6348 = vmatprep.mubr.bf16.mxu0 %v2363
    %6349 = vmatmul.mubr.bf16.gmra.mrb[0].mxu0 %v2362
    %v6350 = vpop.f32.mrb[0].mxu0
    %v6351 = vadd.f32 %v6308, %v6350
    %v6352 = vpop.f32.mrb[0].mxu0
    %v6353 = vadd.f32 %v6310, %v6352
    %v6354 = vpop.f32.mrb[0].mxu0
    %v6355 = vadd.f32 %v6312, %v6354
    %v6356 = vpop.f32.mrb[0].mxu0
    %v6357 = vadd.f32 %v6314, %v6356
    %6358 = vdwg.mxu0
    %6359 = vmatprep.subr.bf16.mxu0 %v5125
    %6360 = vmatpush1.bf16.msra.mxu0 %v5124
    %6361 = vmatprep.subr.bf16.mxu0 %v5137
    %6362 = vmatpush1.bf16.msra.mxu0 %v5136
    %6363 = vmatprep.subr.bf16.mxu0 %v5149
    %6364 = vmatpush1.bf16.msra.mxu0 %v5148
    %6365 = vmatprep.subr.bf16.mxu0 %v5161
    %6366 = vmatpush1.bf16.msra.mxu0 %v5160
    %6367 = vmatprep.subr.bf16.mxu0 %v5173
    %6368 = vmatpush1.bf16.msra.mxu0 %v5172
    %6369 = vmatprep.subr.bf16.mxu0 %v5185
    %6370 = vmatpush1.bf16.msra.mxu0 %v5184
    %6371 = vmatprep.subr.bf16.mxu0 %v5197
    %6372 = vmatpush1.bf16.msra.mxu0 %v5196
    %6373 = vmatprep.subr.bf16.mxu0 %v5209
    %6374 = vmatpush1.bf16.msra.mxu0 %v5208
    %6375 = vmatprep.subr.bf16.mxu0 %v5221
    %6376 = vmatpush1.bf16.msra.mxu0 %v5220
    %6377 = vmatprep.subr.bf16.mxu0 %v5233
    %6378 = vmatpush1.bf16.msra.mxu0 %v5232
    %6379 = vmatprep.subr.bf16.mxu0 %v5245
    %6380 = vmatpush1.bf16.msra.mxu0 %v5244
    %6381 = vmatprep.subr.bf16.mxu0 %v5257
    %6382 = vmatpush1.bf16.msra.mxu0 %v5256
    %6383 = vmatprep.subr.bf16.mxu0 %v5269
    %6384 = vmatpush1.bf16.msra.mxu0 %v5268
    %6385 = vmatprep.subr.bf16.mxu0 %v5281
    %6386 = vmatpush1.bf16.msra.mxu0 %v5280
    %6387 = vmatprep.subr.bf16.mxu0 %v5293
    %6388 = vmatpush1.bf16.msra.mxu0 %v5292
    %6389 = vmatprep.subr.bf16.mxu0 %v5305
    %6390 = vmatpush1.bf16.msra.mxu0 %v5304
    %6391 = vmatprep.mubr.bf16.mxu0 %v2365
    %6392 = vmatmul.mubr.bf16.gmra.mrb[0].mxu0 %v2364
    %v6393 = vpop.f32.mrb[0].mxu0
    %v6394 = vadd.f32 %v6351, %v6393
    %v6395 = vpop.f32.mrb[0].mxu0
    %v6396 = vadd.f32 %v6353, %v6395
    %v6397 = vpop.f32.mrb[0].mxu0
    %v6398 = vadd.f32 %v6355, %v6397
    %v6399 = vpop.f32.mrb[0].mxu0
    %v6400 = vadd.f32 %v6357, %v6399
    %6401 = vdwg.mxu0
    %6402 = vmatprep.subr.bf16.mxu0 %v4743
    %6403 = vmatpush1.bf16.msra.mxu0 %v4742
    %6404 = vmatprep.subr.bf16.mxu0 %v4755
    %6405 = vmatpush1.bf16.msra.mxu0 %v4754
    %6406 = vmatprep.subr.bf16.mxu0 %v4767
    %6407 = vmatpush1.bf16.msra.mxu0 %v4766
    %6408 = vmatprep.subr.bf16.mxu0 %v4779
    %6409 = vmatpush1.bf16.msra.mxu0 %v4778
    %6410 = vmatprep.subr.bf16.mxu0 %v4791
    %6411 = vmatpush1.bf16.msra.mxu0 %v4790
    %6412 = vmatprep.subr.bf16.mxu0 %v4803
    %6413 = vmatpush1.bf16.msra.mxu0 %v4802
    %6414 = vmatprep.subr.bf16.mxu0 %v4815
    %6415 = vmatpush1.bf16.msra.mxu0 %v4814
    %6416 = vmatprep.subr.bf16.mxu0 %v4827
    %6417 = vmatpush1.bf16.msra.mxu0 %v4826
    %6418 = vmatprep.subr.bf16.mxu0 %v4839
    %6419 = vmatpush1.bf16.msra.mxu0 %v4838
    %6420 = vmatprep.subr.bf16.mxu0 %v4851
    %6421 = vmatpush1.bf16.msra.mxu0 %v4850
    %6422 = vmatprep.subr.bf16.mxu0 %v4863
    %6423 = vmatpush1.bf16.msra.mxu0 %v4862
    %6424 = vmatprep.subr.bf16.mxu0 %v4875
    %6425 = vmatpush1.bf16.msra.mxu0 %v4874
    %6426 = vmatprep.subr.bf16.mxu0 %v4887
    %6427 = vmatpush1.bf16.msra.mxu0 %v4886
    %6428 = vmatprep.subr.bf16.mxu0 %v4899
    %6429 = vmatpush1.bf16.msra.mxu0 %v4898
    %6430 = vmatprep.subr.bf16.mxu0 %v4911
    %6431 = vmatpush1.bf16.msra.mxu0 %v4910
    %6432 = vmatprep.subr.bf16.mxu0 %v4923
    %6433 = vmatpush1.bf16.msra.mxu0 %v4922
    %6434 = vmatprep.mubr.bf16.mxu0 %v2361
    %6435 = vmatmul.mubr.bf16.gmra.mrb[0].mxu0 %v2360
    %v6436 = vpop.f32.mrb[0].mxu0
    %v6437 = vadd.f32 %v2981, %v6436
    %v6438 = vpop.f32.mrb[0].mxu0
    %v6439 = vadd.f32 %v2985, %v6438
    %v6440 = vpop.f32.mrb[0].mxu0
    %v6441 = vadd.f32 %v2981, %v6440
    %v6442 = vpop.f32.mrb[0].mxu0
    %v6443 = vadd.f32 %v2985, %v6442
    %6444 = vdwg.mxu0
    %6445 = vmatprep.subr.bf16.mxu0 %v4935
    %6446 = vmatpush1.bf16.msra.mxu0 %v4934
    %6447 = vmatprep.subr.bf16.mxu0 %v4947
    %6448 = vmatpush1.bf16.msra.mxu0 %v4946
    %6449 = vmatprep.subr.bf16.mxu0 %v4959
    %6450 = vmatpush1.bf16.msra.mxu0 %v4958
    %6451 = vmatprep.subr.bf16.mxu0 %v4971
    %6452 = vmatpush1.bf16.msra.mxu0 %v4970
    %6453 = vmatprep.subr.bf16.mxu0 %v4983
    %6454 = vmatpush1.bf16.msra.mxu0 %v4982
    %6455 = vmatprep.subr.bf16.mxu0 %v4995
    %6456 = vmatpush1.bf16.msra.mxu0 %v4994
    %6457 = vmatprep.subr.bf16.mxu0 %v5007
    %6458 = vmatpush1.bf16.msra.mxu0 %v5006
    %6459 = vmatprep.subr.bf16.mxu0 %v5019
    %6460 = vmatpush1.bf16.msra.mxu0 %v5018
    %6461 = vmatprep.subr.bf16.mxu0 %v5031
    %6462 = vmatpush1.bf16.msra.mxu0 %v5030
    %6463 = vmatprep.subr.bf16.mxu0 %v5043
    %6464 = vmatpush1.bf16.msra.mxu0 %v5042
    %6465 = vmatprep.subr.bf16.mxu0 %v5055
    %6466 = vmatpush1.bf16.msra.mxu0 %v5054
    %6467 = vmatprep.subr.bf16.mxu0 %v5067
    %6468 = vmatpush1.bf16.msra.mxu0 %v5066
    %6469 = vmatprep.subr.bf16.mxu0 %v5079
    %6470 = vmatpush1.bf16.msra.mxu0 %v5078
    %6471 = vmatprep.subr.bf16.mxu0 %v5091
    %6472 = vmatpush1.bf16.msra.mxu0 %v5090
    %6473 = vmatprep.subr.bf16.mxu0 %v5103
    %6474 = vmatpush1.bf16.msra.mxu0 %v5102
    %6475 = vmatprep.subr.bf16.mxu0 %v5115
    %6476 = vmatpush1.bf16.msra.mxu0 %v5114
    %6477 = vmatprep.mubr.bf16.mxu0 %v2363
    %6478 = vmatmul.mubr.bf16.gmra.mrb[0].mxu0 %v2362
    %v6479 = vpop.f32.mrb[0].mxu0
    %v6480 = vadd.f32 %v6437, %v6479
    %v6481 = vpop.f32.mrb[0].mxu0
    %v6482 = vadd.f32 %v6439, %v6481
    %v6483 = vpop.f32.mrb[0].mxu0
    %v6484 = vadd.f32 %v6441, %v6483
    %v6485 = vpop.f32.mrb[0].mxu0
    %v6486 = vadd.f32 %v6443, %v6485
    %6487 = vdwg.mxu0
    %6488 = vmatprep.subr.bf16.mxu0 %v5127
    %6489 = vmatpush1.bf16.msra.mxu0 %v5126
    %6490 = vmatprep.subr.bf16.mxu0 %v5139
    %6491 = vmatpush1.bf16.msra.mxu0 %v5138
    %6492 = vmatprep.subr.bf16.mxu0 %v5151
    %6493 = vmatpush1.bf16.msra.mxu0 %v5150
    %6494 = vmatprep.subr.bf16.mxu0 %v5163
    %6495 = vmatpush1.bf16.msra.mxu0 %v5162
    %6496 = vmatprep.subr.bf16.mxu0 %v5175
    %6497 = vmatpush1.bf16.msra.mxu0 %v5174
    %6498 = vmatprep.subr.bf16.mxu0 %v5187
    %6499 = vmatpush1.bf16.msra.mxu0 %v5186
    %6500 = vmatprep.subr.bf16.mxu0 %v5199
    %6501 = vmatpush1.bf16.msra.mxu0 %v5198
    %6502 = vmatprep.subr.bf16.mxu0 %v5211
    %6503 = vmatpush1.bf16.msra.mxu0 %v5210
    %6504 = vmatprep.subr.bf16.mxu0 %v5223
    %6505 = vmatpush1.bf16.msra.mxu0 %v5222
    %6506 = vmatprep.subr.bf16.mxu0 %v5235
    %6507 = vmatpush1.bf16.msra.mxu0 %v5234
    %6508 = vmatprep.subr.bf16.mxu0 %v5247
    %6509 = vmatpush1.bf16.msra.mxu0 %v5246
    %6510 = vmatprep.subr.bf16.mxu0 %v5259
    %6511 = vmatpush1.bf16.msra.mxu0 %v5258
    %6512 = vmatprep.subr.bf16.mxu0 %v5271
    %6513 = vmatpush1.bf16.msra.mxu0 %v5270
    %6514 = vmatprep.subr.bf16.mxu0 %v5283
    %6515 = vmatpush1.bf16.msra.mxu0 %v5282
    %6516 = vmatprep.subr.bf16.mxu0 %v5295
    %6517 = vmatpush1.bf16.msra.mxu0 %v5294
    %6518 = vmatprep.subr.bf16.mxu0 %v5307
    %6519 = vmatpush1.bf16.msra.mxu0 %v5306
    %6520 = vmatprep.mubr.bf16.mxu0 %v2365
    %6521 = vmatmul.mubr.bf16.gmra.mrb[0].mxu0 %v2364
    %v6522 = vpop.f32.mrb[0].mxu0
    %v6523 = vadd.f32 %v6480, %v6522
    %v6524 = vpop.f32.mrb[0].mxu0
    %v6525 = vadd.f32 %v6482, %v6524
    %v6526 = vpop.f32.mrb[0].mxu0
    %v6527 = vadd.f32 %v6484, %v6526
    %v6528 = vpop.f32.mrb[0].mxu0
    %v6529 = vadd.f32 %v6486, %v6528
    %6530 = vdwg.mxu0
    %6531 = vmatprep.subr.bf16.mxu0 %v4745
    %6532 = vmatpush1.bf16.msra.mxu0 %v4744
    %6533 = vmatprep.subr.bf16.mxu0 %v4757
    %6534 = vmatpush1.bf16.msra.mxu0 %v4756
    %6535 = vmatprep.subr.bf16.mxu0 %v4769
    %6536 = vmatpush1.bf16.msra.mxu0 %v4768
    %6537 = vmatprep.subr.bf16.mxu0 %v4781
    %6538 = vmatpush1.bf16.msra.mxu0 %v4780
    %6539 = vmatprep.subr.bf16.mxu0 %v4793
    %6540 = vmatpush1.bf16.msra.mxu0 %v4792
    %6541 = vmatprep.subr.bf16.mxu0 %v4805
    %6542 = vmatpush1.bf16.msra.mxu0 %v4804
    %6543 = vmatprep.subr.bf16.mxu0 %v4817
    %6544 = vmatpush1.bf16.msra.mxu0 %v4816
    %6545 = vmatprep.subr.bf16.mxu0 %v4829
    %6546 = vmatpush1.bf16.msra.mxu0 %v4828
    %6547 = vmatprep.subr.bf16.mxu0 %v4841
    %6548 = vmatpush1.bf16.msra.mxu0 %v4840
    %6549 = vmatprep.subr.bf16.mxu0 %v4853
    %6550 = vmatpush1.bf16.msra.mxu0 %v4852
    %6551 = vmatprep.subr.bf16.mxu0 %v4865
    %6552 = vmatpush1.bf16.msra.mxu0 %v4864
    %6553 = vmatprep.subr.bf16.mxu0 %v4877
    %6554 = vmatpush1.bf16.msra.mxu0 %v4876
    %6555 = vmatprep.subr.bf16.mxu0 %v4889
    %6556 = vmatpush1.bf16.msra.mxu0 %v4888
    %6557 = vmatprep.subr.bf16.mxu0 %v4901
    %6558 = vmatpush1.bf16.msra.mxu0 %v4900
    %6559 = vmatprep.subr.bf16.mxu0 %v4913
    %6560 = vmatpush1.bf16.msra.mxu0 %v4912
    %6561 = vmatprep.subr.bf16.mxu0 %v4925
    %6562 = vmatpush1.bf16.msra.mxu0 %v4924
    %6563 = vmatprep.mubr.bf16.mxu0 %v2361
    %6564 = vmatmul.mubr.bf16.gmra.mrb[0].mxu0 %v2360
    %v6565 = vpop.f32.mrb[0].mxu0
    %v6566 = vadd.f32 %v2989, %v6565
    %v6567 = vpop.f32.mrb[0].mxu0
    %v6568 = vadd.f32 %v2993, %v6567
    %v6569 = vpop.f32.mrb[0].mxu0
    %v6570 = vadd.f32 %v2989, %v6569
    %v6571 = vpop.f32.mrb[0].mxu0
    %v6572 = vadd.f32 %v2993, %v6571
    %6573 = vdwg.mxu0
    %6574 = vmatprep.subr.bf16.mxu0 %v4937
    %6575 = vmatpush1.bf16.msra.mxu0 %v4936
    %6576 = vmatprep.subr.bf16.mxu0 %v4949
    %6577 = vmatpush1.bf16.msra.mxu0 %v4948
    %6578 = vmatprep.subr.bf16.mxu0 %v4961
    %6579 = vmatpush1.bf16.msra.mxu0 %v4960
    %6580 = vmatprep.subr.bf16.mxu0 %v4973
    %6581 = vmatpush1.bf16.msra.mxu0 %v4972
    %6582 = vmatprep.subr.bf16.mxu0 %v4985
    %6583 = vmatpush1.bf16.msra.mxu0 %v4984
    %6584 = vmatprep.subr.bf16.mxu0 %v4997
    %6585 = vmatpush1.bf16.msra.mxu0 %v4996
    %6586 = vmatprep.subr.bf16.mxu0 %v5009
    %6587 = vmatpush1.bf16.msra.mxu0 %v5008
    %6588 = vmatprep.subr.bf16.mxu0 %v5021
    %6589 = vmatpush1.bf16.msra.mxu0 %v5020
    %6590 = vmatprep.subr.bf16.mxu0 %v5033
    %6591 = vmatpush1.bf16.msra.mxu0 %v5032
    %6592 = vmatprep.subr.bf16.mxu0 %v5045
    %6593 = vmatpush1.bf16.msra.mxu0 %v5044
    %6594 = vmatprep.subr.bf16.mxu0 %v5057
    %6595 = vmatpush1.bf16.msra.mxu0 %v5056
    %6596 = vmatprep.subr.bf16.mxu0 %v5069
    %6597 = vmatpush1.bf16.msra.mxu0 %v5068
    %6598 = vmatprep.subr.bf16.mxu0 %v5081
    %6599 = vmatpush1.bf16.msra.mxu0 %v5080
    %6600 = vmatprep.subr.bf16.mxu0 %v5093
    %6601 = vmatpush1.bf16.msra.mxu0 %v5092
    %6602 = vmatprep.subr.bf16.mxu0 %v5105
    %6603 = vmatpush1.bf16.msra.mxu0 %v5104
    %6604 = vmatprep.subr.bf16.mxu0 %v5117
    %6605 = vmatpush1.bf16.msra.mxu0 %v5116
    %6606 = vmatprep.mubr.bf16.mxu0 %v2363
    %6607 = vmatmul.mubr.bf16.gmra.mrb[0].mxu0 %v2362
    %v6608 = vpop.f32.mrb[0].mxu0
    %v6609 = vadd.f32 %v6566, %v6608
    %v6610 = vpop.f32.mrb[0].mxu0
    %v6611 = vadd.f32 %v6568, %v6610
    %v6612 = vpop.f32.mrb[0].mxu0
    %v6613 = vadd.f32 %v6570, %v6612
    %v6614 = vpop.f32.mrb[0].mxu0
    %v6615 = vadd.f32 %v6572, %v6614
    %6616 = vdwg.mxu0
    %6617 = vmatprep.subr.bf16.mxu0 %v5129
    %6618 = vmatpush1.bf16.msra.mxu0 %v5128
    %6619 = vmatprep.subr.bf16.mxu0 %v5141
    %6620 = vmatpush1.bf16.msra.mxu0 %v5140
    %6621 = vmatprep.subr.bf16.mxu0 %v5153
    %6622 = vmatpush1.bf16.msra.mxu0 %v5152
    %6623 = vmatprep.subr.bf16.mxu0 %v5165
    %6624 = vmatpush1.bf16.msra.mxu0 %v5164
    %6625 = vmatprep.subr.bf16.mxu0 %v5177
    %6626 = vmatpush1.bf16.msra.mxu0 %v5176
    %6627 = vmatprep.subr.bf16.mxu0 %v5189
    %6628 = vmatpush1.bf16.msra.mxu0 %v5188
    %6629 = vmatprep.subr.bf16.mxu0 %v5201
    %6630 = vmatpush1.bf16.msra.mxu0 %v5200
    %6631 = vmatprep.subr.bf16.mxu0 %v5213
    %6632 = vmatpush1.bf16.msra.mxu0 %v5212
    %6633 = vmatprep.subr.bf16.mxu0 %v5225
    %6634 = vmatpush1.bf16.msra.mxu0 %v5224
    %6635 = vmatprep.subr.bf16.mxu0 %v5237
    %6636 = vmatpush1.bf16.msra.mxu0 %v5236
    %6637 = vmatprep.subr.bf16.mxu0 %v5249
    %6638 = vmatpush1.bf16.msra.mxu0 %v5248
    %6639 = vmatprep.subr.bf16.mxu0 %v5261
    %6640 = vmatpush1.bf16.msra.mxu0 %v5260
    %6641 = vmatprep.subr.bf16.mxu0 %v5273
    %6642 = vmatpush1.bf16.msra.mxu0 %v5272
    %6643 = vmatprep.subr.bf16.mxu0 %v5285
    %6644 = vmatpush1.bf16.msra.mxu0 %v5284
    %6645 = vmatprep.subr.bf16.mxu0 %v5297
    %6646 = vmatpush1.bf16.msra.mxu0 %v5296
    %6647 = vmatprep.subr.bf16.mxu0 %v5309
    %6648 = vmatpush1.bf16.msra.mxu0 %v5308
    %6649 = vmatprep.mubr.bf16.mxu0 %v2365
    %6650 = vmatmul.mubr.bf16.gmra.mrb[0].mxu0 %v2364
    %v6651 = vpop.f32.mrb[0].mxu0
    %v6652 = vadd.f32 %v6609, %v6651
    %v6653 = vpop.f32.mrb[0].mxu0
    %v6654 = vadd.f32 %v6611, %v6653
    %v6655 = vpop.f32.mrb[0].mxu0
    %v6656 = vadd.f32 %v6613, %v6655
    %v6657 = vpop.f32.mrb[0].mxu0
    %v6658 = vadd.f32 %v6615, %v6657
    %6659 = vdwg.mxu0
    %v6660 = vmax.f32 %v6007, 0.0
    %v6661 = vmax.f32 %v6009, 0.0
    %v6662 = vmax.f32 %v6136, 0.0
    %v6663 = vmax.f32 %v6138, 0.0
    %v6664 = vmax.f32 %v6265, 0.0
    %v6665 = vmax.f32 %v6267, 0.0
    %v6666 = vmax.f32 %v6394, 0.0
    %v6667 = vmax.f32 %v6396, 0.0
    %v6668 = vmax.f32 %v6011, 0.0
    %v6669 = vmax.f32 %v6013, 0.0
    %v6670 = vmax.f32 %v6140, 0.0
    %v6671 = vmax.f32 %v6142, 0.0
    %v6672 = vmax.f32 %v6269, 0.0
    %v6673 = vmax.f32 %v6271, 0.0
    %v6674 = vmax.f32 %v6398, 0.0
    %v6675 = vmax.f32 %v6400, 0.0
    %v6676 = vpack.c.bf16 %v6668, %v6660
    %v6677 = vpack.c.bf16 %v6669, %v6661
    %v6678 = vpack.c.bf16 %v6670, %v6662
    %v6679 = vpack.c.bf16 %v6671, %v6663
    %v6680 = vpack.c.bf16 %v6672, %v6664
    %v6681 = vpack.c.bf16 %v6673, %v6665
    %v6682 = vpack.c.bf16 %v6674, %v6666
    %v6683 = vpack.c.bf16 %v6675, %v6667
    %v6684 = vld [vmem:[#allocation11] sm:$0xf]
    %v6685 = vld [vmem:[#allocation11 + $0x4] sm:$0xf]
    %v6686 = vld [vmem:[#allocation11 + $0x8] sm:$0xf]
    %v6687 = vld [vmem:[#allocation11 + $0xc] sm:$0xf]
    %v6688 = vld [vmem:[#allocation11 + $0x10] sm:$0xf]
    %v6689 = vld [vmem:[#allocation11 + $0x14] sm:$0xf]
    %v6690 = vld [vmem:[#allocation11 + $0x18] sm:$0xf]
    %v6691 = vld [vmem:[#allocation11 + $0x1c] sm:$0xf]
    %v6692 = vld [vmem:[#allocation11 + $0x20] sm:$0xf]
    %v6693 = vld [vmem:[#allocation11 + $0x24] sm:$0xf]
    %v6694 = vld [vmem:[#allocation11 + $0x28] sm:$0xf]
    %v6695 = vld [vmem:[#allocation11 + $0x2c] sm:$0xf]
    %v6696 = vld [vmem:[#allocation11 + $0x30] sm:$0xf]
    %v6697 = vld [vmem:[#allocation11 + $0x34] sm:$0xf]
    %v6698 = vld [vmem:[#allocation11 + $0x38] sm:$0xf]
    %v6699 = vld [vmem:[#allocation11 + $0x3c] sm:$0xf]
    %v6700 = vld [vmem:[#allocation11 + $0x40] sm:$0xf]
    %v6701 = vld [vmem:[#allocation11 + $0x44] sm:$0xf]
    %v6702 = vld [vmem:[#allocation11 + $0x48] sm:$0xf]
    %v6703 = vld [vmem:[#allocation11 + $0x4c] sm:$0xf]
    %v6704 = vld [vmem:[#allocation11 + $0x50] sm:$0xf]
    %v6705 = vld [vmem:[#allocation11 + $0x54] sm:$0xf]
    %v6706 = vld [vmem:[#allocation11 + $0x58] sm:$0xf]
    %v6707 = vld [vmem:[#allocation11 + $0x5c] sm:$0xf]
    %v6708 = vld [vmem:[#allocation11 + $0x60] sm:$0xf]
    %v6709 = vld [vmem:[#allocation11 + $0x64] sm:$0xf]
    %v6710 = vld [vmem:[#allocation11 + $0x68] sm:$0xf]
    %v6711 = vld [vmem:[#allocation11 + $0x6c] sm:$0xf]
    %v6712 = vld [vmem:[#allocation11 + $0x70] sm:$0xf]
    %v6713 = vld [vmem:[#allocation11 + $0x74] sm:$0xf]
    %v6714 = vld [vmem:[#allocation11 + $0x78] sm:$0xf]
    %v6715 = vld [vmem:[#allocation11 + $0x7c] sm:$0xf]
    %v6716 = vld [vmem:[#allocation11 + $0x80] sm:$0xf]
    %v6717 = vld [vmem:[#allocation11 + $0x84] sm:$0xf]
    %v6718 = vld [vmem:[#allocation11 + $0x88] sm:$0xf]
    %v6719 = vld [vmem:[#allocation11 + $0x8c] sm:$0xf]
    %v6720 = vld [vmem:[#allocation11 + $0x90] sm:$0xf]
    %v6721 = vld [vmem:[#allocation11 + $0x94] sm:$0xf]
    %v6722 = vld [vmem:[#allocation11 + $0x98] sm:$0xf]
    %v6723 = vld [vmem:[#allocation11 + $0x9c] sm:$0xf]
    %v6724 = vld [vmem:[#allocation11 + $0xa0] sm:$0xf]
    %v6725 = vld [vmem:[#allocation11 + $0xa4] sm:$0xf]
    %v6726 = vld [vmem:[#allocation11 + $0xa8] sm:$0xf]
    %v6727 = vld [vmem:[#allocation11 + $0xac] sm:$0xf]
    %v6728 = vld [vmem:[#allocation11 + $0xb0] sm:$0xf]
    %v6729 = vld [vmem:[#allocation11 + $0xb4] sm:$0xf]
    %v6730 = vld [vmem:[#allocation11 + $0xb8] sm:$0xf]
    %v6731 = vld [vmem:[#allocation11 + $0xbc] sm:$0xf]
    %v6732 = vld [vmem:[#allocation11 + $0xc0] sm:$0xf]
    %v6733 = vld [vmem:[#allocation11 + $0xc4] sm:$0xf]
    %v6734 = vld [vmem:[#allocation11 + $0xc8] sm:$0xf]
    %v6735 = vld [vmem:[#allocation11 + $0xcc] sm:$0xf]
    %v6736 = vld [vmem:[#allocation11 + $0xd0] sm:$0xf]
    %v6737 = vld [vmem:[#allocation11 + $0xd4] sm:$0xf]
    %v6738 = vld [vmem:[#allocation11 + $0xd8] sm:$0xf]
    %v6739 = vld [vmem:[#allocation11 + $0xdc] sm:$0xf]
    %v6740 = vld [vmem:[#allocation11 + $0xe0] sm:$0xf]
    %v6741 = vld [vmem:[#allocation11 + $0xe4] sm:$0xf]
    %v6742 = vld [vmem:[#allocation11 + $0xe8] sm:$0xf]
    %v6743 = vld [vmem:[#allocation11 + $0xec] sm:$0xf]
    %v6744 = vld [vmem:[#allocation11 + $0xf0] sm:$0xf]
    %v6745 = vld [vmem:[#allocation11 + $0xf4] sm:$0xf]
    %v6746 = vld [vmem:[#allocation11 + $0xf8] sm:$0xf]
    %v6747 = vld [vmem:[#allocation11 + $0xfc] sm:$0xf]
    %v6748 = vld [vmem:[#allocation11 + $0x100] sm:$0xf]
    %v6749 = vld [vmem:[#allocation11 + $0x104] sm:$0xf]
    %v6750 = vld [vmem:[#allocation11 + $0x108] sm:$0xf]
    %v6751 = vld [vmem:[#allocation11 + $0x10c] sm:$0xf]
    %v6752 = vld [vmem:[#allocation11 + $0x110] sm:$0xf]
    %v6753 = vld [vmem:[#allocation11 + $0x114] sm:$0xf]
    %v6754 = vld [vmem:[#allocation11 + $0x118] sm:$0xf]
    %v6755 = vld [vmem:[#allocation11 + $0x11c] sm:$0xf]
    %v6756 = vld [vmem:[#allocation11 + $0x120] sm:$0xf]
    %v6757 = vld [vmem:[#allocation11 + $0x124] sm:$0xf]
    %v6758 = vld [vmem:[#allocation11 + $0x128] sm:$0xf]
    %v6759 = vld [vmem:[#allocation11 + $0x12c] sm:$0xf]
    %v6760 = vld [vmem:[#allocation11 + $0x130] sm:$0xf]
    %v6761 = vld [vmem:[#allocation11 + $0x134] sm:$0xf]
    %v6762 = vld [vmem:[#allocation11 + $0x138] sm:$0xf]
    %v6763 = vld [vmem:[#allocation11 + $0x13c] sm:$0xf]
    %v6764 = vld [vmem:[#allocation11 + $0x140] sm:$0xf]
    %v6765 = vld [vmem:[#allocation11 + $0x144] sm:$0xf]
    %v6766 = vld [vmem:[#allocation11 + $0x148] sm:$0xf]
    %v6767 = vld [vmem:[#allocation11 + $0x14c] sm:$0xf]
    %v6768 = vld [vmem:[#allocation11 + $0x150] sm:$0xf]
    %v6769 = vld [vmem:[#allocation11 + $0x154] sm:$0xf]
    %v6770 = vld [vmem:[#allocation11 + $0x158] sm:$0xf]
    %v6771 = vld [vmem:[#allocation11 + $0x15c] sm:$0xf]
    %v6772 = vld [vmem:[#allocation11 + $0x160] sm:$0xf]
    %v6773 = vld [vmem:[#allocation11 + $0x164] sm:$0xf]
    %v6774 = vld [vmem:[#allocation11 + $0x168] sm:$0xf]
    %v6775 = vld [vmem:[#allocation11 + $0x16c] sm:$0xf]
    %v6776 = vld [vmem:[#allocation11 + $0x170] sm:$0xf]
    %v6777 = vld [vmem:[#allocation11 + $0x174] sm:$0xf]
    %v6778 = vld [vmem:[#allocation11 + $0x178] sm:$0xf]
    %v6779 = vld [vmem:[#allocation11 + $0x17c] sm:$0xf]
    %v6780 = vld [vmem:[#allocation11 + $0x180] sm:$0xf]
    %v6781 = vld [vmem:[#allocation11 + $0x184] sm:$0xf]
    %v6782 = vld [vmem:[#allocation11 + $0x188] sm:$0xf]
    %v6783 = vld [vmem:[#allocation11 + $0x18c] sm:$0xf]
    %v6784 = vld [vmem:[#allocation11 + $0x190] sm:$0xf]
    %v6785 = vld [vmem:[#allocation11 + $0x194] sm:$0xf]
    %v6786 = vld [vmem:[#allocation11 + $0x198] sm:$0xf]
    %v6787 = vld [vmem:[#allocation11 + $0x19c] sm:$0xf]
    %v6788 = vld [vmem:[#allocation11 + $0x1a0] sm:$0xf]
    %v6789 = vld [vmem:[#allocation11 + $0x1a4] sm:$0xf]
    %v6790 = vld [vmem:[#allocation11 + $0x1a8] sm:$0xf]
    %v6791 = vld [vmem:[#allocation11 + $0x1ac] sm:$0xf]
    %v6792 = vld [vmem:[#allocation11 + $0x1b0] sm:$0xf]
    %v6793 = vld [vmem:[#allocation11 + $0x1b4] sm:$0xf]
    %v6794 = vld [vmem:[#allocation11 + $0x1b8] sm:$0xf]
    %v6795 = vld [vmem:[#allocation11 + $0x1bc] sm:$0xf]
    %v6796 = vld [vmem:[#allocation11 + $0x1c0] sm:$0xf]
    %v6797 = vld [vmem:[#allocation11 + $0x1c4] sm:$0xf]
    %v6798 = vld [vmem:[#allocation11 + $0x1c8] sm:$0xf]
    %v6799 = vld [vmem:[#allocation11 + $0x1cc] sm:$0xf]
    %v6800 = vld [vmem:[#allocation11 + $0x1d0] sm:$0xf]
    %v6801 = vld [vmem:[#allocation11 + $0x1d4] sm:$0xf]
    %v6802 = vld [vmem:[#allocation11 + $0x1d8] sm:$0xf]
    %v6803 = vld [vmem:[#allocation11 + $0x1dc] sm:$0xf]
    %v6804 = vld [vmem:[#allocation11 + $0x1e0] sm:$0xf]
    %v6805 = vld [vmem:[#allocation11 + $0x1e4] sm:$0xf]
    %v6806 = vld [vmem:[#allocation11 + $0x1e8] sm:$0xf]
    %v6807 = vld [vmem:[#allocation11 + $0x1ec] sm:$0xf]
    %v6808 = vld [vmem:[#allocation11 + $0x1f0] sm:$0xf]
    %v6809 = vld [vmem:[#allocation11 + $0x1f4] sm:$0xf]
    %v6810 = vld [vmem:[#allocation11 + $0x1f8] sm:$0xf]
    %v6811 = vld [vmem:[#allocation11 + $0x1fc] sm:$0xf]
    %v6812 = vld [vmem:[#allocation13] sm:$0x1]
    %v6814 = vlaneseq
    %v6815 = vshrl.u32 %v6814, 7
    %v6816 = vsub.s32 0, %v6815
    %v6817 = vrot.slane %v6812, %v6816
    %v6947 = vunpack.c.l.b16 %v6684
    %v6948 = vunpack.c.l.b16 %v6685
    %v6949 = vunpack.c.l.b16 %v6686
    %v6950 = vunpack.c.l.b16 %v6687
    %v6951 = vunpack.c.l.b16 %v6688
    %v6952 = vunpack.c.l.b16 %v6689
    %v6953 = vunpack.c.l.b16 %v6690
    %v6954 = vunpack.c.l.b16 %v6691
    %v6955 = vunpack.c.l.b16 %v6692
    %v6956 = vunpack.c.l.b16 %v6693
    %v6957 = vunpack.c.l.b16 %v6694
    %v6958 = vunpack.c.l.b16 %v6695
    %v6959 = vunpack.c.l.b16 %v6696
    %v6960 = vunpack.c.l.b16 %v6697
    %v6961 = vunpack.c.l.b16 %v6698
    %v6962 = vunpack.c.l.b16 %v6699
    %v6963 = vunpack.c.l.b16 %v6700
    %v6964 = vunpack.c.l.b16 %v6701
    %v6965 = vunpack.c.l.b16 %v6702
    %v6966 = vunpack.c.l.b16 %v6703
    %v6967 = vunpack.c.l.b16 %v6704
    %v6968 = vunpack.c.l.b16 %v6705
    %v6969 = vunpack.c.l.b16 %v6706
    %v6970 = vunpack.c.l.b16 %v6707
    %v6971 = vunpack.c.l.b16 %v6708
    %v6972 = vunpack.c.l.b16 %v6709
    %v6973 = vunpack.c.l.b16 %v6710
    %v6974 = vunpack.c.l.b16 %v6711
    %v6975 = vunpack.c.l.b16 %v6712
    %v6976 = vunpack.c.l.b16 %v6713
    %v6977 = vunpack.c.l.b16 %v6714
    %v6978 = vunpack.c.l.b16 %v6715
    %v6979 = vunpack.c.l.b16 %v6716
    %v6980 = vunpack.c.l.b16 %v6717
    %v6981 = vunpack.c.l.b16 %v6718
    %v6982 = vunpack.c.l.b16 %v6719
    %v6983 = vunpack.c.l.b16 %v6720
    %v6984 = vunpack.c.l.b16 %v6721
    %v6985 = vunpack.c.l.b16 %v6722
    %v6986 = vunpack.c.l.b16 %v6723
    %v6987 = vunpack.c.l.b16 %v6724
    %v6988 = vunpack.c.l.b16 %v6725
    %v6989 = vunpack.c.l.b16 %v6726
    %v6990 = vunpack.c.l.b16 %v6727
    %v6991 = vunpack.c.l.b16 %v6728
    %v6992 = vunpack.c.l.b16 %v6729
    %v6993 = vunpack.c.l.b16 %v6730
    %v6994 = vunpack.c.l.b16 %v6731
    %v6995 = vunpack.c.l.b16 %v6732
    %v6996 = vunpack.c.l.b16 %v6733
    %v6997 = vunpack.c.l.b16 %v6734
    %v6998 = vunpack.c.l.b16 %v6735
    %v6999 = vunpack.c.l.b16 %v6736
    %v7000 = vunpack.c.l.b16 %v6737
    %v7001 = vunpack.c.l.b16 %v6738
    %v7002 = vunpack.c.l.b16 %v6739
    %v7003 = vunpack.c.l.b16 %v6740
    %v7004 = vunpack.c.l.b16 %v6741
    %v7005 = vunpack.c.l.b16 %v6742
    %v7006 = vunpack.c.l.b16 %v6743
    %v7007 = vunpack.c.l.b16 %v6744
    %v7008 = vunpack.c.l.b16 %v6745
    %v7009 = vunpack.c.l.b16 %v6746
    %v7010 = vunpack.c.l.b16 %v6747
    %v7011 = vunpack.c.l.b16 %v6748
    %v7012 = vunpack.c.l.b16 %v6749
    %v7013 = vunpack.c.l.b16 %v6750
    %v7014 = vunpack.c.l.b16 %v6751
    %v7015 = vunpack.c.l.b16 %v6752
    %v7016 = vunpack.c.l.b16 %v6753
    %v7017 = vunpack.c.l.b16 %v6754
    %v7018 = vunpack.c.l.b16 %v6755
    %v7019 = vunpack.c.l.b16 %v6756
    %v7020 = vunpack.c.l.b16 %v6757
    %v7021 = vunpack.c.l.b16 %v6758
    %v7022 = vunpack.c.l.b16 %v6759
    %v7023 = vunpack.c.l.b16 %v6760
    %v7024 = vunpack.c.l.b16 %v6761
    %v7025 = vunpack.c.l.b16 %v6762
    %v7026 = vunpack.c.l.b16 %v6763
    %v7027 = vunpack.c.l.b16 %v6764
    %v7028 = vunpack.c.l.b16 %v6765
    %v7029 = vunpack.c.l.b16 %v6766
    %v7030 = vunpack.c.l.b16 %v6767
    %v7031 = vunpack.c.l.b16 %v6768
    %v7032 = vunpack.c.l.b16 %v6769
    %v7033 = vunpack.c.l.b16 %v6770
    %v7034 = vunpack.c.l.b16 %v6771
    %v7035 = vunpack.c.l.b16 %v6772
    %v7036 = vunpack.c.l.b16 %v6773
    %v7037 = vunpack.c.l.b16 %v6774
    %v7038 = vunpack.c.l.b16 %v6775
    %v7039 = vunpack.c.l.b16 %v6776
    %v7040 = vunpack.c.l.b16 %v6777
    %v7041 = vunpack.c.l.b16 %v6778
    %v7042 = vunpack.c.l.b16 %v6779
    %v7043 = vunpack.c.l.b16 %v6780
    %v7044 = vunpack.c.l.b16 %v6781
    %v7045 = vunpack.c.l.b16 %v6782
    %v7046 = vunpack.c.l.b16 %v6783
    %v7047 = vunpack.c.l.b16 %v6784
    %v7048 = vunpack.c.l.b16 %v6785
    %v7049 = vunpack.c.l.b16 %v6786
    %v7050 = vunpack.c.l.b16 %v6787
    %v7051 = vunpack.c.l.b16 %v6788
    %v7052 = vunpack.c.l.b16 %v6789
    %v7053 = vunpack.c.l.b16 %v6790
    %v7054 = vunpack.c.l.b16 %v6791
    %v7055 = vunpack.c.l.b16 %v6792
    %v7056 = vunpack.c.l.b16 %v6793
    %v7057 = vunpack.c.l.b16 %v6794
    %v7058 = vunpack.c.l.b16 %v6795
    %v7059 = vunpack.c.l.b16 %v6796
    %v7060 = vunpack.c.l.b16 %v6797
    %v7061 = vunpack.c.l.b16 %v6798
    %v7062 = vunpack.c.l.b16 %v6799
    %v7063 = vunpack.c.l.b16 %v6800
    %v7064 = vunpack.c.l.b16 %v6801
    %v7065 = vunpack.c.l.b16 %v6802
    %v7066 = vunpack.c.l.b16 %v6803
    %v7067 = vunpack.c.l.b16 %v6804
    %v7068 = vunpack.c.l.b16 %v6805
    %v7069 = vunpack.c.l.b16 %v6806
    %v7070 = vunpack.c.l.b16 %v6807
    %v7071 = vunpack.c.l.b16 %v6808
    %v7072 = vunpack.c.l.b16 %v6809
    %v7073 = vunpack.c.l.b16 %v6810
    %v7074 = vunpack.c.l.b16 %v6811
    %v7075 = vpack.c.b16 %v6948, %v6947
    %v7076 = vpack.c.b16 %v6950, %v6949
    %v7077 = vpack.c.b16 %v6952, %v6951
    %v7078 = vpack.c.b16 %v6954, %v6953
    %v7079 = vpack.c.b16 %v6956, %v6955
    %v7080 = vpack.c.b16 %v6958, %v6957
    %v7081 = vpack.c.b16 %v6960, %v6959
    %v7082 = vpack.c.b16 %v6962, %v6961
    %v7083 = vpack.c.b16 %v6964, %v6963
    %v7084 = vpack.c.b16 %v6966, %v6965
    %v7085 = vpack.c.b16 %v6968, %v6967
    %v7086 = vpack.c.b16 %v6970, %v6969
    %v7087 = vpack.c.b16 %v6972, %v6971
    %v7088 = vpack.c.b16 %v6974, %v6973
    %v7089 = vpack.c.b16 %v6976, %v6975
    %v7090 = vpack.c.b16 %v6978, %v6977
    %v7091 = vpack.c.b16 %v6980, %v6979
    %v7092 = vpack.c.b16 %v6982, %v6981
    %v7093 = vpack.c.b16 %v6984, %v6983
    %v7094 = vpack.c.b16 %v6986, %v6985
    %v7095 = vpack.c.b16 %v6988, %v6987
    %v7096 = vpack.c.b16 %v6990, %v6989
    %v7097 = vpack.c.b16 %v6992, %v6991
    %v7098 = vpack.c.b16 %v6994, %v6993
    %v7099 = vpack.c.b16 %v6996, %v6995
    %v7100 = vpack.c.b16 %v6998, %v6997
    %v7101 = vpack.c.b16 %v7000, %v6999
    %v7102 = vpack.c.b16 %v7002, %v7001
    %v7103 = vpack.c.b16 %v7004, %v7003
    %v7104 = vpack.c.b16 %v7006, %v7005
    %v7105 = vpack.c.b16 %v7008, %v7007
    %v7106 = vpack.c.b16 %v7010, %v7009
    %v7107 = vpack.c.b16 %v7012, %v7011
    %v7108 = vpack.c.b16 %v7014, %v7013
    %v7109 = vpack.c.b16 %v7016, %v7015
    %v7110 = vpack.c.b16 %v7018, %v7017
    %v7111 = vpack.c.b16 %v7020, %v7019
    %v7112 = vpack.c.b16 %v7022, %v7021
    %v7113 = vpack.c.b16 %v7024, %v7023
    %v7114 = vpack.c.b16 %v7026, %v7025
    %v7115 = vpack.c.b16 %v7028, %v7027
    %v7116 = vpack.c.b16 %v7030, %v7029
    %v7117 = vpack.c.b16 %v7032, %v7031
    %v7118 = vpack.c.b16 %v7034, %v7033
    %v7119 = vpack.c.b16 %v7036, %v7035
    %v7120 = vpack.c.b16 %v7038, %v7037
    %v7121 = vpack.c.b16 %v7040, %v7039
    %v7122 = vpack.c.b16 %v7042, %v7041
    %v7123 = vpack.c.b16 %v7044, %v7043
    %v7124 = vpack.c.b16 %v7046, %v7045
    %v7125 = vpack.c.b16 %v7048, %v7047
    %v7126 = vpack.c.b16 %v7050, %v7049
    %v7127 = vpack.c.b16 %v7052, %v7051
    %v7128 = vpack.c.b16 %v7054, %v7053
    %v7129 = vpack.c.b16 %v7056, %v7055
    %v7130 = vpack.c.b16 %v7058, %v7057
    %v7131 = vpack.c.b16 %v7060, %v7059
    %v7132 = vpack.c.b16 %v7062, %v7061
    %v7133 = vpack.c.b16 %v7064, %v7063
    %v7134 = vpack.c.b16 %v7066, %v7065
    %v7135 = vpack.c.b16 %v7068, %v7067
    %v7136 = vpack.c.b16 %v7070, %v7069
    %v7137 = vpack.c.b16 %v7072, %v7071
    %v7138 = vpack.c.b16 %v7074, %v7073
    %7203 = vmatprep.subr.bf16.mxu0 0
    %7204 = vmatpush1.bf16.msra.mxu0 %v7075
    %7205 = vmatprep.subr.bf16.mxu0 0
    %7206 = vmatpush1.bf16.msra.mxu0 %v7076
    %7207 = vmatprep.subr.bf16.mxu0 0
    %7208 = vmatpush1.bf16.msra.mxu0 %v7077
    %7209 = vmatprep.subr.bf16.mxu0 0
    %7210 = vmatpush1.bf16.msra.mxu0 %v7078
    %7211 = vmatprep.subr.bf16.mxu0 0
    %7212 = vmatpush1.bf16.msra.mxu0 %v7079
    %7213 = vmatprep.subr.bf16.mxu0 0
    %7214 = vmatpush1.bf16.msra.mxu0 %v7080
    %7215 = vmatprep.subr.bf16.mxu0 0
    %7216 = vmatpush1.bf16.msra.mxu0 %v7081
    %7217 = vmatprep.subr.bf16.mxu0 0
    %7218 = vmatpush1.bf16.msra.mxu0 %v7082
    %7219 = vmatprep.subr.bf16.mxu0 0
    %7220 = vmatpush1.bf16.msra.mxu0 %v7083
    %7221 = vmatprep.subr.bf16.mxu0 0
    %7222 = vmatpush1.bf16.msra.mxu0 %v7084
    %7223 = vmatprep.subr.bf16.mxu0 0
    %7224 = vmatpush1.bf16.msra.mxu0 %v7085
    %7225 = vmatprep.subr.bf16.mxu0 0
    %7226 = vmatpush1.bf16.msra.mxu0 %v7086
    %7227 = vmatprep.subr.bf16.mxu0 0
    %7228 = vmatpush1.bf16.msra.mxu0 %v7087
    %7229 = vmatprep.subr.bf16.mxu0 0
    %7230 = vmatpush1.bf16.msra.mxu0 %v7088
    %7231 = vmatprep.subr.bf16.mxu0 0
    %7232 = vmatpush1.bf16.msra.mxu0 %v7089
    %7233 = vmatprep.subr.bf16.mxu0 0
    %7234 = vmatpush1.bf16.msra.mxu0 %v7090
    %7235 = vmatprep.mubr.bf16.mxu0 %v6677
    %7236 = vmatmul.mubr.bf16.gmra.mrb[0].mxu0 %v6676
    %v7237 = vpop.f32.mrb[0].mxu0
    %v7238 = vadd.f32 %v6817, %v7237
    %v7239 = vpop.f32.mrb[0].mxu0
    %v7240 = vpop.f32.mrb[0].mxu0
    %v7241 = vadd.f32 %v6817, %v7240
    %v7242 = vpop.f32.mrb[0].mxu0
    %7243 = vdwg.mxu0
    %7244 = vmatprep.subr.bf16.mxu0 0
    %7245 = vmatpush1.bf16.msra.mxu0 %v7091
    %7246 = vmatprep.subr.bf16.mxu0 0
    %7247 = vmatpush1.bf16.msra.mxu0 %v7092
    %7248 = vmatprep.subr.bf16.mxu0 0
    %7249 = vmatpush1.bf16.msra.mxu0 %v7093
    %7250 = vmatprep.subr.bf16.mxu0 0
    %7251 = vmatpush1.bf16.msra.mxu0 %v7094
    %7252 = vmatprep.subr.bf16.mxu0 0
    %7253 = vmatpush1.bf16.msra.mxu0 %v7095
    %7254 = vmatprep.subr.bf16.mxu0 0
    %7255 = vmatpush1.bf16.msra.mxu0 %v7096
    %7256 = vmatprep.subr.bf16.mxu0 0
    %7257 = vmatpush1.bf16.msra.mxu0 %v7097
    %7258 = vmatprep.subr.bf16.mxu0 0
    %7259 = vmatpush1.bf16.msra.mxu0 %v7098
    %7260 = vmatprep.subr.bf16.mxu0 0
    %7261 = vmatpush1.bf16.msra.mxu0 %v7099
    %7262 = vmatprep.subr.bf16.mxu0 0
    %7263 = vmatpush1.bf16.msra.mxu0 %v7100
    %7264 = vmatprep.subr.bf16.mxu0 0
    %7265 = vmatpush1.bf16.msra.mxu0 %v7101
    %7266 = vmatprep.subr.bf16.mxu0 0
    %7267 = vmatpush1.bf16.msra.mxu0 %v7102
    %7268 = vmatprep.subr.bf16.mxu0 0
    %7269 = vmatpush1.bf16.msra.mxu0 %v7103
    %7270 = vmatprep.subr.bf16.mxu0 0
    %7271 = vmatpush1.bf16.msra.mxu0 %v7104
    %7272 = vmatprep.subr.bf16.mxu0 0
    %7273 = vmatpush1.bf16.msra.mxu0 %v7105
    %7274 = vmatprep.subr.bf16.mxu0 0
    %7275 = vmatpush1.bf16.msra.mxu0 %v7106
    %7276 = vmatprep.mubr.bf16.mxu0 %v6679
    %7277 = vmatmul.mubr.bf16.gmra.mrb[0].mxu0 %v6678
    %v7278 = vpop.f32.mrb[0].mxu0
    %v7279 = vadd.f32 %v7238, %v7278
    %v7280 = vpop.f32.mrb[0].mxu0
    %v7281 = vpop.f32.mrb[0].mxu0
    %v7282 = vadd.f32 %v7241, %v7281
    %v7283 = vpop.f32.mrb[0].mxu0
    %7284 = vdwg.mxu0
    %7285 = vmatprep.subr.bf16.mxu0 0
    %7286 = vmatpush1.bf16.msra.mxu0 %v7107
    %7287 = vmatprep.subr.bf16.mxu0 0
    %7288 = vmatpush1.bf16.msra.mxu0 %v7108
    %7289 = vmatprep.subr.bf16.mxu0 0
    %7290 = vmatpush1.bf16.msra.mxu0 %v7109
    %7291 = vmatprep.subr.bf16.mxu0 0
    %7292 = vmatpush1.bf16.msra.mxu0 %v7110
    %7293 = vmatprep.subr.bf16.mxu0 0
    %7294 = vmatpush1.bf16.msra.mxu0 %v7111
    %7295 = vmatprep.subr.bf16.mxu0 0
    %7296 = vmatpush1.bf16.msra.mxu0 %v7112
    %7297 = vmatprep.subr.bf16.mxu0 0
    %7298 = vmatpush1.bf16.msra.mxu0 %v7113
    %7299 = vmatprep.subr.bf16.mxu0 0
    %7300 = vmatpush1.bf16.msra.mxu0 %v7114
    %7301 = vmatprep.subr.bf16.mxu0 0
    %7302 = vmatpush1.bf16.msra.mxu0 %v7115
    %7303 = vmatprep.subr.bf16.mxu0 0
    %7304 = vmatpush1.bf16.msra.mxu0 %v7116
    %7305 = vmatprep.subr.bf16.mxu0 0
    %7306 = vmatpush1.bf16.msra.mxu0 %v7117
    %7307 = vmatprep.subr.bf16.mxu0 0
    %7308 = vmatpush1.bf16.msra.mxu0 %v7118
    %7309 = vmatprep.subr.bf16.mxu0 0
    %7310 = vmatpush1.bf16.msra.mxu0 %v7119
    %7311 = vmatprep.subr.bf16.mxu0 0
    %7312 = vmatpush1.bf16.msra.mxu0 %v7120
    %7313 = vmatprep.subr.bf16.mxu0 0
    %7314 = vmatpush1.bf16.msra.mxu0 %v7121
    %7315 = vmatprep.subr.bf16.mxu0 0
    %7316 = vmatpush1.bf16.msra.mxu0 %v7122
    %7317 = vmatprep.mubr.bf16.mxu0 %v6681
    %7318 = vmatmul.mubr.bf16.gmra.mrb[0].mxu0 %v6680
    %v7319 = vpop.f32.mrb[0].mxu0
    %v7320 = vadd.f32 %v7279, %v7319
    %v7321 = vpop.f32.mrb[0].mxu0
    %v7322 = vpop.f32.mrb[0].mxu0
    %v7323 = vadd.f32 %v7282, %v7322
    %v7324 = vpop.f32.mrb[0].mxu0
    %7325 = vdwg.mxu0
    %7326 = vmatprep.subr.bf16.mxu0 0
    %7327 = vmatpush1.bf16.msra.mxu0 %v7123
    %7328 = vmatprep.subr.bf16.mxu0 0
    %7329 = vmatpush1.bf16.msra.mxu0 %v7124
    %7330 = vmatprep.subr.bf16.mxu0 0
    %7331 = vmatpush1.bf16.msra.mxu0 %v7125
    %7332 = vmatprep.subr.bf16.mxu0 0
    %7333 = vmatpush1.bf16.msra.mxu0 %v7126
    %7334 = vmatprep.subr.bf16.mxu0 0
    %7335 = vmatpush1.bf16.msra.mxu0 %v7127
    %7336 = vmatprep.subr.bf16.mxu0 0
    %7337 = vmatpush1.bf16.msra.mxu0 %v7128
    %7338 = vmatprep.subr.bf16.mxu0 0
    %7339 = vmatpush1.bf16.msra.mxu0 %v7129
    %7340 = vmatprep.subr.bf16.mxu0 0
    %7341 = vmatpush1.bf16.msra.mxu0 %v7130
    %7342 = vmatprep.subr.bf16.mxu0 0
    %7343 = vmatpush1.bf16.msra.mxu0 %v7131
    %7344 = vmatprep.subr.bf16.mxu0 0
    %7345 = vmatpush1.bf16.msra.mxu0 %v7132
    %7346 = vmatprep.subr.bf16.mxu0 0
    %7347 = vmatpush1.bf16.msra.mxu0 %v7133
    %7348 = vmatprep.subr.bf16.mxu0 0
    %7349 = vmatpush1.bf16.msra.mxu0 %v7134
    %7350 = vmatprep.subr.bf16.mxu0 0
    %7351 = vmatpush1.bf16.msra.mxu0 %v7135
    %7352 = vmatprep.subr.bf16.mxu0 0
    %7353 = vmatpush1.bf16.msra.mxu0 %v7136
    %7354 = vmatprep.subr.bf16.mxu0 0
    %7355 = vmatpush1.bf16.msra.mxu0 %v7137
    %7356 = vmatprep.subr.bf16.mxu0 0
    %7357 = vmatpush1.bf16.msra.mxu0 %v7138
    %7358 = vmatprep.mubr.bf16.mxu0 %v6683
    %7359 = vmatmul.mubr.bf16.gmra.mrb[0].mxu0 %v6682
    %v7360 = vpop.f32.mrb[0].mxu0
    %v7361 = vadd.f32 %v7320, %v7360
    %v7362 = vpop.f32.mrb[0].mxu0
    %v7363 = vpop.f32.mrb[0].mxu0
    %v7364 = vadd.f32 %v7323, %v7363
    %v7365 = vpop.f32.mrb[0].mxu0
    %7366 = vdwg.mxu0
    %v7367 = vlaneseq
    %v7368 = vand.u32 %v7367, 127
    %vm7369 = vcmp.ge.s32.totalorder %v7368, 2
    %vm7370 = vcmp.lt.s32.totalorder %v7368, 4
    %vm7371 = vmand %vm7369, %vm7370
    %v7372 = vsel %vm7371, %v7361, -1e+30
    %v7373 = vsel %vm7371, %v7364, -1e+30
    %7374 = vmax.xlane.f32.xlu0 %v7372
    %v7375 = vpop.xlane.xlu0 %7374
    %7376 = vmax.xlane.f32.xlu0 %v7373
    %v7377 = vpop.xlane.xlu0 %7376
    %v7378 = vsub.f32 %v7372, %v7375
    %v7379 = vsub.f32 %v7373, %v7377
    %v7380 = vmul.f32 %v7378, 1.442695
    %v7381 = vpow.pop %v7380
    %v7382 = vmul.f32 %v7379, 1.442695
    %v7383 = vpow.pop %v7382
    %7384 = vadd.xlane.f32.xlu0 %v7381
    %v7385 = vpop.xlane.xlu0 %7384
    %7386 = vadd.xlane.f32.xlu0 %v7383
    %v7387 = vpop.xlane.xlu0 %7386
    %v7388 = vlog2.pop %v7385
    %v7389 = vmul.f32 %v7388, 0.6931472
    %v7390 = vlog2.pop %v7387
    %v7391 = vmul.f32 %v7390, 0.6931472
    %v7392 = vsub.f32 %v7378, %v7389
    %v7393 = vsub.f32 %v7379, %v7391
    %v7394 = vsel %vm7371, %v7392, 0.0
    %v7395 = vsel %vm7371, %v7393, 0.0
    %vm7396 = vcmp.ge.s32.totalorder %v7368, 4
    %vm7397 = vcmp.lt.s32.totalorder %v7368, 8
    %vm7398 = vmand %vm7396, %vm7397
    %v7399 = vsel %vm7398, %v7361, -1e+30
    %v7400 = vsel %vm7398, %v7364, -1e+30
    %7401 = vmax.xlane.f32.xlu0 %v7399
    %v7402 = vpop.xlane.xlu0 %7401
    %7403 = vmax.xlane.f32.xlu0 %v7400
    %v7404 = vpop.xlane.xlu0 %7403
    %v7405 = vsub.f32 %v7399, %v7402
    %v7406 = vsub.f32 %v7400, %v7404
    %v7407 = vmul.f32 %v7405, 1.442695
    %v7408 = vpow.pop %v7407
    %v7409 = vmul.f32 %v7406, 1.442695
    %v7410 = vpow.pop %v7409
    %7411 = vadd.xlane.f32.xlu0 %v7408
    %v7412 = vpop.xlane.xlu0 %7411
    %7413 = vadd.xlane.f32.xlu0 %v7410
    %v7414 = vpop.xlane.xlu0 %7413
    %v7415 = vlog2.pop %v7412
    %v7416 = vmul.f32 %v7415, 0.6931472
    %v7417 = vlog2.pop %v7414
    %v7418 = vmul.f32 %v7417, 0.6931472
    %v7419 = vsub.f32 %v7405, %v7416
    %v7420 = vsub.f32 %v7406, %v7418
    %v7421 = vsel %vm7398, %v7419, 0.0
    %v7422 = vsel %vm7398, %v7420, 0.0
    %v7423 = vadd.f32 %v7394, %v7421
    %v7424 = vadd.f32 %v7395, %v7422
    %v7425 = vpack.c.bf16 %v7424, %v7423
    %v7426 = vld [vmem:[#allocation14] sm:$0xff]
    %v7427 = vld [vmem:[#allocation14 + $0x8] sm:$0xff]
    %v7428 = vld [vmem:[#allocation14 + $0x10] sm:$0xff]
    %v7429 = vld [vmem:[#allocation14 + $0x18] sm:$0xff]
    %v7430 = vld [vmem:[#allocation14 + $0x20] sm:$0xff]
    %v7431 = vld [vmem:[#allocation14 + $0x28] sm:$0xff]
    %v7432 = vld [vmem:[#allocation14 + $0x30] sm:$0xff]
    %v7433 = vld [vmem:[#allocation14 + $0x38] sm:$0xff]
    %v7434 = vld [vmem:[#allocation14 + $0x40] sm:$0xff]
    %v7435 = vld [vmem:[#allocation14 + $0x48] sm:$0xff]
    %v7436 = vld [vmem:[#allocation14 + $0x50] sm:$0xff]
    %v7437 = vld [vmem:[#allocation14 + $0x58] sm:$0xff]
    %v7438 = vld [vmem:[#allocation14 + $0x60] sm:$0xff]
    %v7439 = vld [vmem:[#allocation14 + $0x68] sm:$0xff]
    %v7440 = vld [vmem:[#allocation14 + $0x70] sm:$0xff]
    %v7441 = vld [vmem:[#allocation14 + $0x78] sm:$0xff]
    %v7442 = vld [vmem:[#allocation14 + $0x80] sm:$0xff]
    %v7443 = vld [vmem:[#allocation14 + $0x88] sm:$0xff]
    %v7444 = vld [vmem:[#allocation14 + $0x90] sm:$0xff]
    %v7445 = vld [vmem:[#allocation14 + $0x98] sm:$0xff]
    %v7446 = vld [vmem:[#allocation14 + $0xa0] sm:$0xff]
    %v7447 = vld [vmem:[#allocation14 + $0xa8] sm:$0xff]
    %v7448 = vld [vmem:[#allocation14 + $0xb0] sm:$0xff]
    %v7449 = vld [vmem:[#allocation14 + $0xb8] sm:$0xff]
    %v7450 = vld [vmem:[#allocation14 + $0xc0] sm:$0xff]
    %v7451 = vld [vmem:[#allocation14 + $0xc8] sm:$0xff]
    %v7452 = vld [vmem:[#allocation14 + $0xd0] sm:$0xff]
    %v7453 = vld [vmem:[#allocation14 + $0xd8] sm:$0xff]
    %v7454 = vld [vmem:[#allocation14 + $0xe0] sm:$0xff]
    %v7455 = vld [vmem:[#allocation14 + $0xe8] sm:$0xff]
    %v7456 = vld [vmem:[#allocation14 + $0xf0] sm:$0xff]
    %v7457 = vld [vmem:[#allocation14 + $0xf8] sm:$0xff]
    %v7490 = vunpack.c.l.b16 %v7426
    %v7491 = vunpack.c.h.b16 %v7426
    %v7492 = vunpack.c.l.b16 %v7427
    %v7493 = vunpack.c.h.b16 %v7427
    %v7494 = vunpack.c.l.b16 %v7428
    %v7495 = vunpack.c.h.b16 %v7428
    %v7496 = vunpack.c.l.b16 %v7429
    %v7497 = vunpack.c.h.b16 %v7429
    %v7498 = vunpack.c.l.b16 %v7430
    %v7499 = vunpack.c.h.b16 %v7430
    %v7500 = vunpack.c.l.b16 %v7431
    %v7501 = vunpack.c.h.b16 %v7431
    %v7502 = vunpack.c.l.b16 %v7432
    %v7503 = vunpack.c.h.b16 %v7432
    %v7504 = vunpack.c.l.b16 %v7433
    %v7505 = vunpack.c.h.b16 %v7433
    %v7506 = vunpack.c.l.b16 %v7434
    %v7507 = vunpack.c.h.b16 %v7434
    %v7508 = vunpack.c.l.b16 %v7435
    %v7509 = vunpack.c.h.b16 %v7435
    %v7510 = vunpack.c.l.b16 %v7436
    %v7511 = vunpack.c.h.b16 %v7436
    %v7512 = vunpack.c.l.b16 %v7437
    %v7513 = vunpack.c.h.b16 %v7437
    %v7514 = vunpack.c.l.b16 %v7438
    %v7515 = vunpack.c.h.b16 %v7438
    %v7516 = vunpack.c.l.b16 %v7439
    %v7517 = vunpack.c.h.b16 %v7439
    %v7518 = vunpack.c.l.b16 %v7440
    %v7519 = vunpack.c.h.b16 %v7440
    %v7520 = vunpack.c.l.b16 %v7441
    %v7521 = vunpack.c.h.b16 %v7441
    %v7522 = vunpack.c.l.b16 %v7442
    %v7523 = vunpack.c.h.b16 %v7442
    %v7524 = vunpack.c.l.b16 %v7443
    %v7525 = vunpack.c.h.b16 %v7443
    %v7526 = vunpack.c.l.b16 %v7444
    %v7527 = vunpack.c.h.b16 %v7444
    %v7528 = vunpack.c.l.b16 %v7445
    %v7529 = vunpack.c.h.b16 %v7445
    %v7530 = vunpack.c.l.b16 %v7446
    %v7531 = vunpack.c.h.b16 %v7446
    %v7532 = vunpack.c.l.b16 %v7447
    %v7533 = vunpack.c.h.b16 %v7447
    %v7534 = vunpack.c.l.b16 %v7448
    %v7535 = vunpack.c.h.b16 %v7448
    %v7536 = vunpack.c.l.b16 %v7449
    %v7537 = vunpack.c.h.b16 %v7449
    %v7538 = vunpack.c.l.b16 %v7450
    %v7539 = vunpack.c.h.b16 %v7450
    %v7540 = vunpack.c.l.b16 %v7451
    %v7541 = vunpack.c.h.b16 %v7451
    %v7542 = vunpack.c.l.b16 %v7452
    %v7543 = vunpack.c.h.b16 %v7452
    %v7544 = vunpack.c.l.b16 %v7453
    %v7545 = vunpack.c.h.b16 %v7453
    %v7546 = vunpack.c.l.b16 %v7454
    %v7547 = vunpack.c.h.b16 %v7454
    %v7548 = vunpack.c.l.b16 %v7455
    %v7549 = vunpack.c.h.b16 %v7455
    %v7550 = vunpack.c.l.b16 %v7456
    %v7551 = vunpack.c.h.b16 %v7456
    %v7552 = vunpack.c.l.b16 %v7457
    %v7553 = vunpack.c.h.b16 %v7457
    %v7554 = vpack.c.b16 %v7494, %v7490
    %v7555 = vpack.c.b16 %v7495, %v7491
    %v7556 = vpack.c.b16 %v7496, %v7492
    %v7557 = vpack.c.b16 %v7497, %v7493
    %v7558 = vpack.c.b16 %v7502, %v7498
    %v7559 = vpack.c.b16 %v7503, %v7499
    %v7560 = vpack.c.b16 %v7504, %v7500
    %v7561 = vpack.c.b16 %v7505, %v7501
    %v7562 = vpack.c.b16 %v7510, %v7506
    %v7563 = vpack.c.b16 %v7511, %v7507
    %v7564 = vpack.c.b16 %v7512, %v7508
    %v7565 = vpack.c.b16 %v7513, %v7509
    %v7566 = vpack.c.b16 %v7518, %v7514
    %v7567 = vpack.c.b16 %v7519, %v7515
    %v7568 = vpack.c.b16 %v7520, %v7516
    %v7569 = vpack.c.b16 %v7521, %v7517
    %v7570 = vpack.c.b16 %v7526, %v7522
    %v7571 = vpack.c.b16 %v7527, %v7523
    %v7572 = vpack.c.b16 %v7528, %v7524
    %v7573 = vpack.c.b16 %v7529, %v7525
    %v7574 = vpack.c.b16 %v7534, %v7530
    %v7575 = vpack.c.b16 %v7535, %v7531
    %v7576 = vpack.c.b16 %v7536, %v7532
    %v7577 = vpack.c.b16 %v7537, %v7533
    %v7578 = vpack.c.b16 %v7542, %v7538
    %v7579 = vpack.c.b16 %v7543, %v7539
    %v7580 = vpack.c.b16 %v7544, %v7540
    %v7581 = vpack.c.b16 %v7545, %v7541
    %v7582 = vpack.c.b16 %v7550, %v7546
    %v7583 = vpack.c.b16 %v7551, %v7547
    %v7584 = vpack.c.b16 %v7552, %v7548
    %v7585 = vpack.c.b16 %v7553, %v7549
    %7618 = vmatprep.subr.bf16.mxu0 %v7555
    %7619 = vmatpush1.bf16.msra.mxu0 %v7554
    %7620 = vmatprep.subr.bf16.mxu0 %v7559
    %7621 = vmatpush1.bf16.msra.mxu0 %v7558
    %7622 = vmatprep.subr.bf16.mxu0 %v7563
    %7623 = vmatpush1.bf16.msra.mxu0 %v7562
    %7624 = vmatprep.subr.bf16.mxu0 %v7567
    %7625 = vmatpush1.bf16.msra.mxu0 %v7566
    %7626 = vmatprep.subr.bf16.mxu0 %v7571
    %7627 = vmatpush1.bf16.msra.mxu0 %v7570
    %7628 = vmatprep.subr.bf16.mxu0 %v7575
    %7629 = vmatpush1.bf16.msra.mxu0 %v7574
    %7630 = vmatprep.subr.bf16.mxu0 %v7579
    %7631 = vmatpush1.bf16.msra.mxu0 %v7578
    %7632 = vmatprep.subr.bf16.mxu0 %v7583
    %7633 = vmatpush1.bf16.msra.mxu0 %v7582
    %7634 = vmatprep.subr.bf16.mxu0 0
    %7635 = vmatpush1.bf16.msra.mxu0 0
    %7636 = vmatprep.subr.bf16.mxu0 0
    %7637 = vmatpush1.bf16.msra.mxu0 0
    %7638 = vmatprep.subr.bf16.mxu0 0
    %7639 = vmatpush1.bf16.msra.mxu0 0
    %7640 = vmatprep.subr.bf16.mxu0 0
    %7641 = vmatpush1.bf16.msra.mxu0 0
    %7642 = vmatprep.subr.bf16.mxu0 0
    %7643 = vmatpush1.bf16.msra.mxu0 0
    %7644 = vmatprep.subr.bf16.mxu0 0
    %7645 = vmatpush1.bf16.msra.mxu0 0
    %7646 = vmatprep.subr.bf16.mxu0 0
    %7647 = vmatpush1.bf16.msra.mxu0 0
    %7648 = vmatprep.subr.bf16.mxu0 0
    %7649 = vmatpush1.bf16.msra.mxu0 0
    %7650 = vmatprep.mubr.bf16.mxu0 0
    %7651 = vmatmul.mubr.bf16.gmra.mrb[0].mxu0 %v7425
    %v7652 = vpop.f32.mrb[0].mxu0
    %v7653 = vadd.f32 0.0, %v7652
    %v7654 = vpop.f32.mrb[0].mxu0
    %v7655 = vadd.f32 0.0, %v7654
    %v7656 = vpop.f32.mrb[0].mxu0
    %v7657 = vadd.f32 0.0, %v7656
    %v7658 = vpop.f32.mrb[0].mxu0
    %v7659 = vadd.f32 0.0, %v7658
    %7660 = vdwg.mxu0
    %7661 = vmatprep.subr.bf16.mxu0 %v7557
    %7662 = vmatpush1.bf16.msra.mxu0 %v7556
    %7663 = vmatprep.subr.bf16.mxu0 %v7561
    %7664 = vmatpush1.bf16.msra.mxu0 %v7560
    %7665 = vmatprep.subr.bf16.mxu0 %v7565
    %7666 = vmatpush1.bf16.msra.mxu0 %v7564
    %7667 = vmatprep.subr.bf16.mxu0 %v7569
    %7668 = vmatpush1.bf16.msra.mxu0 %v7568
    %7669 = vmatprep.subr.bf16.mxu0 %v7573
    %7670 = vmatpush1.bf16.msra.mxu0 %v7572
    %7671 = vmatprep.subr.bf16.mxu0 %v7577
    %7672 = vmatpush1.bf16.msra.mxu0 %v7576
    %7673 = vmatprep.subr.bf16.mxu0 %v7581
    %7674 = vmatpush1.bf16.msra.mxu0 %v7580
    %7675 = vmatprep.subr.bf16.mxu0 %v7585
    %7676 = vmatpush1.bf16.msra.mxu0 %v7584
    %7677 = vmatprep.subr.bf16.mxu0 0
    %7678 = vmatpush1.bf16.msra.mxu0 0
    %7679 = vmatprep.subr.bf16.mxu0 0
    %7680 = vmatpush1.bf16.msra.mxu0 0
    %7681 = vmatprep.subr.bf16.mxu0 0
    %7682 = vmatpush1.bf16.msra.mxu0 0
    %7683 = vmatprep.subr.bf16.mxu0 0
    %7684 = vmatpush1.bf16.msra.mxu0 0
    %7685 = vmatprep.subr.bf16.mxu0 0
    %7686 = vmatpush1.bf16.msra.mxu0 0
    %7687 = vmatprep.subr.bf16.mxu0 0
    %7688 = vmatpush1.bf16.msra.mxu0 0
    %7689 = vmatprep.subr.bf16.mxu0 0
    %7690 = vmatpush1.bf16.msra.mxu0 0
    %7691 = vmatprep.subr.bf16.mxu0 0
    %7692 = vmatpush1.bf16.msra.mxu0 0
    %7693 = vmatprep.mubr.bf16.mxu0 0
    %7694 = vmatmul.mubr.bf16.gmra.mrb[0].mxu0 %v7425
    %v7695 = vpop.f32.mrb[0].mxu0
    %v7696 = vadd.f32 0.0, %v7695
    %v7697 = vpop.f32.mrb[0].mxu0
    %v7698 = vadd.f32 0.0, %v7697
    %v7699 = vpop.f32.mrb[0].mxu0
    %v7700 = vadd.f32 0.0, %v7699
    %v7701 = vpop.f32.mrb[0].mxu0
    %v7702 = vadd.f32 0.0, %v7701
    %7703 = vdwg.mxu0
    %v7704 = vadd.f32 %v6523, %v7653
    %v7705 = vadd.f32 %v6525, %v7655
    %v7706 = vadd.f32 %v6652, %v7696
    %v7707 = vadd.f32 %v6654, %v7698
    %v7708 = vadd.f32 %v6527, %v7657
    %v7709 = vadd.f32 %v6529, %v7659
    %v7710 = vadd.f32 %v6656, %v7700
    %v7711 = vadd.f32 %v6658, %v7702
    %v7712 = vmax.f32 %v7704, 0.0
    %v7713 = vmax.f32 %v7705, 0.0
    %v7714 = vmax.f32 %v7706, 0.0
    %v7715 = vmax.f32 %v7707, 0.0
    %v7716 = vmax.f32 %v7708, 0.0
    %v7717 = vmax.f32 %v7709, 0.0
    %v7718 = vmax.f32 %v7710, 0.0
    %v7719 = vmax.f32 %v7711, 0.0
    %v7720 = vpack.c.bf16 %v7716, %v7712
    %v7721 = vpack.c.bf16 %v7717, %v7713
    %v7722 = vpack.c.bf16 %v7718, %v7714
    %v7723 = vpack.c.bf16 %v7719, %v7715
    %v7724 = vld [vmem:[#allocation16] sm:$0xf]
    %v7725 = vld [vmem:[#allocation16 + $0x4] sm:$0xf]
    %v7726 = vld [vmem:[#allocation16 + $0x8] sm:$0xf]
    %v7727 = vld [vmem:[#allocation16 + $0xc] sm:$0xf]
    %v7728 = vld [vmem:[#allocation16 + $0x10] sm:$0xf]
    %v7729 = vld [vmem:[#allocation16 + $0x14] sm:$0xf]
    %v7730 = vld [vmem:[#allocation16 + $0x18] sm:$0xf]
    %v7731 = vld [vmem:[#allocation16 + $0x1c] sm:$0xf]
    %v7732 = vld [vmem:[#allocation16 + $0x20] sm:$0xf]
    %v7733 = vld [vmem:[#allocation16 + $0x24] sm:$0xf]
    %v7734 = vld [vmem:[#allocation16 + $0x28] sm:$0xf]
    %v7735 = vld [vmem:[#allocation16 + $0x2c] sm:$0xf]
    %v7736 = vld [vmem:[#allocation16 + $0x30] sm:$0xf]
    %v7737 = vld [vmem:[#allocation16 + $0x34] sm:$0xf]
    %v7738 = vld [vmem:[#allocation16 + $0x38] sm:$0xf]
    %v7739 = vld [vmem:[#allocation16 + $0x3c] sm:$0xf]
    %v7740 = vld [vmem:[#allocation16 + $0x40] sm:$0xf]
    %v7741 = vld [vmem:[#allocation16 + $0x44] sm:$0xf]
    %v7742 = vld [vmem:[#allocation16 + $0x48] sm:$0xf]
    %v7743 = vld [vmem:[#allocation16 + $0x4c] sm:$0xf]
    %v7744 = vld [vmem:[#allocation16 + $0x50] sm:$0xf]
    %v7745 = vld [vmem:[#allocation16 + $0x54] sm:$0xf]
    %v7746 = vld [vmem:[#allocation16 + $0x58] sm:$0xf]
    %v7747 = vld [vmem:[#allocation16 + $0x5c] sm:$0xf]
    %v7748 = vld [vmem:[#allocation16 + $0x60] sm:$0xf]
    %v7749 = vld [vmem:[#allocation16 + $0x64] sm:$0xf]
    %v7750 = vld [vmem:[#allocation16 + $0x68] sm:$0xf]
    %v7751 = vld [vmem:[#allocation16 + $0x6c] sm:$0xf]
    %v7752 = vld [vmem:[#allocation16 + $0x70] sm:$0xf]
    %v7753 = vld [vmem:[#allocation16 + $0x74] sm:$0xf]
    %v7754 = vld [vmem:[#allocation16 + $0x78] sm:$0xf]
    %v7755 = vld [vmem:[#allocation16 + $0x7c] sm:$0xf]
    %v7756 = vld [vmem:[#allocation16 + $0x80] sm:$0xf]
    %v7757 = vld [vmem:[#allocation16 + $0x84] sm:$0xf]
    %v7758 = vld [vmem:[#allocation16 + $0x88] sm:$0xf]
    %v7759 = vld [vmem:[#allocation16 + $0x8c] sm:$0xf]
    %v7760 = vld [vmem:[#allocation16 + $0x90] sm:$0xf]
    %v7761 = vld [vmem:[#allocation16 + $0x94] sm:$0xf]
    %v7762 = vld [vmem:[#allocation16 + $0x98] sm:$0xf]
    %v7763 = vld [vmem:[#allocation16 + $0x9c] sm:$0xf]
    %v7764 = vld [vmem:[#allocation16 + $0xa0] sm:$0xf]
    %v7765 = vld [vmem:[#allocation16 + $0xa4] sm:$0xf]
    %v7766 = vld [vmem:[#allocation16 + $0xa8] sm:$0xf]
    %v7767 = vld [vmem:[#allocation16 + $0xac] sm:$0xf]
    %v7768 = vld [vmem:[#allocation16 + $0xb0] sm:$0xf]
    %v7769 = vld [vmem:[#allocation16 + $0xb4] sm:$0xf]
    %v7770 = vld [vmem:[#allocation16 + $0xb8] sm:$0xf]
    %v7771 = vld [vmem:[#allocation16 + $0xbc] sm:$0xf]
    %v7772 = vld [vmem:[#allocation16 + $0xc0] sm:$0xf]
    %v7773 = vld [vmem:[#allocation16 + $0xc4] sm:$0xf]
    %v7774 = vld [vmem:[#allocation16 + $0xc8] sm:$0xf]
    %v7775 = vld [vmem:[#allocation16 + $0xcc] sm:$0xf]
    %v7776 = vld [vmem:[#allocation16 + $0xd0] sm:$0xf]
    %v7777 = vld [vmem:[#allocation16 + $0xd4] sm:$0xf]
    %v7778 = vld [vmem:[#allocation16 + $0xd8] sm:$0xf]
    %v7779 = vld [vmem:[#allocation16 + $0xdc] sm:$0xf]
    %v7780 = vld [vmem:[#allocation16 + $0xe0] sm:$0xf]
    %v7781 = vld [vmem:[#allocation16 + $0xe4] sm:$0xf]
    %v7782 = vld [vmem:[#allocation16 + $0xe8] sm:$0xf]
    %v7783 = vld [vmem:[#allocation16 + $0xec] sm:$0xf]
    %v7784 = vld [vmem:[#allocation16 + $0xf0] sm:$0xf]
    %v7785 = vld [vmem:[#allocation16 + $0xf4] sm:$0xf]
    %v7786 = vld [vmem:[#allocation16 + $0xf8] sm:$0xf]
    %v7787 = vld [vmem:[#allocation16 + $0xfc] sm:$0xf]
    %v7788 = vld [vmem:[#allocation17] sm:$0x1]
    %v7790 = vlaneseq
    %v7791 = vshrl.u32 %v7790, 7
    %v7792 = vsub.s32 0, %v7791
    %v7793 = vrot.slane %v7788, %v7792
    %v7859 = vunpack.c.l.b16 %v7724
    %v7860 = vunpack.c.l.b16 %v7725
    %v7861 = vunpack.c.l.b16 %v7726
    %v7862 = vunpack.c.l.b16 %v7727
    %v7863 = vunpack.c.l.b16 %v7728
    %v7864 = vunpack.c.l.b16 %v7729
    %v7865 = vunpack.c.l.b16 %v7730
    %v7866 = vunpack.c.l.b16 %v7731
    %v7867 = vunpack.c.l.b16 %v7732
    %v7868 = vunpack.c.l.b16 %v7733
    %v7869 = vunpack.c.l.b16 %v7734
    %v7870 = vunpack.c.l.b16 %v7735
    %v7871 = vunpack.c.l.b16 %v7736
    %v7872 = vunpack.c.l.b16 %v7737
    %v7873 = vunpack.c.l.b16 %v7738
    %v7874 = vunpack.c.l.b16 %v7739
    %v7875 = vunpack.c.l.b16 %v7740
    %v7876 = vunpack.c.l.b16 %v7741
    %v7877 = vunpack.c.l.b16 %v7742
    %v7878 = vunpack.c.l.b16 %v7743
    %v7879 = vunpack.c.l.b16 %v7744
    %v7880 = vunpack.c.l.b16 %v7745
    %v7881 = vunpack.c.l.b16 %v7746
    %v7882 = vunpack.c.l.b16 %v7747
    %v7883 = vunpack.c.l.b16 %v7748
    %v7884 = vunpack.c.l.b16 %v7749
    %v7885 = vunpack.c.l.b16 %v7750
    %v7886 = vunpack.c.l.b16 %v7751
    %v7887 = vunpack.c.l.b16 %v7752
    %v7888 = vunpack.c.l.b16 %v7753
    %v7889 = vunpack.c.l.b16 %v7754
    %v7890 = vunpack.c.l.b16 %v7755
    %v7891 = vunpack.c.l.b16 %v7756
    %v7892 = vunpack.c.l.b16 %v7757
    %v7893 = vunpack.c.l.b16 %v7758
    %v7894 = vunpack.c.l.b16 %v7759
    %v7895 = vunpack.c.l.b16 %v7760
    %v7896 = vunpack.c.l.b16 %v7761
    %v7897 = vunpack.c.l.b16 %v7762
    %v7898 = vunpack.c.l.b16 %v7763
    %v7899 = vunpack.c.l.b16 %v7764
    %v7900 = vunpack.c.l.b16 %v7765
    %v7901 = vunpack.c.l.b16 %v7766
    %v7902 = vunpack.c.l.b16 %v7767
    %v7903 = vunpack.c.l.b16 %v7768
    %v7904 = vunpack.c.l.b16 %v7769
    %v7905 = vunpack.c.l.b16 %v7770
    %v7906 = vunpack.c.l.b16 %v7771
    %v7907 = vunpack.c.l.b16 %v7772
    %v7908 = vunpack.c.l.b16 %v7773
    %v7909 = vunpack.c.l.b16 %v7774
    %v7910 = vunpack.c.l.b16 %v7775
    %v7911 = vunpack.c.l.b16 %v7776
    %v7912 = vunpack.c.l.b16 %v7777
    %v7913 = vunpack.c.l.b16 %v7778
    %v7914 = vunpack.c.l.b16 %v7779
    %v7915 = vunpack.c.l.b16 %v7780
    %v7916 = vunpack.c.l.b16 %v7781
    %v7917 = vunpack.c.l.b16 %v7782
    %v7918 = vunpack.c.l.b16 %v7783
    %v7919 = vunpack.c.l.b16 %v7784
    %v7920 = vunpack.c.l.b16 %v7785
    %v7921 = vunpack.c.l.b16 %v7786
    %v7922 = vunpack.c.l.b16 %v7787
    %v7923 = vpack.c.b16 %v7860, %v7859
    %v7924 = vpack.c.b16 %v7862, %v7861
    %v7925 = vpack.c.b16 %v7864, %v7863
    %v7926 = vpack.c.b16 %v7866, %v7865
    %v7927 = vpack.c.b16 %v7868, %v7867
    %v7928 = vpack.c.b16 %v7870, %v7869
    %v7929 = vpack.c.b16 %v7872, %v7871
    %v7930 = vpack.c.b16 %v7874, %v7873
    %v7931 = vpack.c.b16 %v7876, %v7875
    %v7932 = vpack.c.b16 %v7878, %v7877
    %v7933 = vpack.c.b16 %v7880, %v7879
    %v7934 = vpack.c.b16 %v7882, %v7881
    %v7935 = vpack.c.b16 %v7884, %v7883
    %v7936 = vpack.c.b16 %v7886, %v7885
    %v7937 = vpack.c.b16 %v7888, %v7887
    %v7938 = vpack.c.b16 %v7890, %v7889
    %v7939 = vpack.c.b16 %v7892, %v7891
    %v7940 = vpack.c.b16 %v7894, %v7893
    %v7941 = vpack.c.b16 %v7896, %v7895
    %v7942 = vpack.c.b16 %v7898, %v7897
    %v7943 = vpack.c.b16 %v7900, %v7899
    %v7944 = vpack.c.b16 %v7902, %v7901
    %v7945 = vpack.c.b16 %v7904, %v7903
    %v7946 = vpack.c.b16 %v7906, %v7905
    %v7947 = vpack.c.b16 %v7908, %v7907
    %v7948 = vpack.c.b16 %v7910, %v7909
    %v7949 = vpack.c.b16 %v7912, %v7911
    %v7950 = vpack.c.b16 %v7914, %v7913
    %v7951 = vpack.c.b16 %v7916, %v7915
    %v7952 = vpack.c.b16 %v7918, %v7917
    %v7953 = vpack.c.b16 %v7920, %v7919
    %v7954 = vpack.c.b16 %v7922, %v7921
    %7987 = vmatprep.subr.bf16.mxu0 0
    %7988 = vmatpush1.bf16.msra.mxu0 %v7923
    %7989 = vmatprep.subr.bf16.mxu0 0
    %7990 = vmatpush1.bf16.msra.mxu0 %v7924
    %7991 = vmatprep.subr.bf16.mxu0 0
    %7992 = vmatpush1.bf16.msra.mxu0 %v7925
    %7993 = vmatprep.subr.bf16.mxu0 0
    %7994 = vmatpush1.bf16.msra.mxu0 %v7926
    %7995 = vmatprep.subr.bf16.mxu0 0
    %7996 = vmatpush1.bf16.msra.mxu0 %v7927
    %7997 = vmatprep.subr.bf16.mxu0 0
    %7998 = vmatpush1.bf16.msra.mxu0 %v7928
    %7999 = vmatprep.subr.bf16.mxu0 0
    %8000 = vmatpush1.bf16.msra.mxu0 %v7929
    %8001 = vmatprep.subr.bf16.mxu0 0
    %8002 = vmatpush1.bf16.msra.mxu0 %v7930
    %8003 = vmatprep.subr.bf16.mxu0 0
    %8004 = vmatpush1.bf16.msra.mxu0 %v7931
    %8005 = vmatprep.subr.bf16.mxu0 0
    %8006 = vmatpush1.bf16.msra.mxu0 %v7932
    %8007 = vmatprep.subr.bf16.mxu0 0
    %8008 = vmatpush1.bf16.msra.mxu0 %v7933
    %8009 = vmatprep.subr.bf16.mxu0 0
    %8010 = vmatpush1.bf16.msra.mxu0 %v7934
    %8011 = vmatprep.subr.bf16.mxu0 0
    %8012 = vmatpush1.bf16.msra.mxu0 %v7935
    %8013 = vmatprep.subr.bf16.mxu0 0
    %8014 = vmatpush1.bf16.msra.mxu0 %v7936
    %8015 = vmatprep.subr.bf16.mxu0 0
    %8016 = vmatpush1.bf16.msra.mxu0 %v7937
    %8017 = vmatprep.subr.bf16.mxu0 0
    %8018 = vmatpush1.bf16.msra.mxu0 %v7938
    %8019 = vmatprep.mubr.bf16.mxu0 %v7721
    %8020 = vmatmul.mubr.bf16.gmra.mrb[0].mxu0 %v7720
    %v8021 = vpop.f32.mrb[0].mxu0
    %v8022 = vadd.f32 %v7793, %v8021
    %v8023 = vpop.f32.mrb[0].mxu0
    %v8024 = vpop.f32.mrb[0].mxu0
    %v8025 = vadd.f32 %v7793, %v8024
    %v8026 = vpop.f32.mrb[0].mxu0
    %8027 = vdwg.mxu0
    %8028 = vmatprep.subr.bf16.mxu0 0
    %8029 = vmatpush1.bf16.msra.mxu0 %v7939
    %8030 = vmatprep.subr.bf16.mxu0 0
    %8031 = vmatpush1.bf16.msra.mxu0 %v7940
    %8032 = vmatprep.subr.bf16.mxu0 0
    %8033 = vmatpush1.bf16.msra.mxu0 %v7941
    %8034 = vmatprep.subr.bf16.mxu0 0
    %8035 = vmatpush1.bf16.msra.mxu0 %v7942
    %8036 = vmatprep.subr.bf16.mxu0 0
    %8037 = vmatpush1.bf16.msra.mxu0 %v7943
    %8038 = vmatprep.subr.bf16.mxu0 0
    %8039 = vmatpush1.bf16.msra.mxu0 %v7944
    %8040 = vmatprep.subr.bf16.mxu0 0
    %8041 = vmatpush1.bf16.msra.mxu0 %v7945
    %8042 = vmatprep.subr.bf16.mxu0 0
    %8043 = vmatpush1.bf16.msra.mxu0 %v7946
    %8044 = vmatprep.subr.bf16.mxu0 0
    %8045 = vmatpush1.bf16.msra.mxu0 %v7947
    %8046 = vmatprep.subr.bf16.mxu0 0
    %8047 = vmatpush1.bf16.msra.mxu0 %v7948
    %8048 = vmatprep.subr.bf16.mxu0 0
    %8049 = vmatpush1.bf16.msra.mxu0 %v7949
    %8050 = vmatprep.subr.bf16.mxu0 0
    %8051 = vmatpush1.bf16.msra.mxu0 %v7950
    %8052 = vmatprep.subr.bf16.mxu0 0
    %8053 = vmatpush1.bf16.msra.mxu0 %v7951
    %8054 = vmatprep.subr.bf16.mxu0 0
    %8055 = vmatpush1.bf16.msra.mxu0 %v7952
    %8056 = vmatprep.subr.bf16.mxu0 0
    %8057 = vmatpush1.bf16.msra.mxu0 %v7953
    %8058 = vmatprep.subr.bf16.mxu0 0
    %8059 = vmatpush1.bf16.msra.mxu0 %v7954
    %8060 = vmatprep.mubr.bf16.mxu0 %v7723
    %8061 = vmatmul.mubr.bf16.gmra.mrb[0].mxu0 %v7722
    %v8062 = vpop.f32.mrb[0].mxu0
    %v8063 = vadd.f32 %v8022, %v8062
    %v8064 = vpop.f32.mrb[0].mxu0
    %v8065 = vpop.f32.mrb[0].mxu0
    %v8066 = vadd.f32 %v8025, %v8065
    %v8067 = vpop.f32.mrb[0].mxu0
    %8068 = vdwg.mxu0
    %vm8069 = vcmp.ge.s32.totalorder %v7368, 0
    %vm8070 = vcmp.lt.s32.totalorder %v7368, 2
    %vm8071 = vmand %vm8069, %vm8070
    %v8072 = vsel %vm8071, %v8063, -1e+30
    %v8073 = vsel %vm8071, %v8066, -1e+30
    %8074 = vmax.xlane.f32.xlu0 %v8072
    %v8075 = vpop.xlane.xlu0 %8074
    %8076 = vmax.xlane.f32.xlu0 %v8073
    %v8077 = vpop.xlane.xlu0 %8076
    %v8078 = vsub.f32 %v8072, %v8075
    %v8079 = vsub.f32 %v8073, %v8077
    %v8080 = vmul.f32 %v8078, 1.442695
    %v8081 = vpow.pop %v8080
    %v8082 = vmul.f32 %v8079, 1.442695
    %v8083 = vpow.pop %v8082
    %8084 = vadd.xlane.f32.xlu0 %v8081
    %v8085 = vpop.xlane.xlu0 %8084
    %8086 = vadd.xlane.f32.xlu0 %v8083
    %v8087 = vpop.xlane.xlu0 %8086
    %v8088 = vlog2.pop %v8085
    %v8089 = vmul.f32 %v8088, 0.6931472
    %v8090 = vlog2.pop %v8087
    %v8091 = vmul.f32 %v8090, 0.6931472
    %v8092 = vsub.f32 %v8078, %v8089
    %v8093 = vsub.f32 %v8079, %v8091
    %v8094 = vsel %vm8071, %v8092, 0.0
    %v8095 = vsel %vm8071, %v8093, 0.0
    %v8096 = vadd.f32 %v8094, %v7394
    %v8097 = vadd.f32 %v8095, %v7395
    %v8098 = vadd.f32 %v8096, %v7421
    %v8099 = vadd.f32 %v8097, %v7422
    %8100 = vst [vmem:[#allocation19] sm:$0xff] %v8098
    %8101 = vst [vmem:[#allocation19 + $0x8] sm:$0xff] %v8099
    // Predicated region
    $region82: #{_heads_pallas.1} parent=1 // pred_check
      _
    $region83: #{_heads_pallas.1} parent=1 // pred_check_branch
      %8103 = sbr.rel (0) target = $region85
    $region84: #{_heads_pallas.1} parent=1 // pred_region
      %s8105 = ssub.s32 256, 256
      %8106 = vsyncadd [#allocation4], %s8105
      %s8107 = sshll.u32 [#allocation19], 4
      %s8108 = int_to_ptr.vmem [resolvable:$true] %s8107
      %8113 = dma.vmem_to_hbm [thread:$0]  %s8108, 256, %s10, [#allocation4], 128, 128, 8
    $region85: #{_heads_pallas.1} parent=1 // pred_fallthru
      _
    // Predicated region
    $region86: #{_heads_pallas.1} parent=1 // pred_check
      _
    $region87: #{_heads_pallas.1} parent=1 // pred_check_branch
      %8115 = sbr.rel (0) target = $region89
    $region88: #{_heads_pallas.1} parent=1 // pred_region
      %8116 = dma.done [#allocation4], 256
    $region89: #{_heads_pallas.1} parent=1 // pred_fallthru
      _
    %8117 = vsyncpa [#allocation3], 1
    %8118 = vsyncpa [#allocation6], 1
    %8119 = vsyncpa [#allocation9], 1
    %8120 = vsyncpa [#allocation12], 1
    %8121 = vsyncpa [#allocation15], 1
    %8122 = vsyncpa [#allocation18], 1
    %8123 = vsyncpa [#allocation4], 1

</llo_original>
